<compile_context>
chip_gen: v6e
topology: v6e:2x2x1
jax: 0.10.0
libtpu: 0.0.40
codegen_flags: <defaults>
</compile_context>

<pallas_src>
import functools

import jax
import jax.numpy as jnp
import numpy as np
from jax import lax
from jax.experimental import pallas as pl
from jax.experimental.pallas import tpu as pltpu

EPS = 1e-5      # nn.BatchNorm2d default eps
LANE = 128      # TPU lane width; channel axis is padded to a multiple of this


def _round_up(x, m):
    return (x + m - 1) // m * m


def _vmem_limit_bytes():
    """Generation-aware scoped-VMEM budget (~3/4 of physical, capped)."""
    try:
        info = pltpu.get_tpu_info()
        cap = getattr(info, "vmem_capacity_bytes", None)
        if cap:
            return int(min(cap * 3 // 4, 100 * 1024 * 1024))
    except Exception:
        pass
    return 48 * 1024 * 1024        # safe default on v5e / v6e / v7x


def _pick_batch_tile(n, h, w, h_out, w_out, cin_p, cout_p, width, vmem_limit):
    """Largest divisor of n whose pass-1 working set fits comfortably in VMEM."""
    per_img = ((h + 2) * (w + 2) * cin_p * 2 * 2         # bf16 padded input (dbl-buffered)
               + h_out * w_out * cout_p * 2 * 2 * 2      # bf16 y1 (+ shortcut) outputs
               + h_out * w_out * width * 4 * 4)          # f32 accumulator + tap temps
    budget = max(vmem_limit // 3, per_img)
    bt = int(max(1, min(n, budget // per_img)))
    bt = min(bt, max(1, 4096 // (h_out * w_out)))        # keep the MXU M dim sane
    while n % bt:
        bt -= 1
    return bt


# --------------------------------------------------------------------------
# pass 1: conv1 (3x3, stride s) [+ fused 1x1 shortcut conv] + BN partial stats
# --------------------------------------------------------------------------
def _pass1_kernel(xp_ref, w_ref, *out_refs, h_out, w_out, cin_p, cout_p,
                  stride, use_conv_sc):
    if use_conv_sc:
        y1_ref, sum1_ref, sq1_ref, sc_ref, sums_ref, sqs_ref = out_refs
    else:
        y1_ref, sum1_ref, sq1_ref = out_refs

    bt = y1_ref.shape[0]
    m = bt * h_out * w_out
    hi = stride * (h_out - 1) + 1
    wi = stride * (w_out - 1) + 1
    width = w_ref.shape[-1]               # cout_p, or 2*cout_p with fused shortcut

    xp = xp_ref[...]                      # (bt, H+2, W+2, Cin_p) bf16, pre-padded
    acc = jnp.zeros((m, width), jnp.float32)
    for t in range(9):                    # 9 accumulating dots, no concatenate
        kh, kw = t // 3, t % 3
        tap = xp[:, kh:kh + hi:stride, kw:kw + wi:stride, :].reshape(m, cin_p)
        acc = acc + jnp.dot(tap, w_ref[t], preferred_element_type=jnp.float32)

    y1 = acc[:, :cout_p]
    y1_ref[...] = y1.reshape(bt, h_out, w_out, cout_p).astype(y1_ref.dtype)
    sum1_ref[...] = jnp.sum(y1, axis=0, keepdims=True).reshape(1, 1, cout_p)
    sq1_ref[...] = jnp.sum(y1 * y1, axis=0, keepdims=True).reshape(1, 1, cout_p)
    if use_conv_sc:
        sc = acc[:, cout_p:]
        sc_ref[...] = sc.reshape(bt, h_out, w_out, cout_p).astype(sc_ref.dtype)
        sums_ref[...] = jnp.sum(sc, axis=0, keepdims=True).reshape(1, 1, cout_p)
        sqs_ref[...] = jnp.sum(sc * sc, axis=0, keepdims=True).reshape(1, 1, cout_p)


# --------------------------------------------------------------------------
# pass 2: BN1 affine + ReLU + conv2 (3x3 stride 1) + BN2 partial stats
# --------------------------------------------------------------------------
def _pass2_kernel(y1_ref, a1_ref, b1_ref, w2_ref,
                  y2_ref, sum2_ref, sq2_ref, ypad_ref,
                  *, h_out, w_out, cout_p):
    bt = y1_ref.shape[0]
    m = bt * h_out * w_out

    y1 = y1_ref[...].astype(jnp.float32).reshape(m, cout_p)
    act = jnp.maximum(y1 * a1_ref[...] + b1_ref[...], 0.0).astype(jnp.bfloat16)

    # conv2's zero padding has to happen here (BN1 stats only exist after
    # pass 1); the grid is "parallel", so the scratch is re-zeroed each step.
    ypad_ref[...] = jnp.zeros_like(ypad_ref)
    ypad_ref[:, pl.ds(1, h_out), pl.ds(1, w_out), :] = act.reshape(
        bt, h_out, w_out, cout_p)
    yp = ypad_ref[...]

    acc = jnp.zeros((m, cout_p), jnp.float32)
    for t in range(9):
        kh, kw = t // 3, t % 3
        tap = yp[:, kh:kh + h_out, kw:kw + w_out, :].reshape(m, cout_p)
        acc = acc + jnp.dot(tap, w2_ref[t], preferred_element_type=jnp.float32)

    y2_ref[...] = acc.reshape(bt, h_out, w_out, cout_p).astype(y2_ref.dtype)
    sum2_ref[...] = jnp.sum(acc, axis=0, keepdims=True).reshape(1, 1, cout_p)
    sq2_ref[...] = jnp.sum(acc * acc, axis=0, keepdims=True).reshape(1, 1, cout_p)


# --------------------------------------------------------------------------
# pass 3: BN2 affine + shortcut (identity or BN_sc of the fused 1x1) + ReLU
# --------------------------------------------------------------------------
def _pass3_kernel(*refs, use_conv_sc):
    if use_conv_sc:
        y2_ref, sc_ref, a2_ref, b2_ref, as_ref, bs_ref, out_ref = refs
    else:
        y2_ref, sc_ref, a2_ref, b2_ref, out_ref = refs
    bt, h_out, w_out, cout_p = y2_ref.shape
    m = bt * h_out * w_out

    y2 = y2_ref[...].astype(jnp.float32).reshape(m, cout_p)
    out = y2 * a2_ref[...] + b2_ref[...]
    sc = sc_ref[...].astype(jnp.float32).reshape(m, cout_p)
    if use_conv_sc:
        sc = sc * as_ref[...] + bs_ref[...]
    out = jnp.maximum(out + sc, 0.0)
    out_ref[...] = out.reshape(bt, h_out, w_out, cout_p).astype(out_ref.dtype)


# --------------------------------------------------------------------------
# wrapper
# --------------------------------------------------------------------------
def _bn_affine(psum, psq, gamma, beta, count, cout_p):
    """Per-block partials -> per-channel (scale, shift) so BN(y) = y*scale + shift."""
    s = jnp.sum(psum, axis=(0, 1))                      # (cout_p,)
    q = jnp.sum(psq, axis=(0, 1))
    mu = s / count
    var = jnp.maximum(q / count - mu * mu, 0.0)         # biased batch var, clamped
    g = jnp.pad(gamma, (0, cout_p - gamma.shape[0]))
    b = jnp.pad(beta, (0, cout_p - beta.shape[0]))
    scale = g * lax.rsqrt(var + EPS)
    shift = b - mu * scale
    return (scale.reshape(1, cout_p).astype(jnp.float32),
            shift.reshape(1, cout_p).astype(jnp.float32))


@functools.partial(jax.jit, static_argnames=("stride",))
def residual_block_forward_nhwc(x_nhwc, params, stride=1):
    """NHWC-native forward: (N, H, W, Cin) -> (N, H', W', Cout)."""
    n, h, w, cin = x_nhwc.shape
    cout = params["w1"].shape[-1]
    h_out = (h + 2 - 3) // stride + 1
    w_out = (w + 2 - 3) // stride + 1
    use_conv_sc = (stride != 1) or (cin != cout)
    count = float(n * h_out * w_out)

    cin_p = _round_up(cin, LANE)
    cout_p = _round_up(cout, LANE)
    width = 2 * cout_p if use_conv_sc else cout_p

    # ---- wrapper-side layout prep: lane-dense channels, bf16, spatial pad ----
    xc = jnp.pad(x_nhwc, ((0, 0), (0, 0), (0, 0), (0, cin_p - cin))
                 ).astype(jnp.bfloat16)
    xp = jnp.pad(xc, ((0, 0), (1, 1), (1, 1), (0, 0)))          # conv1 zero padding

    w1 = jnp.pad(params["w1"],
                 ((0, 0), (0, 0), (0, cin_p - cin), (0, cout_p - cout))
                 ).reshape(9, cin_p, cout_p)
    if use_conv_sc:
        wsc = jnp.pad(params["wsc"], ((0, cin_p - cin), (0, cout_p - cout)))
        w1p = jnp.zeros((9, cin_p, width), jnp.float32)
        w1p = w1p.at[:, :, :cout_p].set(w1)
        w1p = w1p.at[4, :, cout_p:].set(wsc)   # center tap == strided 1x1 input
    else:
        w1p = w1
    w1p = w1p.astype(jnp.bfloat16)
    w2p = jnp.pad(params["w2"],
                  ((0, 0), (0, 0), (0, cout_p - cout), (0, cout_p - cout))
                  ).reshape(9, cout_p, cout_p).astype(jnp.bfloat16)

    vmem_limit = _vmem_limit_bytes()
    bt = _pick_batch_tile(n, h, w, h_out, w_out, cin_p, cout_p, width, vmem_limit)
    nblk = n // bt

    par = pltpu.CompilerParams(dimension_semantics=("parallel",),
                               vmem_limit_bytes=vmem_limit)

    tile = pl.BlockSpec((bt, h_out, w_out, cout_p), lambda b: (b, 0, 0, 0))
    vec_out = pl.BlockSpec((1, 1, cout_p), lambda b: (b, 0, 0))   # per-block partials
    vec_in = pl.BlockSpec((1, cout_p), lambda b: (0, 0))          # broadcast BN affine
    tile_sd = jax.ShapeDtypeStruct((n, h_out, w_out, cout_p), jnp.bfloat16)
    vec_sd = jax.ShapeDtypeStruct((nblk, 1, cout_p), jnp.float32)

    # ---------------- pass 1: conv1 (+ fused 1x1 shortcut) + BN1/BNsc partials
    out_specs1 = [tile, vec_out, vec_out]
    out_shape1 = [tile_sd, vec_sd, vec_sd]
    if use_conv_sc:
        out_specs1 += [tile, vec_out, vec_out]
        out_shape1 += [tile_sd, vec_sd, vec_sd]
    kernel1 = functools.partial(
        _pass1_kernel, h_out=h_out, w_out=w_out, cin_p=cin_p, cout_p=cout_p,
        stride=stride, use_conv_sc=use_conv_sc)
    res1 = pl.pallas_call(
        kernel1, grid=(nblk,),
        in_specs=[pl.BlockSpec((bt, h + 2, w + 2, cin_p), lambda b: (b, 0, 0, 0)),
                  pl.BlockSpec((9, cin_p, width), lambda b: (0, 0, 0))],
        out_specs=tuple(out_specs1),
        out_shape=tuple(out_shape1),
        compiler_params=par,
    )(xp, w1p)
    if use_conv_sc:
        y1_raw, psum1, psq1, sc_raw, psums, psqs = res1
        shortcut_in = sc_raw
    else:
        y1_raw, psum1, psq1 = res1
        shortcut_in = xc                       # identity shortcut (bf16, lane-padded)

    scale1, shift1 = _bn_affine(psum1, psq1, params["g1"], params["b1"], count, cout_p)

    # ---------------- pass 2: BN1 affine + ReLU + conv2 + BN2 partials
    kernel2 = functools.partial(_pass2_kernel, h_out=h_out, w_out=w_out, cout_p=cout_p)
    y2_raw, psum2, psq2 = pl.pallas_call(
        kernel2, grid=(nblk,),
        in_specs=[tile, vec_in, vec_in,
                  pl.BlockSpec((9, cout_p, cout_p), lambda b: (0, 0, 0))],
        out_specs=(tile, vec_out, vec_out),
        out_shape=(tile_sd, vec_sd, vec_sd),
        scratch_shapes=[pltpu.VMEM((bt, h_out + 2, w_out + 2, cout_p), jnp.bfloat16)],
        compiler_params=par,
    )(y1_raw, scale1, shift1, w2p)

    scale2, shift2 = _bn_affine(psum2, psq2, params["g2"], params["b2"], count, cout_p)

    # ---------------- pass 3: BN2 affine + shortcut + ReLU (pure elementwise)
    in_specs3 = [tile, tile, vec_in, vec_in]
    inputs3 = [y2_raw, shortcut_in, scale2, shift2]
    if use_conv_sc:
        scale_s, shift_s = _bn_affine(psums, psqs, params["gsc"], params["bsc"],
                                      count, cout_p)
        in_specs3 += [vec_in, vec_in]
        inputs3 += [scale_s, shift_s]
    kernel3 = functools.partial(_pass3_kernel, use_conv_sc=use_conv_sc)
    out = pl.pallas_call(
        kernel3, grid=(nblk,),
        in_specs=in_specs3,
        out_specs=tile,
        out_shape=jax.ShapeDtypeStruct((n, h_out, w_out, cout_p), x_nhwc.dtype),
        compiler_params=par,
    )(*inputs3)
    return out[..., :cout]


def residual_block_forward(x_nchw, params, stride=1):
    """PyTorch-layout entry point: (N, Cin, H, W) -> (N, Cout, H', W')."""
    x_nhwc = jnp.transpose(x_nchw, (0, 2, 3, 1))
    out = residual_block_forward_nhwc(x_nhwc, params, stride=stride)
    return jnp.transpose(out, (0, 3, 1, 2))


# ---------------- deterministic parameter init (shapes from __init__) ---------
def init_params(key, cin, cout, stride):
    k1, k2, k3, k4, k5 = jax.random.split(key, 5)
    p = {
        "w1": jax.random.normal(k1, (3, 3, cin, cout), jnp.float32) * 0.1,   # HWIO
        "g1": 1.0 + 0.1 * jax.random.normal(k4, (cout,), jnp.float32),
        "b1": 0.1 * jax.random.normal(k5, (cout,), jnp.float32),
        "w2": jax.random.normal(k2, (3, 3, cout, cout), jnp.float32) * 0.1,
        "g2": jnp.ones((cout,), jnp.float32),
        "b2": jnp.zeros((cout,), jnp.float32),
    }
    if stride != 1 or cin != cout:
        p["wsc"] = jax.random.normal(k3, (cin, cout), jnp.float32) * 0.1     # 1x1 conv
        p["gsc"] = 1.0 + 0.1 * jax.random.normal(k3, (cout,), jnp.float32)
        p["bsc"] = 0.05 * jnp.ones((cout,), jnp.float32)
    else:
        p["wsc"] = jnp.eye(cin, cout, dtype=jnp.float32)   # unused (identity path)
        p["gsc"] = jnp.ones((cout,), jnp.float32)
        p["bsc"] = jnp.zeros((cout,), jnp.float32)
    return p


# ---------------- pure-JAX reference (mirrors the torch forward) --------------
def _bn_train(y, g, b):
    mu = jnp.mean(y, axis=(0, 1, 2))
    var = jnp.mean((y - mu) ** 2, axis=(0, 1, 2))
    return (y - mu) * lax.rsqrt(var + EPS) * g + b


def reference_forward(x_nchw, params, stride=1):
    dn = ("NHWC", "HWIO", "NHWC")
    x = jnp.transpose(x_nchw, (0, 2, 3, 1))
    cin = x.shape[-1]
    cout = params["w1"].shape[-1]
    y = lax.conv_general_dilated(x, params["w1"], (stride, stride),
                                 ((1, 1), (1, 1)), dimension_numbers=dn)
    y = jnp.maximum(_bn_train(y, params["g1"], params["b1"]), 0.0)
    y = lax.conv_general_dilated(y, params["w2"], (1, 1),
                                 ((1, 1), (1, 1)), dimension_numbers=dn)
    y = _bn_train(y, params["g2"], params["b2"])
    if stride != 1 or cin != cout:
        s = lax.conv_general_dilated(x, params["wsc"].reshape(1, 1, cin, cout),
                                     (stride, stride), ((0, 0), (0, 0)),
                                     dimension_numbers=dn)
        s = _bn_train(s, params["gsc"], params["bsc"])
    else:
        s = x
    return jnp.transpose(jnp.maximum(y + s, 0.0), (0, 3, 1, 2))


if __name__ == "__main__":
    # TODO(synk): BatchNorm running-stat buffer updates (a training-mode side
    # effect) are not modeled; they do not affect the forward output.
    key = jax.random.PRNGKey(0)
    configs = [
        (4, 4, 1),   # identity shortcut (inchannel == outchannel, stride == 1)
        (4, 8, 1),   # 1x1-conv + BN shortcut (channel change)
        (4, 8, 2),   # 1x1-conv + BN shortcut (stride 2)
    ]
    for cin, cout, stride in configs:
        key, kx, kp = jax.random.split(key, 3)
        x = jax.random.normal(kx, (2, cin, 16, 16), jnp.float32)
        params = init_params(kp, cin, cout, stride)

        out = jax.block_until_ready(residual_block_forward(x, params, stride))
        ref = jax.block_until_ready(reference_forward(x, params, stride))
        # tolerance loosened vs a pure-f32 path: bf16 MXU operands + bf16
        # inter-pass intermediates (BN renormalization keeps drift small).
        np.testing.assert_allclose(np.asarray(out), np.asarray(ref),
                                   atol=5e-2, rtol=5e-2)
        assert out.shape == (2, cout, 16 // stride, 16 // stride)

    print("KERNEL_OK")
</pallas_src>

<mosaic_0001>
module attributes {stable_mosaic.version = 11 : i64} {
  func.func @_pass1_kernel(%arg0: i32, %arg1: memref<2x18x18x128xbf16, #tpu.memory_space<vmem>>, %arg2: memref<9x128x128xbf16, #tpu.memory_space<vmem>>, %arg3: memref<2x16x16x128xbf16, #tpu.memory_space<vmem>>, %arg4: memref<1x1x128xf32, #tpu.memory_space<vmem>>, %arg5: memref<1x1x128xf32, #tpu.memory_space<vmem>>) attributes {dimension_semantics = [#tpu.dimension_semantics<parallel>], iteration_bounds = array<i64: 1>, scalar_prefetch = 0 : i64, scratch_operands = 0 : i64, tpu.core_type = #tpu.core_type<tc>, window_params = [{transform_indices = @transform_0, window_bounds = array<i64: 2, 18, 18, 128>}, {pipeline_mode = #tpu.pipeline_mode<synchronous>, transform_indices = @transform_1, window_bounds = array<i64: 9, 128, 128>}, {transform_indices = @transform_2, window_bounds = array<i64: 2, 16, 16, 128>}, {transform_indices = @transform_3, window_bounds = array<i64: 1, 1, 128>}, {transform_indices = @transform_4, window_bounds = array<i64: 1, 1, 128>}]} {
    %c0 = arith.constant 0 : index
    %c0_0 = arith.constant 0 : index
    %c0_1 = arith.constant 0 : index
    %c0_2 = arith.constant 0 : index
    %0 = vector.load %arg1[%c0, %c0_0, %c0_1, %c0_2] : memref<2x18x18x128xbf16, #tpu.memory_space<vmem>>, vector<2x18x18x128xbf16>
    %cst = arith.constant 0.000000e+00 : f32
    %1 = vector.broadcast %cst : f32 to vector<512x128xf32>
    %2 = vector.extract_strided_slice %0 {offsets = [0, 0, 0, 0], sizes = [2, 16, 16, 128], strides = [1, 1, 1, 1]} : vector<2x18x18x128xbf16> to vector<2x16x16x128xbf16>
    %3 = vector.shape_cast %2 : vector<2x16x16x128xbf16> to vector<512x128xbf16>
    %c0_3 = arith.constant 0 : index
    %c0_4 = arith.constant 0 : index
    %c0_5 = arith.constant 0 : index
    %4 = vector.load %arg2[%c0_3, %c0_4, %c0_5] : memref<9x128x128xbf16, #tpu.memory_space<vmem>>, vector<1x128x128xbf16>
    %5 = vector.shape_cast %4 : vector<1x128x128xbf16> to vector<128x128xbf16>
    %cst_6 = arith.constant dense<0.000000e+00> : vector<512x128xf32>
    %6 = tpu.matmul %3, %5, %cst_6 {dimension_numbers = #tpu.dot_dimension_numbers<[1], [0], [0], [1], [0, 0, 1, 1], [], []>} : vector<512x128xbf16>, vector<128x128xbf16>, vector<512x128xf32> -> vector<512x128xf32>
    %7 = arith.addf %1, %6 : vector<512x128xf32>
    %8 = vector.extract_strided_slice %0 {offsets = [0, 0, 1, 0], sizes = [2, 16, 16, 128], strides = [1, 1, 1, 1]} : vector<2x18x18x128xbf16> to vector<2x16x16x128xbf16>
    %9 = vector.shape_cast %8 : vector<2x16x16x128xbf16> to vector<512x128xbf16>
    %c1 = arith.constant 1 : index
    %c0_7 = arith.constant 0 : index
    %c0_8 = arith.constant 0 : index
    %10 = vector.load %arg2[%c1, %c0_7, %c0_8] : memref<9x128x128xbf16, #tpu.memory_space<vmem>>, vector<1x128x128xbf16>
    %11 = vector.shape_cast %10 : vector<1x128x128xbf16> to vector<128x128xbf16>
    %cst_9 = arith.constant dense<0.000000e+00> : vector<512x128xf32>
    %12 = tpu.matmul %9, %11, %cst_9 {dimension_numbers = #tpu.dot_dimension_numbers<[1], [0], [0], [1], [0, 0, 1, 1], [], []>} : vector<512x128xbf16>, vector<128x128xbf16>, vector<512x128xf32> -> vector<512x128xf32>
    %13 = arith.addf %7, %12 : vector<512x128xf32>
    %14 = vector.extract_strided_slice %0 {offsets = [0, 0, 2, 0], sizes = [2, 16, 16, 128], strides = [1, 1, 1, 1]} : vector<2x18x18x128xbf16> to vector<2x16x16x128xbf16>
    %15 = vector.shape_cast %14 : vector<2x16x16x128xbf16> to vector<512x128xbf16>
    %c2 = arith.constant 2 : index
    %c0_10 = arith.constant 0 : index
    %c0_11 = arith.constant 0 : index
    %16 = vector.load %arg2[%c2, %c0_10, %c0_11] : memref<9x128x128xbf16, #tpu.memory_space<vmem>>, vector<1x128x128xbf16>
    %17 = vector.shape_cast %16 : vector<1x128x128xbf16> to vector<128x128xbf16>
    %cst_12 = arith.constant dense<0.000000e+00> : vector<512x128xf32>
    %18 = tpu.matmul %15, %17, %cst_12 {dimension_numbers = #tpu.dot_dimension_numbers<[1], [0], [0], [1], [0, 0, 1, 1], [], []>} : vector<512x128xbf16>, vector<128x128xbf16>, vector<512x128xf32> -> vector<512x128xf32>
    %19 = arith.addf %13, %18 : vector<512x128xf32>
    %20 = vector.extract_strided_slice %0 {offsets = [0, 1, 0, 0], sizes = [2, 16, 16, 128], strides = [1, 1, 1, 1]} : vector<2x18x18x128xbf16> to vector<2x16x16x128xbf16>
    %21 = vector.shape_cast %20 : vector<2x16x16x128xbf16> to vector<512x128xbf16>
    %c3 = arith.constant 3 : index
    %c0_13 = arith.constant 0 : index
    %c0_14 = arith.constant 0 : index
    %22 = vector.load %arg2[%c3, %c0_13, %c0_14] : memref<9x128x128xbf16, #tpu.memory_space<vmem>>, vector<1x128x128xbf16>
    %23 = vector.shape_cast %22 : vector<1x128x128xbf16> to vector<128x128xbf16>
    %cst_15 = arith.constant dense<0.000000e+00> : vector<512x128xf32>
    %24 = tpu.matmul %21, %23, %cst_15 {dimension_numbers = #tpu.dot_dimension_numbers<[1], [0], [0], [1], [0, 0, 1, 1], [], []>} : vector<512x128xbf16>, vector<128x128xbf16>, vector<512x128xf32> -> vector<512x128xf32>
    %25 = arith.addf %19, %24 : vector<512x128xf32>
    %26 = vector.extract_strided_slice %0 {offsets = [0, 1, 1, 0], sizes = [2, 16, 16, 128], strides = [1, 1, 1, 1]} : vector<2x18x18x128xbf16> to vector<2x16x16x128xbf16>
    %27 = vector.shape_cast %26 : vector<2x16x16x128xbf16> to vector<512x128xbf16>
    %c4 = arith.constant 4 : index
    %c0_16 = arith.constant 0 : index
    %c0_17 = arith.constant 0 : index
    %28 = vector.load %arg2[%c4, %c0_16, %c0_17] : memref<9x128x128xbf16, #tpu.memory_space<vmem>>, vector<1x128x128xbf16>
    %29 = vector.shape_cast %28 : vector<1x128x128xbf16> to vector<128x128xbf16>
    %cst_18 = arith.constant dense<0.000000e+00> : vector<512x128xf32>
    %30 = tpu.matmul %27, %29, %cst_18 {dimension_numbers = #tpu.dot_dimension_numbers<[1], [0], [0], [1], [0, 0, 1, 1], [], []>} : vector<512x128xbf16>, vector<128x128xbf16>, vector<512x128xf32> -> vector<512x128xf32>
    %31 = arith.addf %25, %30 : vector<512x128xf32>
    %32 = vector.extract_strided_slice %0 {offsets = [0, 1, 2, 0], sizes = [2, 16, 16, 128], strides = [1, 1, 1, 1]} : vector<2x18x18x128xbf16> to vector<2x16x16x128xbf16>
    %33 = vector.shape_cast %32 : vector<2x16x16x128xbf16> to vector<512x128xbf16>
    %c5 = arith.constant 5 : index
    %c0_19 = arith.constant 0 : index
    %c0_20 = arith.constant 0 : index
    %34 = vector.load %arg2[%c5, %c0_19, %c0_20] : memref<9x128x128xbf16, #tpu.memory_space<vmem>>, vector<1x128x128xbf16>
    %35 = vector.shape_cast %34 : vector<1x128x128xbf16> to vector<128x128xbf16>
    %cst_21 = arith.constant dense<0.000000e+00> : vector<512x128xf32>
    %36 = tpu.matmul %33, %35, %cst_21 {dimension_numbers = #tpu.dot_dimension_numbers<[1], [0], [0], [1], [0, 0, 1, 1], [], []>} : vector<512x128xbf16>, vector<128x128xbf16>, vector<512x128xf32> -> vector<512x128xf32>
    %37 = arith.addf %31, %36 : vector<512x128xf32>
    %38 = vector.extract_strided_slice %0 {offsets = [0, 2, 0, 0], sizes = [2, 16, 16, 128], strides = [1, 1, 1, 1]} : vector<2x18x18x128xbf16> to vector<2x16x16x128xbf16>
    %39 = vector.shape_cast %38 : vector<2x16x16x128xbf16> to vector<512x128xbf16>
    %c6 = arith.constant 6 : index
    %c0_22 = arith.constant 0 : index
    %c0_23 = arith.constant 0 : index
    %40 = vector.load %arg2[%c6, %c0_22, %c0_23] : memref<9x128x128xbf16, #tpu.memory_space<vmem>>, vector<1x128x128xbf16>
    %41 = vector.shape_cast %40 : vector<1x128x128xbf16> to vector<128x128xbf16>
    %cst_24 = arith.constant dense<0.000000e+00> : vector<512x128xf32>
    %42 = tpu.matmul %39, %41, %cst_24 {dimension_numbers = #tpu.dot_dimension_numbers<[1], [0], [0], [1], [0, 0, 1, 1], [], []>} : vector<512x128xbf16>, vector<128x128xbf16>, vector<512x128xf32> -> vector<512x128xf32>
    %43 = arith.addf %37, %42 : vector<512x128xf32>
    %44 = vector.extract_strided_slice %0 {offsets = [0, 2, 1, 0], sizes = [2, 16, 16, 128], strides = [1, 1, 1, 1]} : vector<2x18x18x128xbf16> to vector<2x16x16x128xbf16>
    %45 = vector.shape_cast %44 : vector<2x16x16x128xbf16> to vector<512x128xbf16>
    %c7 = arith.constant 7 : index
    %c0_25 = arith.constant 0 : index
    %c0_26 = arith.constant 0 : index
    %46 = vector.load %arg2[%c7, %c0_25, %c0_26] : memref<9x128x128xbf16, #tpu.memory_space<vmem>>, vector<1x128x128xbf16>
    %47 = vector.shape_cast %46 : vector<1x128x128xbf16> to vector<128x128xbf16>
    %cst_27 = arith.constant dense<0.000000e+00> : vector<512x128xf32>
    %48 = tpu.matmul %45, %47, %cst_27 {dimension_numbers = #tpu.dot_dimension_numbers<[1], [0], [0], [1], [0, 0, 1, 1], [], []>} : vector<512x128xbf16>, vector<128x128xbf16>, vector<512x128xf32> -> vector<512x128xf32>
    %49 = arith.addf %43, %48 : vector<512x128xf32>
    %50 = vector.extract_strided_slice %0 {offsets = [0, 2, 2, 0], sizes = [2, 16, 16, 128], strides = [1, 1, 1, 1]} : vector<2x18x18x128xbf16> to vector<2x16x16x128xbf16>
    %51 = vector.shape_cast %50 : vector<2x16x16x128xbf16> to vector<512x128xbf16>
    %c8 = arith.constant 8 : index
    %c0_28 = arith.constant 0 : index
    %c0_29 = arith.constant 0 : index
    %52 = vector.load %arg2[%c8, %c0_28, %c0_29] : memref<9x128x128xbf16, #tpu.memory_space<vmem>>, vector<1x128x128xbf16>
    %53 = vector.shape_cast %52 : vector<1x128x128xbf16> to vector<128x128xbf16>
    %cst_30 = arith.constant dense<0.000000e+00> : vector<512x128xf32>
    %54 = tpu.matmul %51, %53, %cst_30 {dimension_numbers = #tpu.dot_dimension_numbers<[1], [0], [0], [1], [0, 0, 1, 1], [], []>} : vector<512x128xbf16>, vector<128x128xbf16>, vector<512x128xf32> -> vector<512x128xf32>
    %55 = arith.addf %49, %54 : vector<512x128xf32>
    %56 = vector.shape_cast %55 : vector<512x128xf32> to vector<2x16x16x128xf32>
    %57 = arith.truncf %56 : vector<2x16x16x128xf32> to vector<2x16x16x128xbf16>
    %c0_31 = arith.constant 0 : index
    %c0_32 = arith.constant 0 : index
    %c0_33 = arith.constant 0 : index
    %c0_34 = arith.constant 0 : index
    %58 = vector.load %arg3[%c0_31, %c0_32, %c0_33, %c0_34] : memref<2x16x16x128xbf16, #tpu.memory_space<vmem>>, vector<2x16x16x128xbf16>
    tpu.vector_store %arg3[%c0_31, %c0_32, %c0_33, %c0_34], %57 {strides = array<i32>} : memref<2x16x16x128xbf16, #tpu.memory_space<vmem>>, vector<2x16x16x128xbf16>,
    %cst_35 = arith.constant dense<0.000000e+00> : vector<128xf32>
    %59 = vector.multi_reduction <add>, %55, %cst_35 [0] : vector<512x128xf32> to vector<128xf32>
    %60 = vector.shape_cast %59 : vector<128xf32> to vector<1x128xf32>
    %61 = vector.shape_cast %60 : vector<1x128xf32> to vector<1x1x128xf32>
    %c0_36 = arith.constant 0 : index
    %c0_37 = arith.constant 0 : index
    %c0_38 = arith.constant 0 : index
    %62 = vector.load %arg4[%c0_36, %c0_37, %c0_38] : memref<1x1x128xf32, #tpu.memory_space<vmem>>, vector<1x1x128xf32>
    tpu.vector_store %arg4[%c0_36, %c0_37, %c0_38], %61 {strides = array<i32>} : memref<1x1x128xf32, #tpu.memory_space<vmem>>, vector<1x1x128xf32>,
    %63 = arith.mulf %55, %55 : vector<512x128xf32>
    %cst_39 = arith.constant dense<0.000000e+00> : vector<128xf32>
    %64 = vector.multi_reduction <add>, %63, %cst_39 [0] : vector<512x128xf32> to vector<128xf32>
    %65 = vector.shape_cast %64 : vector<128xf32> to vector<1x128xf32>
    %66 = vector.shape_cast %65 : vector<1x128xf32> to vector<1x1x128xf32>
    %c0_40 = arith.constant 0 : index
    %c0_41 = arith.constant 0 : index
    %c0_42 = arith.constant 0 : index
    %67 = vector.load %arg5[%c0_40, %c0_41, %c0_42] : memref<1x1x128xf32, #tpu.memory_space<vmem>>, vector<1x1x128xf32>
    tpu.vector_store %arg5[%c0_40, %c0_41, %c0_42], %66 {strides = array<i32>} : memref<1x1x128xf32, #tpu.memory_space<vmem>>, vector<1x1x128xf32>,
    return
  }
  func.func @transform_0(%arg0: i32) -> (i32, i32, i32, i32) {
    %c0_i32 = arith.constant 0 : i32
    %c0_i32_0 = arith.constant 0 : i32
    %c0_i32_1 = arith.constant 0 : i32
    %c0_i32_2 = arith.constant 0 : i32
    return %arg0, %c0_i32, %c0_i32_0, %c0_i32_1 : i32, i32, i32, i32
  }
  func.func @transform_1(%arg0: i32) -> (i32, i32, i32) {
    %c0_i32 = arith.constant 0 : i32
    %c0_i32_0 = arith.constant 0 : i32
    %c0_i32_1 = arith.constant 0 : i32
    %c0_i32_2 = arith.constant 0 : i32
    return %c0_i32, %c0_i32_0, %c0_i32_1 : i32, i32, i32
  }
  func.func @transform_2(%arg0: i32) -> (i32, i32, i32, i32) {
    %c0_i32 = arith.constant 0 : i32
    %c0_i32_0 = arith.constant 0 : i32
    %c0_i32_1 = arith.constant 0 : i32
    %c0_i32_2 = arith.constant 0 : i32
    return %arg0, %c0_i32, %c0_i32_0, %c0_i32_1 : i32, i32, i32, i32
  }
  func.func @transform_3(%arg0: i32) -> (i32, i32, i32) {
    %c0_i32 = arith.constant 0 : i32
    %c0_i32_0 = arith.constant 0 : i32
    %c0_i32_1 = arith.constant 0 : i32
    return %arg0, %c0_i32, %c0_i32_0 : i32, i32, i32
  }
  func.func @transform_4(%arg0: i32) -> (i32, i32, i32) {
    %c0_i32 = arith.constant 0 : i32
    %c0_i32_0 = arith.constant 0 : i32
    %c0_i32_1 = arith.constant 0 : i32
    return %arg0, %c0_i32, %c0_i32_0 : i32, i32, i32
  }
}

module attributes {stable_mosaic.version = 11 : i64} {
  func.func @_pass2_kernel(%arg0: i32, %arg1: memref<2x16x16x128xbf16, #tpu.memory_space<vmem>>, %arg2: memref<1x128xf32, #tpu.memory_space<vmem>>, %arg3: memref<1x128xf32, #tpu.memory_space<vmem>>, %arg4: memref<9x128x128xbf16, #tpu.memory_space<vmem>>, %arg5: memref<2x16x16x128xbf16, #tpu.memory_space<vmem>>, %arg6: memref<1x1x128xf32, #tpu.memory_space<vmem>>, %arg7: memref<1x1x128xf32, #tpu.memory_space<vmem>>, %arg8: memref<2x18x18x128xbf16, #tpu.memory_space<vmem>>) attributes {dimension_semantics = [#tpu.dimension_semantics<parallel>], iteration_bounds = array<i64: 1>, scalar_prefetch = 0 : i64, scratch_operands = 1 : i64, tpu.core_type = #tpu.core_type<tc>, window_params = [{transform_indices = @transform_0, window_bounds = array<i64: 2, 16, 16, 128>}, {pipeline_mode = #tpu.pipeline_mode<synchronous>, transform_indices = @transform_1, window_bounds = array<i64: 1, 128>}, {pipeline_mode = #tpu.pipeline_mode<synchronous>, transform_indices = @transform_2, window_bounds = array<i64: 1, 128>}, {pipeline_mode = #tpu.pipeline_mode<synchronous>, transform_indices = @transform_3, window_bounds = array<i64: 9, 128, 128>}, {transform_indices = @transform_4, window_bounds = array<i64: 2, 16, 16, 128>}, {transform_indices = @transform_5, window_bounds = array<i64: 1, 1, 128>}, {transform_indices = @transform_6, window_bounds = array<i64: 1, 1, 128>}]} {
    %c0 = arith.constant 0 : index
    %c0_0 = arith.constant 0 : index
    %c0_1 = arith.constant 0 : index
    %c0_2 = arith.constant 0 : index
    %0 = vector.load %arg1[%c0, %c0_0, %c0_1, %c0_2] : memref<2x16x16x128xbf16, #tpu.memory_space<vmem>>, vector<2x16x16x128xbf16>
    %1 = arith.extf %0 : vector<2x16x16x128xbf16> to vector<2x16x16x128xf32>
    %2 = vector.shape_cast %1 : vector<2x16x16x128xf32> to vector<512x128xf32>
    %c0_3 = arith.constant 0 : index
    %c0_4 = arith.constant 0 : index
    %3 = vector.load %arg2[%c0_3, %c0_4] : memref<1x128xf32, #tpu.memory_space<vmem>>, vector<1x128xf32>
    %4 = vector.broadcast %3 : vector<1x128xf32> to vector<512x128xf32>
    %5 = arith.mulf %2, %4 : vector<512x128xf32>
    %c0_5 = arith.constant 0 : index
    %c0_6 = arith.constant 0 : index
    %6 = vector.load %arg3[%c0_5, %c0_6] : memref<1x128xf32, #tpu.memory_space<vmem>>, vector<1x128xf32>
    %7 = vector.broadcast %6 : vector<1x128xf32> to vector<512x128xf32>
    %8 = arith.addf %5, %7 : vector<512x128xf32>
    %cst = arith.constant 0.000000e+00 : f32
    %9 = vector.broadcast %cst : f32 to vector<512x128xf32>
    %10 = arith.maximumf %8, %9 : vector<512x128xf32>
    %11 = arith.truncf %10 : vector<512x128xf32> to vector<512x128xbf16>
    %cst_7 = arith.constant 0.000000e+00 : bf16
    %12 = vector.broadcast %cst_7 : bf16 to vector<2x18x18x128xbf16>
    %c0_8 = arith.constant 0 : index
    %c0_9 = arith.constant 0 : index
    %c0_10 = arith.constant 0 : index
    %c0_11 = arith.constant 0 : index
    %13 = vector.load %arg8[%c0_8, %c0_9, %c0_10, %c0_11] : memref<2x18x18x128xbf16, #tpu.memory_space<vmem>>, vector<2x18x18x128xbf16>
    tpu.vector_store %arg8[%c0_8, %c0_9, %c0_10, %c0_11], %12 {strides = array<i32>} : memref<2x18x18x128xbf16, #tpu.memory_space<vmem>>, vector<2x18x18x128xbf16>,
    %14 = vector.shape_cast %11 : vector<512x128xbf16> to vector<2x16x16x128xbf16>
    %c0_12 = arith.constant 0 : index
    %c1 = arith.constant 1 : index
    %c1_13 = arith.constant 1 : index
    %c0_14 = arith.constant 0 : index
    %15 = vector.load %arg8[%c0_12, %c1, %c1_13, %c0_14] : memref<2x18x18x128xbf16, #tpu.memory_space<vmem>>, vector<2x16x16x128xbf16>
    tpu.vector_store %arg8[%c0_12, %c1, %c1_13, %c0_14], %14 {strides = array<i32>} : memref<2x18x18x128xbf16, #tpu.memory_space<vmem>>, vector<2x16x16x128xbf16>,
    %c0_15 = arith.constant 0 : index
    %c0_16 = arith.constant 0 : index
    %c0_17 = arith.constant 0 : index
    %c0_18 = arith.constant 0 : index
    %16 = vector.load %arg8[%c0_15, %c0_16, %c0_17, %c0_18] : memref<2x18x18x128xbf16, #tpu.memory_space<vmem>>, vector<2x18x18x128xbf16>
    %cst_19 = arith.constant 0.000000e+00 : f32
    %17 = vector.broadcast %cst_19 : f32 to vector<512x128xf32>
    %18 = vector.extract_strided_slice %16 {offsets = [0, 0, 0, 0], sizes = [2, 16, 16, 128], strides = [1, 1, 1, 1]} : vector<2x18x18x128xbf16> to vector<2x16x16x128xbf16>
    %19 = vector.shape_cast %18 : vector<2x16x16x128xbf16> to vector<512x128xbf16>
    %c0_20 = arith.constant 0 : index
    %c0_21 = arith.constant 0 : index
    %c0_22 = arith.constant 0 : index
    %20 = vector.load %arg4[%c0_20, %c0_21, %c0_22] : memref<9x128x128xbf16, #tpu.memory_space<vmem>>, vector<1x128x128xbf16>
    %21 = vector.shape_cast %20 : vector<1x128x128xbf16> to vector<128x128xbf16>
    %cst_23 = arith.constant dense<0.000000e+00> : vector<512x128xf32>
    %22 = tpu.matmul %19, %21, %cst_23 {dimension_numbers = #tpu.dot_dimension_numbers<[1], [0], [0], [1], [0, 0, 1, 1], [], []>} : vector<512x128xbf16>, vector<128x128xbf16>, vector<512x128xf32> -> vector<512x128xf32>
    %23 = arith.addf %17, %22 : vector<512x128xf32>
    %24 = vector.extract_strided_slice %16 {offsets = [0, 0, 1, 0], sizes = [2, 16, 16, 128], strides = [1, 1, 1, 1]} : vector<2x18x18x128xbf16> to vector<2x16x16x128xbf16>
    %25 = vector.shape_cast %24 : vector<2x16x16x128xbf16> to vector<512x128xbf16>
    %c1_24 = arith.constant 1 : index
    %c0_25 = arith.constant 0 : index
    %c0_26 = arith.constant 0 : index
    %26 = vector.load %arg4[%c1_24, %c0_25, %c0_26] : memref<9x128x128xbf16, #tpu.memory_space<vmem>>, vector<1x128x128xbf16>
    %27 = vector.shape_cast %26 : vector<1x128x128xbf16> to vector<128x128xbf16>
    %cst_27 = arith.constant dense<0.000000e+00> : vector<512x128xf32>
    %28 = tpu.matmul %25, %27, %cst_27 {dimension_numbers = #tpu.dot_dimension_numbers<[1], [0], [0], [1], [0, 0, 1, 1], [], []>} : vector<512x128xbf16>, vector<128x128xbf16>, vector<512x128xf32> -> vector<512x128xf32>
    %29 = arith.addf %23, %28 : vector<512x128xf32>
    %30 = vector.extract_strided_slice %16 {offsets = [0, 0, 2, 0], sizes = [2, 16, 16, 128], strides = [1, 1, 1, 1]} : vector<2x18x18x128xbf16> to vector<2x16x16x128xbf16>
    %31 = vector.shape_cast %30 : vector<2x16x16x128xbf16> to vector<512x128xbf16>
    %c2 = arith.constant 2 : index
    %c0_28 = arith.constant 0 : index
    %c0_29 = arith.constant 0 : index
    %32 = vector.load %arg4[%c2, %c0_28, %c0_29] : memref<9x128x128xbf16, #tpu.memory_space<vmem>>, vector<1x128x128xbf16>
    %33 = vector.shape_cast %32 : vector<1x128x128xbf16> to vector<128x128xbf16>
    %cst_30 = arith.constant dense<0.000000e+00> : vector<512x128xf32>
    %34 = tpu.matmul %31, %33, %cst_30 {dimension_numbers = #tpu.dot_dimension_numbers<[1], [0], [0], [1], [0, 0, 1, 1], [], []>} : vector<512x128xbf16>, vector<128x128xbf16>, vector<512x128xf32> -> vector<512x128xf32>
    %35 = arith.addf %29, %34 : vector<512x128xf32>
    %36 = vector.extract_strided_slice %16 {offsets = [0, 1, 0, 0], sizes = [2, 16, 16, 128], strides = [1, 1, 1, 1]} : vector<2x18x18x128xbf16> to vector<2x16x16x128xbf16>
    %37 = vector.shape_cast %36 : vector<2x16x16x128xbf16> to vector<512x128xbf16>
    %c3 = arith.constant 3 : index
    %c0_31 = arith.constant 0 : index
    %c0_32 = arith.constant 0 : index
    %38 = vector.load %arg4[%c3, %c0_31, %c0_32] : memref<9x128x128xbf16, #tpu.memory_space<vmem>>, vector<1x128x128xbf16>
    %39 = vector.shape_cast %38 : vector<1x128x128xbf16> to vector<128x128xbf16>
    %cst_33 = arith.constant dense<0.000000e+00> : vector<512x128xf32>
    %40 = tpu.matmul %37, %39, %cst_33 {dimension_numbers = #tpu.dot_dimension_numbers<[1], [0], [0], [1], [0, 0, 1, 1], [], []>} : vector<512x128xbf16>, vector<128x128xbf16>, vector<512x128xf32> -> vector<512x128xf32>
    %41 = arith.addf %35, %40 : vector<512x128xf32>
    %42 = vector.extract_strided_slice %16 {offsets = [0, 1, 1, 0], sizes = [2, 16, 16, 128], strides = [1, 1, 1, 1]} : vector<2x18x18x128xbf16> to vector<2x16x16x128xbf16>
    %43 = vector.shape_cast %42 : vector<2x16x16x128xbf16> to vector<512x128xbf16>
    %c4 = arith.constant 4 : index
    %c0_34 = arith.constant 0 : index
    %c0_35 = arith.constant 0 : index
    %44 = vector.load %arg4[%c4, %c0_34, %c0_35] : memref<9x128x128xbf16, #tpu.memory_space<vmem>>, vector<1x128x128xbf16>
    %45 = vector.shape_cast %44 : vector<1x128x128xbf16> to vector<128x128xbf16>
    %cst_36 = arith.constant dense<0.000000e+00> : vector<512x128xf32>
    %46 = tpu.matmul %43, %45, %cst_36 {dimension_numbers = #tpu.dot_dimension_numbers<[1], [0], [0], [1], [0, 0, 1, 1], [], []>} : vector<512x128xbf16>, vector<128x128xbf16>, vector<512x128xf32> -> vector<512x128xf32>
    %47 = arith.addf %41, %46 : vector<512x128xf32>
    %48 = vector.extract_strided_slice %16 {offsets = [0, 1, 2, 0], sizes = [2, 16, 16, 128], strides = [1, 1, 1, 1]} : vector<2x18x18x128xbf16> to vector<2x16x16x128xbf16>
    %49 = vector.shape_cast %48 : vector<2x16x16x128xbf16> to vector<512x128xbf16>
    %c5 = arith.constant 5 : index
    %c0_37 = arith.constant 0 : index
    %c0_38 = arith.constant 0 : index
    %50 = vector.load %arg4[%c5, %c0_37, %c0_38] : memref<9x128x128xbf16, #tpu.memory_space<vmem>>, vector<1x128x128xbf16>
    %51 = vector.shape_cast %50 : vector<1x128x128xbf16> to vector<128x128xbf16>
    %cst_39 = arith.constant dense<0.000000e+00> : vector<512x128xf32>
    %52 = tpu.matmul %49, %51, %cst_39 {dimension_numbers = #tpu.dot_dimension_numbers<[1], [0], [0], [1], [0, 0, 1, 1], [], []>} : vector<512x128xbf16>, vector<128x128xbf16>, vector<512x128xf32> -> vector<512x128xf32>
    %53 = arith.addf %47, %52 : vector<512x128xf32>
    %54 = vector.extract_strided_slice %16 {offsets = [0, 2, 0, 0], sizes = [2, 16, 16, 128], strides = [1, 1, 1, 1]} : vector<2x18x18x128xbf16> to vector<2x16x16x128xbf16>
    %55 = vector.shape_cast %54 : vector<2x16x16x128xbf16> to vector<512x128xbf16>
    %c6 = arith.constant 6 : index
    %c0_40 = arith.constant 0 : index
    %c0_41 = arith.constant 0 : index
    %56 = vector.load %arg4[%c6, %c0_40, %c0_41] : memref<9x128x128xbf16, #tpu.memory_space<vmem>>, vector<1x128x128xbf16>
    %57 = vector.shape_cast %56 : vector<1x128x128xbf16> to vector<128x128xbf16>
    %cst_42 = arith.constant dense<0.000000e+00> : vector<512x128xf32>
    %58 = tpu.matmul %55, %57, %cst_42 {dimension_numbers = #tpu.dot_dimension_numbers<[1], [0], [0], [1], [0, 0, 1, 1], [], []>} : vector<512x128xbf16>, vector<128x128xbf16>, vector<512x128xf32> -> vector<512x128xf32>
    %59 = arith.addf %53, %58 : vector<512x128xf32>
    %60 = vector.extract_strided_slice %16 {offsets = [0, 2, 1, 0], sizes = [2, 16, 16, 128], strides = [1, 1, 1, 1]} : vector<2x18x18x128xbf16> to vector<2x16x16x128xbf16>
    %61 = vector.shape_cast %60 : vector<2x16x16x128xbf16> to vector<512x128xbf16>
    %c7 = arith.constant 7 : index
    %c0_43 = arith.constant 0 : index
    %c0_44 = arith.constant 0 : index
    %62 = vector.load %arg4[%c7, %c0_43, %c0_44] : memref<9x128x128xbf16, #tpu.memory_space<vmem>>, vector<1x128x128xbf16>
    %63 = vector.shape_cast %62 : vector<1x128x128xbf16> to vector<128x128xbf16>
    %cst_45 = arith.constant dense<0.000000e+00> : vector<512x128xf32>
    %64 = tpu.matmul %61, %63, %cst_45 {dimension_numbers = #tpu.dot_dimension_numbers<[1], [0], [0], [1], [0, 0, 1, 1], [], []>} : vector<512x128xbf16>, vector<128x128xbf16>, vector<512x128xf32> -> vector<512x128xf32>
    %65 = arith.addf %59, %64 : vector<512x128xf32>
    %66 = vector.extract_strided_slice %16 {offsets = [0, 2, 2, 0], sizes = [2, 16, 16, 128], strides = [1, 1, 1, 1]} : vector<2x18x18x128xbf16> to vector<2x16x16x128xbf16>
    %67 = vector.shape_cast %66 : vector<2x16x16x128xbf16> to vector<512x128xbf16>
    %c8 = arith.constant 8 : index
    %c0_46 = arith.constant 0 : index
    %c0_47 = arith.constant 0 : index
    %68 = vector.load %arg4[%c8, %c0_46, %c0_47] : memref<9x128x128xbf16, #tpu.memory_space<vmem>>, vector<1x128x128xbf16>
    %69 = vector.shape_cast %68 : vector<1x128x128xbf16> to vector<128x128xbf16>
    %cst_48 = arith.constant dense<0.000000e+00> : vector<512x128xf32>
    %70 = tpu.matmul %67, %69, %cst_48 {dimension_numbers = #tpu.dot_dimension_numbers<[1], [0], [0], [1], [0, 0, 1, 1], [], []>} : vector<512x128xbf16>, vector<128x128xbf16>, vector<512x128xf32> -> vector<512x128xf32>
    %71 = arith.addf %65, %70 : vector<512x128xf32>
    %72 = vector.shape_cast %71 : vector<512x128xf32> to vector<2x16x16x128xf32>
    %73 = arith.truncf %72 : vector<2x16x16x128xf32> to vector<2x16x16x128xbf16>
    %c0_49 = arith.constant 0 : index
    %c0_50 = arith.constant 0 : index
    %c0_51 = arith.constant 0 : index
    %c0_52 = arith.constant 0 : index
    %74 = vector.load %arg5[%c0_49, %c0_50, %c0_51, %c0_52] : memref<2x16x16x128xbf16, #tpu.memory_space<vmem>>, vector<2x16x16x128xbf16>
    tpu.vector_store %arg5[%c0_49, %c0_50, %c0_51, %c0_52], %73 {strides = array<i32>} : memref<2x16x16x128xbf16, #tpu.memory_space<vmem>>, vector<2x16x16x128xbf16>,
    %cst_53 = arith.constant dense<0.000000e+00> : vector<128xf32>
    %75 = vector.multi_reduction <add>, %71, %cst_53 [0] : vector<512x128xf32> to vector<128xf32>
    %76 = vector.shape_cast %75 : vector<128xf32> to vector<1x128xf32>
    %77 = vector.shape_cast %76 : vector<1x128xf32> to vector<1x1x128xf32>
    %c0_54 = arith.constant 0 : index
    %c0_55 = arith.constant 0 : index
    %c0_56 = arith.constant 0 : index
    %78 = vector.load %arg6[%c0_54, %c0_55, %c0_56] : memref<1x1x128xf32, #tpu.memory_space<vmem>>, vector<1x1x128xf32>
    tpu.vector_store %arg6[%c0_54, %c0_55, %c0_56], %77 {strides = array<i32>} : memref<1x1x128xf32, #tpu.memory_space<vmem>>, vector<1x1x128xf32>,
    %79 = arith.mulf %71, %71 : vector<512x128xf32>
    %cst_57 = arith.constant dense<0.000000e+00> : vector<128xf32>
    %80 = vector.multi_reduction <add>, %79, %cst_57 [0] : vector<512x128xf32> to vector<128xf32>
    %81 = vector.shape_cast %80 : vector<128xf32> to vector<1x128xf32>
    %82 = vector.shape_cast %81 : vector<1x128xf32> to vector<1x1x128xf32>
    %c0_58 = arith.constant 0 : index
    %c0_59 = arith.constant 0 : index
    %c0_60 = arith.constant 0 : index
    %83 = vector.load %arg7[%c0_58, %c0_59, %c0_60] : memref<1x1x128xf32, #tpu.memory_space<vmem>>, vector<1x1x128xf32>
    tpu.vector_store %arg7[%c0_58, %c0_59, %c0_60], %82 {strides = array<i32>} : memref<1x1x128xf32, #tpu.memory_space<vmem>>, vector<1x1x128xf32>,
    return
  }
  func.func @transform_0(%arg0: i32) -> (i32, i32, i32, i32) {
    %c0_i32 = arith.constant 0 : i32
    %c0_i32_0 = arith.constant 0 : i32
    %c0_i32_1 = arith.constant 0 : i32
    %c0_i32_2 = arith.constant 0 : i32
    return %arg0, %c0_i32, %c0_i32_0, %c0_i32_1 : i32, i32, i32, i32
  }
  func.func @transform_1(%arg0: i32) -> (i32, i32) {
    %c0_i32 = arith.constant 0 : i32
    %c0_i32_0 = arith.constant 0 : i32
    %c0_i32_1 = arith.constant 0 : i32
    return %c0_i32, %c0_i32_0 : i32, i32
  }
  func.func @transform_2(%arg0: i32) -> (i32, i32) {
    %c0_i32 = arith.constant 0 : i32
    %c0_i32_0 = arith.constant 0 : i32
    %c0_i32_1 = arith.constant 0 : i32
    return %c0_i32, %c0_i32_0 : i32, i32
  }
  func.func @transform_3(%arg0: i32) -> (i32, i32, i32) {
    %c0_i32 = arith.constant 0 : i32
    %c0_i32_0 = arith.constant 0 : i32
    %c0_i32_1 = arith.constant 0 : i32
    %c0_i32_2 = arith.constant 0 : i32
    return %c0_i32, %c0_i32_0, %c0_i32_1 : i32, i32, i32
  }
  func.func @transform_4(%arg0: i32) -> (i32, i32, i32, i32) {
    %c0_i32 = arith.constant 0 : i32
    %c0_i32_0 = arith.constant 0 : i32
    %c0_i32_1 = arith.constant 0 : i32
    %c0_i32_2 = arith.constant 0 : i32
    return %arg0, %c0_i32, %c0_i32_0, %c0_i32_1 : i32, i32, i32, i32
  }
  func.func @transform_5(%arg0: i32) -> (i32, i32, i32) {
    %c0_i32 = arith.constant 0 : i32
    %c0_i32_0 = arith.constant 0 : i32
    %c0_i32_1 = arith.constant 0 : i32
    return %arg0, %c0_i32, %c0_i32_0 : i32, i32, i32
  }
  func.func @transform_6(%arg0: i32) -> (i32, i32, i32) {
    %c0_i32 = arith.constant 0 : i32
    %c0_i32_0 = arith.constant 0 : i32
    %c0_i32_1 = arith.constant 0 : i32
    return %arg0, %c0_i32, %c0_i32_0 : i32, i32, i32
  }
}

module attributes {stable_mosaic.version = 11 : i64} {
  func.func @_pass3_kernel(%arg0: i32, %arg1: memref<2x16x16x128xbf16, #tpu.memory_space<vmem>>, %arg2: memref<2x16x16x128xbf16, #tpu.memory_space<vmem>>, %arg3: memref<1x128xf32, #tpu.memory_space<vmem>>, %arg4: memref<1x128xf32, #tpu.memory_space<vmem>>, %arg5: memref<2x16x16x128xf32, #tpu.memory_space<vmem>>) attributes {dimension_semantics = [#tpu.dimension_semantics<parallel>], iteration_bounds = array<i64: 1>, scalar_prefetch = 0 : i64, scratch_operands = 0 : i64, tpu.core_type = #tpu.core_type<tc>, window_params = [{transform_indices = @transform_0, window_bounds = array<i64: 2, 16, 16, 128>}, {transform_indices = @transform_1, window_bounds = array<i64: 2, 16, 16, 128>}, {pipeline_mode = #tpu.pipeline_mode<synchronous>, transform_indices = @transform_2, window_bounds = array<i64: 1, 128>}, {pipeline_mode = #tpu.pipeline_mode<synchronous>, transform_indices = @transform_3, window_bounds = array<i64: 1, 128>}, {transform_indices = @transform_4, window_bounds = array<i64: 2, 16, 16, 128>}]} {
    %c0 = arith.constant 0 : index
    %c0_0 = arith.constant 0 : index
    %c0_1 = arith.constant 0 : index
    %c0_2 = arith.constant 0 : index
    %0 = vector.load %arg1[%c0, %c0_0, %c0_1, %c0_2] : memref<2x16x16x128xbf16, #tpu.memory_space<vmem>>, vector<2x16x16x128xbf16>
    %1 = arith.extf %0 : vector<2x16x16x128xbf16> to vector<2x16x16x128xf32>
    %2 = vector.shape_cast %1 : vector<2x16x16x128xf32> to vector<512x128xf32>
    %c0_3 = arith.constant 0 : index
    %c0_4 = arith.constant 0 : index
    %3 = vector.load %arg3[%c0_3, %c0_4] : memref<1x128xf32, #tpu.memory_space<vmem>>, vector<1x128xf32>
    %4 = vector.broadcast %3 : vector<1x128xf32> to vector<512x128xf32>
    %5 = arith.mulf %2, %4 : vector<512x128xf32>
    %c0_5 = arith.constant 0 : index
    %c0_6 = arith.constant 0 : index
    %6 = vector.load %arg4[%c0_5, %c0_6] : memref<1x128xf32, #tpu.memory_space<vmem>>, vector<1x128xf32>
    %7 = vector.broadcast %6 : vector<1x128xf32> to vector<512x128xf32>
    %8 = arith.addf %5, %7 : vector<512x128xf32>
    %c0_7 = arith.constant 0 : index
    %c0_8 = arith.constant 0 : index
    %c0_9 = arith.constant 0 : index
    %c0_10 = arith.constant 0 : index
    %9 = vector.load %arg2[%c0_7, %c0_8, %c0_9, %c0_10] : memref<2x16x16x128xbf16, #tpu.memory_space<vmem>>, vector<2x16x16x128xbf16>
    %10 = arith.extf %9 : vector<2x16x16x128xbf16> to vector<2x16x16x128xf32>
    %11 = vector.shape_cast %10 : vector<2x16x16x128xf32> to vector<512x128xf32>
    %12 = arith.addf %8, %11 : vector<512x128xf32>
    %cst = arith.constant 0.000000e+00 : f32
    %13 = vector.broadcast %cst : f32 to vector<512x128xf32>
    %14 = arith.maximumf %12, %13 : vector<512x128xf32>
    %15 = vector.shape_cast %14 : vector<512x128xf32> to vector<2x16x16x128xf32>
    %c0_11 = arith.constant 0 : index
    %c0_12 = arith.constant 0 : index
    %c0_13 = arith.constant 0 : index
    %c0_14 = arith.constant 0 : index
    %16 = vector.load %arg5[%c0_11, %c0_12, %c0_13, %c0_14] : memref<2x16x16x128xf32, #tpu.memory_space<vmem>>, vector<2x16x16x128xf32>
    tpu.vector_store %arg5[%c0_11, %c0_12, %c0_13, %c0_14], %15 {strides = array<i32>} : memref<2x16x16x128xf32, #tpu.memory_space<vmem>>, vector<2x16x16x128xf32>,
    return
  }
  func.func @transform_0(%arg0: i32) -> (i32, i32, i32, i32) {
    %c0_i32 = arith.constant 0 : i32
    %c0_i32_0 = arith.constant 0 : i32
    %c0_i32_1 = arith.constant 0 : i32
    %c0_i32_2 = arith.constant 0 : i32
    return %arg0, %c0_i32, %c0_i32_0, %c0_i32_1 : i32, i32, i32, i32
  }
  func.func @transform_1(%arg0: i32) -> (i32, i32, i32, i32) {
    %c0_i32 = arith.constant 0 : i32
    %c0_i32_0 = arith.constant 0 : i32
    %c0_i32_1 = arith.constant 0 : i32
    %c0_i32_2 = arith.constant 0 : i32
    return %arg0, %c0_i32, %c0_i32_0, %c0_i32_1 : i32, i32, i32, i32
  }
  func.func @transform_2(%arg0: i32) -> (i32, i32) {
    %c0_i32 = arith.constant 0 : i32
    %c0_i32_0 = arith.constant 0 : i32
    %c0_i32_1 = arith.constant 0 : i32
    return %c0_i32, %c0_i32_0 : i32, i32
  }
  func.func @transform_3(%arg0: i32) -> (i32, i32) {
    %c0_i32 = arith.constant 0 : i32
    %c0_i32_0 = arith.constant 0 : i32
    %c0_i32_1 = arith.constant 0 : i32
    return %c0_i32, %c0_i32_0 : i32, i32
  }
  func.func @transform_4(%arg0: i32) -> (i32, i32, i32, i32) {
    %c0_i32 = arith.constant 0 : i32
    %c0_i32_0 = arith.constant 0 : i32
    %c0_i32_1 = arith.constant 0 : i32
    %c0_i32_2 = arith.constant 0 : i32
    return %arg0, %c0_i32, %c0_i32_0, %c0_i32_1 : i32, i32, i32, i32
  }
}

</mosaic_0001>

<llo_original>
// kernel: residual_block_forward_nhwc.5
$region0: #{residual_block_forward_nhwc.5}
  #allocation0 [shape = 'u32[]', space=smem, size = 0x4, offset = 0x4, fixed_abs, tag = 'smem constant byte address 0x4 - core index']
  #allocation1 [shape = 'u32[144,128]{1,0:T(1,128)}', space=vmem, size = 0x12000, scoped, tag = 'internal scratch']
  %s0 = inlined_call_operand.vmem [shape: bf16[2,16,16,128], index: 0, kind: input, shape index: {}]
  %s1 = inlined_call_operand.vmem [shape: bf16[2,16,16,128], index: 1, kind: input, shape index: {}]
  %s2 = inlined_call_operand.vmem [shape: f32[1,128], index: 2, kind: input, shape index: {}]
  %s3 = inlined_call_operand.vmem [shape: f32[1,128], index: 3, kind: input, shape index: {}]
  %s4 = inlined_call_operand.vmem [shape: f32[2,16,16,128], index: 4, kind: output, shape index: {}]
  %s5 = sld [smem:[#allocation0]]
  $region26: #{residual_block_forward_nhwc.5} parent=0
    _
  %s7 = ssub.s32 1, %s5
  %s8 = scalar_select 0, %s7, %s5
  // Predicated region
  $region2: #{residual_block_forward_nhwc.5} parent=0 // pred_check
    _
  $region3: #{residual_block_forward_nhwc.5} parent=0 // pred_check_branch
    %10 = sbr.rel (0) target = $region5
  $region4: #{residual_block_forward_nhwc.5} parent=0 // pred_region
    _
  $region5: #{residual_block_forward_nhwc.5} parent=0 // pred_fallthru
    _
  // Predicated region
  $region6: #{residual_block_forward_nhwc.5} parent=0 // pred_check
    _
  $region7: #{residual_block_forward_nhwc.5} parent=0 // pred_check_branch
    %12 = sbr.rel (0) target = $region9
  $region8: #{residual_block_forward_nhwc.5} parent=0 // pred_region
    _
  $region9: #{residual_block_forward_nhwc.5} parent=0 // pred_fallthru
    _
  // Predicated region
  $region10: #{residual_block_forward_nhwc.5} parent=0 // pred_check
    _
  $region11: #{residual_block_forward_nhwc.5} parent=0 // pred_check_branch
    %14 = sbr.rel (0) target = $region13
  $region12: #{residual_block_forward_nhwc.5} parent=0 // pred_region
    _
  $region13: #{residual_block_forward_nhwc.5} parent=0 // pred_fallthru
    _
  // Predicated region
  $region14: #{residual_block_forward_nhwc.5} parent=0 // pred_check
    _
  $region15: #{residual_block_forward_nhwc.5} parent=0 // pred_check_branch
    %16 = sbr.rel (0) target = $region17
  $region16: #{residual_block_forward_nhwc.5} parent=0 // pred_region
    _
  $region17: #{residual_block_forward_nhwc.5} parent=0 // pred_fallthru
    _
  %v17 = vld [vmem:[%s0] sm:$0xf]
  %v18 = vld [vmem:[%s0 + $0x4] sm:$0xf]
  %v19 = vld [vmem:[%s0 + $0x8] sm:$0xf]
  %v20 = vld [vmem:[%s0 + $0xc] sm:$0xf]
  %v21 = vld [vmem:[%s0 + $0x10] sm:$0xf]
  %v22 = vld [vmem:[%s0 + $0x14] sm:$0xf]
  %v23 = vld [vmem:[%s0 + $0x18] sm:$0xf]
  %v24 = vld [vmem:[%s0 + $0x1c] sm:$0xf]
  %v25 = vld [vmem:[%s0 + $0x20] sm:$0xf]
  %v26 = vld [vmem:[%s0 + $0x24] sm:$0xf]
  %v27 = vld [vmem:[%s0 + $0x28] sm:$0xf]
  %v28 = vld [vmem:[%s0 + $0x2c] sm:$0xf]
  %v29 = vld [vmem:[%s0 + $0x30] sm:$0xf]
  %v30 = vld [vmem:[%s0 + $0x34] sm:$0xf]
  %v31 = vld [vmem:[%s0 + $0x38] sm:$0xf]
  %v32 = vld [vmem:[%s0 + $0x3c] sm:$0xf]
  %v33 = vld [vmem:[%s0 + $0x40] sm:$0xf]
  %v34 = vld [vmem:[%s0 + $0x44] sm:$0xf]
  %v35 = vld [vmem:[%s0 + $0x48] sm:$0xf]
  %v36 = vld [vmem:[%s0 + $0x4c] sm:$0xf]
  %v37 = vld [vmem:[%s0 + $0x50] sm:$0xf]
  %v38 = vld [vmem:[%s0 + $0x54] sm:$0xf]
  %v39 = vld [vmem:[%s0 + $0x58] sm:$0xf]
  %v40 = vld [vmem:[%s0 + $0x5c] sm:$0xf]
  %v41 = vld [vmem:[%s0 + $0x60] sm:$0xf]
  %v42 = vld [vmem:[%s0 + $0x64] sm:$0xf]
  %v43 = vld [vmem:[%s0 + $0x68] sm:$0xf]
  %v44 = vld [vmem:[%s0 + $0x6c] sm:$0xf]
  %v45 = vld [vmem:[%s0 + $0x70] sm:$0xf]
  %v46 = vld [vmem:[%s0 + $0x74] sm:$0xf]
  %v47 = vld [vmem:[%s0 + $0x78] sm:$0xf]
  %v48 = vld [vmem:[%s0 + $0x7c] sm:$0xf]
  %v49 = vld [vmem:[%s0 + $0x80] sm:$0xf]
  %v50 = vld [vmem:[%s0 + $0x84] sm:$0xf]
  %v51 = vld [vmem:[%s0 + $0x88] sm:$0xf]
  %v52 = vld [vmem:[%s0 + $0x8c] sm:$0xf]
  %v53 = vld [vmem:[%s0 + $0x90] sm:$0xf]
  %v54 = vld [vmem:[%s0 + $0x94] sm:$0xf]
  %v55 = vld [vmem:[%s0 + $0x98] sm:$0xf]
  %v56 = vld [vmem:[%s0 + $0x9c] sm:$0xf]
  %v57 = vld [vmem:[%s0 + $0xa0] sm:$0xf]
  %v58 = vld [vmem:[%s0 + $0xa4] sm:$0xf]
  %v59 = vld [vmem:[%s0 + $0xa8] sm:$0xf]
  %v60 = vld [vmem:[%s0 + $0xac] sm:$0xf]
  %v61 = vld [vmem:[%s0 + $0xb0] sm:$0xf]
  %v62 = vld [vmem:[%s0 + $0xb4] sm:$0xf]
  %v63 = vld [vmem:[%s0 + $0xb8] sm:$0xf]
  %v64 = vld [vmem:[%s0 + $0xbc] sm:$0xf]
  %v65 = vld [vmem:[%s0 + $0xc0] sm:$0xf]
  %v66 = vld [vmem:[%s0 + $0xc4] sm:$0xf]
  %v67 = vld [vmem:[%s0 + $0xc8] sm:$0xf]
  %v68 = vld [vmem:[%s0 + $0xcc] sm:$0xf]
  %v69 = vld [vmem:[%s0 + $0xd0] sm:$0xf]
  %v70 = vld [vmem:[%s0 + $0xd4] sm:$0xf]
  %v71 = vld [vmem:[%s0 + $0xd8] sm:$0xf]
  %v72 = vld [vmem:[%s0 + $0xdc] sm:$0xf]
  %v73 = vld [vmem:[%s0 + $0xe0] sm:$0xf]
  %v74 = vld [vmem:[%s0 + $0xe4] sm:$0xf]
  %v75 = vld [vmem:[%s0 + $0xe8] sm:$0xf]
  %v76 = vld [vmem:[%s0 + $0xec] sm:$0xf]
  %v77 = vld [vmem:[%s0 + $0xf0] sm:$0xf]
  %v78 = vld [vmem:[%s0 + $0xf4] sm:$0xf]
  %v79 = vld [vmem:[%s0 + $0xf8] sm:$0xf]
  %v80 = vld [vmem:[%s0 + $0xfc] sm:$0xf]
  %v81 = vunpack.c.l.bf16 %v17
  %v82 = vunpack.c.l.bf16 %v18
  %v83 = vunpack.c.l.bf16 %v19
  %v84 = vunpack.c.l.bf16 %v20
  %v85 = vunpack.c.l.bf16 %v21
  %v86 = vunpack.c.l.bf16 %v22
  %v87 = vunpack.c.l.bf16 %v23
  %v88 = vunpack.c.l.bf16 %v24
  %v89 = vunpack.c.l.bf16 %v25
  %v90 = vunpack.c.l.bf16 %v26
  %v91 = vunpack.c.l.bf16 %v27
  %v92 = vunpack.c.l.bf16 %v28
  %v93 = vunpack.c.l.bf16 %v29
  %v94 = vunpack.c.l.bf16 %v30
  %v95 = vunpack.c.l.bf16 %v31
  %v96 = vunpack.c.l.bf16 %v32
  %v97 = vunpack.c.l.bf16 %v33
  %v98 = vunpack.c.l.bf16 %v34
  %v99 = vunpack.c.l.bf16 %v35
  %v100 = vunpack.c.l.bf16 %v36
  %v101 = vunpack.c.l.bf16 %v37
  %v102 = vunpack.c.l.bf16 %v38
  %v103 = vunpack.c.l.bf16 %v39
  %v104 = vunpack.c.l.bf16 %v40
  %v105 = vunpack.c.l.bf16 %v41
  %v106 = vunpack.c.l.bf16 %v42
  %v107 = vunpack.c.l.bf16 %v43
  %v108 = vunpack.c.l.bf16 %v44
  %v109 = vunpack.c.l.bf16 %v45
  %v110 = vunpack.c.l.bf16 %v46
  %v111 = vunpack.c.l.bf16 %v47
  %v112 = vunpack.c.l.bf16 %v48
  %v113 = vunpack.c.l.bf16 %v49
  %v114 = vunpack.c.l.bf16 %v50
  %v115 = vunpack.c.l.bf16 %v51
  %v116 = vunpack.c.l.bf16 %v52
  %v117 = vunpack.c.l.bf16 %v53
  %v118 = vunpack.c.l.bf16 %v54
  %v119 = vunpack.c.l.bf16 %v55
  %v120 = vunpack.c.l.bf16 %v56
  %v121 = vunpack.c.l.bf16 %v57
  %v122 = vunpack.c.l.bf16 %v58
  %v123 = vunpack.c.l.bf16 %v59
  %v124 = vunpack.c.l.bf16 %v60
  %v125 = vunpack.c.l.bf16 %v61
  %v126 = vunpack.c.l.bf16 %v62
  %v127 = vunpack.c.l.bf16 %v63
  %v128 = vunpack.c.l.bf16 %v64
  %v129 = vunpack.c.l.bf16 %v65
  %v130 = vunpack.c.l.bf16 %v66
  %v131 = vunpack.c.l.bf16 %v67
  %v132 = vunpack.c.l.bf16 %v68
  %v133 = vunpack.c.l.bf16 %v69
  %v134 = vunpack.c.l.bf16 %v70
  %v135 = vunpack.c.l.bf16 %v71
  %v136 = vunpack.c.l.bf16 %v72
  %v137 = vunpack.c.l.bf16 %v73
  %v138 = vunpack.c.l.bf16 %v74
  %v139 = vunpack.c.l.bf16 %v75
  %v140 = vunpack.c.l.bf16 %v76
  %v141 = vunpack.c.l.bf16 %v77
  %v142 = vunpack.c.l.bf16 %v78
  %v143 = vunpack.c.l.bf16 %v79
  %v144 = vunpack.c.l.bf16 %v80
  %v145 = vld [vmem:[%s2] sm:$0x1]
  %v147 = vlaneseq
  %v148 = vshrl.u32 %v147, 7
  %v149 = vsub.s32 0, %v148
  %v150 = vrot.slane %v145, %v149
  %v152 = vmul.f32 %v81, %v150
  %v153 = vmul.f32 %v82, %v150
  %v154 = vmul.f32 %v83, %v150
  %v155 = vmul.f32 %v84, %v150
  %v156 = vmul.f32 %v85, %v150
  %v157 = vmul.f32 %v86, %v150
  %v158 = vmul.f32 %v87, %v150
  %v159 = vmul.f32 %v88, %v150
  %v160 = vmul.f32 %v89, %v150
  %v161 = vmul.f32 %v90, %v150
  %v162 = vmul.f32 %v91, %v150
  %v163 = vmul.f32 %v92, %v150
  %v164 = vmul.f32 %v93, %v150
  %v165 = vmul.f32 %v94, %v150
  %v166 = vmul.f32 %v95, %v150
  %v167 = vmul.f32 %v96, %v150
  %v168 = vmul.f32 %v97, %v150
  %v169 = vmul.f32 %v98, %v150
  %v170 = vmul.f32 %v99, %v150
  %v171 = vmul.f32 %v100, %v150
  %v172 = vmul.f32 %v101, %v150
  %v173 = vmul.f32 %v102, %v150
  %v174 = vmul.f32 %v103, %v150
  %v175 = vmul.f32 %v104, %v150
  %v176 = vmul.f32 %v105, %v150
  %v177 = vmul.f32 %v106, %v150
  %v178 = vmul.f32 %v107, %v150
  %v179 = vmul.f32 %v108, %v150
  %v180 = vmul.f32 %v109, %v150
  %v181 = vmul.f32 %v110, %v150
  %v182 = vmul.f32 %v111, %v150
  %v183 = vmul.f32 %v112, %v150
  %v184 = vmul.f32 %v113, %v150
  %v185 = vmul.f32 %v114, %v150
  %v186 = vmul.f32 %v115, %v150
  %v187 = vmul.f32 %v116, %v150
  %v188 = vmul.f32 %v117, %v150
  %v189 = vmul.f32 %v118, %v150
  %v190 = vmul.f32 %v119, %v150
  %v191 = vmul.f32 %v120, %v150
  %v192 = vmul.f32 %v121, %v150
  %v193 = vmul.f32 %v122, %v150
  %v194 = vmul.f32 %v123, %v150
  %v195 = vmul.f32 %v124, %v150
  %v196 = vmul.f32 %v125, %v150
  %v197 = vmul.f32 %v126, %v150
  %v198 = vmul.f32 %v127, %v150
  %v199 = vmul.f32 %v128, %v150
  %v200 = vmul.f32 %v129, %v150
  %v201 = vmul.f32 %v130, %v150
  %v202 = vmul.f32 %v131, %v150
  %v203 = vmul.f32 %v132, %v150
  %v204 = vmul.f32 %v133, %v150
  %v205 = vmul.f32 %v134, %v150
  %v206 = vmul.f32 %v135, %v150
  %v207 = vmul.f32 %v136, %v150
  %v208 = vmul.f32 %v137, %v150
  %v209 = vmul.f32 %v138, %v150
  %v210 = vmul.f32 %v139, %v150
  %v211 = vmul.f32 %v140, %v150
  %v212 = vmul.f32 %v141, %v150
  %v213 = vmul.f32 %v142, %v150
  %v214 = vmul.f32 %v143, %v150
  %v215 = vmul.f32 %v144, %v150
  %v216 = vld [vmem:[%s3] sm:$0x1]
  %v218 = vlaneseq
  %v219 = vshrl.u32 %v218, 7
  %v220 = vsub.s32 0, %v219
  %v221 = vrot.slane %v216, %v220
  %v223 = vadd.f32 %v152, %v221
  %v224 = vadd.f32 %v153, %v221
  %v225 = vadd.f32 %v154, %v221
  %v226 = vadd.f32 %v155, %v221
  %v227 = vadd.f32 %v156, %v221
  %v228 = vadd.f32 %v157, %v221
  %v229 = vadd.f32 %v158, %v221
  %v230 = vadd.f32 %v159, %v221
  %v231 = vadd.f32 %v160, %v221
  %v232 = vadd.f32 %v161, %v221
  %v233 = vadd.f32 %v162, %v221
  %v234 = vadd.f32 %v163, %v221
  %v235 = vadd.f32 %v164, %v221
  %v236 = vadd.f32 %v165, %v221
  %v237 = vadd.f32 %v166, %v221
  %v238 = vadd.f32 %v167, %v221
  %v239 = vadd.f32 %v168, %v221
  %v240 = vadd.f32 %v169, %v221
  %v241 = vadd.f32 %v170, %v221
  %v242 = vadd.f32 %v171, %v221
  %v243 = vadd.f32 %v172, %v221
  %v244 = vadd.f32 %v173, %v221
  %v245 = vadd.f32 %v174, %v221
  %v246 = vadd.f32 %v175, %v221
  %v247 = vadd.f32 %v176, %v221
  %v248 = vadd.f32 %v177, %v221
  %v249 = vadd.f32 %v178, %v221
  %v250 = vadd.f32 %v179, %v221
  %v251 = vadd.f32 %v180, %v221
  %v252 = vadd.f32 %v181, %v221
  %v253 = vadd.f32 %v182, %v221
  %v254 = vadd.f32 %v183, %v221
  %v255 = vadd.f32 %v184, %v221
  %v256 = vadd.f32 %v185, %v221
  %v257 = vadd.f32 %v186, %v221
  %v258 = vadd.f32 %v187, %v221
  %v259 = vadd.f32 %v188, %v221
  %v260 = vadd.f32 %v189, %v221
  %v261 = vadd.f32 %v190, %v221
  %v262 = vadd.f32 %v191, %v221
  %v263 = vadd.f32 %v192, %v221
  %v264 = vadd.f32 %v193, %v221
  %v265 = vadd.f32 %v194, %v221
  %v266 = vadd.f32 %v195, %v221
  %v267 = vadd.f32 %v196, %v221
  %v268 = vadd.f32 %v197, %v221
  %v269 = vadd.f32 %v198, %v221
  %v270 = vadd.f32 %v199, %v221
  %v271 = vadd.f32 %v200, %v221
  %v272 = vadd.f32 %v201, %v221
  %v273 = vadd.f32 %v202, %v221
  %v274 = vadd.f32 %v203, %v221
  %v275 = vadd.f32 %v204, %v221
  %v276 = vadd.f32 %v205, %v221
  %v277 = vadd.f32 %v206, %v221
  %v278 = vadd.f32 %v207, %v221
  %v279 = vadd.f32 %v208, %v221
  %v280 = vadd.f32 %v209, %v221
  %v281 = vadd.f32 %v210, %v221
  %v282 = vadd.f32 %v211, %v221
  %v283 = vadd.f32 %v212, %v221
  %v284 = vadd.f32 %v213, %v221
  %v285 = vadd.f32 %v214, %v221
  %v286 = vadd.f32 %v215, %v221
  %v287 = vld [vmem:[%s1] sm:$0xf]
  %v288 = vld [vmem:[%s1 + $0x4] sm:$0xf]
  %v289 = vld [vmem:[%s1 + $0x8] sm:$0xf]
  %v290 = vld [vmem:[%s1 + $0xc] sm:$0xf]
  %v291 = vld [vmem:[%s1 + $0x10] sm:$0xf]
  %v292 = vld [vmem:[%s1 + $0x14] sm:$0xf]
  %v293 = vld [vmem:[%s1 + $0x18] sm:$0xf]
  %v294 = vld [vmem:[%s1 + $0x1c] sm:$0xf]
  %v295 = vld [vmem:[%s1 + $0x20] sm:$0xf]
  %v296 = vld [vmem:[%s1 + $0x24] sm:$0xf]
  %v297 = vld [vmem:[%s1 + $0x28] sm:$0xf]
  %v298 = vld [vmem:[%s1 + $0x2c] sm:$0xf]
  %v299 = vld [vmem:[%s1 + $0x30] sm:$0xf]
  %v300 = vld [vmem:[%s1 + $0x34] sm:$0xf]
  %v301 = vld [vmem:[%s1 + $0x38] sm:$0xf]
  %v302 = vld [vmem:[%s1 + $0x3c] sm:$0xf]
  %v303 = vld [vmem:[%s1 + $0x40] sm:$0xf]
  %v304 = vld [vmem:[%s1 + $0x44] sm:$0xf]
  %v305 = vld [vmem:[%s1 + $0x48] sm:$0xf]
  %v306 = vld [vmem:[%s1 + $0x4c] sm:$0xf]
  %v307 = vld [vmem:[%s1 + $0x50] sm:$0xf]
  %v308 = vld [vmem:[%s1 + $0x54] sm:$0xf]
  %v309 = vld [vmem:[%s1 + $0x58] sm:$0xf]
  %v310 = vld [vmem:[%s1 + $0x5c] sm:$0xf]
  %v311 = vld [vmem:[%s1 + $0x60] sm:$0xf]
  %v312 = vld [vmem:[%s1 + $0x64] sm:$0xf]
  %v313 = vld [vmem:[%s1 + $0x68] sm:$0xf]
  %v314 = vld [vmem:[%s1 + $0x6c] sm:$0xf]
  %v315 = vld [vmem:[%s1 + $0x70] sm:$0xf]
  %v316 = vld [vmem:[%s1 + $0x74] sm:$0xf]
  %v317 = vld [vmem:[%s1 + $0x78] sm:$0xf]
  %v318 = vld [vmem:[%s1 + $0x7c] sm:$0xf]
  %v319 = vld [vmem:[%s1 + $0x80] sm:$0xf]
  %v320 = vld [vmem:[%s1 + $0x84] sm:$0xf]
  %v321 = vld [vmem:[%s1 + $0x88] sm:$0xf]
  %v322 = vld [vmem:[%s1 + $0x8c] sm:$0xf]
  %v323 = vld [vmem:[%s1 + $0x90] sm:$0xf]
  %v324 = vld [vmem:[%s1 + $0x94] sm:$0xf]
  %v325 = vld [vmem:[%s1 + $0x98] sm:$0xf]
  %v326 = vld [vmem:[%s1 + $0x9c] sm:$0xf]
  %v327 = vld [vmem:[%s1 + $0xa0] sm:$0xf]
  %v328 = vld [vmem:[%s1 + $0xa4] sm:$0xf]
  %v329 = vld [vmem:[%s1 + $0xa8] sm:$0xf]
  %v330 = vld [vmem:[%s1 + $0xac] sm:$0xf]
  %v331 = vld [vmem:[%s1 + $0xb0] sm:$0xf]
  %v332 = vld [vmem:[%s1 + $0xb4] sm:$0xf]
  %v333 = vld [vmem:[%s1 + $0xb8] sm:$0xf]
  %v334 = vld [vmem:[%s1 + $0xbc] sm:$0xf]
  %v335 = vld [vmem:[%s1 + $0xc0] sm:$0xf]
  %v336 = vld [vmem:[%s1 + $0xc4] sm:$0xf]
  %v337 = vld [vmem:[%s1 + $0xc8] sm:$0xf]
  %v338 = vld [vmem:[%s1 + $0xcc] sm:$0xf]
  %v339 = vld [vmem:[%s1 + $0xd0] sm:$0xf]
  %v340 = vld [vmem:[%s1 + $0xd4] sm:$0xf]
  %v341 = vld [vmem:[%s1 + $0xd8] sm:$0xf]
  %v342 = vld [vmem:[%s1 + $0xdc] sm:$0xf]
  %v343 = vld [vmem:[%s1 + $0xe0] sm:$0xf]
  %v344 = vld [vmem:[%s1 + $0xe4] sm:$0xf]
  %v345 = vld [vmem:[%s1 + $0xe8] sm:$0xf]
  %v346 = vld [vmem:[%s1 + $0xec] sm:$0xf]
  %v347 = vld [vmem:[%s1 + $0xf0] sm:$0xf]
  %v348 = vld [vmem:[%s1 + $0xf4] sm:$0xf]
  %v349 = vld [vmem:[%s1 + $0xf8] sm:$0xf]
  %v350 = vld [vmem:[%s1 + $0xfc] sm:$0xf]
  %v351 = vunpack.c.l.bf16 %v287
  %v352 = vunpack.c.l.bf16 %v288
  %v353 = vunpack.c.l.bf16 %v289
  %v354 = vunpack.c.l.bf16 %v290
  %v355 = vunpack.c.l.bf16 %v291
  %v356 = vunpack.c.l.bf16 %v292
  %v357 = vunpack.c.l.bf16 %v293
  %v358 = vunpack.c.l.bf16 %v294
  %v359 = vunpack.c.l.bf16 %v295
  %v360 = vunpack.c.l.bf16 %v296
  %v361 = vunpack.c.l.bf16 %v297
  %v362 = vunpack.c.l.bf16 %v298
  %v363 = vunpack.c.l.bf16 %v299
  %v364 = vunpack.c.l.bf16 %v300
  %v365 = vunpack.c.l.bf16 %v301
  %v366 = vunpack.c.l.bf16 %v302
  %v367 = vunpack.c.l.bf16 %v303
  %v368 = vunpack.c.l.bf16 %v304
  %v369 = vunpack.c.l.bf16 %v305
  %v370 = vunpack.c.l.bf16 %v306
  %v371 = vunpack.c.l.bf16 %v307
  %v372 = vunpack.c.l.bf16 %v308
  %v373 = vunpack.c.l.bf16 %v309
  %v374 = vunpack.c.l.bf16 %v310
  %v375 = vunpack.c.l.bf16 %v311
  %v376 = vunpack.c.l.bf16 %v312
  %v377 = vunpack.c.l.bf16 %v313
  %v378 = vunpack.c.l.bf16 %v314
  %v379 = vunpack.c.l.bf16 %v315
  %v380 = vunpack.c.l.bf16 %v316
  %v381 = vunpack.c.l.bf16 %v317
  %v382 = vunpack.c.l.bf16 %v318
  %v383 = vunpack.c.l.bf16 %v319
  %v384 = vunpack.c.l.bf16 %v320
  %v385 = vunpack.c.l.bf16 %v321
  %v386 = vunpack.c.l.bf16 %v322
  %v387 = vunpack.c.l.bf16 %v323
  %v388 = vunpack.c.l.bf16 %v324
  %v389 = vunpack.c.l.bf16 %v325
  %v390 = vunpack.c.l.bf16 %v326
  %v391 = vunpack.c.l.bf16 %v327
  %v392 = vunpack.c.l.bf16 %v328
  %v393 = vunpack.c.l.bf16 %v329
  %v394 = vunpack.c.l.bf16 %v330
  %v395 = vunpack.c.l.bf16 %v331
  %v396 = vunpack.c.l.bf16 %v332
  %v397 = vunpack.c.l.bf16 %v333
  %v398 = vunpack.c.l.bf16 %v334
  %v399 = vunpack.c.l.bf16 %v335
  %v400 = vunpack.c.l.bf16 %v336
  %v401 = vunpack.c.l.bf16 %v337
  %v402 = vunpack.c.l.bf16 %v338
  %v403 = vunpack.c.l.bf16 %v339
  %v404 = vunpack.c.l.bf16 %v340
  %v405 = vunpack.c.l.bf16 %v341
  %v406 = vunpack.c.l.bf16 %v342
  %v407 = vunpack.c.l.bf16 %v343
  %v408 = vunpack.c.l.bf16 %v344
  %v409 = vunpack.c.l.bf16 %v345
  %v410 = vunpack.c.l.bf16 %v346
  %v411 = vunpack.c.l.bf16 %v347
  %v412 = vunpack.c.l.bf16 %v348
  %v413 = vunpack.c.l.bf16 %v349
  %v414 = vunpack.c.l.bf16 %v350
  %v415 = vadd.f32 %v223, %v351
  %v416 = vadd.f32 %v224, %v352
  %v417 = vadd.f32 %v225, %v353
  %v418 = vadd.f32 %v226, %v354
  %v419 = vadd.f32 %v227, %v355
  %v420 = vadd.f32 %v228, %v356
  %v421 = vadd.f32 %v229, %v357
  %v422 = vadd.f32 %v230, %v358
  %v423 = vadd.f32 %v231, %v359
  %v424 = vadd.f32 %v232, %v360
  %v425 = vadd.f32 %v233, %v361
  %v426 = vadd.f32 %v234, %v362
  %v427 = vadd.f32 %v235, %v363
  %v428 = vadd.f32 %v236, %v364
  %v429 = vadd.f32 %v237, %v365
  %v430 = vadd.f32 %v238, %v366
  %v431 = vadd.f32 %v239, %v367
  %v432 = vadd.f32 %v240, %v368
  %v433 = vadd.f32 %v241, %v369
  %v434 = vadd.f32 %v242, %v370
  %v435 = vadd.f32 %v243, %v371
  %v436 = vadd.f32 %v244, %v372
  %v437 = vadd.f32 %v245, %v373
  %v438 = vadd.f32 %v246, %v374
  %v439 = vadd.f32 %v247, %v375
  %v440 = vadd.f32 %v248, %v376
  %v441 = vadd.f32 %v249, %v377
  %v442 = vadd.f32 %v250, %v378
  %v443 = vadd.f32 %v251, %v379
  %v444 = vadd.f32 %v252, %v380
  %v445 = vadd.f32 %v253, %v381
  %v446 = vadd.f32 %v254, %v382
  %v447 = vadd.f32 %v255, %v383
  %v448 = vadd.f32 %v256, %v384
  %v449 = vadd.f32 %v257, %v385
  %v450 = vadd.f32 %v258, %v386
  %v451 = vadd.f32 %v259, %v387
  %v452 = vadd.f32 %v260, %v388
  %v453 = vadd.f32 %v261, %v389
  %v454 = vadd.f32 %v262, %v390
  %v455 = vadd.f32 %v263, %v391
  %v456 = vadd.f32 %v264, %v392
  %v457 = vadd.f32 %v265, %v393
  %v458 = vadd.f32 %v266, %v394
  %v459 = vadd.f32 %v267, %v395
  %v460 = vadd.f32 %v268, %v396
  %v461 = vadd.f32 %v269, %v397
  %v462 = vadd.f32 %v270, %v398
  %v463 = vadd.f32 %v271, %v399
  %v464 = vadd.f32 %v272, %v400
  %v465 = vadd.f32 %v273, %v401
  %v466 = vadd.f32 %v274, %v402
  %v467 = vadd.f32 %v275, %v403
  %v468 = vadd.f32 %v276, %v404
  %v469 = vadd.f32 %v277, %v405
  %v470 = vadd.f32 %v278, %v406
  %v471 = vadd.f32 %v279, %v407
  %v472 = vadd.f32 %v280, %v408
  %v473 = vadd.f32 %v281, %v409
  %v474 = vadd.f32 %v282, %v410
  %v475 = vadd.f32 %v283, %v411
  %v476 = vadd.f32 %v284, %v412
  %v477 = vadd.f32 %v285, %v413
  %v478 = vadd.f32 %v286, %v414
  %v479 = vmax.f32 %v415, 0.0
  %v480 = vmax.f32 %v416, 0.0
  %v481 = vmax.f32 %v417, 0.0
  %v482 = vmax.f32 %v418, 0.0
  %v483 = vmax.f32 %v419, 0.0
  %v484 = vmax.f32 %v420, 0.0
  %v485 = vmax.f32 %v421, 0.0
  %v486 = vmax.f32 %v422, 0.0
  %v487 = vmax.f32 %v423, 0.0
  %v488 = vmax.f32 %v424, 0.0
  %v489 = vmax.f32 %v425, 0.0
  %v490 = vmax.f32 %v426, 0.0
  %v491 = vmax.f32 %v427, 0.0
  %v492 = vmax.f32 %v428, 0.0
  %v493 = vmax.f32 %v429, 0.0
  %v494 = vmax.f32 %v430, 0.0
  %v495 = vmax.f32 %v431, 0.0
  %v496 = vmax.f32 %v432, 0.0
  %v497 = vmax.f32 %v433, 0.0
  %v498 = vmax.f32 %v434, 0.0
  %v499 = vmax.f32 %v435, 0.0
  %v500 = vmax.f32 %v436, 0.0
  %v501 = vmax.f32 %v437, 0.0
  %v502 = vmax.f32 %v438, 0.0
  %v503 = vmax.f32 %v439, 0.0
  %v504 = vmax.f32 %v440, 0.0
  %v505 = vmax.f32 %v441, 0.0
  %v506 = vmax.f32 %v442, 0.0
  %v507 = vmax.f32 %v443, 0.0
  %v508 = vmax.f32 %v444, 0.0
  %v509 = vmax.f32 %v445, 0.0
  %v510 = vmax.f32 %v446, 0.0
  %v511 = vmax.f32 %v447, 0.0
  %v512 = vmax.f32 %v448, 0.0
  %v513 = vmax.f32 %v449, 0.0
  %v514 = vmax.f32 %v450, 0.0
  %v515 = vmax.f32 %v451, 0.0
  %v516 = vmax.f32 %v452, 0.0
  %v517 = vmax.f32 %v453, 0.0
  %v518 = vmax.f32 %v454, 0.0
  %v519 = vmax.f32 %v455, 0.0
  %v520 = vmax.f32 %v456, 0.0
  %v521 = vmax.f32 %v457, 0.0
  %v522 = vmax.f32 %v458, 0.0
  %v523 = vmax.f32 %v459, 0.0
  %v524 = vmax.f32 %v460, 0.0
  %v525 = vmax.f32 %v461, 0.0
  %v526 = vmax.f32 %v462, 0.0
  %v527 = vmax.f32 %v463, 0.0
  %v528 = vmax.f32 %v464, 0.0
  %v529 = vmax.f32 %v465, 0.0
  %v530 = vmax.f32 %v466, 0.0
  %v531 = vmax.f32 %v467, 0.0
  %v532 = vmax.f32 %v468, 0.0
  %v533 = vmax.f32 %v469, 0.0
  %v534 = vmax.f32 %v470, 0.0
  %v535 = vmax.f32 %v471, 0.0
  %v536 = vmax.f32 %v472, 0.0
  %v537 = vmax.f32 %v473, 0.0
  %v538 = vmax.f32 %v474, 0.0
  %v539 = vmax.f32 %v475, 0.0
  %v540 = vmax.f32 %v476, 0.0
  %v541 = vmax.f32 %v477, 0.0
  %v542 = vmax.f32 %v478, 0.0
  %543 = vst [vmem:[%s4] sm:$0xff] %v479
  %544 = vst [vmem:[%s4 + $0x8] sm:$0xff] %v480
  %545 = vst [vmem:[%s4 + $0x10] sm:$0xff] %v481
  %546 = vst [vmem:[%s4 + $0x18] sm:$0xff] %v482
  %547 = vst [vmem:[%s4 + $0x20] sm:$0xff] %v483
  %548 = vst [vmem:[%s4 + $0x28] sm:$0xff] %v484
  %549 = vst [vmem:[%s4 + $0x30] sm:$0xff] %v485
  %550 = vst [vmem:[%s4 + $0x38] sm:$0xff] %v486
  %551 = vst [vmem:[%s4 + $0x40] sm:$0xff] %v487
  %552 = vst [vmem:[%s4 + $0x48] sm:$0xff] %v488
  %553 = vst [vmem:[%s4 + $0x50] sm:$0xff] %v489
  %554 = vst [vmem:[%s4 + $0x58] sm:$0xff] %v490
  %555 = vst [vmem:[%s4 + $0x60] sm:$0xff] %v491
  %556 = vst [vmem:[%s4 + $0x68] sm:$0xff] %v492
  %557 = vst [vmem:[%s4 + $0x70] sm:$0xff] %v493
  %558 = vst [vmem:[%s4 + $0x78] sm:$0xff] %v494
  %559 = vst [vmem:[%s4 + $0x80] sm:$0xff] %v495
  %560 = vst [vmem:[%s4 + $0x88] sm:$0xff] %v496
  %561 = vst [vmem:[%s4 + $0x90] sm:$0xff] %v497
  %562 = vst [vmem:[%s4 + $0x98] sm:$0xff] %v498
  %563 = vst [vmem:[%s4 + $0xa0] sm:$0xff] %v499
  %564 = vst [vmem:[%s4 + $0xa8] sm:$0xff] %v500
  %565 = vst [vmem:[%s4 + $0xb0] sm:$0xff] %v501
  %566 = vst [vmem:[%s4 + $0xb8] sm:$0xff] %v502
  %567 = vst [vmem:[%s4 + $0xc0] sm:$0xff] %v503
  %568 = vst [vmem:[%s4 + $0xc8] sm:$0xff] %v504
  %569 = vst [vmem:[%s4 + $0xd0] sm:$0xff] %v505
  %570 = vst [vmem:[%s4 + $0xd8] sm:$0xff] %v506
  %571 = vst [vmem:[%s4 + $0xe0] sm:$0xff] %v507
  %572 = vst [vmem:[%s4 + $0xe8] sm:$0xff] %v508
  %573 = vst [vmem:[%s4 + $0xf0] sm:$0xff] %v509
  %574 = vst [vmem:[%s4 + $0xf8] sm:$0xff] %v510
  %575 = vst [vmem:[%s4 + $0x100] sm:$0xff] %v511
  %576 = vst [vmem:[%s4 + $0x108] sm:$0xff] %v512
  %577 = vst [vmem:[%s4 + $0x110] sm:$0xff] %v513
  %578 = vst [vmem:[%s4 + $0x118] sm:$0xff] %v514
  %579 = vst [vmem:[%s4 + $0x120] sm:$0xff] %v515
  %580 = vst [vmem:[%s4 + $0x128] sm:$0xff] %v516
  %581 = vst [vmem:[%s4 + $0x130] sm:$0xff] %v517
  %582 = vst [vmem:[%s4 + $0x138] sm:$0xff] %v518
  %583 = vst [vmem:[%s4 + $0x140] sm:$0xff] %v519
  %584 = vst [vmem:[%s4 + $0x148] sm:$0xff] %v520
  %585 = vst [vmem:[%s4 + $0x150] sm:$0xff] %v521
  %586 = vst [vmem:[%s4 + $0x158] sm:$0xff] %v522
  %587 = vst [vmem:[%s4 + $0x160] sm:$0xff] %v523
  %588 = vst [vmem:[%s4 + $0x168] sm:$0xff] %v524
  %589 = vst [vmem:[%s4 + $0x170] sm:$0xff] %v525
  %590 = vst [vmem:[%s4 + $0x178] sm:$0xff] %v526
  %591 = vst [vmem:[%s4 + $0x180] sm:$0xff] %v527
  %592 = vst [vmem:[%s4 + $0x188] sm:$0xff] %v528
  %593 = vst [vmem:[%s4 + $0x190] sm:$0xff] %v529
  %594 = vst [vmem:[%s4 + $0x198] sm:$0xff] %v530
  %595 = vst [vmem:[%s4 + $0x1a0] sm:$0xff] %v531
  %596 = vst [vmem:[%s4 + $0x1a8] sm:$0xff] %v532
  %597 = vst [vmem:[%s4 + $0x1b0] sm:$0xff] %v533
  %598 = vst [vmem:[%s4 + $0x1b8] sm:$0xff] %v534
  %599 = vst [vmem:[%s4 + $0x1c0] sm:$0xff] %v535
  %600 = vst [vmem:[%s4 + $0x1c8] sm:$0xff] %v536
  %601 = vst [vmem:[%s4 + $0x1d0] sm:$0xff] %v537
  %602 = vst [vmem:[%s4 + $0x1d8] sm:$0xff] %v538
  %603 = vst [vmem:[%s4 + $0x1e0] sm:$0xff] %v539
  %604 = vst [vmem:[%s4 + $0x1e8] sm:$0xff] %v540
  %605 = vst [vmem:[%s4 + $0x1f0] sm:$0xff] %v541
  %606 = vst [vmem:[%s4 + $0x1f8] sm:$0xff] %v542
  // Predicated region
  $region18: #{residual_block_forward_nhwc.5} parent=0 // pred_check
    _
  $region19: #{residual_block_forward_nhwc.5} parent=0 // pred_check_branch
    %608 = sbr.rel (0) target = $region21
  $region20: #{residual_block_forward_nhwc.5} parent=0 // pred_region
    _
  $region21: #{residual_block_forward_nhwc.5} parent=0 // pred_fallthru
    _
  // Predicated region
  $region22: #{residual_block_forward_nhwc.5} parent=0 // pred_check
    _
  $region23: #{residual_block_forward_nhwc.5} parent=0 // pred_check_branch
    %610 = sbr.rel (0) target = $region25
  $region24: #{residual_block_forward_nhwc.5} parent=0 // pred_region
    _
  $region25: #{residual_block_forward_nhwc.5} parent=0 // pred_fallthru
    _

// kernel: residual_block_forward_nhwc.3
$region0: #{residual_block_forward_nhwc.3}
  #allocation0 [shape = 'u32[]', space=smem, size = 0x4, offset = 0x4, fixed_abs, tag = 'smem constant byte address 0x4 - core index']
  #allocation1 [shape = 'u32[144,128]{1,0:T(1,128)}', space=vmem, size = 0x12000, scoped, tag = 'internal scratch']
  %s0 = inlined_call_operand.vmem [shape: bf16[2,18,18,128], index: 0, kind: input, shape index: {}]
  %s1 = inlined_call_operand.vmem [shape: bf16[9,128,128], index: 1, kind: input, shape index: {}]
  %s2 = inlined_call_operand.vmem [shape: bf16[2,16,16,128], index: 2, kind: output, shape index: {0}]
  %s3 = inlined_call_operand.vmem [shape: f32[1,1,128], index: 3, kind: output, shape index: {1}]
  %s4 = inlined_call_operand.vmem [shape: f32[1,1,128], index: 4, kind: output, shape index: {2}]
  %5 = xla_tuple %s2, %s3, %s4
  %s6 = sld [smem:[#allocation0]]
  $region34: #{residual_block_forward_nhwc.3} parent=0
    _
  %s8 = ssub.s32 1, %s6
  %s9 = scalar_select 0, %s8, %s6
  // Predicated region
  $region2: #{residual_block_forward_nhwc.3} parent=0 // pred_check
    _
  $region3: #{residual_block_forward_nhwc.3} parent=0 // pred_check_branch
    %11 = sbr.rel (0) target = $region5
  $region4: #{residual_block_forward_nhwc.3} parent=0 // pred_region
    _
  $region5: #{residual_block_forward_nhwc.3} parent=0 // pred_fallthru
    _
  // Predicated region
  $region6: #{residual_block_forward_nhwc.3} parent=0 // pred_check
    _
  $region7: #{residual_block_forward_nhwc.3} parent=0 // pred_check_branch
    %13 = sbr.rel (0) target = $region9
  $region8: #{residual_block_forward_nhwc.3} parent=0 // pred_region
    _
  $region9: #{residual_block_forward_nhwc.3} parent=0 // pred_fallthru
    _
  %v15 = vld [vmem:[%s0] sm:$0xf]
  %v16 = vld [vmem:[%s0 + $0x4] sm:$0xf]
  %v17 = vld [vmem:[%s0 + $0x8] sm:$0x1]
  %v18 = vld [vmem:[%s0 + $0xc] sm:$0xf]
  %v19 = vld [vmem:[%s0 + $0x10] sm:$0xf]
  %v20 = vld [vmem:[%s0 + $0x14] sm:$0x1]
  %v21 = vld [vmem:[%s0 + $0x18] sm:$0xf]
  %v22 = vld [vmem:[%s0 + $0x1c] sm:$0xf]
  %v23 = vld [vmem:[%s0 + $0x20] sm:$0x1]
  %v24 = vld [vmem:[%s0 + $0x24] sm:$0xf]
  %v25 = vld [vmem:[%s0 + $0x28] sm:$0xf]
  %v26 = vld [vmem:[%s0 + $0x2c] sm:$0x1]
  %v27 = vld [vmem:[%s0 + $0x30] sm:$0xf]
  %v28 = vld [vmem:[%s0 + $0x34] sm:$0xf]
  %v29 = vld [vmem:[%s0 + $0x38] sm:$0x1]
  %v30 = vld [vmem:[%s0 + $0x3c] sm:$0xf]
  %v31 = vld [vmem:[%s0 + $0x40] sm:$0xf]
  %v32 = vld [vmem:[%s0 + $0x44] sm:$0x1]
  %v33 = vld [vmem:[%s0 + $0x48] sm:$0xf]
  %v34 = vld [vmem:[%s0 + $0x4c] sm:$0xf]
  %v35 = vld [vmem:[%s0 + $0x50] sm:$0x1]
  %v36 = vld [vmem:[%s0 + $0x54] sm:$0xf]
  %v37 = vld [vmem:[%s0 + $0x58] sm:$0xf]
  %v38 = vld [vmem:[%s0 + $0x5c] sm:$0x1]
  %v39 = vld [vmem:[%s0 + $0x60] sm:$0xf]
  %v40 = vld [vmem:[%s0 + $0x64] sm:$0xf]
  %v41 = vld [vmem:[%s0 + $0x68] sm:$0x1]
  %v42 = vld [vmem:[%s0 + $0x6c] sm:$0xf]
  %v43 = vld [vmem:[%s0 + $0x70] sm:$0xf]
  %v44 = vld [vmem:[%s0 + $0x74] sm:$0x1]
  %v45 = vld [vmem:[%s0 + $0x78] sm:$0xf]
  %v46 = vld [vmem:[%s0 + $0x7c] sm:$0xf]
  %v47 = vld [vmem:[%s0 + $0x80] sm:$0x1]
  %v48 = vld [vmem:[%s0 + $0x84] sm:$0xf]
  %v49 = vld [vmem:[%s0 + $0x88] sm:$0xf]
  %v50 = vld [vmem:[%s0 + $0x8c] sm:$0x1]
  %v51 = vld [vmem:[%s0 + $0x90] sm:$0xf]
  %v52 = vld [vmem:[%s0 + $0x94] sm:$0xf]
  %v53 = vld [vmem:[%s0 + $0x98] sm:$0x1]
  %v54 = vld [vmem:[%s0 + $0x9c] sm:$0xf]
  %v55 = vld [vmem:[%s0 + $0xa0] sm:$0xf]
  %v56 = vld [vmem:[%s0 + $0xa4] sm:$0x1]
  %v57 = vld [vmem:[%s0 + $0xa8] sm:$0xf]
  %v58 = vld [vmem:[%s0 + $0xac] sm:$0xf]
  %v59 = vld [vmem:[%s0 + $0xb0] sm:$0x1]
  %v60 = vld [vmem:[%s0 + $0xb4] sm:$0xf]
  %v61 = vld [vmem:[%s0 + $0xb8] sm:$0xf]
  %v62 = vld [vmem:[%s0 + $0xbc] sm:$0x1]
  %v63 = vld [vmem:[%s0 + $0xc0] sm:$0xf]
  %v64 = vld [vmem:[%s0 + $0xc4] sm:$0xf]
  %v65 = vld [vmem:[%s0 + $0xc8] sm:$0x1]
  %v66 = vld [vmem:[%s0 + $0xcc] sm:$0xf]
  %v67 = vld [vmem:[%s0 + $0xd0] sm:$0xf]
  %v68 = vld [vmem:[%s0 + $0xd4] sm:$0x1]
  %v69 = vld [vmem:[%s0 + $0xd8] sm:$0xf]
  %v70 = vld [vmem:[%s0 + $0xdc] sm:$0xf]
  %v71 = vld [vmem:[%s0 + $0xe0] sm:$0x1]
  %v72 = vld [vmem:[%s0 + $0xe4] sm:$0xf]
  %v73 = vld [vmem:[%s0 + $0xe8] sm:$0xf]
  %v74 = vld [vmem:[%s0 + $0xec] sm:$0x1]
  %v75 = vld [vmem:[%s0 + $0xf0] sm:$0xf]
  %v76 = vld [vmem:[%s0 + $0xf4] sm:$0xf]
  %v77 = vld [vmem:[%s0 + $0xf8] sm:$0x1]
  %v78 = vld [vmem:[%s0 + $0xfc] sm:$0xf]
  %v79 = vld [vmem:[%s0 + $0x100] sm:$0xf]
  %v80 = vld [vmem:[%s0 + $0x104] sm:$0x1]
  %v81 = vld [vmem:[%s0 + $0x108] sm:$0xf]
  %v82 = vld [vmem:[%s0 + $0x10c] sm:$0xf]
  %v83 = vld [vmem:[%s0 + $0x110] sm:$0x1]
  %v84 = vld [vmem:[%s0 + $0x114] sm:$0xf]
  %v85 = vld [vmem:[%s0 + $0x118] sm:$0xf]
  %v86 = vld [vmem:[%s0 + $0x11c] sm:$0x1]
  %v87 = vld [vmem:[%s0 + $0x120] sm:$0xf]
  %v88 = vld [vmem:[%s0 + $0x124] sm:$0xf]
  %v89 = vld [vmem:[%s0 + $0x128] sm:$0x1]
  %v90 = vld [vmem:[%s0 + $0x12c] sm:$0xf]
  %v91 = vld [vmem:[%s0 + $0x130] sm:$0xf]
  %v92 = vld [vmem:[%s0 + $0x134] sm:$0x1]
  %v93 = vld [vmem:[%s0 + $0x138] sm:$0xf]
  %v94 = vld [vmem:[%s0 + $0x13c] sm:$0xf]
  %v95 = vld [vmem:[%s0 + $0x140] sm:$0x1]
  %v96 = vld [vmem:[%s0 + $0x144] sm:$0xf]
  %v97 = vld [vmem:[%s0 + $0x148] sm:$0xf]
  %v98 = vld [vmem:[%s0 + $0x14c] sm:$0x1]
  %v99 = vld [vmem:[%s0 + $0x150] sm:$0xf]
  %v100 = vld [vmem:[%s0 + $0x154] sm:$0xf]
  %v101 = vld [vmem:[%s0 + $0x158] sm:$0x1]
  %v102 = vld [vmem:[%s0 + $0x15c] sm:$0xf]
  %v103 = vld [vmem:[%s0 + $0x160] sm:$0xf]
  %v104 = vld [vmem:[%s0 + $0x164] sm:$0x1]
  %v105 = vld [vmem:[%s0 + $0x168] sm:$0xf]
  %v106 = vld [vmem:[%s0 + $0x16c] sm:$0xf]
  %v107 = vld [vmem:[%s0 + $0x170] sm:$0x1]
  %v108 = vld [vmem:[%s0 + $0x174] sm:$0xf]
  %v109 = vld [vmem:[%s0 + $0x178] sm:$0xf]
  %v110 = vld [vmem:[%s0 + $0x17c] sm:$0x1]
  %v111 = vld [vmem:[%s0 + $0x180] sm:$0xf]
  %v112 = vld [vmem:[%s0 + $0x184] sm:$0xf]
  %v113 = vld [vmem:[%s0 + $0x188] sm:$0x1]
  %v114 = vld [vmem:[%s0 + $0x18c] sm:$0xf]
  %v115 = vld [vmem:[%s0 + $0x190] sm:$0xf]
  %v116 = vld [vmem:[%s0 + $0x194] sm:$0x1]
  %v117 = vld [vmem:[%s0 + $0x198] sm:$0xf]
  %v118 = vld [vmem:[%s0 + $0x19c] sm:$0xf]
  %v119 = vld [vmem:[%s0 + $0x1a0] sm:$0x1]
  %v120 = vld [vmem:[%s0 + $0x1a4] sm:$0xf]
  %v121 = vld [vmem:[%s0 + $0x1a8] sm:$0xf]
  %v122 = vld [vmem:[%s0 + $0x1ac] sm:$0x1]
  %v123 = vld [vmem:[%s1] sm:$0xf]
  %v124 = vld [vmem:[%s1 + $0x4] sm:$0xf]
  %v125 = vld [vmem:[%s1 + $0x8] sm:$0xf]
  %v126 = vld [vmem:[%s1 + $0xc] sm:$0xf]
  %v127 = vld [vmem:[%s1 + $0x10] sm:$0xf]
  %v128 = vld [vmem:[%s1 + $0x14] sm:$0xf]
  %v129 = vld [vmem:[%s1 + $0x18] sm:$0xf]
  %v130 = vld [vmem:[%s1 + $0x1c] sm:$0xf]
  %v131 = vld [vmem:[%s1 + $0x20] sm:$0xf]
  %v132 = vld [vmem:[%s1 + $0x24] sm:$0xf]
  %v133 = vld [vmem:[%s1 + $0x28] sm:$0xf]
  %v134 = vld [vmem:[%s1 + $0x2c] sm:$0xf]
  %v135 = vld [vmem:[%s1 + $0x30] sm:$0xf]
  %v136 = vld [vmem:[%s1 + $0x34] sm:$0xf]
  %v137 = vld [vmem:[%s1 + $0x38] sm:$0xf]
  %v138 = vld [vmem:[%s1 + $0x3c] sm:$0xf]
  %vm139 = vsmask.f32 3328
  %vm140 = vsmask.f32 7440
  %vm141 = vmor %vm139, %vm140
  %v143 = vshrl.u32 %v15, 16
  %v145 = vrot.slane %v143, 4
  %v146 = vshll.u32 %v15, 16
  %v148 = vrot.slane %v146, 5
  %v149 = vor.u32 %v145, %v148
  %v150 = vrot.slane %v149, 4
  %v152 = vshll.u32 %v16, 16
  %v154 = vrot.slane %v152, 5
  %v155 = vsel %vm141, %v150, %v154
  %v156 = vshrl.u32 %v16, 16
  %v158 = vrot.slane %v156, 4
  %v159 = vor.u32 %v158, %v154
  %v160 = vrot.slane %v159, 4
  %v162 = vshll.u32 %v17, 16
  %v164 = vrot.slane %v162, 5
  %v165 = vsel %vm141, %v160, %v164
  %v167 = vshrl.u32 %v18, 16
  %v169 = vrot.slane %v167, 4
  %v170 = vshll.u32 %v18, 16
  %v172 = vrot.slane %v170, 5
  %v173 = vor.u32 %v169, %v172
  %v174 = vrot.slane %v173, 4
  %v176 = vshll.u32 %v19, 16
  %v178 = vrot.slane %v176, 5
  %v179 = vsel %vm141, %v174, %v178
  %v180 = vshrl.u32 %v19, 16
  %v182 = vrot.slane %v180, 4
  %v183 = vor.u32 %v182, %v178
  %v184 = vrot.slane %v183, 4
  %v186 = vshll.u32 %v20, 16
  %v188 = vrot.slane %v186, 5
  %v189 = vsel %vm141, %v184, %v188
  %v191 = vshrl.u32 %v21, 16
  %v193 = vrot.slane %v191, 4
  %v194 = vshll.u32 %v21, 16
  %v196 = vrot.slane %v194, 5
  %v197 = vor.u32 %v193, %v196
  %v198 = vrot.slane %v197, 4
  %v200 = vshll.u32 %v22, 16
  %v202 = vrot.slane %v200, 5
  %v203 = vsel %vm141, %v198, %v202
  %v204 = vshrl.u32 %v22, 16
  %v206 = vrot.slane %v204, 4
  %v207 = vor.u32 %v206, %v202
  %v208 = vrot.slane %v207, 4
  %v210 = vshll.u32 %v23, 16
  %v212 = vrot.slane %v210, 5
  %v213 = vsel %vm141, %v208, %v212
  %v215 = vshrl.u32 %v24, 16
  %v217 = vrot.slane %v215, 4
  %v218 = vshll.u32 %v24, 16
  %v220 = vrot.slane %v218, 5
  %v221 = vor.u32 %v217, %v220
  %v222 = vrot.slane %v221, 4
  %v224 = vshll.u32 %v25, 16
  %v226 = vrot.slane %v224, 5
  %v227 = vsel %vm141, %v222, %v226
  %v228 = vshrl.u32 %v25, 16
  %v230 = vrot.slane %v228, 4
  %v231 = vor.u32 %v230, %v226
  %v232 = vrot.slane %v231, 4
  %v234 = vshll.u32 %v26, 16
  %v236 = vrot.slane %v234, 5
  %v237 = vsel %vm141, %v232, %v236
  %v239 = vshrl.u32 %v27, 16
  %v241 = vrot.slane %v239, 4
  %v242 = vshll.u32 %v27, 16
  %v244 = vrot.slane %v242, 5
  %v245 = vor.u32 %v241, %v244
  %v246 = vrot.slane %v245, 4
  %v248 = vshll.u32 %v28, 16
  %v250 = vrot.slane %v248, 5
  %v251 = vsel %vm141, %v246, %v250
  %v252 = vshrl.u32 %v28, 16
  %v254 = vrot.slane %v252, 4
  %v255 = vor.u32 %v254, %v250
  %v256 = vrot.slane %v255, 4
  %v258 = vshll.u32 %v29, 16
  %v260 = vrot.slane %v258, 5
  %v261 = vsel %vm141, %v256, %v260
  %v263 = vshrl.u32 %v30, 16
  %v265 = vrot.slane %v263, 4
  %v266 = vshll.u32 %v30, 16
  %v268 = vrot.slane %v266, 5
  %v269 = vor.u32 %v265, %v268
  %v270 = vrot.slane %v269, 4
  %v272 = vshll.u32 %v31, 16
  %v274 = vrot.slane %v272, 5
  %v275 = vsel %vm141, %v270, %v274
  %v276 = vshrl.u32 %v31, 16
  %v278 = vrot.slane %v276, 4
  %v279 = vor.u32 %v278, %v274
  %v280 = vrot.slane %v279, 4
  %v282 = vshll.u32 %v32, 16
  %v284 = vrot.slane %v282, 5
  %v285 = vsel %vm141, %v280, %v284
  %v287 = vshrl.u32 %v33, 16
  %v289 = vrot.slane %v287, 4
  %v290 = vshll.u32 %v33, 16
  %v292 = vrot.slane %v290, 5
  %v293 = vor.u32 %v289, %v292
  %v294 = vrot.slane %v293, 4
  %v296 = vshll.u32 %v34, 16
  %v298 = vrot.slane %v296, 5
  %v299 = vsel %vm141, %v294, %v298
  %v300 = vshrl.u32 %v34, 16
  %v302 = vrot.slane %v300, 4
  %v303 = vor.u32 %v302, %v298
  %v304 = vrot.slane %v303, 4
  %v306 = vshll.u32 %v35, 16
  %v308 = vrot.slane %v306, 5
  %v309 = vsel %vm141, %v304, %v308
  %v311 = vshrl.u32 %v36, 16
  %v313 = vrot.slane %v311, 4
  %v314 = vshll.u32 %v36, 16
  %v316 = vrot.slane %v314, 5
  %v317 = vor.u32 %v313, %v316
  %v318 = vrot.slane %v317, 4
  %v320 = vshll.u32 %v37, 16
  %v322 = vrot.slane %v320, 5
  %v323 = vsel %vm141, %v318, %v322
  %v324 = vshrl.u32 %v37, 16
  %v326 = vrot.slane %v324, 4
  %v327 = vor.u32 %v326, %v322
  %v328 = vrot.slane %v327, 4
  %v330 = vshll.u32 %v38, 16
  %v332 = vrot.slane %v330, 5
  %v333 = vsel %vm141, %v328, %v332
  %v335 = vshrl.u32 %v39, 16
  %v337 = vrot.slane %v335, 4
  %v338 = vshll.u32 %v39, 16
  %v340 = vrot.slane %v338, 5
  %v341 = vor.u32 %v337, %v340
  %v342 = vrot.slane %v341, 4
  %v344 = vshll.u32 %v40, 16
  %v346 = vrot.slane %v344, 5
  %v347 = vsel %vm141, %v342, %v346
  %v348 = vshrl.u32 %v40, 16
  %v350 = vrot.slane %v348, 4
  %v351 = vor.u32 %v350, %v346
  %v352 = vrot.slane %v351, 4
  %v354 = vshll.u32 %v41, 16
  %v356 = vrot.slane %v354, 5
  %v357 = vsel %vm141, %v352, %v356
  %v359 = vshrl.u32 %v42, 16
  %v361 = vrot.slane %v359, 4
  %v362 = vshll.u32 %v42, 16
  %v364 = vrot.slane %v362, 5
  %v365 = vor.u32 %v361, %v364
  %v366 = vrot.slane %v365, 4
  %v368 = vshll.u32 %v43, 16
  %v370 = vrot.slane %v368, 5
  %v371 = vsel %vm141, %v366, %v370
  %v372 = vshrl.u32 %v43, 16
  %v374 = vrot.slane %v372, 4
  %v375 = vor.u32 %v374, %v370
  %v376 = vrot.slane %v375, 4
  %v378 = vshll.u32 %v44, 16
  %v380 = vrot.slane %v378, 5
  %v381 = vsel %vm141, %v376, %v380
  %v383 = vshrl.u32 %v45, 16
  %v385 = vrot.slane %v383, 4
  %v386 = vshll.u32 %v45, 16
  %v388 = vrot.slane %v386, 5
  %v389 = vor.u32 %v385, %v388
  %v390 = vrot.slane %v389, 4
  %v392 = vshll.u32 %v46, 16
  %v394 = vrot.slane %v392, 5
  %v395 = vsel %vm141, %v390, %v394
  %v396 = vshrl.u32 %v46, 16
  %v398 = vrot.slane %v396, 4
  %v399 = vor.u32 %v398, %v394
  %v400 = vrot.slane %v399, 4
  %v402 = vshll.u32 %v47, 16
  %v404 = vrot.slane %v402, 5
  %v405 = vsel %vm141, %v400, %v404
  %v407 = vshrl.u32 %v48, 16
  %v409 = vrot.slane %v407, 4
  %v410 = vshll.u32 %v48, 16
  %v412 = vrot.slane %v410, 5
  %v413 = vor.u32 %v409, %v412
  %v414 = vrot.slane %v413, 4
  %v416 = vshll.u32 %v49, 16
  %v418 = vrot.slane %v416, 5
  %v419 = vsel %vm141, %v414, %v418
  %v420 = vshrl.u32 %v49, 16
  %v422 = vrot.slane %v420, 4
  %v423 = vor.u32 %v422, %v418
  %v424 = vrot.slane %v423, 4
  %v426 = vshll.u32 %v50, 16
  %v428 = vrot.slane %v426, 5
  %v429 = vsel %vm141, %v424, %v428
  %v431 = vshrl.u32 %v51, 16
  %v433 = vrot.slane %v431, 4
  %v434 = vshll.u32 %v51, 16
  %v436 = vrot.slane %v434, 5
  %v437 = vor.u32 %v433, %v436
  %v438 = vrot.slane %v437, 4
  %v440 = vshll.u32 %v52, 16
  %v442 = vrot.slane %v440, 5
  %v443 = vsel %vm141, %v438, %v442
  %v444 = vshrl.u32 %v52, 16
  %v446 = vrot.slane %v444, 4
  %v447 = vor.u32 %v446, %v442
  %v448 = vrot.slane %v447, 4
  %v450 = vshll.u32 %v53, 16
  %v452 = vrot.slane %v450, 5
  %v453 = vsel %vm141, %v448, %v452
  %v455 = vshrl.u32 %v54, 16
  %v457 = vrot.slane %v455, 4
  %v458 = vshll.u32 %v54, 16
  %v460 = vrot.slane %v458, 5
  %v461 = vor.u32 %v457, %v460
  %v462 = vrot.slane %v461, 4
  %v464 = vshll.u32 %v55, 16
  %v466 = vrot.slane %v464, 5
  %v467 = vsel %vm141, %v462, %v466
  %v468 = vshrl.u32 %v55, 16
  %v470 = vrot.slane %v468, 4
  %v471 = vor.u32 %v470, %v466
  %v472 = vrot.slane %v471, 4
  %v474 = vshll.u32 %v56, 16
  %v476 = vrot.slane %v474, 5
  %v477 = vsel %vm141, %v472, %v476
  %v479 = vshrl.u32 %v57, 16
  %v481 = vrot.slane %v479, 4
  %v482 = vshll.u32 %v57, 16
  %v484 = vrot.slane %v482, 5
  %v485 = vor.u32 %v481, %v484
  %v486 = vrot.slane %v485, 4
  %v488 = vshll.u32 %v58, 16
  %v490 = vrot.slane %v488, 5
  %v491 = vsel %vm141, %v486, %v490
  %v492 = vshrl.u32 %v58, 16
  %v494 = vrot.slane %v492, 4
  %v495 = vor.u32 %v494, %v490
  %v496 = vrot.slane %v495, 4
  %v498 = vshll.u32 %v59, 16
  %v500 = vrot.slane %v498, 5
  %v501 = vsel %vm141, %v496, %v500
  %v503 = vshrl.u32 %v60, 16
  %v505 = vrot.slane %v503, 4
  %v506 = vshll.u32 %v60, 16
  %v508 = vrot.slane %v506, 5
  %v509 = vor.u32 %v505, %v508
  %v510 = vrot.slane %v509, 4
  %v512 = vshll.u32 %v61, 16
  %v514 = vrot.slane %v512, 5
  %v515 = vsel %vm141, %v510, %v514
  %v516 = vshrl.u32 %v61, 16
  %v518 = vrot.slane %v516, 4
  %v519 = vor.u32 %v518, %v514
  %v520 = vrot.slane %v519, 4
  %v522 = vshll.u32 %v62, 16
  %v524 = vrot.slane %v522, 5
  %v525 = vsel %vm141, %v520, %v524
  %v527 = vshrl.u32 %v69, 16
  %v529 = vrot.slane %v527, 4
  %v530 = vshll.u32 %v69, 16
  %v532 = vrot.slane %v530, 5
  %v533 = vor.u32 %v529, %v532
  %v534 = vrot.slane %v533, 4
  %v536 = vshll.u32 %v70, 16
  %v538 = vrot.slane %v536, 5
  %v539 = vsel %vm141, %v534, %v538
  %v540 = vshrl.u32 %v70, 16
  %v542 = vrot.slane %v540, 4
  %v543 = vor.u32 %v542, %v538
  %v544 = vrot.slane %v543, 4
  %v546 = vshll.u32 %v71, 16
  %v548 = vrot.slane %v546, 5
  %v549 = vsel %vm141, %v544, %v548
  %v551 = vshrl.u32 %v72, 16
  %v553 = vrot.slane %v551, 4
  %v554 = vshll.u32 %v72, 16
  %v556 = vrot.slane %v554, 5
  %v557 = vor.u32 %v553, %v556
  %v558 = vrot.slane %v557, 4
  %v560 = vshll.u32 %v73, 16
  %v562 = vrot.slane %v560, 5
  %v563 = vsel %vm141, %v558, %v562
  %v564 = vshrl.u32 %v73, 16
  %v566 = vrot.slane %v564, 4
  %v567 = vor.u32 %v566, %v562
  %v568 = vrot.slane %v567, 4
  %v570 = vshll.u32 %v74, 16
  %v572 = vrot.slane %v570, 5
  %v573 = vsel %vm141, %v568, %v572
  %v575 = vshrl.u32 %v75, 16
  %v577 = vrot.slane %v575, 4
  %v578 = vshll.u32 %v75, 16
  %v580 = vrot.slane %v578, 5
  %v581 = vor.u32 %v577, %v580
  %v582 = vrot.slane %v581, 4
  %v584 = vshll.u32 %v76, 16
  %v586 = vrot.slane %v584, 5
  %v587 = vsel %vm141, %v582, %v586
  %v588 = vshrl.u32 %v76, 16
  %v590 = vrot.slane %v588, 4
  %v591 = vor.u32 %v590, %v586
  %v592 = vrot.slane %v591, 4
  %v594 = vshll.u32 %v77, 16
  %v596 = vrot.slane %v594, 5
  %v597 = vsel %vm141, %v592, %v596
  %v599 = vshrl.u32 %v78, 16
  %v601 = vrot.slane %v599, 4
  %v602 = vshll.u32 %v78, 16
  %v604 = vrot.slane %v602, 5
  %v605 = vor.u32 %v601, %v604
  %v606 = vrot.slane %v605, 4
  %v608 = vshll.u32 %v79, 16
  %v610 = vrot.slane %v608, 5
  %v611 = vsel %vm141, %v606, %v610
  %v612 = vshrl.u32 %v79, 16
  %v614 = vrot.slane %v612, 4
  %v615 = vor.u32 %v614, %v610
  %v616 = vrot.slane %v615, 4
  %v618 = vshll.u32 %v80, 16
  %v620 = vrot.slane %v618, 5
  %v621 = vsel %vm141, %v616, %v620
  %v623 = vshrl.u32 %v81, 16
  %v625 = vrot.slane %v623, 4
  %v626 = vshll.u32 %v81, 16
  %v628 = vrot.slane %v626, 5
  %v629 = vor.u32 %v625, %v628
  %v630 = vrot.slane %v629, 4
  %v632 = vshll.u32 %v82, 16
  %v634 = vrot.slane %v632, 5
  %v635 = vsel %vm141, %v630, %v634
  %v636 = vshrl.u32 %v82, 16
  %v638 = vrot.slane %v636, 4
  %v639 = vor.u32 %v638, %v634
  %v640 = vrot.slane %v639, 4
  %v642 = vshll.u32 %v83, 16
  %v644 = vrot.slane %v642, 5
  %v645 = vsel %vm141, %v640, %v644
  %v647 = vshrl.u32 %v84, 16
  %v649 = vrot.slane %v647, 4
  %v650 = vshll.u32 %v84, 16
  %v652 = vrot.slane %v650, 5
  %v653 = vor.u32 %v649, %v652
  %v654 = vrot.slane %v653, 4
  %v656 = vshll.u32 %v85, 16
  %v658 = vrot.slane %v656, 5
  %v659 = vsel %vm141, %v654, %v658
  %v660 = vshrl.u32 %v85, 16
  %v662 = vrot.slane %v660, 4
  %v663 = vor.u32 %v662, %v658
  %v664 = vrot.slane %v663, 4
  %v666 = vshll.u32 %v86, 16
  %v668 = vrot.slane %v666, 5
  %v669 = vsel %vm141, %v664, %v668
  %v671 = vshrl.u32 %v87, 16
  %v673 = vrot.slane %v671, 4
  %v674 = vshll.u32 %v87, 16
  %v676 = vrot.slane %v674, 5
  %v677 = vor.u32 %v673, %v676
  %v678 = vrot.slane %v677, 4
  %v680 = vshll.u32 %v88, 16
  %v682 = vrot.slane %v680, 5
  %v683 = vsel %vm141, %v678, %v682
  %v684 = vshrl.u32 %v88, 16
  %v686 = vrot.slane %v684, 4
  %v687 = vor.u32 %v686, %v682
  %v688 = vrot.slane %v687, 4
  %v690 = vshll.u32 %v89, 16
  %v692 = vrot.slane %v690, 5
  %v693 = vsel %vm141, %v688, %v692
  %v695 = vshrl.u32 %v90, 16
  %v697 = vrot.slane %v695, 4
  %v698 = vshll.u32 %v90, 16
  %v700 = vrot.slane %v698, 5
  %v701 = vor.u32 %v697, %v700
  %v702 = vrot.slane %v701, 4
  %v704 = vshll.u32 %v91, 16
  %v706 = vrot.slane %v704, 5
  %v707 = vsel %vm141, %v702, %v706
  %v708 = vshrl.u32 %v91, 16
  %v710 = vrot.slane %v708, 4
  %v711 = vor.u32 %v710, %v706
  %v712 = vrot.slane %v711, 4
  %v714 = vshll.u32 %v92, 16
  %v716 = vrot.slane %v714, 5
  %v717 = vsel %vm141, %v712, %v716
  %v719 = vshrl.u32 %v93, 16
  %v721 = vrot.slane %v719, 4
  %v722 = vshll.u32 %v93, 16
  %v724 = vrot.slane %v722, 5
  %v725 = vor.u32 %v721, %v724
  %v726 = vrot.slane %v725, 4
  %v728 = vshll.u32 %v94, 16
  %v730 = vrot.slane %v728, 5
  %v731 = vsel %vm141, %v726, %v730
  %v732 = vshrl.u32 %v94, 16
  %v734 = vrot.slane %v732, 4
  %v735 = vor.u32 %v734, %v730
  %v736 = vrot.slane %v735, 4
  %v738 = vshll.u32 %v95, 16
  %v740 = vrot.slane %v738, 5
  %v741 = vsel %vm141, %v736, %v740
  %v743 = vshrl.u32 %v96, 16
  %v745 = vrot.slane %v743, 4
  %v746 = vshll.u32 %v96, 16
  %v748 = vrot.slane %v746, 5
  %v749 = vor.u32 %v745, %v748
  %v750 = vrot.slane %v749, 4
  %v752 = vshll.u32 %v97, 16
  %v754 = vrot.slane %v752, 5
  %v755 = vsel %vm141, %v750, %v754
  %v756 = vshrl.u32 %v97, 16
  %v758 = vrot.slane %v756, 4
  %v759 = vor.u32 %v758, %v754
  %v760 = vrot.slane %v759, 4
  %v762 = vshll.u32 %v98, 16
  %v764 = vrot.slane %v762, 5
  %v765 = vsel %vm141, %v760, %v764
  %v767 = vshrl.u32 %v99, 16
  %v769 = vrot.slane %v767, 4
  %v770 = vshll.u32 %v99, 16
  %v772 = vrot.slane %v770, 5
  %v773 = vor.u32 %v769, %v772
  %v774 = vrot.slane %v773, 4
  %v776 = vshll.u32 %v100, 16
  %v778 = vrot.slane %v776, 5
  %v779 = vsel %vm141, %v774, %v778
  %v780 = vshrl.u32 %v100, 16
  %v782 = vrot.slane %v780, 4
  %v783 = vor.u32 %v782, %v778
  %v784 = vrot.slane %v783, 4
  %v786 = vshll.u32 %v101, 16
  %v788 = vrot.slane %v786, 5
  %v789 = vsel %vm141, %v784, %v788
  %v791 = vshrl.u32 %v102, 16
  %v793 = vrot.slane %v791, 4
  %v794 = vshll.u32 %v102, 16
  %v796 = vrot.slane %v794, 5
  %v797 = vor.u32 %v793, %v796
  %v798 = vrot.slane %v797, 4
  %v800 = vshll.u32 %v103, 16
  %v802 = vrot.slane %v800, 5
  %v803 = vsel %vm141, %v798, %v802
  %v804 = vshrl.u32 %v103, 16
  %v806 = vrot.slane %v804, 4
  %v807 = vor.u32 %v806, %v802
  %v808 = vrot.slane %v807, 4
  %v810 = vshll.u32 %v104, 16
  %v812 = vrot.slane %v810, 5
  %v813 = vsel %vm141, %v808, %v812
  %v815 = vshrl.u32 %v105, 16
  %v817 = vrot.slane %v815, 4
  %v818 = vshll.u32 %v105, 16
  %v820 = vrot.slane %v818, 5
  %v821 = vor.u32 %v817, %v820
  %v822 = vrot.slane %v821, 4
  %v824 = vshll.u32 %v106, 16
  %v826 = vrot.slane %v824, 5
  %v827 = vsel %vm141, %v822, %v826
  %v828 = vshrl.u32 %v106, 16
  %v830 = vrot.slane %v828, 4
  %v831 = vor.u32 %v830, %v826
  %v832 = vrot.slane %v831, 4
  %v834 = vshll.u32 %v107, 16
  %v836 = vrot.slane %v834, 5
  %v837 = vsel %vm141, %v832, %v836
  %v839 = vshrl.u32 %v108, 16
  %v841 = vrot.slane %v839, 4
  %v842 = vshll.u32 %v108, 16
  %v844 = vrot.slane %v842, 5
  %v845 = vor.u32 %v841, %v844
  %v846 = vrot.slane %v845, 4
  %v848 = vshll.u32 %v109, 16
  %v850 = vrot.slane %v848, 5
  %v851 = vsel %vm141, %v846, %v850
  %v852 = vshrl.u32 %v109, 16
  %v854 = vrot.slane %v852, 4
  %v855 = vor.u32 %v854, %v850
  %v856 = vrot.slane %v855, 4
  %v858 = vshll.u32 %v110, 16
  %v860 = vrot.slane %v858, 5
  %v861 = vsel %vm141, %v856, %v860
  %v863 = vshrl.u32 %v111, 16
  %v865 = vrot.slane %v863, 4
  %v866 = vshll.u32 %v111, 16
  %v868 = vrot.slane %v866, 5
  %v869 = vor.u32 %v865, %v868
  %v870 = vrot.slane %v869, 4
  %v872 = vshll.u32 %v112, 16
  %v874 = vrot.slane %v872, 5
  %v875 = vsel %vm141, %v870, %v874
  %v876 = vshrl.u32 %v112, 16
  %v878 = vrot.slane %v876, 4
  %v879 = vor.u32 %v878, %v874
  %v880 = vrot.slane %v879, 4
  %v882 = vshll.u32 %v113, 16
  %v884 = vrot.slane %v882, 5
  %v885 = vsel %vm141, %v880, %v884
  %v887 = vshrl.u32 %v114, 16
  %v889 = vrot.slane %v887, 4
  %v890 = vshll.u32 %v114, 16
  %v892 = vrot.slane %v890, 5
  %v893 = vor.u32 %v889, %v892
  %v894 = vrot.slane %v893, 4
  %v896 = vshll.u32 %v115, 16
  %v898 = vrot.slane %v896, 5
  %v899 = vsel %vm141, %v894, %v898
  %v900 = vshrl.u32 %v115, 16
  %v902 = vrot.slane %v900, 4
  %v903 = vor.u32 %v902, %v898
  %v904 = vrot.slane %v903, 4
  %v906 = vshll.u32 %v116, 16
  %v908 = vrot.slane %v906, 5
  %v909 = vsel %vm141, %v904, %v908
  %s910 = scalar_lea.vmem %s1, 64
  %v911 = vld [vmem:[%s910] sm:$0xf]
  %v912 = vld [vmem:[%s910 + $0x4] sm:$0xf]
  %v913 = vld [vmem:[%s910 + $0x8] sm:$0xf]
  %v914 = vld [vmem:[%s910 + $0xc] sm:$0xf]
  %v915 = vld [vmem:[%s910 + $0x10] sm:$0xf]
  %v916 = vld [vmem:[%s910 + $0x14] sm:$0xf]
  %v917 = vld [vmem:[%s910 + $0x18] sm:$0xf]
  %v918 = vld [vmem:[%s910 + $0x1c] sm:$0xf]
  %v919 = vld [vmem:[%s910 + $0x20] sm:$0xf]
  %v920 = vld [vmem:[%s910 + $0x24] sm:$0xf]
  %v921 = vld [vmem:[%s910 + $0x28] sm:$0xf]
  %v922 = vld [vmem:[%s910 + $0x2c] sm:$0xf]
  %v923 = vld [vmem:[%s910 + $0x30] sm:$0xf]
  %v924 = vld [vmem:[%s910 + $0x34] sm:$0xf]
  %v925 = vld [vmem:[%s910 + $0x38] sm:$0xf]
  %v926 = vld [vmem:[%s910 + $0x3c] sm:$0xf]
  %v927 = vunpack.c.l.b16 %v155
  %v928 = vunpack.c.l.b16 %v165
  %v929 = vunpack.c.l.b16 %v179
  %v930 = vunpack.c.l.b16 %v189
  %v931 = vunpack.c.l.b16 %v203
  %v932 = vunpack.c.l.b16 %v213
  %v933 = vunpack.c.l.b16 %v227
  %v934 = vunpack.c.l.b16 %v237
  %v935 = vunpack.c.l.b16 %v251
  %v936 = vunpack.c.l.b16 %v261
  %v937 = vunpack.c.l.b16 %v275
  %v938 = vunpack.c.l.b16 %v285
  %v939 = vunpack.c.l.b16 %v299
  %v940 = vunpack.c.l.b16 %v309
  %v941 = vunpack.c.l.b16 %v323
  %v942 = vunpack.c.l.b16 %v333
  %v943 = vunpack.c.l.b16 %v347
  %v944 = vunpack.c.l.b16 %v357
  %v945 = vunpack.c.l.b16 %v371
  %v946 = vunpack.c.l.b16 %v381
  %v947 = vunpack.c.l.b16 %v395
  %v948 = vunpack.c.l.b16 %v405
  %v949 = vunpack.c.l.b16 %v419
  %v950 = vunpack.c.l.b16 %v429
  %v951 = vunpack.c.l.b16 %v443
  %v952 = vunpack.c.l.b16 %v453
  %v953 = vunpack.c.l.b16 %v467
  %v954 = vunpack.c.l.b16 %v477
  %v955 = vunpack.c.l.b16 %v491
  %v956 = vunpack.c.l.b16 %v501
  %v957 = vunpack.c.l.b16 %v515
  %v958 = vunpack.c.l.b16 %v525
  %v959 = vunpack.c.l.b16 %v539
  %v960 = vunpack.c.l.b16 %v549
  %v961 = vunpack.c.l.b16 %v563
  %v962 = vunpack.c.l.b16 %v573
  %v963 = vunpack.c.l.b16 %v587
  %v964 = vunpack.c.l.b16 %v597
  %v965 = vunpack.c.l.b16 %v611
  %v966 = vunpack.c.l.b16 %v621
  %v967 = vunpack.c.l.b16 %v635
  %v968 = vunpack.c.l.b16 %v645
  %v969 = vunpack.c.l.b16 %v659
  %v970 = vunpack.c.l.b16 %v669
  %v971 = vunpack.c.l.b16 %v683
  %v972 = vunpack.c.l.b16 %v693
  %v973 = vunpack.c.l.b16 %v707
  %v974 = vunpack.c.l.b16 %v717
  %v975 = vunpack.c.l.b16 %v731
  %v976 = vunpack.c.l.b16 %v741
  %v977 = vunpack.c.l.b16 %v755
  %v978 = vunpack.c.l.b16 %v765
  %v979 = vunpack.c.l.b16 %v779
  %v980 = vunpack.c.l.b16 %v789
  %v981 = vunpack.c.l.b16 %v803
  %v982 = vunpack.c.l.b16 %v813
  %v983 = vunpack.c.l.b16 %v827
  %v984 = vunpack.c.l.b16 %v837
  %v985 = vunpack.c.l.b16 %v851
  %v986 = vunpack.c.l.b16 %v861
  %v987 = vunpack.c.l.b16 %v875
  %v988 = vunpack.c.l.b16 %v885
  %v989 = vunpack.c.l.b16 %v899
  %v990 = vunpack.c.l.b16 %v909
  %v991 = vpack.c.b16 %v928, %v927
  %v992 = vpack.c.b16 %v930, %v929
  %v993 = vpack.c.b16 %v932, %v931
  %v994 = vpack.c.b16 %v934, %v933
  %v995 = vpack.c.b16 %v936, %v935
  %v996 = vpack.c.b16 %v938, %v937
  %v997 = vpack.c.b16 %v940, %v939
  %v998 = vpack.c.b16 %v942, %v941
  %v999 = vpack.c.b16 %v944, %v943
  %v1000 = vpack.c.b16 %v946, %v945
  %v1001 = vpack.c.b16 %v948, %v947
  %v1002 = vpack.c.b16 %v950, %v949
  %v1003 = vpack.c.b16 %v952, %v951
  %v1004 = vpack.c.b16 %v954, %v953
  %v1005 = vpack.c.b16 %v956, %v955
  %v1006 = vpack.c.b16 %v958, %v957
  %v1007 = vpack.c.b16 %v960, %v959
  %v1008 = vpack.c.b16 %v962, %v961
  %v1009 = vpack.c.b16 %v964, %v963
  %v1010 = vpack.c.b16 %v966, %v965
  %v1011 = vpack.c.b16 %v968, %v967
  %v1012 = vpack.c.b16 %v970, %v969
  %v1013 = vpack.c.b16 %v972, %v971
  %v1014 = vpack.c.b16 %v974, %v973
  %v1015 = vpack.c.b16 %v976, %v975
  %v1016 = vpack.c.b16 %v978, %v977
  %v1017 = vpack.c.b16 %v980, %v979
  %v1018 = vpack.c.b16 %v982, %v981
  %v1019 = vpack.c.b16 %v984, %v983
  %v1020 = vpack.c.b16 %v986, %v985
  %v1021 = vpack.c.b16 %v988, %v987
  %v1022 = vpack.c.b16 %v990, %v989
  %v1071 = vunpack.c.l.b16 %v911
  %v1072 = vunpack.c.l.b16 %v912
  %v1073 = vunpack.c.l.b16 %v913
  %v1074 = vunpack.c.l.b16 %v914
  %v1075 = vunpack.c.l.b16 %v915
  %v1076 = vunpack.c.l.b16 %v916
  %v1077 = vunpack.c.l.b16 %v917
  %v1078 = vunpack.c.l.b16 %v918
  %v1079 = vunpack.c.l.b16 %v919
  %v1080 = vunpack.c.l.b16 %v920
  %v1081 = vunpack.c.l.b16 %v921
  %v1082 = vunpack.c.l.b16 %v922
  %v1083 = vunpack.c.l.b16 %v923
  %v1084 = vunpack.c.l.b16 %v924
  %v1085 = vunpack.c.l.b16 %v925
  %v1086 = vunpack.c.l.b16 %v926
  %v1087 = vpack.c.b16 %v1072, %v1071
  %v1088 = vpack.c.b16 %v1074, %v1073
  %v1089 = vpack.c.b16 %v1076, %v1075
  %v1090 = vpack.c.b16 %v1078, %v1077
  %v1091 = vpack.c.b16 %v1080, %v1079
  %v1092 = vpack.c.b16 %v1082, %v1081
  %v1093 = vpack.c.b16 %v1084, %v1083
  %v1094 = vpack.c.b16 %v1086, %v1085
  %1103 = vmatprep.subr.bf16.mxu0 0
  %1104 = vmatpush1.bf16.msra.mxu0 %v1094
  %1105 = vmatprep.subr.bf16.mxu0 0
  %1106 = vmatpush1.bf16.msra.mxu0 %v1093
  %1107 = vmatprep.subr.bf16.mxu0 0
  %1108 = vmatpush1.bf16.msra.mxu0 %v1092
  %1109 = vmatprep.subr.bf16.mxu0 0
  %1110 = vmatpush1.bf16.msra.mxu0 %v1091
  %1111 = vmatprep.subr.bf16.mxu0 0
  %1112 = vmatpush1.bf16.msra.mxu0 %v1090
  %1113 = vmatprep.subr.bf16.mxu0 0
  %1114 = vmatpush1.bf16.msra.mxu0 %v1089
  %1115 = vmatprep.subr.bf16.mxu0 0
  %1116 = vmatpush1.bf16.msra.mxu0 %v1088
  %1117 = vmatprep.subr.bf16.mxu0 0
  %1118 = vmatpush1.bf16.msra.mxu0 %v1087
  %1119 = vmatprep.subr.bf16.mxu0 0
  %1120 = vmatpush2.bf16.msra.mxu0 0
  %1121 = vmatprep.subr.bf16.mxu0 0
  %1122 = vmatpush2.bf16.msra.mxu0 0
  %1123 = vmatprep.subr.bf16.mxu0 0
  %1124 = vmatpush2.bf16.msra.mxu0 0
  %1125 = vmatprep.subr.bf16.mxu0 0
  %1126 = vmatpush2.bf16.msra.mxu0 0
  %1127 = vmatprep.subr.bf16.mxu0 0
  %1128 = vmatpush2.bf16.msra.mxu0 0
  %1129 = vmatprep.subr.bf16.mxu0 0
  %1130 = vmatpush2.bf16.msra.mxu0 0
  %1131 = vmatprep.subr.bf16.mxu0 0
  %1132 = vmatpush2.bf16.msra.mxu0 0
  %1133 = vmatprep.subr.bf16.mxu0 0
  %1134 = vmatpush2.bf16.msra.mxu0 0
  %1135 = vmatprep.mubr.bf16.mxu0 0
  %1136 = vmatmul.mubr.bf16.gmra.mxu0 %v991
  %v1137 = vpop.f32.mrf.mxu0
  %v1138 = vadd.f32 0.0, %v1137
  %v1139 = vpop.f32.mrf.mxu0
  %v1140 = vpop.f32.mrf.mxu0
  %v1141 = vadd.f32 0.0, %v1140
  %v1142 = vpop.f32.mrf.mxu0
  %1143 = vmatprep.mubr.bf16.mxu0 0
  %1144 = vmatmul.mubr.bf16.gmra.mxu0 %v992
  %v1145 = vpop.f32.mrf.mxu0
  %v1146 = vadd.f32 0.0, %v1145
  %v1147 = vpop.f32.mrf.mxu0
  %v1148 = vpop.f32.mrf.mxu0
  %v1149 = vadd.f32 0.0, %v1148
  %v1150 = vpop.f32.mrf.mxu0
  %1151 = vmatprep.mubr.bf16.mxu0 0
  %1152 = vmatmul.mubr.bf16.gmra.mxu0 %v993
  %v1153 = vpop.f32.mrf.mxu0
  %v1154 = vadd.f32 0.0, %v1153
  %v1155 = vpop.f32.mrf.mxu0
  %v1156 = vpop.f32.mrf.mxu0
  %v1157 = vadd.f32 0.0, %v1156
  %v1158 = vpop.f32.mrf.mxu0
  %1159 = vmatprep.mubr.bf16.mxu0 0
  %1160 = vmatmul.mubr.bf16.gmra.mxu0 %v994
  %v1161 = vpop.f32.mrf.mxu0
  %v1162 = vadd.f32 0.0, %v1161
  %v1163 = vpop.f32.mrf.mxu0
  %v1164 = vpop.f32.mrf.mxu0
  %v1165 = vadd.f32 0.0, %v1164
  %v1166 = vpop.f32.mrf.mxu0
  %1167 = vmatprep.mubr.bf16.mxu0 0
  %1168 = vmatmul.mubr.bf16.gmra.mxu0 %v995
  %v1169 = vpop.f32.mrf.mxu0
  %v1170 = vadd.f32 0.0, %v1169
  %v1171 = vpop.f32.mrf.mxu0
  %v1172 = vpop.f32.mrf.mxu0
  %v1173 = vadd.f32 0.0, %v1172
  %v1174 = vpop.f32.mrf.mxu0
  %1175 = vmatprep.mubr.bf16.mxu0 0
  %1176 = vmatmul.mubr.bf16.gmra.mxu0 %v996
  %v1177 = vpop.f32.mrf.mxu0
  %v1178 = vadd.f32 0.0, %v1177
  %v1179 = vpop.f32.mrf.mxu0
  %v1180 = vpop.f32.mrf.mxu0
  %v1181 = vadd.f32 0.0, %v1180
  %v1182 = vpop.f32.mrf.mxu0
  %1183 = vmatprep.mubr.bf16.mxu0 0
  %1184 = vmatmul.mubr.bf16.gmra.mxu0 %v997
  %v1185 = vpop.f32.mrf.mxu0
  %v1186 = vadd.f32 0.0, %v1185
  %v1187 = vpop.f32.mrf.mxu0
  %v1188 = vpop.f32.mrf.mxu0
  %v1189 = vadd.f32 0.0, %v1188
  %v1190 = vpop.f32.mrf.mxu0
  %1191 = vmatprep.mubr.bf16.mxu0 0
  %1192 = vmatmul.mubr.bf16.gmra.mxu0 %v998
  %v1193 = vpop.f32.mrf.mxu0
  %v1194 = vadd.f32 0.0, %v1193
  %v1195 = vpop.f32.mrf.mxu0
  %v1196 = vpop.f32.mrf.mxu0
  %v1197 = vadd.f32 0.0, %v1196
  %v1198 = vpop.f32.mrf.mxu0
  %1199 = vmatprep.mubr.bf16.mxu0 0
  %1200 = vmatmul.mubr.bf16.gmra.mxu0 %v999
  %v1201 = vpop.f32.mrf.mxu0
  %v1202 = vadd.f32 0.0, %v1201
  %v1203 = vpop.f32.mrf.mxu0
  %v1204 = vpop.f32.mrf.mxu0
  %v1205 = vadd.f32 0.0, %v1204
  %v1206 = vpop.f32.mrf.mxu0
  %1207 = vmatprep.mubr.bf16.mxu0 0
  %1208 = vmatmul.mubr.bf16.gmra.mxu0 %v1000
  %v1209 = vpop.f32.mrf.mxu0
  %v1210 = vadd.f32 0.0, %v1209
  %v1211 = vpop.f32.mrf.mxu0
  %v1212 = vpop.f32.mrf.mxu0
  %v1213 = vadd.f32 0.0, %v1212
  %v1214 = vpop.f32.mrf.mxu0
  %1215 = vmatprep.mubr.bf16.mxu0 0
  %1216 = vmatmul.mubr.bf16.gmra.mxu0 %v1001
  %v1217 = vpop.f32.mrf.mxu0
  %v1218 = vadd.f32 0.0, %v1217
  %v1219 = vpop.f32.mrf.mxu0
  %v1220 = vpop.f32.mrf.mxu0
  %v1221 = vadd.f32 0.0, %v1220
  %v1222 = vpop.f32.mrf.mxu0
  %1223 = vmatprep.mubr.bf16.mxu0 0
  %1224 = vmatmul.mubr.bf16.gmra.mxu0 %v1002
  %v1225 = vpop.f32.mrf.mxu0
  %v1226 = vadd.f32 0.0, %v1225
  %v1227 = vpop.f32.mrf.mxu0
  %v1228 = vpop.f32.mrf.mxu0
  %v1229 = vadd.f32 0.0, %v1228
  %v1230 = vpop.f32.mrf.mxu0
  %1231 = vmatprep.mubr.bf16.mxu0 0
  %1232 = vmatmul.mubr.bf16.gmra.mxu0 %v1003
  %v1233 = vpop.f32.mrf.mxu0
  %v1234 = vadd.f32 0.0, %v1233
  %v1235 = vpop.f32.mrf.mxu0
  %v1236 = vpop.f32.mrf.mxu0
  %v1237 = vadd.f32 0.0, %v1236
  %v1238 = vpop.f32.mrf.mxu0
  %1239 = vmatprep.mubr.bf16.mxu0 0
  %1240 = vmatmul.mubr.bf16.gmra.mxu0 %v1004
  %v1241 = vpop.f32.mrf.mxu0
  %v1242 = vadd.f32 0.0, %v1241
  %v1243 = vpop.f32.mrf.mxu0
  %v1244 = vpop.f32.mrf.mxu0
  %v1245 = vadd.f32 0.0, %v1244
  %v1246 = vpop.f32.mrf.mxu0
  %1247 = vmatprep.mubr.bf16.mxu0 0
  %1248 = vmatmul.mubr.bf16.gmra.mxu0 %v1005
  %v1249 = vpop.f32.mrf.mxu0
  %v1250 = vadd.f32 0.0, %v1249
  %v1251 = vpop.f32.mrf.mxu0
  %v1252 = vpop.f32.mrf.mxu0
  %v1253 = vadd.f32 0.0, %v1252
  %v1254 = vpop.f32.mrf.mxu0
  %1255 = vmatprep.mubr.bf16.mxu0 0
  %1256 = vmatmul.mubr.bf16.gmra.mxu0 %v1006
  %v1257 = vpop.f32.mrf.mxu0
  %v1258 = vadd.f32 0.0, %v1257
  %v1259 = vpop.f32.mrf.mxu0
  %v1260 = vpop.f32.mrf.mxu0
  %v1261 = vadd.f32 0.0, %v1260
  %v1262 = vpop.f32.mrf.mxu0
  %1263 = vmatprep.mubr.bf16.mxu0 0
  %1264 = vmatmul.mubr.bf16.gmra.mxu0 %v1007
  %v1265 = vpop.f32.mrf.mxu0
  %v1266 = vadd.f32 0.0, %v1265
  %v1267 = vpop.f32.mrf.mxu0
  %v1268 = vpop.f32.mrf.mxu0
  %v1269 = vadd.f32 0.0, %v1268
  %v1270 = vpop.f32.mrf.mxu0
  %1271 = vmatprep.mubr.bf16.mxu0 0
  %1272 = vmatmul.mubr.bf16.gmra.mxu0 %v1008
  %v1273 = vpop.f32.mrf.mxu0
  %v1274 = vadd.f32 0.0, %v1273
  %v1275 = vpop.f32.mrf.mxu0
  %v1276 = vpop.f32.mrf.mxu0
  %v1277 = vadd.f32 0.0, %v1276
  %v1278 = vpop.f32.mrf.mxu0
  %1279 = vmatprep.mubr.bf16.mxu0 0
  %1280 = vmatmul.mubr.bf16.gmra.mxu0 %v1009
  %v1281 = vpop.f32.mrf.mxu0
  %v1282 = vadd.f32 0.0, %v1281
  %v1283 = vpop.f32.mrf.mxu0
  %v1284 = vpop.f32.mrf.mxu0
  %v1285 = vadd.f32 0.0, %v1284
  %v1286 = vpop.f32.mrf.mxu0
  %1287 = vmatprep.mubr.bf16.mxu0 0
  %1288 = vmatmul.mubr.bf16.gmra.mxu0 %v1010
  %v1289 = vpop.f32.mrf.mxu0
  %v1290 = vadd.f32 0.0, %v1289
  %v1291 = vpop.f32.mrf.mxu0
  %v1292 = vpop.f32.mrf.mxu0
  %v1293 = vadd.f32 0.0, %v1292
  %v1294 = vpop.f32.mrf.mxu0
  %1295 = vmatprep.mubr.bf16.mxu0 0
  %1296 = vmatmul.mubr.bf16.gmra.mxu0 %v1011
  %v1297 = vpop.f32.mrf.mxu0
  %v1298 = vadd.f32 0.0, %v1297
  %v1299 = vpop.f32.mrf.mxu0
  %v1300 = vpop.f32.mrf.mxu0
  %v1301 = vadd.f32 0.0, %v1300
  %v1302 = vpop.f32.mrf.mxu0
  %1303 = vmatprep.mubr.bf16.mxu0 0
  %1304 = vmatmul.mubr.bf16.gmra.mxu0 %v1012
  %v1305 = vpop.f32.mrf.mxu0
  %v1306 = vadd.f32 0.0, %v1305
  %v1307 = vpop.f32.mrf.mxu0
  %v1308 = vpop.f32.mrf.mxu0
  %v1309 = vadd.f32 0.0, %v1308
  %v1310 = vpop.f32.mrf.mxu0
  %1311 = vmatprep.mubr.bf16.mxu0 0
  %1312 = vmatmul.mubr.bf16.gmra.mxu0 %v1013
  %v1313 = vpop.f32.mrf.mxu0
  %v1314 = vadd.f32 0.0, %v1313
  %v1315 = vpop.f32.mrf.mxu0
  %v1316 = vpop.f32.mrf.mxu0
  %v1317 = vadd.f32 0.0, %v1316
  %v1318 = vpop.f32.mrf.mxu0
  %1319 = vmatprep.mubr.bf16.mxu0 0
  %1320 = vmatmul.mubr.bf16.gmra.mxu0 %v1014
  %v1321 = vpop.f32.mrf.mxu0
  %v1322 = vadd.f32 0.0, %v1321
  %v1323 = vpop.f32.mrf.mxu0
  %v1324 = vpop.f32.mrf.mxu0
  %v1325 = vadd.f32 0.0, %v1324
  %v1326 = vpop.f32.mrf.mxu0
  %1327 = vmatprep.mubr.bf16.mxu0 0
  %1328 = vmatmul.mubr.bf16.gmra.mxu0 %v1015
  %v1329 = vpop.f32.mrf.mxu0
  %v1330 = vadd.f32 0.0, %v1329
  %v1331 = vpop.f32.mrf.mxu0
  %v1332 = vpop.f32.mrf.mxu0
  %v1333 = vadd.f32 0.0, %v1332
  %v1334 = vpop.f32.mrf.mxu0
  %1335 = vmatprep.mubr.bf16.mxu0 0
  %1336 = vmatmul.mubr.bf16.gmra.mxu0 %v1016
  %v1337 = vpop.f32.mrf.mxu0
  %v1338 = vadd.f32 0.0, %v1337
  %v1339 = vpop.f32.mrf.mxu0
  %v1340 = vpop.f32.mrf.mxu0
  %v1341 = vadd.f32 0.0, %v1340
  %v1342 = vpop.f32.mrf.mxu0
  %1343 = vmatprep.mubr.bf16.mxu0 0
  %1344 = vmatmul.mubr.bf16.gmra.mxu0 %v1017
  %v1345 = vpop.f32.mrf.mxu0
  %v1346 = vadd.f32 0.0, %v1345
  %v1347 = vpop.f32.mrf.mxu0
  %v1348 = vpop.f32.mrf.mxu0
  %v1349 = vadd.f32 0.0, %v1348
  %v1350 = vpop.f32.mrf.mxu0
  %1351 = vmatprep.mubr.bf16.mxu0 0
  %1352 = vmatmul.mubr.bf16.gmra.mxu0 %v1018
  %v1353 = vpop.f32.mrf.mxu0
  %v1354 = vadd.f32 0.0, %v1353
  %v1355 = vpop.f32.mrf.mxu0
  %v1356 = vpop.f32.mrf.mxu0
  %v1357 = vadd.f32 0.0, %v1356
  %v1358 = vpop.f32.mrf.mxu0
  %1359 = vmatprep.mubr.bf16.mxu0 0
  %1360 = vmatmul.mubr.bf16.gmra.mxu0 %v1019
  %v1361 = vpop.f32.mrf.mxu0
  %v1362 = vadd.f32 0.0, %v1361
  %v1363 = vpop.f32.mrf.mxu0
  %v1364 = vpop.f32.mrf.mxu0
  %v1365 = vadd.f32 0.0, %v1364
  %v1366 = vpop.f32.mrf.mxu0
  %1367 = vmatprep.mubr.bf16.mxu0 0
  %1368 = vmatmul.mubr.bf16.gmra.mxu0 %v1020
  %v1369 = vpop.f32.mrf.mxu0
  %v1370 = vadd.f32 0.0, %v1369
  %v1371 = vpop.f32.mrf.mxu0
  %v1372 = vpop.f32.mrf.mxu0
  %v1373 = vadd.f32 0.0, %v1372
  %v1374 = vpop.f32.mrf.mxu0
  %1375 = vmatprep.mubr.bf16.mxu0 0
  %1376 = vmatmul.mubr.bf16.gmra.mxu0 %v1021
  %v1377 = vpop.f32.mrf.mxu0
  %v1378 = vadd.f32 0.0, %v1377
  %v1379 = vpop.f32.mrf.mxu0
  %v1380 = vpop.f32.mrf.mxu0
  %v1381 = vadd.f32 0.0, %v1380
  %v1382 = vpop.f32.mrf.mxu0
  %1383 = vmatprep.mubr.bf16.mxu0 0
  %1384 = vmatmul.mubr.bf16.gmra.mxu0 %v1022
  %v1385 = vpop.f32.mrf.mxu0
  %v1386 = vadd.f32 0.0, %v1385
  %v1387 = vpop.f32.mrf.mxu0
  %v1388 = vpop.f32.mrf.mxu0
  %v1389 = vadd.f32 0.0, %v1388
  %v1390 = vpop.f32.mrf.mxu0
  %1391 = vdwg.mxu0
  %v1456 = vunpack.c.l.b16 %v15
  %v1457 = vunpack.c.l.b16 %v16
  %v1458 = vunpack.c.l.b16 %v18
  %v1459 = vunpack.c.l.b16 %v19
  %v1460 = vunpack.c.l.b16 %v21
  %v1461 = vunpack.c.l.b16 %v22
  %v1462 = vunpack.c.l.b16 %v24
  %v1463 = vunpack.c.l.b16 %v25
  %v1464 = vunpack.c.l.b16 %v27
  %v1465 = vunpack.c.l.b16 %v28
  %v1466 = vunpack.c.l.b16 %v30
  %v1467 = vunpack.c.l.b16 %v31
  %v1468 = vunpack.c.l.b16 %v33
  %v1469 = vunpack.c.l.b16 %v34
  %v1470 = vunpack.c.l.b16 %v36
  %v1471 = vunpack.c.l.b16 %v37
  %v1472 = vunpack.c.l.b16 %v39
  %v1473 = vunpack.c.l.b16 %v40
  %v1474 = vunpack.c.l.b16 %v42
  %v1475 = vunpack.c.l.b16 %v43
  %v1476 = vunpack.c.l.b16 %v45
  %v1477 = vunpack.c.l.b16 %v46
  %v1478 = vunpack.c.l.b16 %v48
  %v1479 = vunpack.c.l.b16 %v49
  %v1480 = vunpack.c.l.b16 %v51
  %v1481 = vunpack.c.l.b16 %v52
  %v1482 = vunpack.c.l.b16 %v54
  %v1483 = vunpack.c.l.b16 %v55
  %v1484 = vunpack.c.l.b16 %v57
  %v1485 = vunpack.c.l.b16 %v58
  %v1486 = vunpack.c.l.b16 %v60
  %v1487 = vunpack.c.l.b16 %v61
  %v1488 = vunpack.c.l.b16 %v69
  %v1489 = vunpack.c.l.b16 %v70
  %v1490 = vunpack.c.l.b16 %v72
  %v1491 = vunpack.c.l.b16 %v73
  %v1492 = vunpack.c.l.b16 %v75
  %v1493 = vunpack.c.l.b16 %v76
  %v1494 = vunpack.c.l.b16 %v78
  %v1495 = vunpack.c.l.b16 %v79
  %v1496 = vunpack.c.l.b16 %v81
  %v1497 = vunpack.c.l.b16 %v82
  %v1498 = vunpack.c.l.b16 %v84
  %v1499 = vunpack.c.l.b16 %v85
  %v1500 = vunpack.c.l.b16 %v87
  %v1501 = vunpack.c.l.b16 %v88
  %v1502 = vunpack.c.l.b16 %v90
  %v1503 = vunpack.c.l.b16 %v91
  %v1504 = vunpack.c.l.b16 %v93
  %v1505 = vunpack.c.l.b16 %v94
  %v1506 = vunpack.c.l.b16 %v96
  %v1507 = vunpack.c.l.b16 %v97
  %v1508 = vunpack.c.l.b16 %v99
  %v1509 = vunpack.c.l.b16 %v100
  %v1510 = vunpack.c.l.b16 %v102
  %v1511 = vunpack.c.l.b16 %v103
  %v1512 = vunpack.c.l.b16 %v105
  %v1513 = vunpack.c.l.b16 %v106
  %v1514 = vunpack.c.l.b16 %v108
  %v1515 = vunpack.c.l.b16 %v109
  %v1516 = vunpack.c.l.b16 %v111
  %v1517 = vunpack.c.l.b16 %v112
  %v1518 = vunpack.c.l.b16 %v114
  %v1519 = vunpack.c.l.b16 %v115
  %v1520 = vpack.c.b16 %v1457, %v1456
  %v1521 = vpack.c.b16 %v1459, %v1458
  %v1522 = vpack.c.b16 %v1461, %v1460
  %v1523 = vpack.c.b16 %v1463, %v1462
  %v1524 = vpack.c.b16 %v1465, %v1464
  %v1525 = vpack.c.b16 %v1467, %v1466
  %v1526 = vpack.c.b16 %v1469, %v1468
  %v1527 = vpack.c.b16 %v1471, %v1470
  %v1528 = vpack.c.b16 %v1473, %v1472
  %v1529 = vpack.c.b16 %v1475, %v1474
  %v1530 = vpack.c.b16 %v1477, %v1476
  %v1531 = vpack.c.b16 %v1479, %v1478
  %v1532 = vpack.c.b16 %v1481, %v1480
  %v1533 = vpack.c.b16 %v1483, %v1482
  %v1534 = vpack.c.b16 %v1485, %v1484
  %v1535 = vpack.c.b16 %v1487, %v1486
  %v1536 = vpack.c.b16 %v1489, %v1488
  %v1537 = vpack.c.b16 %v1491, %v1490
  %v1538 = vpack.c.b16 %v1493, %v1492
  %v1539 = vpack.c.b16 %v1495, %v1494
  %v1540 = vpack.c.b16 %v1497, %v1496
  %v1541 = vpack.c.b16 %v1499, %v1498
  %v1542 = vpack.c.b16 %v1501, %v1500
  %v1543 = vpack.c.b16 %v1503, %v1502
  %v1544 = vpack.c.b16 %v1505, %v1504
  %v1545 = vpack.c.b16 %v1507, %v1506
  %v1546 = vpack.c.b16 %v1509, %v1508
  %v1547 = vpack.c.b16 %v1511, %v1510
  %v1548 = vpack.c.b16 %v1513, %v1512
  %v1549 = vpack.c.b16 %v1515, %v1514
  %v1550 = vpack.c.b16 %v1517, %v1516
  %v1551 = vpack.c.b16 %v1519, %v1518
  %v1600 = vunpack.c.l.b16 %v123
  %v1601 = vunpack.c.l.b16 %v124
  %v1602 = vunpack.c.l.b16 %v125
  %v1603 = vunpack.c.l.b16 %v126
  %v1604 = vunpack.c.l.b16 %v127
  %v1605 = vunpack.c.l.b16 %v128
  %v1606 = vunpack.c.l.b16 %v129
  %v1607 = vunpack.c.l.b16 %v130
  %v1608 = vunpack.c.l.b16 %v131
  %v1609 = vunpack.c.l.b16 %v132
  %v1610 = vunpack.c.l.b16 %v133
  %v1611 = vunpack.c.l.b16 %v134
  %v1612 = vunpack.c.l.b16 %v135
  %v1613 = vunpack.c.l.b16 %v136
  %v1614 = vunpack.c.l.b16 %v137
  %v1615 = vunpack.c.l.b16 %v138
  %v1616 = vpack.c.b16 %v1601, %v1600
  %v1617 = vpack.c.b16 %v1603, %v1602
  %v1618 = vpack.c.b16 %v1605, %v1604
  %v1619 = vpack.c.b16 %v1607, %v1606
  %v1620 = vpack.c.b16 %v1609, %v1608
  %v1621 = vpack.c.b16 %v1611, %v1610
  %v1622 = vpack.c.b16 %v1613, %v1612
  %v1623 = vpack.c.b16 %v1615, %v1614
  %1632 = vmatprep.subr.bf16.mxu0 0
  %1633 = vmatpush1.bf16.msra.mxu0 %v1623
  %1634 = vmatprep.subr.bf16.mxu0 0
  %1635 = vmatpush1.bf16.msra.mxu0 %v1622
  %1636 = vmatprep.subr.bf16.mxu0 0
  %1637 = vmatpush1.bf16.msra.mxu0 %v1621
  %1638 = vmatprep.subr.bf16.mxu0 0
  %1639 = vmatpush1.bf16.msra.mxu0 %v1620
  %1640 = vmatprep.subr.bf16.mxu0 0
  %1641 = vmatpush1.bf16.msra.mxu0 %v1619
  %1642 = vmatprep.subr.bf16.mxu0 0
  %1643 = vmatpush1.bf16.msra.mxu0 %v1618
  %1644 = vmatprep.subr.bf16.mxu0 0
  %1645 = vmatpush1.bf16.msra.mxu0 %v1617
  %1646 = vmatprep.subr.bf16.mxu0 0
  %1647 = vmatpush1.bf16.msra.mxu0 %v1616
  %1648 = vmatprep.subr.bf16.mxu0 0
  %1649 = vmatpush2.bf16.msra.mxu0 0
  %1650 = vmatprep.subr.bf16.mxu0 0
  %1651 = vmatpush2.bf16.msra.mxu0 0
  %1652 = vmatprep.subr.bf16.mxu0 0
  %1653 = vmatpush2.bf16.msra.mxu0 0
  %1654 = vmatprep.subr.bf16.mxu0 0
  %1655 = vmatpush2.bf16.msra.mxu0 0
  %1656 = vmatprep.subr.bf16.mxu0 0
  %1657 = vmatpush2.bf16.msra.mxu0 0
  %1658 = vmatprep.subr.bf16.mxu0 0
  %1659 = vmatpush2.bf16.msra.mxu0 0
  %1660 = vmatprep.subr.bf16.mxu0 0
  %1661 = vmatpush2.bf16.msra.mxu0 0
  %1662 = vmatprep.subr.bf16.mxu0 0
  %1663 = vmatpush2.bf16.msra.mxu0 0
  %1664 = vmatprep.mubr.bf16.mxu0 0
  %1665 = vmatmul.mubr.bf16.gmra.mxu0 %v1520
  %v1666 = vpop.f32.mrf.mxu0
  %v1667 = vadd.f32 %v1138, %v1666
  %v1668 = vpop.f32.mrf.mxu0
  %v1669 = vpop.f32.mrf.mxu0
  %v1670 = vadd.f32 %v1141, %v1669
  %v1671 = vpop.f32.mrf.mxu0
  %1672 = vmatprep.mubr.bf16.mxu0 0
  %1673 = vmatmul.mubr.bf16.gmra.mxu0 %v1521
  %v1674 = vpop.f32.mrf.mxu0
  %v1675 = vadd.f32 %v1146, %v1674
  %v1676 = vpop.f32.mrf.mxu0
  %v1677 = vpop.f32.mrf.mxu0
  %v1678 = vadd.f32 %v1149, %v1677
  %v1679 = vpop.f32.mrf.mxu0
  %1680 = vmatprep.mubr.bf16.mxu0 0
  %1681 = vmatmul.mubr.bf16.gmra.mxu0 %v1522
  %v1682 = vpop.f32.mrf.mxu0
  %v1683 = vadd.f32 %v1154, %v1682
  %v1684 = vpop.f32.mrf.mxu0
  %v1685 = vpop.f32.mrf.mxu0
  %v1686 = vadd.f32 %v1157, %v1685
  %v1687 = vpop.f32.mrf.mxu0
  %1688 = vmatprep.mubr.bf16.mxu0 0
  %1689 = vmatmul.mubr.bf16.gmra.mxu0 %v1523
  %v1690 = vpop.f32.mrf.mxu0
  %v1691 = vadd.f32 %v1162, %v1690
  %v1692 = vpop.f32.mrf.mxu0
  %v1693 = vpop.f32.mrf.mxu0
  %v1694 = vadd.f32 %v1165, %v1693
  %v1695 = vpop.f32.mrf.mxu0
  %1696 = vmatprep.mubr.bf16.mxu0 0
  %1697 = vmatmul.mubr.bf16.gmra.mxu0 %v1524
  %v1698 = vpop.f32.mrf.mxu0
  %v1699 = vadd.f32 %v1170, %v1698
  %v1700 = vpop.f32.mrf.mxu0
  %v1701 = vpop.f32.mrf.mxu0
  %v1702 = vadd.f32 %v1173, %v1701
  %v1703 = vpop.f32.mrf.mxu0
  %1704 = vmatprep.mubr.bf16.mxu0 0
  %1705 = vmatmul.mubr.bf16.gmra.mxu0 %v1525
  %v1706 = vpop.f32.mrf.mxu0
  %v1707 = vadd.f32 %v1178, %v1706
  %v1708 = vpop.f32.mrf.mxu0
  %v1709 = vpop.f32.mrf.mxu0
  %v1710 = vadd.f32 %v1181, %v1709
  %v1711 = vpop.f32.mrf.mxu0
  %1712 = vmatprep.mubr.bf16.mxu0 0
  %1713 = vmatmul.mubr.bf16.gmra.mxu0 %v1526
  %v1714 = vpop.f32.mrf.mxu0
  %v1715 = vadd.f32 %v1186, %v1714
  %v1716 = vpop.f32.mrf.mxu0
  %v1717 = vpop.f32.mrf.mxu0
  %v1718 = vadd.f32 %v1189, %v1717
  %v1719 = vpop.f32.mrf.mxu0
  %1720 = vmatprep.mubr.bf16.mxu0 0
  %1721 = vmatmul.mubr.bf16.gmra.mxu0 %v1527
  %v1722 = vpop.f32.mrf.mxu0
  %v1723 = vadd.f32 %v1194, %v1722
  %v1724 = vpop.f32.mrf.mxu0
  %v1725 = vpop.f32.mrf.mxu0
  %v1726 = vadd.f32 %v1197, %v1725
  %v1727 = vpop.f32.mrf.mxu0
  %1728 = vmatprep.mubr.bf16.mxu0 0
  %1729 = vmatmul.mubr.bf16.gmra.mxu0 %v1528
  %v1730 = vpop.f32.mrf.mxu0
  %v1731 = vadd.f32 %v1202, %v1730
  %v1732 = vpop.f32.mrf.mxu0
  %v1733 = vpop.f32.mrf.mxu0
  %v1734 = vadd.f32 %v1205, %v1733
  %v1735 = vpop.f32.mrf.mxu0
  %1736 = vmatprep.mubr.bf16.mxu0 0
  %1737 = vmatmul.mubr.bf16.gmra.mxu0 %v1529
  %v1738 = vpop.f32.mrf.mxu0
  %v1739 = vadd.f32 %v1210, %v1738
  %v1740 = vpop.f32.mrf.mxu0
  %v1741 = vpop.f32.mrf.mxu0
  %v1742 = vadd.f32 %v1213, %v1741
  %v1743 = vpop.f32.mrf.mxu0
  %1744 = vmatprep.mubr.bf16.mxu0 0
  %1745 = vmatmul.mubr.bf16.gmra.mxu0 %v1530
  %v1746 = vpop.f32.mrf.mxu0
  %v1747 = vadd.f32 %v1218, %v1746
  %v1748 = vpop.f32.mrf.mxu0
  %v1749 = vpop.f32.mrf.mxu0
  %v1750 = vadd.f32 %v1221, %v1749
  %v1751 = vpop.f32.mrf.mxu0
  %1752 = vmatprep.mubr.bf16.mxu0 0
  %1753 = vmatmul.mubr.bf16.gmra.mxu0 %v1531
  %v1754 = vpop.f32.mrf.mxu0
  %v1755 = vadd.f32 %v1226, %v1754
  %v1756 = vpop.f32.mrf.mxu0
  %v1757 = vpop.f32.mrf.mxu0
  %v1758 = vadd.f32 %v1229, %v1757
  %v1759 = vpop.f32.mrf.mxu0
  %1760 = vmatprep.mubr.bf16.mxu0 0
  %1761 = vmatmul.mubr.bf16.gmra.mxu0 %v1532
  %v1762 = vpop.f32.mrf.mxu0
  %v1763 = vadd.f32 %v1234, %v1762
  %v1764 = vpop.f32.mrf.mxu0
  %v1765 = vpop.f32.mrf.mxu0
  %v1766 = vadd.f32 %v1237, %v1765
  %v1767 = vpop.f32.mrf.mxu0
  %1768 = vmatprep.mubr.bf16.mxu0 0
  %1769 = vmatmul.mubr.bf16.gmra.mxu0 %v1533
  %v1770 = vpop.f32.mrf.mxu0
  %v1771 = vadd.f32 %v1242, %v1770
  %v1772 = vpop.f32.mrf.mxu0
  %v1773 = vpop.f32.mrf.mxu0
  %v1774 = vadd.f32 %v1245, %v1773
  %v1775 = vpop.f32.mrf.mxu0
  %1776 = vmatprep.mubr.bf16.mxu0 0
  %1777 = vmatmul.mubr.bf16.gmra.mxu0 %v1534
  %v1778 = vpop.f32.mrf.mxu0
  %v1779 = vadd.f32 %v1250, %v1778
  %v1780 = vpop.f32.mrf.mxu0
  %v1781 = vpop.f32.mrf.mxu0
  %v1782 = vadd.f32 %v1253, %v1781
  %v1783 = vpop.f32.mrf.mxu0
  %1784 = vmatprep.mubr.bf16.mxu0 0
  %1785 = vmatmul.mubr.bf16.gmra.mxu0 %v1535
  %v1786 = vpop.f32.mrf.mxu0
  %v1787 = vadd.f32 %v1258, %v1786
  %v1788 = vpop.f32.mrf.mxu0
  %v1789 = vpop.f32.mrf.mxu0
  %v1790 = vadd.f32 %v1261, %v1789
  %v1791 = vpop.f32.mrf.mxu0
  %1792 = vmatprep.mubr.bf16.mxu0 0
  %1793 = vmatmul.mubr.bf16.gmra.mxu0 %v1536
  %v1794 = vpop.f32.mrf.mxu0
  %v1795 = vadd.f32 %v1266, %v1794
  %v1796 = vpop.f32.mrf.mxu0
  %v1797 = vpop.f32.mrf.mxu0
  %v1798 = vadd.f32 %v1269, %v1797
  %v1799 = vpop.f32.mrf.mxu0
  %1800 = vmatprep.mubr.bf16.mxu0 0
  %1801 = vmatmul.mubr.bf16.gmra.mxu0 %v1537
  %v1802 = vpop.f32.mrf.mxu0
  %v1803 = vadd.f32 %v1274, %v1802
  %v1804 = vpop.f32.mrf.mxu0
  %v1805 = vpop.f32.mrf.mxu0
  %v1806 = vadd.f32 %v1277, %v1805
  %v1807 = vpop.f32.mrf.mxu0
  %1808 = vmatprep.mubr.bf16.mxu0 0
  %1809 = vmatmul.mubr.bf16.gmra.mxu0 %v1538
  %v1810 = vpop.f32.mrf.mxu0
  %v1811 = vadd.f32 %v1282, %v1810
  %v1812 = vpop.f32.mrf.mxu0
  %v1813 = vpop.f32.mrf.mxu0
  %v1814 = vadd.f32 %v1285, %v1813
  %v1815 = vpop.f32.mrf.mxu0
  %1816 = vmatprep.mubr.bf16.mxu0 0
  %1817 = vmatmul.mubr.bf16.gmra.mxu0 %v1539
  %v1818 = vpop.f32.mrf.mxu0
  %v1819 = vadd.f32 %v1290, %v1818
  %v1820 = vpop.f32.mrf.mxu0
  %v1821 = vpop.f32.mrf.mxu0
  %v1822 = vadd.f32 %v1293, %v1821
  %v1823 = vpop.f32.mrf.mxu0
  %1824 = vmatprep.mubr.bf16.mxu0 0
  %1825 = vmatmul.mubr.bf16.gmra.mxu0 %v1540
  %v1826 = vpop.f32.mrf.mxu0
  %v1827 = vadd.f32 %v1298, %v1826
  %v1828 = vpop.f32.mrf.mxu0
  %v1829 = vpop.f32.mrf.mxu0
  %v1830 = vadd.f32 %v1301, %v1829
  %v1831 = vpop.f32.mrf.mxu0
  %1832 = vmatprep.mubr.bf16.mxu0 0
  %1833 = vmatmul.mubr.bf16.gmra.mxu0 %v1541
  %v1834 = vpop.f32.mrf.mxu0
  %v1835 = vadd.f32 %v1306, %v1834
  %v1836 = vpop.f32.mrf.mxu0
  %v1837 = vpop.f32.mrf.mxu0
  %v1838 = vadd.f32 %v1309, %v1837
  %v1839 = vpop.f32.mrf.mxu0
  %1840 = vmatprep.mubr.bf16.mxu0 0
  %1841 = vmatmul.mubr.bf16.gmra.mxu0 %v1542
  %v1842 = vpop.f32.mrf.mxu0
  %v1843 = vadd.f32 %v1314, %v1842
  %v1844 = vpop.f32.mrf.mxu0
  %v1845 = vpop.f32.mrf.mxu0
  %v1846 = vadd.f32 %v1317, %v1845
  %v1847 = vpop.f32.mrf.mxu0
  %1848 = vmatprep.mubr.bf16.mxu0 0
  %1849 = vmatmul.mubr.bf16.gmra.mxu0 %v1543
  %v1850 = vpop.f32.mrf.mxu0
  %v1851 = vadd.f32 %v1322, %v1850
  %v1852 = vpop.f32.mrf.mxu0
  %v1853 = vpop.f32.mrf.mxu0
  %v1854 = vadd.f32 %v1325, %v1853
  %v1855 = vpop.f32.mrf.mxu0
  %1856 = vmatprep.mubr.bf16.mxu0 0
  %1857 = vmatmul.mubr.bf16.gmra.mxu0 %v1544
  %v1858 = vpop.f32.mrf.mxu0
  %v1859 = vadd.f32 %v1330, %v1858
  %v1860 = vpop.f32.mrf.mxu0
  %v1861 = vpop.f32.mrf.mxu0
  %v1862 = vadd.f32 %v1333, %v1861
  %v1863 = vpop.f32.mrf.mxu0
  %1864 = vmatprep.mubr.bf16.mxu0 0
  %1865 = vmatmul.mubr.bf16.gmra.mxu0 %v1545
  %v1866 = vpop.f32.mrf.mxu0
  %v1867 = vadd.f32 %v1338, %v1866
  %v1868 = vpop.f32.mrf.mxu0
  %v1869 = vpop.f32.mrf.mxu0
  %v1870 = vadd.f32 %v1341, %v1869
  %v1871 = vpop.f32.mrf.mxu0
  %1872 = vmatprep.mubr.bf16.mxu0 0
  %1873 = vmatmul.mubr.bf16.gmra.mxu0 %v1546
  %v1874 = vpop.f32.mrf.mxu0
  %v1875 = vadd.f32 %v1346, %v1874
  %v1876 = vpop.f32.mrf.mxu0
  %v1877 = vpop.f32.mrf.mxu0
  %v1878 = vadd.f32 %v1349, %v1877
  %v1879 = vpop.f32.mrf.mxu0
  %1880 = vmatprep.mubr.bf16.mxu0 0
  %1881 = vmatmul.mubr.bf16.gmra.mxu0 %v1547
  %v1882 = vpop.f32.mrf.mxu0
  %v1883 = vadd.f32 %v1354, %v1882
  %v1884 = vpop.f32.mrf.mxu0
  %v1885 = vpop.f32.mrf.mxu0
  %v1886 = vadd.f32 %v1357, %v1885
  %v1887 = vpop.f32.mrf.mxu0
  %1888 = vmatprep.mubr.bf16.mxu0 0
  %1889 = vmatmul.mubr.bf16.gmra.mxu0 %v1548
  %v1890 = vpop.f32.mrf.mxu0
  %v1891 = vadd.f32 %v1362, %v1890
  %v1892 = vpop.f32.mrf.mxu0
  %v1893 = vpop.f32.mrf.mxu0
  %v1894 = vadd.f32 %v1365, %v1893
  %v1895 = vpop.f32.mrf.mxu0
  %1896 = vmatprep.mubr.bf16.mxu0 0
  %1897 = vmatmul.mubr.bf16.gmra.mxu0 %v1549
  %v1898 = vpop.f32.mrf.mxu0
  %v1899 = vadd.f32 %v1370, %v1898
  %v1900 = vpop.f32.mrf.mxu0
  %v1901 = vpop.f32.mrf.mxu0
  %v1902 = vadd.f32 %v1373, %v1901
  %v1903 = vpop.f32.mrf.mxu0
  %1904 = vmatprep.mubr.bf16.mxu0 0
  %1905 = vmatmul.mubr.bf16.gmra.mxu0 %v1550
  %v1906 = vpop.f32.mrf.mxu0
  %v1907 = vadd.f32 %v1378, %v1906
  %v1908 = vpop.f32.mrf.mxu0
  %v1909 = vpop.f32.mrf.mxu0
  %v1910 = vadd.f32 %v1381, %v1909
  %v1911 = vpop.f32.mrf.mxu0
  %1912 = vmatprep.mubr.bf16.mxu0 0
  %1913 = vmatmul.mubr.bf16.gmra.mxu0 %v1551
  %v1914 = vpop.f32.mrf.mxu0
  %v1915 = vadd.f32 %v1386, %v1914
  %v1916 = vpop.f32.mrf.mxu0
  %v1917 = vpop.f32.mrf.mxu0
  %v1918 = vadd.f32 %v1389, %v1917
  %v1919 = vpop.f32.mrf.mxu0
  %1920 = vdwg.mxu0
  %vm1953 = vcmask 1042432
  %vm1954 = vcmask 1046532
  %vm1955 = vmor %vm1953, %vm1954
  %v1956 = vrot.slane %v15, 5
  %v1957 = vrot.slane %v1956, 4
  %v1958 = vrot.slane %v16, 5
  %v1959 = vsel %vm1955, %v1957, %v1958
  %v1960 = vrot.slane %v1958, 4
  %v1961 = vrot.slane %v17, 5
  %v1962 = vsel %vm1955, %v1960, %v1961
  %v1963 = vrot.slane %v18, 5
  %v1964 = vrot.slane %v1963, 4
  %v1965 = vrot.slane %v19, 5
  %v1966 = vsel %vm1955, %v1964, %v1965
  %v1967 = vrot.slane %v1965, 4
  %v1968 = vrot.slane %v20, 5
  %v1969 = vsel %vm1955, %v1967, %v1968
  %v1970 = vrot.slane %v21, 5
  %v1971 = vrot.slane %v1970, 4
  %v1972 = vrot.slane %v22, 5
  %v1973 = vsel %vm1955, %v1971, %v1972
  %v1974 = vrot.slane %v1972, 4
  %v1975 = vrot.slane %v23, 5
  %v1976 = vsel %vm1955, %v1974, %v1975
  %v1977 = vrot.slane %v24, 5
  %v1978 = vrot.slane %v1977, 4
  %v1979 = vrot.slane %v25, 5
  %v1980 = vsel %vm1955, %v1978, %v1979
  %v1981 = vrot.slane %v1979, 4
  %v1982 = vrot.slane %v26, 5
  %v1983 = vsel %vm1955, %v1981, %v1982
  %v1984 = vrot.slane %v27, 5
  %v1985 = vrot.slane %v1984, 4
  %v1986 = vrot.slane %v28, 5
  %v1987 = vsel %vm1955, %v1985, %v1986
  %v1988 = vrot.slane %v1986, 4
  %v1989 = vrot.slane %v29, 5
  %v1990 = vsel %vm1955, %v1988, %v1989
  %v1991 = vrot.slane %v30, 5
  %v1992 = vrot.slane %v1991, 4
  %v1993 = vrot.slane %v31, 5
  %v1994 = vsel %vm1955, %v1992, %v1993
  %v1995 = vrot.slane %v1993, 4
  %v1996 = vrot.slane %v32, 5
  %v1997 = vsel %vm1955, %v1995, %v1996
  %v1998 = vrot.slane %v33, 5
  %v1999 = vrot.slane %v1998, 4
  %v2000 = vrot.slane %v34, 5
  %v2001 = vsel %vm1955, %v1999, %v2000
  %v2002 = vrot.slane %v2000, 4
  %v2003 = vrot.slane %v35, 5
  %v2004 = vsel %vm1955, %v2002, %v2003
  %v2005 = vrot.slane %v36, 5
  %v2006 = vrot.slane %v2005, 4
  %v2007 = vrot.slane %v37, 5
  %v2008 = vsel %vm1955, %v2006, %v2007
  %v2009 = vrot.slane %v2007, 4
  %v2010 = vrot.slane %v38, 5
  %v2011 = vsel %vm1955, %v2009, %v2010
  %v2012 = vrot.slane %v39, 5
  %v2013 = vrot.slane %v2012, 4
  %v2014 = vrot.slane %v40, 5
  %v2015 = vsel %vm1955, %v2013, %v2014
  %v2016 = vrot.slane %v2014, 4
  %v2017 = vrot.slane %v41, 5
  %v2018 = vsel %vm1955, %v2016, %v2017
  %v2019 = vrot.slane %v42, 5
  %v2020 = vrot.slane %v2019, 4
  %v2021 = vrot.slane %v43, 5
  %v2022 = vsel %vm1955, %v2020, %v2021
  %v2023 = vrot.slane %v2021, 4
  %v2024 = vrot.slane %v44, 5
  %v2025 = vsel %vm1955, %v2023, %v2024
  %v2026 = vrot.slane %v45, 5
  %v2027 = vrot.slane %v2026, 4
  %v2028 = vrot.slane %v46, 5
  %v2029 = vsel %vm1955, %v2027, %v2028
  %v2030 = vrot.slane %v2028, 4
  %v2031 = vrot.slane %v47, 5
  %v2032 = vsel %vm1955, %v2030, %v2031
  %v2033 = vrot.slane %v48, 5
  %v2034 = vrot.slane %v2033, 4
  %v2035 = vrot.slane %v49, 5
  %v2036 = vsel %vm1955, %v2034, %v2035
  %v2037 = vrot.slane %v2035, 4
  %v2038 = vrot.slane %v50, 5
  %v2039 = vsel %vm1955, %v2037, %v2038
  %v2040 = vrot.slane %v51, 5
  %v2041 = vrot.slane %v2040, 4
  %v2042 = vrot.slane %v52, 5
  %v2043 = vsel %vm1955, %v2041, %v2042
  %v2044 = vrot.slane %v2042, 4
  %v2045 = vrot.slane %v53, 5
  %v2046 = vsel %vm1955, %v2044, %v2045
  %v2047 = vrot.slane %v54, 5
  %v2048 = vrot.slane %v2047, 4
  %v2049 = vrot.slane %v55, 5
  %v2050 = vsel %vm1955, %v2048, %v2049
  %v2051 = vrot.slane %v2049, 4
  %v2052 = vrot.slane %v56, 5
  %v2053 = vsel %vm1955, %v2051, %v2052
  %v2054 = vrot.slane %v57, 5
  %v2055 = vrot.slane %v2054, 4
  %v2056 = vrot.slane %v58, 5
  %v2057 = vsel %vm1955, %v2055, %v2056
  %v2058 = vrot.slane %v2056, 4
  %v2059 = vrot.slane %v59, 5
  %v2060 = vsel %vm1955, %v2058, %v2059
  %v2061 = vrot.slane %v60, 5
  %v2062 = vrot.slane %v2061, 4
  %v2063 = vrot.slane %v61, 5
  %v2064 = vsel %vm1955, %v2062, %v2063
  %v2065 = vrot.slane %v2063, 4
  %v2066 = vrot.slane %v62, 5
  %v2067 = vsel %vm1955, %v2065, %v2066
  %v2068 = vrot.slane %v69, 5
  %v2069 = vrot.slane %v2068, 4
  %v2070 = vrot.slane %v70, 5
  %v2071 = vsel %vm1955, %v2069, %v2070
  %v2072 = vrot.slane %v2070, 4
  %v2073 = vrot.slane %v71, 5
  %v2074 = vsel %vm1955, %v2072, %v2073
  %v2075 = vrot.slane %v72, 5
  %v2076 = vrot.slane %v2075, 4
  %v2077 = vrot.slane %v73, 5
  %v2078 = vsel %vm1955, %v2076, %v2077
  %v2079 = vrot.slane %v2077, 4
  %v2080 = vrot.slane %v74, 5
  %v2081 = vsel %vm1955, %v2079, %v2080
  %v2082 = vrot.slane %v75, 5
  %v2083 = vrot.slane %v2082, 4
  %v2084 = vrot.slane %v76, 5
  %v2085 = vsel %vm1955, %v2083, %v2084
  %v2086 = vrot.slane %v2084, 4
  %v2087 = vrot.slane %v77, 5
  %v2088 = vsel %vm1955, %v2086, %v2087
  %v2089 = vrot.slane %v78, 5
  %v2090 = vrot.slane %v2089, 4
  %v2091 = vrot.slane %v79, 5
  %v2092 = vsel %vm1955, %v2090, %v2091
  %v2093 = vrot.slane %v2091, 4
  %v2094 = vrot.slane %v80, 5
  %v2095 = vsel %vm1955, %v2093, %v2094
  %v2096 = vrot.slane %v81, 5
  %v2097 = vrot.slane %v2096, 4
  %v2098 = vrot.slane %v82, 5
  %v2099 = vsel %vm1955, %v2097, %v2098
  %v2100 = vrot.slane %v2098, 4
  %v2101 = vrot.slane %v83, 5
  %v2102 = vsel %vm1955, %v2100, %v2101
  %v2103 = vrot.slane %v84, 5
  %v2104 = vrot.slane %v2103, 4
  %v2105 = vrot.slane %v85, 5
  %v2106 = vsel %vm1955, %v2104, %v2105
  %v2107 = vrot.slane %v2105, 4
  %v2108 = vrot.slane %v86, 5
  %v2109 = vsel %vm1955, %v2107, %v2108
  %v2110 = vrot.slane %v87, 5
  %v2111 = vrot.slane %v2110, 4
  %v2112 = vrot.slane %v88, 5
  %v2113 = vsel %vm1955, %v2111, %v2112
  %v2114 = vrot.slane %v2112, 4
  %v2115 = vrot.slane %v89, 5
  %v2116 = vsel %vm1955, %v2114, %v2115
  %v2117 = vrot.slane %v90, 5
  %v2118 = vrot.slane %v2117, 4
  %v2119 = vrot.slane %v91, 5
  %v2120 = vsel %vm1955, %v2118, %v2119
  %v2121 = vrot.slane %v2119, 4
  %v2122 = vrot.slane %v92, 5
  %v2123 = vsel %vm1955, %v2121, %v2122
  %v2124 = vrot.slane %v93, 5
  %v2125 = vrot.slane %v2124, 4
  %v2126 = vrot.slane %v94, 5
  %v2127 = vsel %vm1955, %v2125, %v2126
  %v2128 = vrot.slane %v2126, 4
  %v2129 = vrot.slane %v95, 5
  %v2130 = vsel %vm1955, %v2128, %v2129
  %v2131 = vrot.slane %v96, 5
  %v2132 = vrot.slane %v2131, 4
  %v2133 = vrot.slane %v97, 5
  %v2134 = vsel %vm1955, %v2132, %v2133
  %v2135 = vrot.slane %v2133, 4
  %v2136 = vrot.slane %v98, 5
  %v2137 = vsel %vm1955, %v2135, %v2136
  %v2138 = vrot.slane %v99, 5
  %v2139 = vrot.slane %v2138, 4
  %v2140 = vrot.slane %v100, 5
  %v2141 = vsel %vm1955, %v2139, %v2140
  %v2142 = vrot.slane %v2140, 4
  %v2143 = vrot.slane %v101, 5
  %v2144 = vsel %vm1955, %v2142, %v2143
  %v2145 = vrot.slane %v102, 5
  %v2146 = vrot.slane %v2145, 4
  %v2147 = vrot.slane %v103, 5
  %v2148 = vsel %vm1955, %v2146, %v2147
  %v2149 = vrot.slane %v2147, 4
  %v2150 = vrot.slane %v104, 5
  %v2151 = vsel %vm1955, %v2149, %v2150
  %v2152 = vrot.slane %v105, 5
  %v2153 = vrot.slane %v2152, 4
  %v2154 = vrot.slane %v106, 5
  %v2155 = vsel %vm1955, %v2153, %v2154
  %v2156 = vrot.slane %v2154, 4
  %v2157 = vrot.slane %v107, 5
  %v2158 = vsel %vm1955, %v2156, %v2157
  %v2159 = vrot.slane %v108, 5
  %v2160 = vrot.slane %v2159, 4
  %v2161 = vrot.slane %v109, 5
  %v2162 = vsel %vm1955, %v2160, %v2161
  %v2163 = vrot.slane %v2161, 4
  %v2164 = vrot.slane %v110, 5
  %v2165 = vsel %vm1955, %v2163, %v2164
  %v2166 = vrot.slane %v111, 5
  %v2167 = vrot.slane %v2166, 4
  %v2168 = vrot.slane %v112, 5
  %v2169 = vsel %vm1955, %v2167, %v2168
  %v2170 = vrot.slane %v2168, 4
  %v2171 = vrot.slane %v113, 5
  %v2172 = vsel %vm1955, %v2170, %v2171
  %v2173 = vrot.slane %v114, 5
  %v2174 = vrot.slane %v2173, 4
  %v2175 = vrot.slane %v115, 5
  %v2176 = vsel %vm1955, %v2174, %v2175
  %v2177 = vrot.slane %v2175, 4
  %v2178 = vrot.slane %v116, 5
  %v2179 = vsel %vm1955, %v2177, %v2178
  %s2180 = scalar_lea.vmem %s1, 128
  %v2181 = vld [vmem:[%s2180] sm:$0xf]
  %v2182 = vld [vmem:[%s2180 + $0x4] sm:$0xf]
  %v2183 = vld [vmem:[%s2180 + $0x8] sm:$0xf]
  %v2184 = vld [vmem:[%s2180 + $0xc] sm:$0xf]
  %v2185 = vld [vmem:[%s2180 + $0x10] sm:$0xf]
  %v2186 = vld [vmem:[%s2180 + $0x14] sm:$0xf]
  %v2187 = vld [vmem:[%s2180 + $0x18] sm:$0xf]
  %v2188 = vld [vmem:[%s2180 + $0x1c] sm:$0xf]
  %v2189 = vld [vmem:[%s2180 + $0x20] sm:$0xf]
  %v2190 = vld [vmem:[%s2180 + $0x24] sm:$0xf]
  %v2191 = vld [vmem:[%s2180 + $0x28] sm:$0xf]
  %v2192 = vld [vmem:[%s2180 + $0x2c] sm:$0xf]
  %v2193 = vld [vmem:[%s2180 + $0x30] sm:$0xf]
  %v2194 = vld [vmem:[%s2180 + $0x34] sm:$0xf]
  %v2195 = vld [vmem:[%s2180 + $0x38] sm:$0xf]
  %v2196 = vld [vmem:[%s2180 + $0x3c] sm:$0xf]
  %v2197 = vunpack.c.l.b16 %v1959
  %v2198 = vunpack.c.l.b16 %v1962
  %v2199 = vunpack.c.l.b16 %v1966
  %v2200 = vunpack.c.l.b16 %v1969
  %v2201 = vunpack.c.l.b16 %v1973
  %v2202 = vunpack.c.l.b16 %v1976
  %v2203 = vunpack.c.l.b16 %v1980
  %v2204 = vunpack.c.l.b16 %v1983
  %v2205 = vunpack.c.l.b16 %v1987
  %v2206 = vunpack.c.l.b16 %v1990
  %v2207 = vunpack.c.l.b16 %v1994
  %v2208 = vunpack.c.l.b16 %v1997
  %v2209 = vunpack.c.l.b16 %v2001
  %v2210 = vunpack.c.l.b16 %v2004
  %v2211 = vunpack.c.l.b16 %v2008
  %v2212 = vunpack.c.l.b16 %v2011
  %v2213 = vunpack.c.l.b16 %v2015
  %v2214 = vunpack.c.l.b16 %v2018
  %v2215 = vunpack.c.l.b16 %v2022
  %v2216 = vunpack.c.l.b16 %v2025
  %v2217 = vunpack.c.l.b16 %v2029
  %v2218 = vunpack.c.l.b16 %v2032
  %v2219 = vunpack.c.l.b16 %v2036
  %v2220 = vunpack.c.l.b16 %v2039
  %v2221 = vunpack.c.l.b16 %v2043
  %v2222 = vunpack.c.l.b16 %v2046
  %v2223 = vunpack.c.l.b16 %v2050
  %v2224 = vunpack.c.l.b16 %v2053
  %v2225 = vunpack.c.l.b16 %v2057
  %v2226 = vunpack.c.l.b16 %v2060
  %v2227 = vunpack.c.l.b16 %v2064
  %v2228 = vunpack.c.l.b16 %v2067
  %v2229 = vunpack.c.l.b16 %v2071
  %v2230 = vunpack.c.l.b16 %v2074
  %v2231 = vunpack.c.l.b16 %v2078
  %v2232 = vunpack.c.l.b16 %v2081
  %v2233 = vunpack.c.l.b16 %v2085
  %v2234 = vunpack.c.l.b16 %v2088
  %v2235 = vunpack.c.l.b16 %v2092
  %v2236 = vunpack.c.l.b16 %v2095
  %v2237 = vunpack.c.l.b16 %v2099
  %v2238 = vunpack.c.l.b16 %v2102
  %v2239 = vunpack.c.l.b16 %v2106
  %v2240 = vunpack.c.l.b16 %v2109
  %v2241 = vunpack.c.l.b16 %v2113
  %v2242 = vunpack.c.l.b16 %v2116
  %v2243 = vunpack.c.l.b16 %v2120
  %v2244 = vunpack.c.l.b16 %v2123
  %v2245 = vunpack.c.l.b16 %v2127
  %v2246 = vunpack.c.l.b16 %v2130
  %v2247 = vunpack.c.l.b16 %v2134
  %v2248 = vunpack.c.l.b16 %v2137
  %v2249 = vunpack.c.l.b16 %v2141
  %v2250 = vunpack.c.l.b16 %v2144
  %v2251 = vunpack.c.l.b16 %v2148
  %v2252 = vunpack.c.l.b16 %v2151
  %v2253 = vunpack.c.l.b16 %v2155
  %v2254 = vunpack.c.l.b16 %v2158
  %v2255 = vunpack.c.l.b16 %v2162
  %v2256 = vunpack.c.l.b16 %v2165
  %v2257 = vunpack.c.l.b16 %v2169
  %v2258 = vunpack.c.l.b16 %v2172
  %v2259 = vunpack.c.l.b16 %v2176
  %v2260 = vunpack.c.l.b16 %v2179
  %v2261 = vpack.c.b16 %v2198, %v2197
  %v2262 = vpack.c.b16 %v2200, %v2199
  %v2263 = vpack.c.b16 %v2202, %v2201
  %v2264 = vpack.c.b16 %v2204, %v2203
  %v2265 = vpack.c.b16 %v2206, %v2205
  %v2266 = vpack.c.b16 %v2208, %v2207
  %v2267 = vpack.c.b16 %v2210, %v2209
  %v2268 = vpack.c.b16 %v2212, %v2211
  %v2269 = vpack.c.b16 %v2214, %v2213
  %v2270 = vpack.c.b16 %v2216, %v2215
  %v2271 = vpack.c.b16 %v2218, %v2217
  %v2272 = vpack.c.b16 %v2220, %v2219
  %v2273 = vpack.c.b16 %v2222, %v2221
  %v2274 = vpack.c.b16 %v2224, %v2223
  %v2275 = vpack.c.b16 %v2226, %v2225
  %v2276 = vpack.c.b16 %v2228, %v2227
  %v2277 = vpack.c.b16 %v2230, %v2229
  %v2278 = vpack.c.b16 %v2232, %v2231
  %v2279 = vpack.c.b16 %v2234, %v2233
  %v2280 = vpack.c.b16 %v2236, %v2235
  %v2281 = vpack.c.b16 %v2238, %v2237
  %v2282 = vpack.c.b16 %v2240, %v2239
  %v2283 = vpack.c.b16 %v2242, %v2241
  %v2284 = vpack.c.b16 %v2244, %v2243
  %v2285 = vpack.c.b16 %v2246, %v2245
  %v2286 = vpack.c.b16 %v2248, %v2247
  %v2287 = vpack.c.b16 %v2250, %v2249
  %v2288 = vpack.c.b16 %v2252, %v2251
  %v2289 = vpack.c.b16 %v2254, %v2253
  %v2290 = vpack.c.b16 %v2256, %v2255
  %v2291 = vpack.c.b16 %v2258, %v2257
  %v2292 = vpack.c.b16 %v2260, %v2259
  %v2341 = vunpack.c.l.b16 %v2181
  %v2342 = vunpack.c.l.b16 %v2182
  %v2343 = vunpack.c.l.b16 %v2183
  %v2344 = vunpack.c.l.b16 %v2184
  %v2345 = vunpack.c.l.b16 %v2185
  %v2346 = vunpack.c.l.b16 %v2186
  %v2347 = vunpack.c.l.b16 %v2187
  %v2348 = vunpack.c.l.b16 %v2188
  %v2349 = vunpack.c.l.b16 %v2189
  %v2350 = vunpack.c.l.b16 %v2190
  %v2351 = vunpack.c.l.b16 %v2191
  %v2352 = vunpack.c.l.b16 %v2192
  %v2353 = vunpack.c.l.b16 %v2193
  %v2354 = vunpack.c.l.b16 %v2194
  %v2355 = vunpack.c.l.b16 %v2195
  %v2356 = vunpack.c.l.b16 %v2196
  %v2357 = vpack.c.b16 %v2342, %v2341
  %v2358 = vpack.c.b16 %v2344, %v2343
  %v2359 = vpack.c.b16 %v2346, %v2345
  %v2360 = vpack.c.b16 %v2348, %v2347
  %v2361 = vpack.c.b16 %v2350, %v2349
  %v2362 = vpack.c.b16 %v2352, %v2351
  %v2363 = vpack.c.b16 %v2354, %v2353
  %v2364 = vpack.c.b16 %v2356, %v2355
  %2373 = vmatprep.subr.bf16.mxu0 0
  %2374 = vmatpush1.bf16.msra.mxu0 %v2364
  %2375 = vmatprep.subr.bf16.mxu0 0
  %2376 = vmatpush1.bf16.msra.mxu0 %v2363
  %2377 = vmatprep.subr.bf16.mxu0 0
  %2378 = vmatpush1.bf16.msra.mxu0 %v2362
  %2379 = vmatprep.subr.bf16.mxu0 0
  %2380 = vmatpush1.bf16.msra.mxu0 %v2361
  %2381 = vmatprep.subr.bf16.mxu0 0
  %2382 = vmatpush1.bf16.msra.mxu0 %v2360
  %2383 = vmatprep.subr.bf16.mxu0 0
  %2384 = vmatpush1.bf16.msra.mxu0 %v2359
  %2385 = vmatprep.subr.bf16.mxu0 0
  %2386 = vmatpush1.bf16.msra.mxu0 %v2358
  %2387 = vmatprep.subr.bf16.mxu0 0
  %2388 = vmatpush1.bf16.msra.mxu0 %v2357
  %2389 = vmatprep.subr.bf16.mxu0 0
  %2390 = vmatpush2.bf16.msra.mxu0 0
  %2391 = vmatprep.subr.bf16.mxu0 0
  %2392 = vmatpush2.bf16.msra.mxu0 0
  %2393 = vmatprep.subr.bf16.mxu0 0
  %2394 = vmatpush2.bf16.msra.mxu0 0
  %2395 = vmatprep.subr.bf16.mxu0 0
  %2396 = vmatpush2.bf16.msra.mxu0 0
  %2397 = vmatprep.subr.bf16.mxu0 0
  %2398 = vmatpush2.bf16.msra.mxu0 0
  %2399 = vmatprep.subr.bf16.mxu0 0
  %2400 = vmatpush2.bf16.msra.mxu0 0
  %2401 = vmatprep.subr.bf16.mxu0 0
  %2402 = vmatpush2.bf16.msra.mxu0 0
  %2403 = vmatprep.subr.bf16.mxu0 0
  %2404 = vmatpush2.bf16.msra.mxu0 0
  %2405 = vmatprep.mubr.bf16.mxu0 0
  %2406 = vmatmul.mubr.bf16.gmra.mxu0 %v2261
  %v2407 = vpop.f32.mrf.mxu0
  %v2408 = vadd.f32 0.0, %v2407
  %v2409 = vpop.f32.mrf.mxu0
  %v2410 = vpop.f32.mrf.mxu0
  %v2411 = vadd.f32 0.0, %v2410
  %v2412 = vpop.f32.mrf.mxu0
  %2413 = vmatprep.mubr.bf16.mxu0 0
  %2414 = vmatmul.mubr.bf16.gmra.mxu0 %v2262
  %v2415 = vpop.f32.mrf.mxu0
  %v2416 = vadd.f32 0.0, %v2415
  %v2417 = vpop.f32.mrf.mxu0
  %v2418 = vpop.f32.mrf.mxu0
  %v2419 = vadd.f32 0.0, %v2418
  %v2420 = vpop.f32.mrf.mxu0
  %2421 = vmatprep.mubr.bf16.mxu0 0
  %2422 = vmatmul.mubr.bf16.gmra.mxu0 %v2263
  %v2423 = vpop.f32.mrf.mxu0
  %v2424 = vadd.f32 0.0, %v2423
  %v2425 = vpop.f32.mrf.mxu0
  %v2426 = vpop.f32.mrf.mxu0
  %v2427 = vadd.f32 0.0, %v2426
  %v2428 = vpop.f32.mrf.mxu0
  %2429 = vmatprep.mubr.bf16.mxu0 0
  %2430 = vmatmul.mubr.bf16.gmra.mxu0 %v2264
  %v2431 = vpop.f32.mrf.mxu0
  %v2432 = vadd.f32 0.0, %v2431
  %v2433 = vpop.f32.mrf.mxu0
  %v2434 = vpop.f32.mrf.mxu0
  %v2435 = vadd.f32 0.0, %v2434
  %v2436 = vpop.f32.mrf.mxu0
  %2437 = vmatprep.mubr.bf16.mxu0 0
  %2438 = vmatmul.mubr.bf16.gmra.mxu0 %v2265
  %v2439 = vpop.f32.mrf.mxu0
  %v2440 = vadd.f32 0.0, %v2439
  %v2441 = vpop.f32.mrf.mxu0
  %v2442 = vpop.f32.mrf.mxu0
  %v2443 = vadd.f32 0.0, %v2442
  %v2444 = vpop.f32.mrf.mxu0
  %2445 = vmatprep.mubr.bf16.mxu0 0
  %2446 = vmatmul.mubr.bf16.gmra.mxu0 %v2266
  %v2447 = vpop.f32.mrf.mxu0
  %v2448 = vadd.f32 0.0, %v2447
  %v2449 = vpop.f32.mrf.mxu0
  %v2450 = vpop.f32.mrf.mxu0
  %v2451 = vadd.f32 0.0, %v2450
  %v2452 = vpop.f32.mrf.mxu0
  %2453 = vmatprep.mubr.bf16.mxu0 0
  %2454 = vmatmul.mubr.bf16.gmra.mxu0 %v2267
  %v2455 = vpop.f32.mrf.mxu0
  %v2456 = vadd.f32 0.0, %v2455
  %v2457 = vpop.f32.mrf.mxu0
  %v2458 = vpop.f32.mrf.mxu0
  %v2459 = vadd.f32 0.0, %v2458
  %v2460 = vpop.f32.mrf.mxu0
  %2461 = vmatprep.mubr.bf16.mxu0 0
  %2462 = vmatmul.mubr.bf16.gmra.mxu0 %v2268
  %v2463 = vpop.f32.mrf.mxu0
  %v2464 = vadd.f32 0.0, %v2463
  %v2465 = vpop.f32.mrf.mxu0
  %v2466 = vpop.f32.mrf.mxu0
  %v2467 = vadd.f32 0.0, %v2466
  %v2468 = vpop.f32.mrf.mxu0
  %2469 = vmatprep.mubr.bf16.mxu0 0
  %2470 = vmatmul.mubr.bf16.gmra.mxu0 %v2269
  %v2471 = vpop.f32.mrf.mxu0
  %v2472 = vadd.f32 0.0, %v2471
  %v2473 = vpop.f32.mrf.mxu0
  %v2474 = vpop.f32.mrf.mxu0
  %v2475 = vadd.f32 0.0, %v2474
  %v2476 = vpop.f32.mrf.mxu0
  %2477 = vmatprep.mubr.bf16.mxu0 0
  %2478 = vmatmul.mubr.bf16.gmra.mxu0 %v2270
  %v2479 = vpop.f32.mrf.mxu0
  %v2480 = vadd.f32 0.0, %v2479
  %v2481 = vpop.f32.mrf.mxu0
  %v2482 = vpop.f32.mrf.mxu0
  %v2483 = vadd.f32 0.0, %v2482
  %v2484 = vpop.f32.mrf.mxu0
  %2485 = vmatprep.mubr.bf16.mxu0 0
  %2486 = vmatmul.mubr.bf16.gmra.mxu0 %v2271
  %v2487 = vpop.f32.mrf.mxu0
  %v2488 = vadd.f32 0.0, %v2487
  %v2489 = vpop.f32.mrf.mxu0
  %v2490 = vpop.f32.mrf.mxu0
  %v2491 = vadd.f32 0.0, %v2490
  %v2492 = vpop.f32.mrf.mxu0
  %2493 = vmatprep.mubr.bf16.mxu0 0
  %2494 = vmatmul.mubr.bf16.gmra.mxu0 %v2272
  %v2495 = vpop.f32.mrf.mxu0
  %v2496 = vadd.f32 0.0, %v2495
  %v2497 = vpop.f32.mrf.mxu0
  %v2498 = vpop.f32.mrf.mxu0
  %v2499 = vadd.f32 0.0, %v2498
  %v2500 = vpop.f32.mrf.mxu0
  %2501 = vmatprep.mubr.bf16.mxu0 0
  %2502 = vmatmul.mubr.bf16.gmra.mxu0 %v2273
  %v2503 = vpop.f32.mrf.mxu0
  %v2504 = vadd.f32 0.0, %v2503
  %v2505 = vpop.f32.mrf.mxu0
  %v2506 = vpop.f32.mrf.mxu0
  %v2507 = vadd.f32 0.0, %v2506
  %v2508 = vpop.f32.mrf.mxu0
  %2509 = vmatprep.mubr.bf16.mxu0 0
  %2510 = vmatmul.mubr.bf16.gmra.mxu0 %v2274
  %v2511 = vpop.f32.mrf.mxu0
  %v2512 = vadd.f32 0.0, %v2511
  %v2513 = vpop.f32.mrf.mxu0
  %v2514 = vpop.f32.mrf.mxu0
  %v2515 = vadd.f32 0.0, %v2514
  %v2516 = vpop.f32.mrf.mxu0
  %2517 = vmatprep.mubr.bf16.mxu0 0
  %2518 = vmatmul.mubr.bf16.gmra.mxu0 %v2275
  %v2519 = vpop.f32.mrf.mxu0
  %v2520 = vadd.f32 0.0, %v2519
  %v2521 = vpop.f32.mrf.mxu0
  %v2522 = vpop.f32.mrf.mxu0
  %v2523 = vadd.f32 0.0, %v2522
  %v2524 = vpop.f32.mrf.mxu0
  %2525 = vmatprep.mubr.bf16.mxu0 0
  %2526 = vmatmul.mubr.bf16.gmra.mxu0 %v2276
  %v2527 = vpop.f32.mrf.mxu0
  %v2528 = vadd.f32 0.0, %v2527
  %v2529 = vpop.f32.mrf.mxu0
  %v2530 = vpop.f32.mrf.mxu0
  %v2531 = vadd.f32 0.0, %v2530
  %v2532 = vpop.f32.mrf.mxu0
  %2533 = vmatprep.mubr.bf16.mxu0 0
  %2534 = vmatmul.mubr.bf16.gmra.mxu0 %v2277
  %v2535 = vpop.f32.mrf.mxu0
  %v2536 = vadd.f32 0.0, %v2535
  %v2537 = vpop.f32.mrf.mxu0
  %v2538 = vpop.f32.mrf.mxu0
  %v2539 = vadd.f32 0.0, %v2538
  %v2540 = vpop.f32.mrf.mxu0
  %2541 = vmatprep.mubr.bf16.mxu0 0
  %2542 = vmatmul.mubr.bf16.gmra.mxu0 %v2278
  %v2543 = vpop.f32.mrf.mxu0
  %v2544 = vadd.f32 0.0, %v2543
  %v2545 = vpop.f32.mrf.mxu0
  %v2546 = vpop.f32.mrf.mxu0
  %v2547 = vadd.f32 0.0, %v2546
  %v2548 = vpop.f32.mrf.mxu0
  %2549 = vmatprep.mubr.bf16.mxu0 0
  %2550 = vmatmul.mubr.bf16.gmra.mxu0 %v2279
  %v2551 = vpop.f32.mrf.mxu0
  %v2552 = vadd.f32 0.0, %v2551
  %v2553 = vpop.f32.mrf.mxu0
  %v2554 = vpop.f32.mrf.mxu0
  %v2555 = vadd.f32 0.0, %v2554
  %v2556 = vpop.f32.mrf.mxu0
  %2557 = vmatprep.mubr.bf16.mxu0 0
  %2558 = vmatmul.mubr.bf16.gmra.mxu0 %v2280
  %v2559 = vpop.f32.mrf.mxu0
  %v2560 = vadd.f32 0.0, %v2559
  %v2561 = vpop.f32.mrf.mxu0
  %v2562 = vpop.f32.mrf.mxu0
  %v2563 = vadd.f32 0.0, %v2562
  %v2564 = vpop.f32.mrf.mxu0
  %2565 = vmatprep.mubr.bf16.mxu0 0
  %2566 = vmatmul.mubr.bf16.gmra.mxu0 %v2281
  %v2567 = vpop.f32.mrf.mxu0
  %v2568 = vadd.f32 0.0, %v2567
  %v2569 = vpop.f32.mrf.mxu0
  %v2570 = vpop.f32.mrf.mxu0
  %v2571 = vadd.f32 0.0, %v2570
  %v2572 = vpop.f32.mrf.mxu0
  %2573 = vmatprep.mubr.bf16.mxu0 0
  %2574 = vmatmul.mubr.bf16.gmra.mxu0 %v2282
  %v2575 = vpop.f32.mrf.mxu0
  %v2576 = vadd.f32 0.0, %v2575
  %v2577 = vpop.f32.mrf.mxu0
  %v2578 = vpop.f32.mrf.mxu0
  %v2579 = vadd.f32 0.0, %v2578
  %v2580 = vpop.f32.mrf.mxu0
  %2581 = vmatprep.mubr.bf16.mxu0 0
  %2582 = vmatmul.mubr.bf16.gmra.mxu0 %v2283
  %v2583 = vpop.f32.mrf.mxu0
  %v2584 = vadd.f32 0.0, %v2583
  %v2585 = vpop.f32.mrf.mxu0
  %v2586 = vpop.f32.mrf.mxu0
  %v2587 = vadd.f32 0.0, %v2586
  %v2588 = vpop.f32.mrf.mxu0
  %2589 = vmatprep.mubr.bf16.mxu0 0
  %2590 = vmatmul.mubr.bf16.gmra.mxu0 %v2284
  %v2591 = vpop.f32.mrf.mxu0
  %v2592 = vadd.f32 0.0, %v2591
  %v2593 = vpop.f32.mrf.mxu0
  %v2594 = vpop.f32.mrf.mxu0
  %v2595 = vadd.f32 0.0, %v2594
  %v2596 = vpop.f32.mrf.mxu0
  %2597 = vmatprep.mubr.bf16.mxu0 0
  %2598 = vmatmul.mubr.bf16.gmra.mxu0 %v2285
  %v2599 = vpop.f32.mrf.mxu0
  %v2600 = vadd.f32 0.0, %v2599
  %v2601 = vpop.f32.mrf.mxu0
  %v2602 = vpop.f32.mrf.mxu0
  %v2603 = vadd.f32 0.0, %v2602
  %v2604 = vpop.f32.mrf.mxu0
  %2605 = vmatprep.mubr.bf16.mxu0 0
  %2606 = vmatmul.mubr.bf16.gmra.mxu0 %v2286
  %v2607 = vpop.f32.mrf.mxu0
  %v2608 = vadd.f32 0.0, %v2607
  %v2609 = vpop.f32.mrf.mxu0
  %v2610 = vpop.f32.mrf.mxu0
  %v2611 = vadd.f32 0.0, %v2610
  %v2612 = vpop.f32.mrf.mxu0
  %2613 = vmatprep.mubr.bf16.mxu0 0
  %2614 = vmatmul.mubr.bf16.gmra.mxu0 %v2287
  %v2615 = vpop.f32.mrf.mxu0
  %v2616 = vadd.f32 0.0, %v2615
  %v2617 = vpop.f32.mrf.mxu0
  %v2618 = vpop.f32.mrf.mxu0
  %v2619 = vadd.f32 0.0, %v2618
  %v2620 = vpop.f32.mrf.mxu0
  %2621 = vmatprep.mubr.bf16.mxu0 0
  %2622 = vmatmul.mubr.bf16.gmra.mxu0 %v2288
  %v2623 = vpop.f32.mrf.mxu0
  %v2624 = vadd.f32 0.0, %v2623
  %v2625 = vpop.f32.mrf.mxu0
  %v2626 = vpop.f32.mrf.mxu0
  %v2627 = vadd.f32 0.0, %v2626
  %v2628 = vpop.f32.mrf.mxu0
  %2629 = vmatprep.mubr.bf16.mxu0 0
  %2630 = vmatmul.mubr.bf16.gmra.mxu0 %v2289
  %v2631 = vpop.f32.mrf.mxu0
  %v2632 = vadd.f32 0.0, %v2631
  %v2633 = vpop.f32.mrf.mxu0
  %v2634 = vpop.f32.mrf.mxu0
  %v2635 = vadd.f32 0.0, %v2634
  %v2636 = vpop.f32.mrf.mxu0
  %2637 = vmatprep.mubr.bf16.mxu0 0
  %2638 = vmatmul.mubr.bf16.gmra.mxu0 %v2290
  %v2639 = vpop.f32.mrf.mxu0
  %v2640 = vadd.f32 0.0, %v2639
  %v2641 = vpop.f32.mrf.mxu0
  %v2642 = vpop.f32.mrf.mxu0
  %v2643 = vadd.f32 0.0, %v2642
  %v2644 = vpop.f32.mrf.mxu0
  %2645 = vmatprep.mubr.bf16.mxu0 0
  %2646 = vmatmul.mubr.bf16.gmra.mxu0 %v2291
  %v2647 = vpop.f32.mrf.mxu0
  %v2648 = vadd.f32 0.0, %v2647
  %v2649 = vpop.f32.mrf.mxu0
  %v2650 = vpop.f32.mrf.mxu0
  %v2651 = vadd.f32 0.0, %v2650
  %v2652 = vpop.f32.mrf.mxu0
  %2653 = vmatprep.mubr.bf16.mxu0 0
  %2654 = vmatmul.mubr.bf16.gmra.mxu0 %v2292
  %v2655 = vpop.f32.mrf.mxu0
  %v2656 = vadd.f32 0.0, %v2655
  %v2657 = vpop.f32.mrf.mxu0
  %v2658 = vpop.f32.mrf.mxu0
  %v2659 = vadd.f32 0.0, %v2658
  %v2660 = vpop.f32.mrf.mxu0
  %2661 = vdwg.mxu0
  %v2662 = vadd.f32 %v1667, %v2408
  %v2663 = vadd.f32 %v1670, %v2411
  %v2664 = vadd.f32 %v1675, %v2416
  %v2665 = vadd.f32 %v1678, %v2419
  %v2666 = vadd.f32 %v1683, %v2424
  %v2667 = vadd.f32 %v1686, %v2427
  %v2668 = vadd.f32 %v1691, %v2432
  %v2669 = vadd.f32 %v1694, %v2435
  %v2670 = vadd.f32 %v1699, %v2440
  %v2671 = vadd.f32 %v1702, %v2443
  %v2672 = vadd.f32 %v1707, %v2448
  %v2673 = vadd.f32 %v1710, %v2451
  %v2674 = vadd.f32 %v1715, %v2456
  %v2675 = vadd.f32 %v1718, %v2459
  %v2676 = vadd.f32 %v1723, %v2464
  %v2677 = vadd.f32 %v1726, %v2467
  %v2678 = vadd.f32 %v1731, %v2472
  %v2679 = vadd.f32 %v1734, %v2475
  %v2680 = vadd.f32 %v1739, %v2480
  %v2681 = vadd.f32 %v1742, %v2483
  %v2682 = vadd.f32 %v1747, %v2488
  %v2683 = vadd.f32 %v1750, %v2491
  %v2684 = vadd.f32 %v1755, %v2496
  %v2685 = vadd.f32 %v1758, %v2499
  %v2686 = vadd.f32 %v1763, %v2504
  %v2687 = vadd.f32 %v1766, %v2507
  %v2688 = vadd.f32 %v1771, %v2512
  %v2689 = vadd.f32 %v1774, %v2515
  %v2690 = vadd.f32 %v1779, %v2520
  %v2691 = vadd.f32 %v1782, %v2523
  %v2692 = vadd.f32 %v1787, %v2528
  %v2693 = vadd.f32 %v1790, %v2531
  %v2694 = vadd.f32 %v1795, %v2536
  %v2695 = vadd.f32 %v1798, %v2539
  %v2696 = vadd.f32 %v1803, %v2544
  %v2697 = vadd.f32 %v1806, %v2547
  %v2698 = vadd.f32 %v1811, %v2552
  %v2699 = vadd.f32 %v1814, %v2555
  %v2700 = vadd.f32 %v1819, %v2560
  %v2701 = vadd.f32 %v1822, %v2563
  %v2702 = vadd.f32 %v1827, %v2568
  %v2703 = vadd.f32 %v1830, %v2571
  %v2704 = vadd.f32 %v1835, %v2576
  %v2705 = vadd.f32 %v1838, %v2579
  %v2706 = vadd.f32 %v1843, %v2584
  %v2707 = vadd.f32 %v1846, %v2587
  %v2708 = vadd.f32 %v1851, %v2592
  %v2709 = vadd.f32 %v1854, %v2595
  %v2710 = vadd.f32 %v1859, %v2600
  %v2711 = vadd.f32 %v1862, %v2603
  %v2712 = vadd.f32 %v1867, %v2608
  %v2713 = vadd.f32 %v1870, %v2611
  %v2714 = vadd.f32 %v1875, %v2616
  %v2715 = vadd.f32 %v1878, %v2619
  %v2716 = vadd.f32 %v1883, %v2624
  %v2717 = vadd.f32 %v1886, %v2627
  %v2718 = vadd.f32 %v1891, %v2632
  %v2719 = vadd.f32 %v1894, %v2635
  %v2720 = vadd.f32 %v1899, %v2640
  %v2721 = vadd.f32 %v1902, %v2643
  %v2722 = vadd.f32 %v1907, %v2648
  %v2723 = vadd.f32 %v1910, %v2651
  %v2724 = vadd.f32 %v1915, %v2656
  %v2725 = vadd.f32 %v1918, %v2659
  %s2726 = scalar_lea.vmem %s1, 192
  %v2727 = vld [vmem:[%s2726] sm:$0xf]
  %v2728 = vld [vmem:[%s2726 + $0x4] sm:$0xf]
  %v2729 = vld [vmem:[%s2726 + $0x8] sm:$0xf]
  %v2730 = vld [vmem:[%s2726 + $0xc] sm:$0xf]
  %v2731 = vld [vmem:[%s2726 + $0x10] sm:$0xf]
  %v2732 = vld [vmem:[%s2726 + $0x14] sm:$0xf]
  %v2733 = vld [vmem:[%s2726 + $0x18] sm:$0xf]
  %v2734 = vld [vmem:[%s2726 + $0x1c] sm:$0xf]
  %v2735 = vld [vmem:[%s2726 + $0x20] sm:$0xf]
  %v2736 = vld [vmem:[%s2726 + $0x24] sm:$0xf]
  %v2737 = vld [vmem:[%s2726 + $0x28] sm:$0xf]
  %v2738 = vld [vmem:[%s2726 + $0x2c] sm:$0xf]
  %v2739 = vld [vmem:[%s2726 + $0x30] sm:$0xf]
  %v2740 = vld [vmem:[%s2726 + $0x34] sm:$0xf]
  %v2741 = vld [vmem:[%s2726 + $0x38] sm:$0xf]
  %v2742 = vld [vmem:[%s2726 + $0x3c] sm:$0xf]
  %v2747 = vunpack.c.l.b16 %v63
  %v2748 = vunpack.c.l.b16 %v64
  %v2749 = vunpack.c.l.b16 %v117
  %v2750 = vunpack.c.l.b16 %v118
  %v2751 = vpack.c.b16 %v2748, %v2747
  %v2752 = vpack.c.b16 %v2750, %v2749
  %v2771 = vunpack.c.l.b16 %v2727
  %v2772 = vunpack.c.l.b16 %v2728
  %v2773 = vunpack.c.l.b16 %v2729
  %v2774 = vunpack.c.l.b16 %v2730
  %v2775 = vunpack.c.l.b16 %v2731
  %v2776 = vunpack.c.l.b16 %v2732
  %v2777 = vunpack.c.l.b16 %v2733
  %v2778 = vunpack.c.l.b16 %v2734
  %v2779 = vunpack.c.l.b16 %v2735
  %v2780 = vunpack.c.l.b16 %v2736
  %v2781 = vunpack.c.l.b16 %v2737
  %v2782 = vunpack.c.l.b16 %v2738
  %v2783 = vunpack.c.l.b16 %v2739
  %v2784 = vunpack.c.l.b16 %v2740
  %v2785 = vunpack.c.l.b16 %v2741
  %v2786 = vunpack.c.l.b16 %v2742
  %v2787 = vpack.c.b16 %v2772, %v2771
  %v2788 = vpack.c.b16 %v2774, %v2773
  %v2789 = vpack.c.b16 %v2776, %v2775
  %v2790 = vpack.c.b16 %v2778, %v2777
  %v2791 = vpack.c.b16 %v2780, %v2779
  %v2792 = vpack.c.b16 %v2782, %v2781
  %v2793 = vpack.c.b16 %v2784, %v2783
  %v2794 = vpack.c.b16 %v2786, %v2785
  %2803 = vmatprep.subr.bf16.mxu0 0
  %2804 = vmatpush1.bf16.msra.mxu0 %v2794
  %2805 = vmatprep.subr.bf16.mxu0 0
  %2806 = vmatpush1.bf16.msra.mxu0 %v2793
  %2807 = vmatprep.subr.bf16.mxu0 0
  %2808 = vmatpush1.bf16.msra.mxu0 %v2792
  %2809 = vmatprep.subr.bf16.mxu0 0
  %2810 = vmatpush1.bf16.msra.mxu0 %v2791
  %2811 = vmatprep.subr.bf16.mxu0 0
  %2812 = vmatpush1.bf16.msra.mxu0 %v2790
  %2813 = vmatprep.subr.bf16.mxu0 0
  %2814 = vmatpush1.bf16.msra.mxu0 %v2789
  %2815 = vmatprep.subr.bf16.mxu0 0
  %2816 = vmatpush1.bf16.msra.mxu0 %v2788
  %2817 = vmatprep.subr.bf16.mxu0 0
  %2818 = vmatpush1.bf16.msra.mxu0 %v2787
  %2819 = vmatprep.subr.bf16.mxu0 0
  %2820 = vmatpush2.bf16.msra.mxu0 0
  %2821 = vmatprep.subr.bf16.mxu0 0
  %2822 = vmatpush2.bf16.msra.mxu0 0
  %2823 = vmatprep.subr.bf16.mxu0 0
  %2824 = vmatpush2.bf16.msra.mxu0 0
  %2825 = vmatprep.subr.bf16.mxu0 0
  %2826 = vmatpush2.bf16.msra.mxu0 0
  %2827 = vmatprep.subr.bf16.mxu0 0
  %2828 = vmatpush2.bf16.msra.mxu0 0
  %2829 = vmatprep.subr.bf16.mxu0 0
  %2830 = vmatpush2.bf16.msra.mxu0 0
  %2831 = vmatprep.subr.bf16.mxu0 0
  %2832 = vmatpush2.bf16.msra.mxu0 0
  %2833 = vmatprep.subr.bf16.mxu0 0
  %2834 = vmatpush2.bf16.msra.mxu0 0
  %2835 = vmatprep.mubr.bf16.mxu0 0
  %2836 = vmatmul.mubr.bf16.gmra.mxu0 %v1521
  %v2837 = vpop.f32.mrf.mxu0
  %v2838 = vadd.f32 0.0, %v2837
  %v2839 = vpop.f32.mrf.mxu0
  %v2840 = vpop.f32.mrf.mxu0
  %v2841 = vadd.f32 0.0, %v2840
  %v2842 = vpop.f32.mrf.mxu0
  %2843 = vmatprep.mubr.bf16.mxu0 0
  %2844 = vmatmul.mubr.bf16.gmra.mxu0 %v1522
  %v2845 = vpop.f32.mrf.mxu0
  %v2846 = vadd.f32 0.0, %v2845
  %v2847 = vpop.f32.mrf.mxu0
  %v2848 = vpop.f32.mrf.mxu0
  %v2849 = vadd.f32 0.0, %v2848
  %v2850 = vpop.f32.mrf.mxu0
  %2851 = vmatprep.mubr.bf16.mxu0 0
  %2852 = vmatmul.mubr.bf16.gmra.mxu0 %v1523
  %v2853 = vpop.f32.mrf.mxu0
  %v2854 = vadd.f32 0.0, %v2853
  %v2855 = vpop.f32.mrf.mxu0
  %v2856 = vpop.f32.mrf.mxu0
  %v2857 = vadd.f32 0.0, %v2856
  %v2858 = vpop.f32.mrf.mxu0
  %2859 = vmatprep.mubr.bf16.mxu0 0
  %2860 = vmatmul.mubr.bf16.gmra.mxu0 %v1524
  %v2861 = vpop.f32.mrf.mxu0
  %v2862 = vadd.f32 0.0, %v2861
  %v2863 = vpop.f32.mrf.mxu0
  %v2864 = vpop.f32.mrf.mxu0
  %v2865 = vadd.f32 0.0, %v2864
  %v2866 = vpop.f32.mrf.mxu0
  %2867 = vmatprep.mubr.bf16.mxu0 0
  %2868 = vmatmul.mubr.bf16.gmra.mxu0 %v1525
  %v2869 = vpop.f32.mrf.mxu0
  %v2870 = vadd.f32 0.0, %v2869
  %v2871 = vpop.f32.mrf.mxu0
  %v2872 = vpop.f32.mrf.mxu0
  %v2873 = vadd.f32 0.0, %v2872
  %v2874 = vpop.f32.mrf.mxu0
  %2875 = vmatprep.mubr.bf16.mxu0 0
  %2876 = vmatmul.mubr.bf16.gmra.mxu0 %v1526
  %v2877 = vpop.f32.mrf.mxu0
  %v2878 = vadd.f32 0.0, %v2877
  %v2879 = vpop.f32.mrf.mxu0
  %v2880 = vpop.f32.mrf.mxu0
  %v2881 = vadd.f32 0.0, %v2880
  %v2882 = vpop.f32.mrf.mxu0
  %2883 = vmatprep.mubr.bf16.mxu0 0
  %2884 = vmatmul.mubr.bf16.gmra.mxu0 %v1527
  %v2885 = vpop.f32.mrf.mxu0
  %v2886 = vadd.f32 0.0, %v2885
  %v2887 = vpop.f32.mrf.mxu0
  %v2888 = vpop.f32.mrf.mxu0
  %v2889 = vadd.f32 0.0, %v2888
  %v2890 = vpop.f32.mrf.mxu0
  %2891 = vmatprep.mubr.bf16.mxu0 0
  %2892 = vmatmul.mubr.bf16.gmra.mxu0 %v1528
  %v2893 = vpop.f32.mrf.mxu0
  %v2894 = vadd.f32 0.0, %v2893
  %v2895 = vpop.f32.mrf.mxu0
  %v2896 = vpop.f32.mrf.mxu0
  %v2897 = vadd.f32 0.0, %v2896
  %v2898 = vpop.f32.mrf.mxu0
  %2899 = vmatprep.mubr.bf16.mxu0 0
  %2900 = vmatmul.mubr.bf16.gmra.mxu0 %v1529
  %v2901 = vpop.f32.mrf.mxu0
  %v2902 = vadd.f32 0.0, %v2901
  %v2903 = vpop.f32.mrf.mxu0
  %v2904 = vpop.f32.mrf.mxu0
  %v2905 = vadd.f32 0.0, %v2904
  %v2906 = vpop.f32.mrf.mxu0
  %2907 = vmatprep.mubr.bf16.mxu0 0
  %2908 = vmatmul.mubr.bf16.gmra.mxu0 %v1530
  %v2909 = vpop.f32.mrf.mxu0
  %v2910 = vadd.f32 0.0, %v2909
  %v2911 = vpop.f32.mrf.mxu0
  %v2912 = vpop.f32.mrf.mxu0
  %v2913 = vadd.f32 0.0, %v2912
  %v2914 = vpop.f32.mrf.mxu0
  %2915 = vmatprep.mubr.bf16.mxu0 0
  %2916 = vmatmul.mubr.bf16.gmra.mxu0 %v1531
  %v2917 = vpop.f32.mrf.mxu0
  %v2918 = vadd.f32 0.0, %v2917
  %v2919 = vpop.f32.mrf.mxu0
  %v2920 = vpop.f32.mrf.mxu0
  %v2921 = vadd.f32 0.0, %v2920
  %v2922 = vpop.f32.mrf.mxu0
  %2923 = vmatprep.mubr.bf16.mxu0 0
  %2924 = vmatmul.mubr.bf16.gmra.mxu0 %v1532
  %v2925 = vpop.f32.mrf.mxu0
  %v2926 = vadd.f32 0.0, %v2925
  %v2927 = vpop.f32.mrf.mxu0
  %v2928 = vpop.f32.mrf.mxu0
  %v2929 = vadd.f32 0.0, %v2928
  %v2930 = vpop.f32.mrf.mxu0
  %2931 = vmatprep.mubr.bf16.mxu0 0
  %2932 = vmatmul.mubr.bf16.gmra.mxu0 %v1533
  %v2933 = vpop.f32.mrf.mxu0
  %v2934 = vadd.f32 0.0, %v2933
  %v2935 = vpop.f32.mrf.mxu0
  %v2936 = vpop.f32.mrf.mxu0
  %v2937 = vadd.f32 0.0, %v2936
  %v2938 = vpop.f32.mrf.mxu0
  %2939 = vmatprep.mubr.bf16.mxu0 0
  %2940 = vmatmul.mubr.bf16.gmra.mxu0 %v1534
  %v2941 = vpop.f32.mrf.mxu0
  %v2942 = vadd.f32 0.0, %v2941
  %v2943 = vpop.f32.mrf.mxu0
  %v2944 = vpop.f32.mrf.mxu0
  %v2945 = vadd.f32 0.0, %v2944
  %v2946 = vpop.f32.mrf.mxu0
  %2947 = vmatprep.mubr.bf16.mxu0 0
  %2948 = vmatmul.mubr.bf16.gmra.mxu0 %v1535
  %v2949 = vpop.f32.mrf.mxu0
  %v2950 = vadd.f32 0.0, %v2949
  %v2951 = vpop.f32.mrf.mxu0
  %v2952 = vpop.f32.mrf.mxu0
  %v2953 = vadd.f32 0.0, %v2952
  %v2954 = vpop.f32.mrf.mxu0
  %2955 = vmatprep.mubr.bf16.mxu0 0
  %2956 = vmatmul.mubr.bf16.gmra.mxu0 %v2751
  %v2957 = vpop.f32.mrf.mxu0
  %v2958 = vadd.f32 0.0, %v2957
  %v2959 = vpop.f32.mrf.mxu0
  %v2960 = vpop.f32.mrf.mxu0
  %v2961 = vadd.f32 0.0, %v2960
  %v2962 = vpop.f32.mrf.mxu0
  %2963 = vmatprep.mubr.bf16.mxu0 0
  %2964 = vmatmul.mubr.bf16.gmra.mxu0 %v1537
  %v2965 = vpop.f32.mrf.mxu0
  %v2966 = vadd.f32 0.0, %v2965
  %v2967 = vpop.f32.mrf.mxu0
  %v2968 = vpop.f32.mrf.mxu0
  %v2969 = vadd.f32 0.0, %v2968
  %v2970 = vpop.f32.mrf.mxu0
  %2971 = vmatprep.mubr.bf16.mxu0 0
  %2972 = vmatmul.mubr.bf16.gmra.mxu0 %v1538
  %v2973 = vpop.f32.mrf.mxu0
  %v2974 = vadd.f32 0.0, %v2973
  %v2975 = vpop.f32.mrf.mxu0
  %v2976 = vpop.f32.mrf.mxu0
  %v2977 = vadd.f32 0.0, %v2976
  %v2978 = vpop.f32.mrf.mxu0
  %2979 = vmatprep.mubr.bf16.mxu0 0
  %2980 = vmatmul.mubr.bf16.gmra.mxu0 %v1539
  %v2981 = vpop.f32.mrf.mxu0
  %v2982 = vadd.f32 0.0, %v2981
  %v2983 = vpop.f32.mrf.mxu0
  %v2984 = vpop.f32.mrf.mxu0
  %v2985 = vadd.f32 0.0, %v2984
  %v2986 = vpop.f32.mrf.mxu0
  %2987 = vmatprep.mubr.bf16.mxu0 0
  %2988 = vmatmul.mubr.bf16.gmra.mxu0 %v1540
  %v2989 = vpop.f32.mrf.mxu0
  %v2990 = vadd.f32 0.0, %v2989
  %v2991 = vpop.f32.mrf.mxu0
  %v2992 = vpop.f32.mrf.mxu0
  %v2993 = vadd.f32 0.0, %v2992
  %v2994 = vpop.f32.mrf.mxu0
  %2995 = vmatprep.mubr.bf16.mxu0 0
  %2996 = vmatmul.mubr.bf16.gmra.mxu0 %v1541
  %v2997 = vpop.f32.mrf.mxu0
  %v2998 = vadd.f32 0.0, %v2997
  %v2999 = vpop.f32.mrf.mxu0
  %v3000 = vpop.f32.mrf.mxu0
  %v3001 = vadd.f32 0.0, %v3000
  %v3002 = vpop.f32.mrf.mxu0
  %3003 = vmatprep.mubr.bf16.mxu0 0
  %3004 = vmatmul.mubr.bf16.gmra.mxu0 %v1542
  %v3005 = vpop.f32.mrf.mxu0
  %v3006 = vadd.f32 0.0, %v3005
  %v3007 = vpop.f32.mrf.mxu0
  %v3008 = vpop.f32.mrf.mxu0
  %v3009 = vadd.f32 0.0, %v3008
  %v3010 = vpop.f32.mrf.mxu0
  %3011 = vmatprep.mubr.bf16.mxu0 0
  %3012 = vmatmul.mubr.bf16.gmra.mxu0 %v1543
  %v3013 = vpop.f32.mrf.mxu0
  %v3014 = vadd.f32 0.0, %v3013
  %v3015 = vpop.f32.mrf.mxu0
  %v3016 = vpop.f32.mrf.mxu0
  %v3017 = vadd.f32 0.0, %v3016
  %v3018 = vpop.f32.mrf.mxu0
  %3019 = vmatprep.mubr.bf16.mxu0 0
  %3020 = vmatmul.mubr.bf16.gmra.mxu0 %v1544
  %v3021 = vpop.f32.mrf.mxu0
  %v3022 = vadd.f32 0.0, %v3021
  %v3023 = vpop.f32.mrf.mxu0
  %v3024 = vpop.f32.mrf.mxu0
  %v3025 = vadd.f32 0.0, %v3024
  %v3026 = vpop.f32.mrf.mxu0
  %3027 = vmatprep.mubr.bf16.mxu0 0
  %3028 = vmatmul.mubr.bf16.gmra.mxu0 %v1545
  %v3029 = vpop.f32.mrf.mxu0
  %v3030 = vadd.f32 0.0, %v3029
  %v3031 = vpop.f32.mrf.mxu0
  %v3032 = vpop.f32.mrf.mxu0
  %v3033 = vadd.f32 0.0, %v3032
  %v3034 = vpop.f32.mrf.mxu0
  %3035 = vmatprep.mubr.bf16.mxu0 0
  %3036 = vmatmul.mubr.bf16.gmra.mxu0 %v1546
  %v3037 = vpop.f32.mrf.mxu0
  %v3038 = vadd.f32 0.0, %v3037
  %v3039 = vpop.f32.mrf.mxu0
  %v3040 = vpop.f32.mrf.mxu0
  %v3041 = vadd.f32 0.0, %v3040
  %v3042 = vpop.f32.mrf.mxu0
  %3043 = vmatprep.mubr.bf16.mxu0 0
  %3044 = vmatmul.mubr.bf16.gmra.mxu0 %v1547
  %v3045 = vpop.f32.mrf.mxu0
  %v3046 = vadd.f32 0.0, %v3045
  %v3047 = vpop.f32.mrf.mxu0
  %v3048 = vpop.f32.mrf.mxu0
  %v3049 = vadd.f32 0.0, %v3048
  %v3050 = vpop.f32.mrf.mxu0
  %3051 = vmatprep.mubr.bf16.mxu0 0
  %3052 = vmatmul.mubr.bf16.gmra.mxu0 %v1548
  %v3053 = vpop.f32.mrf.mxu0
  %v3054 = vadd.f32 0.0, %v3053
  %v3055 = vpop.f32.mrf.mxu0
  %v3056 = vpop.f32.mrf.mxu0
  %v3057 = vadd.f32 0.0, %v3056
  %v3058 = vpop.f32.mrf.mxu0
  %3059 = vmatprep.mubr.bf16.mxu0 0
  %3060 = vmatmul.mubr.bf16.gmra.mxu0 %v1549
  %v3061 = vpop.f32.mrf.mxu0
  %v3062 = vadd.f32 0.0, %v3061
  %v3063 = vpop.f32.mrf.mxu0
  %v3064 = vpop.f32.mrf.mxu0
  %v3065 = vadd.f32 0.0, %v3064
  %v3066 = vpop.f32.mrf.mxu0
  %3067 = vmatprep.mubr.bf16.mxu0 0
  %3068 = vmatmul.mubr.bf16.gmra.mxu0 %v1550
  %v3069 = vpop.f32.mrf.mxu0
  %v3070 = vadd.f32 0.0, %v3069
  %v3071 = vpop.f32.mrf.mxu0
  %v3072 = vpop.f32.mrf.mxu0
  %v3073 = vadd.f32 0.0, %v3072
  %v3074 = vpop.f32.mrf.mxu0
  %3075 = vmatprep.mubr.bf16.mxu0 0
  %3076 = vmatmul.mubr.bf16.gmra.mxu0 %v1551
  %v3077 = vpop.f32.mrf.mxu0
  %v3078 = vadd.f32 0.0, %v3077
  %v3079 = vpop.f32.mrf.mxu0
  %v3080 = vpop.f32.mrf.mxu0
  %v3081 = vadd.f32 0.0, %v3080
  %v3082 = vpop.f32.mrf.mxu0
  %3083 = vmatprep.mubr.bf16.mxu0 0
  %3084 = vmatmul.mubr.bf16.gmra.mxu0 %v2752
  %v3085 = vpop.f32.mrf.mxu0
  %v3086 = vadd.f32 0.0, %v3085
  %v3087 = vpop.f32.mrf.mxu0
  %v3088 = vpop.f32.mrf.mxu0
  %v3089 = vadd.f32 0.0, %v3088
  %v3090 = vpop.f32.mrf.mxu0
  %3091 = vdwg.mxu0
  %v3092 = vadd.f32 %v2662, %v2838
  %v3093 = vadd.f32 %v2663, %v2841
  %v3094 = vadd.f32 %v2664, %v2846
  %v3095 = vadd.f32 %v2665, %v2849
  %v3096 = vadd.f32 %v2666, %v2854
  %v3097 = vadd.f32 %v2667, %v2857
  %v3098 = vadd.f32 %v2668, %v2862
  %v3099 = vadd.f32 %v2669, %v2865
  %v3100 = vadd.f32 %v2670, %v2870
  %v3101 = vadd.f32 %v2671, %v2873
  %v3102 = vadd.f32 %v2672, %v2878
  %v3103 = vadd.f32 %v2673, %v2881
  %v3104 = vadd.f32 %v2674, %v2886
  %v3105 = vadd.f32 %v2675, %v2889
  %v3106 = vadd.f32 %v2676, %v2894
  %v3107 = vadd.f32 %v2677, %v2897
  %v3108 = vadd.f32 %v2678, %v2902
  %v3109 = vadd.f32 %v2679, %v2905
  %v3110 = vadd.f32 %v2680, %v2910
  %v3111 = vadd.f32 %v2681, %v2913
  %v3112 = vadd.f32 %v2682, %v2918
  %v3113 = vadd.f32 %v2683, %v2921
  %v3114 = vadd.f32 %v2684, %v2926
  %v3115 = vadd.f32 %v2685, %v2929
  %v3116 = vadd.f32 %v2686, %v2934
  %v3117 = vadd.f32 %v2687, %v2937
  %v3118 = vadd.f32 %v2688, %v2942
  %v3119 = vadd.f32 %v2689, %v2945
  %v3120 = vadd.f32 %v2690, %v2950
  %v3121 = vadd.f32 %v2691, %v2953
  %v3122 = vadd.f32 %v2692, %v2958
  %v3123 = vadd.f32 %v2693, %v2961
  %v3124 = vadd.f32 %v2694, %v2966
  %v3125 = vadd.f32 %v2695, %v2969
  %v3126 = vadd.f32 %v2696, %v2974
  %v3127 = vadd.f32 %v2697, %v2977
  %v3128 = vadd.f32 %v2698, %v2982
  %v3129 = vadd.f32 %v2699, %v2985
  %v3130 = vadd.f32 %v2700, %v2990
  %v3131 = vadd.f32 %v2701, %v2993
  %v3132 = vadd.f32 %v2702, %v2998
  %v3133 = vadd.f32 %v2703, %v3001
  %v3134 = vadd.f32 %v2704, %v3006
  %v3135 = vadd.f32 %v2705, %v3009
  %v3136 = vadd.f32 %v2706, %v3014
  %v3137 = vadd.f32 %v2707, %v3017
  %v3138 = vadd.f32 %v2708, %v3022
  %v3139 = vadd.f32 %v2709, %v3025
  %v3140 = vadd.f32 %v2710, %v3030
  %v3141 = vadd.f32 %v2711, %v3033
  %v3142 = vadd.f32 %v2712, %v3038
  %v3143 = vadd.f32 %v2713, %v3041
  %v3144 = vadd.f32 %v2714, %v3046
  %v3145 = vadd.f32 %v2715, %v3049
  %v3146 = vadd.f32 %v2716, %v3054
  %v3147 = vadd.f32 %v2717, %v3057
  %v3148 = vadd.f32 %v2718, %v3062
  %v3149 = vadd.f32 %v2719, %v3065
  %v3150 = vadd.f32 %v2720, %v3070
  %v3151 = vadd.f32 %v2721, %v3073
  %v3152 = vadd.f32 %v2722, %v3078
  %v3153 = vadd.f32 %v2723, %v3081
  %v3154 = vadd.f32 %v2724, %v3086
  %v3155 = vadd.f32 %v2725, %v3089
  %v3157 = vshrl.u32 %v63, 16
  %v3159 = vrot.slane %v3157, 4
  %v3160 = vshll.u32 %v63, 16
  %v3162 = vrot.slane %v3160, 5
  %v3163 = vor.u32 %v3159, %v3162
  %v3164 = vrot.slane %v3163, 4
  %v3166 = vshll.u32 %v64, 16
  %v3168 = vrot.slane %v3166, 5
  %v3169 = vsel %vm141, %v3164, %v3168
  %v3170 = vshrl.u32 %v64, 16
  %v3172 = vrot.slane %v3170, 4
  %v3173 = vor.u32 %v3172, %v3168
  %v3174 = vrot.slane %v3173, 4
  %v3176 = vshll.u32 %v65, 16
  %v3178 = vrot.slane %v3176, 5
  %v3179 = vsel %vm141, %v3174, %v3178
  %v3181 = vshrl.u32 %v117, 16
  %v3183 = vrot.slane %v3181, 4
  %v3184 = vshll.u32 %v117, 16
  %v3186 = vrot.slane %v3184, 5
  %v3187 = vor.u32 %v3183, %v3186
  %v3188 = vrot.slane %v3187, 4
  %v3190 = vshll.u32 %v118, 16
  %v3192 = vrot.slane %v3190, 5
  %v3193 = vsel %vm141, %v3188, %v3192
  %v3194 = vshrl.u32 %v118, 16
  %v3196 = vrot.slane %v3194, 4
  %v3197 = vor.u32 %v3196, %v3192
  %v3198 = vrot.slane %v3197, 4
  %v3200 = vshll.u32 %v119, 16
  %v3202 = vrot.slane %v3200, 5
  %v3203 = vsel %vm141, %v3198, %v3202
  %s3204 = scalar_lea.vmem %s1, 256
  %v3205 = vld [vmem:[%s3204] sm:$0xf]
  %v3206 = vld [vmem:[%s3204 + $0x4] sm:$0xf]
  %v3207 = vld [vmem:[%s3204 + $0x8] sm:$0xf]
  %v3208 = vld [vmem:[%s3204 + $0xc] sm:$0xf]
  %v3209 = vld [vmem:[%s3204 + $0x10] sm:$0xf]
  %v3210 = vld [vmem:[%s3204 + $0x14] sm:$0xf]
  %v3211 = vld [vmem:[%s3204 + $0x18] sm:$0xf]
  %v3212 = vld [vmem:[%s3204 + $0x1c] sm:$0xf]
  %v3213 = vld [vmem:[%s3204 + $0x20] sm:$0xf]
  %v3214 = vld [vmem:[%s3204 + $0x24] sm:$0xf]
  %v3215 = vld [vmem:[%s3204 + $0x28] sm:$0xf]
  %v3216 = vld [vmem:[%s3204 + $0x2c] sm:$0xf]
  %v3217 = vld [vmem:[%s3204 + $0x30] sm:$0xf]
  %v3218 = vld [vmem:[%s3204 + $0x34] sm:$0xf]
  %v3219 = vld [vmem:[%s3204 + $0x38] sm:$0xf]
  %v3220 = vld [vmem:[%s3204 + $0x3c] sm:$0xf]
  %v3221 = vunpack.c.l.b16 %v3169
  %v3222 = vunpack.c.l.b16 %v3179
  %v3223 = vunpack.c.l.b16 %v3193
  %v3224 = vunpack.c.l.b16 %v3203
  %v3225 = vpack.c.b16 %v3222, %v3221
  %v3226 = vpack.c.b16 %v3224, %v3223
  %v3245 = vunpack.c.l.b16 %v3205
  %v3246 = vunpack.c.l.b16 %v3206
  %v3247 = vunpack.c.l.b16 %v3207
  %v3248 = vunpack.c.l.b16 %v3208
  %v3249 = vunpack.c.l.b16 %v3209
  %v3250 = vunpack.c.l.b16 %v3210
  %v3251 = vunpack.c.l.b16 %v3211
  %v3252 = vunpack.c.l.b16 %v3212
  %v3253 = vunpack.c.l.b16 %v3213
  %v3254 = vunpack.c.l.b16 %v3214
  %v3255 = vunpack.c.l.b16 %v3215
  %v3256 = vunpack.c.l.b16 %v3216
  %v3257 = vunpack.c.l.b16 %v3217
  %v3258 = vunpack.c.l.b16 %v3218
  %v3259 = vunpack.c.l.b16 %v3219
  %v3260 = vunpack.c.l.b16 %v3220
  %v3261 = vpack.c.b16 %v3246, %v3245
  %v3262 = vpack.c.b16 %v3248, %v3247
  %v3263 = vpack.c.b16 %v3250, %v3249
  %v3264 = vpack.c.b16 %v3252, %v3251
  %v3265 = vpack.c.b16 %v3254, %v3253
  %v3266 = vpack.c.b16 %v3256, %v3255
  %v3267 = vpack.c.b16 %v3258, %v3257
  %v3268 = vpack.c.b16 %v3260, %v3259
  %3277 = vmatprep.subr.bf16.mxu0 0
  %3278 = vmatpush1.bf16.msra.mxu0 %v3268
  %3279 = vmatprep.subr.bf16.mxu0 0
  %3280 = vmatpush1.bf16.msra.mxu0 %v3267
  %3281 = vmatprep.subr.bf16.mxu0 0
  %3282 = vmatpush1.bf16.msra.mxu0 %v3266
  %3283 = vmatprep.subr.bf16.mxu0 0
  %3284 = vmatpush1.bf16.msra.mxu0 %v3265
  %3285 = vmatprep.subr.bf16.mxu0 0
  %3286 = vmatpush1.bf16.msra.mxu0 %v3264
  %3287 = vmatprep.subr.bf16.mxu0 0
  %3288 = vmatpush1.bf16.msra.mxu0 %v3263
  %3289 = vmatprep.subr.bf16.mxu0 0
  %3290 = vmatpush1.bf16.msra.mxu0 %v3262
  %3291 = vmatprep.subr.bf16.mxu0 0
  %3292 = vmatpush1.bf16.msra.mxu0 %v3261
  %3293 = vmatprep.subr.bf16.mxu0 0
  %3294 = vmatpush2.bf16.msra.mxu0 0
  %3295 = vmatprep.subr.bf16.mxu0 0
  %3296 = vmatpush2.bf16.msra.mxu0 0
  %3297 = vmatprep.subr.bf16.mxu0 0
  %3298 = vmatpush2.bf16.msra.mxu0 0
  %3299 = vmatprep.subr.bf16.mxu0 0
  %3300 = vmatpush2.bf16.msra.mxu0 0
  %3301 = vmatprep.subr.bf16.mxu0 0
  %3302 = vmatpush2.bf16.msra.mxu0 0
  %3303 = vmatprep.subr.bf16.mxu0 0
  %3304 = vmatpush2.bf16.msra.mxu0 0
  %3305 = vmatprep.subr.bf16.mxu0 0
  %3306 = vmatpush2.bf16.msra.mxu0 0
  %3307 = vmatprep.subr.bf16.mxu0 0
  %3308 = vmatpush2.bf16.msra.mxu0 0
  %3309 = vmatprep.mubr.bf16.mxu0 0
  %3310 = vmatmul.mubr.bf16.gmra.mxu0 %v992
  %v3311 = vpop.f32.mrf.mxu0
  %v3312 = vadd.f32 0.0, %v3311
  %v3313 = vpop.f32.mrf.mxu0
  %v3314 = vpop.f32.mrf.mxu0
  %v3315 = vadd.f32 0.0, %v3314
  %v3316 = vpop.f32.mrf.mxu0
  %3317 = vmatprep.mubr.bf16.mxu0 0
  %3318 = vmatmul.mubr.bf16.gmra.mxu0 %v993
  %v3319 = vpop.f32.mrf.mxu0
  %v3320 = vadd.f32 0.0, %v3319
  %v3321 = vpop.f32.mrf.mxu0
  %v3322 = vpop.f32.mrf.mxu0
  %v3323 = vadd.f32 0.0, %v3322
  %v3324 = vpop.f32.mrf.mxu0
  %3325 = vmatprep.mubr.bf16.mxu0 0
  %3326 = vmatmul.mubr.bf16.gmra.mxu0 %v994
  %v3327 = vpop.f32.mrf.mxu0
  %v3328 = vadd.f32 0.0, %v3327
  %v3329 = vpop.f32.mrf.mxu0
  %v3330 = vpop.f32.mrf.mxu0
  %v3331 = vadd.f32 0.0, %v3330
  %v3332 = vpop.f32.mrf.mxu0
  %3333 = vmatprep.mubr.bf16.mxu0 0
  %3334 = vmatmul.mubr.bf16.gmra.mxu0 %v995
  %v3335 = vpop.f32.mrf.mxu0
  %v3336 = vadd.f32 0.0, %v3335
  %v3337 = vpop.f32.mrf.mxu0
  %v3338 = vpop.f32.mrf.mxu0
  %v3339 = vadd.f32 0.0, %v3338
  %v3340 = vpop.f32.mrf.mxu0
  %3341 = vmatprep.mubr.bf16.mxu0 0
  %3342 = vmatmul.mubr.bf16.gmra.mxu0 %v996
  %v3343 = vpop.f32.mrf.mxu0
  %v3344 = vadd.f32 0.0, %v3343
  %v3345 = vpop.f32.mrf.mxu0
  %v3346 = vpop.f32.mrf.mxu0
  %v3347 = vadd.f32 0.0, %v3346
  %v3348 = vpop.f32.mrf.mxu0
  %3349 = vmatprep.mubr.bf16.mxu0 0
  %3350 = vmatmul.mubr.bf16.gmra.mxu0 %v997
  %v3351 = vpop.f32.mrf.mxu0
  %v3352 = vadd.f32 0.0, %v3351
  %v3353 = vpop.f32.mrf.mxu0
  %v3354 = vpop.f32.mrf.mxu0
  %v3355 = vadd.f32 0.0, %v3354
  %v3356 = vpop.f32.mrf.mxu0
  %3357 = vmatprep.mubr.bf16.mxu0 0
  %3358 = vmatmul.mubr.bf16.gmra.mxu0 %v998
  %v3359 = vpop.f32.mrf.mxu0
  %v3360 = vadd.f32 0.0, %v3359
  %v3361 = vpop.f32.mrf.mxu0
  %v3362 = vpop.f32.mrf.mxu0
  %v3363 = vadd.f32 0.0, %v3362
  %v3364 = vpop.f32.mrf.mxu0
  %3365 = vmatprep.mubr.bf16.mxu0 0
  %3366 = vmatmul.mubr.bf16.gmra.mxu0 %v999
  %v3367 = vpop.f32.mrf.mxu0
  %v3368 = vadd.f32 0.0, %v3367
  %v3369 = vpop.f32.mrf.mxu0
  %v3370 = vpop.f32.mrf.mxu0
  %v3371 = vadd.f32 0.0, %v3370
  %v3372 = vpop.f32.mrf.mxu0
  %3373 = vmatprep.mubr.bf16.mxu0 0
  %3374 = vmatmul.mubr.bf16.gmra.mxu0 %v1000
  %v3375 = vpop.f32.mrf.mxu0
  %v3376 = vadd.f32 0.0, %v3375
  %v3377 = vpop.f32.mrf.mxu0
  %v3378 = vpop.f32.mrf.mxu0
  %v3379 = vadd.f32 0.0, %v3378
  %v3380 = vpop.f32.mrf.mxu0
  %3381 = vmatprep.mubr.bf16.mxu0 0
  %3382 = vmatmul.mubr.bf16.gmra.mxu0 %v1001
  %v3383 = vpop.f32.mrf.mxu0
  %v3384 = vadd.f32 0.0, %v3383
  %v3385 = vpop.f32.mrf.mxu0
  %v3386 = vpop.f32.mrf.mxu0
  %v3387 = vadd.f32 0.0, %v3386
  %v3388 = vpop.f32.mrf.mxu0
  %3389 = vmatprep.mubr.bf16.mxu0 0
  %3390 = vmatmul.mubr.bf16.gmra.mxu0 %v1002
  %v3391 = vpop.f32.mrf.mxu0
  %v3392 = vadd.f32 0.0, %v3391
  %v3393 = vpop.f32.mrf.mxu0
  %v3394 = vpop.f32.mrf.mxu0
  %v3395 = vadd.f32 0.0, %v3394
  %v3396 = vpop.f32.mrf.mxu0
  %3397 = vmatprep.mubr.bf16.mxu0 0
  %3398 = vmatmul.mubr.bf16.gmra.mxu0 %v1003
  %v3399 = vpop.f32.mrf.mxu0
  %v3400 = vadd.f32 0.0, %v3399
  %v3401 = vpop.f32.mrf.mxu0
  %v3402 = vpop.f32.mrf.mxu0
  %v3403 = vadd.f32 0.0, %v3402
  %v3404 = vpop.f32.mrf.mxu0
  %3405 = vmatprep.mubr.bf16.mxu0 0
  %3406 = vmatmul.mubr.bf16.gmra.mxu0 %v1004
  %v3407 = vpop.f32.mrf.mxu0
  %v3408 = vadd.f32 0.0, %v3407
  %v3409 = vpop.f32.mrf.mxu0
  %v3410 = vpop.f32.mrf.mxu0
  %v3411 = vadd.f32 0.0, %v3410
  %v3412 = vpop.f32.mrf.mxu0
  %3413 = vmatprep.mubr.bf16.mxu0 0
  %3414 = vmatmul.mubr.bf16.gmra.mxu0 %v1005
  %v3415 = vpop.f32.mrf.mxu0
  %v3416 = vadd.f32 0.0, %v3415
  %v3417 = vpop.f32.mrf.mxu0
  %v3418 = vpop.f32.mrf.mxu0
  %v3419 = vadd.f32 0.0, %v3418
  %v3420 = vpop.f32.mrf.mxu0
  %3421 = vmatprep.mubr.bf16.mxu0 0
  %3422 = vmatmul.mubr.bf16.gmra.mxu0 %v1006
  %v3423 = vpop.f32.mrf.mxu0
  %v3424 = vadd.f32 0.0, %v3423
  %v3425 = vpop.f32.mrf.mxu0
  %v3426 = vpop.f32.mrf.mxu0
  %v3427 = vadd.f32 0.0, %v3426
  %v3428 = vpop.f32.mrf.mxu0
  %3429 = vmatprep.mubr.bf16.mxu0 0
  %3430 = vmatmul.mubr.bf16.gmra.mxu0 %v3225
  %v3431 = vpop.f32.mrf.mxu0
  %v3432 = vadd.f32 0.0, %v3431
  %v3433 = vpop.f32.mrf.mxu0
  %v3434 = vpop.f32.mrf.mxu0
  %v3435 = vadd.f32 0.0, %v3434
  %v3436 = vpop.f32.mrf.mxu0
  %3437 = vmatprep.mubr.bf16.mxu0 0
  %3438 = vmatmul.mubr.bf16.gmra.mxu0 %v1008
  %v3439 = vpop.f32.mrf.mxu0
  %v3440 = vadd.f32 0.0, %v3439
  %v3441 = vpop.f32.mrf.mxu0
  %v3442 = vpop.f32.mrf.mxu0
  %v3443 = vadd.f32 0.0, %v3442
  %v3444 = vpop.f32.mrf.mxu0
  %3445 = vmatprep.mubr.bf16.mxu0 0
  %3446 = vmatmul.mubr.bf16.gmra.mxu0 %v1009
  %v3447 = vpop.f32.mrf.mxu0
  %v3448 = vadd.f32 0.0, %v3447
  %v3449 = vpop.f32.mrf.mxu0
  %v3450 = vpop.f32.mrf.mxu0
  %v3451 = vadd.f32 0.0, %v3450
  %v3452 = vpop.f32.mrf.mxu0
  %3453 = vmatprep.mubr.bf16.mxu0 0
  %3454 = vmatmul.mubr.bf16.gmra.mxu0 %v1010
  %v3455 = vpop.f32.mrf.mxu0
  %v3456 = vadd.f32 0.0, %v3455
  %v3457 = vpop.f32.mrf.mxu0
  %v3458 = vpop.f32.mrf.mxu0
  %v3459 = vadd.f32 0.0, %v3458
  %v3460 = vpop.f32.mrf.mxu0
  %3461 = vmatprep.mubr.bf16.mxu0 0
  %3462 = vmatmul.mubr.bf16.gmra.mxu0 %v1011
  %v3463 = vpop.f32.mrf.mxu0
  %v3464 = vadd.f32 0.0, %v3463
  %v3465 = vpop.f32.mrf.mxu0
  %v3466 = vpop.f32.mrf.mxu0
  %v3467 = vadd.f32 0.0, %v3466
  %v3468 = vpop.f32.mrf.mxu0
  %3469 = vmatprep.mubr.bf16.mxu0 0
  %3470 = vmatmul.mubr.bf16.gmra.mxu0 %v1012
  %v3471 = vpop.f32.mrf.mxu0
  %v3472 = vadd.f32 0.0, %v3471
  %v3473 = vpop.f32.mrf.mxu0
  %v3474 = vpop.f32.mrf.mxu0
  %v3475 = vadd.f32 0.0, %v3474
  %v3476 = vpop.f32.mrf.mxu0
  %3477 = vmatprep.mubr.bf16.mxu0 0
  %3478 = vmatmul.mubr.bf16.gmra.mxu0 %v1013
  %v3479 = vpop.f32.mrf.mxu0
  %v3480 = vadd.f32 0.0, %v3479
  %v3481 = vpop.f32.mrf.mxu0
  %v3482 = vpop.f32.mrf.mxu0
  %v3483 = vadd.f32 0.0, %v3482
  %v3484 = vpop.f32.mrf.mxu0
  %3485 = vmatprep.mubr.bf16.mxu0 0
  %3486 = vmatmul.mubr.bf16.gmra.mxu0 %v1014
  %v3487 = vpop.f32.mrf.mxu0
  %v3488 = vadd.f32 0.0, %v3487
  %v3489 = vpop.f32.mrf.mxu0
  %v3490 = vpop.f32.mrf.mxu0
  %v3491 = vadd.f32 0.0, %v3490
  %v3492 = vpop.f32.mrf.mxu0
  %3493 = vmatprep.mubr.bf16.mxu0 0
  %3494 = vmatmul.mubr.bf16.gmra.mxu0 %v1015
  %v3495 = vpop.f32.mrf.mxu0
  %v3496 = vadd.f32 0.0, %v3495
  %v3497 = vpop.f32.mrf.mxu0
  %v3498 = vpop.f32.mrf.mxu0
  %v3499 = vadd.f32 0.0, %v3498
  %v3500 = vpop.f32.mrf.mxu0
  %3501 = vmatprep.mubr.bf16.mxu0 0
  %3502 = vmatmul.mubr.bf16.gmra.mxu0 %v1016
  %v3503 = vpop.f32.mrf.mxu0
  %v3504 = vadd.f32 0.0, %v3503
  %v3505 = vpop.f32.mrf.mxu0
  %v3506 = vpop.f32.mrf.mxu0
  %v3507 = vadd.f32 0.0, %v3506
  %v3508 = vpop.f32.mrf.mxu0
  %3509 = vmatprep.mubr.bf16.mxu0 0
  %3510 = vmatmul.mubr.bf16.gmra.mxu0 %v1017
  %v3511 = vpop.f32.mrf.mxu0
  %v3512 = vadd.f32 0.0, %v3511
  %v3513 = vpop.f32.mrf.mxu0
  %v3514 = vpop.f32.mrf.mxu0
  %v3515 = vadd.f32 0.0, %v3514
  %v3516 = vpop.f32.mrf.mxu0
  %3517 = vmatprep.mubr.bf16.mxu0 0
  %3518 = vmatmul.mubr.bf16.gmra.mxu0 %v1018
  %v3519 = vpop.f32.mrf.mxu0
  %v3520 = vadd.f32 0.0, %v3519
  %v3521 = vpop.f32.mrf.mxu0
  %v3522 = vpop.f32.mrf.mxu0
  %v3523 = vadd.f32 0.0, %v3522
  %v3524 = vpop.f32.mrf.mxu0
  %3525 = vmatprep.mubr.bf16.mxu0 0
  %3526 = vmatmul.mubr.bf16.gmra.mxu0 %v1019
  %v3527 = vpop.f32.mrf.mxu0
  %v3528 = vadd.f32 0.0, %v3527
  %v3529 = vpop.f32.mrf.mxu0
  %v3530 = vpop.f32.mrf.mxu0
  %v3531 = vadd.f32 0.0, %v3530
  %v3532 = vpop.f32.mrf.mxu0
  %3533 = vmatprep.mubr.bf16.mxu0 0
  %3534 = vmatmul.mubr.bf16.gmra.mxu0 %v1020
  %v3535 = vpop.f32.mrf.mxu0
  %v3536 = vadd.f32 0.0, %v3535
  %v3537 = vpop.f32.mrf.mxu0
  %v3538 = vpop.f32.mrf.mxu0
  %v3539 = vadd.f32 0.0, %v3538
  %v3540 = vpop.f32.mrf.mxu0
  %3541 = vmatprep.mubr.bf16.mxu0 0
  %3542 = vmatmul.mubr.bf16.gmra.mxu0 %v1021
  %v3543 = vpop.f32.mrf.mxu0
  %v3544 = vadd.f32 0.0, %v3543
  %v3545 = vpop.f32.mrf.mxu0
  %v3546 = vpop.f32.mrf.mxu0
  %v3547 = vadd.f32 0.0, %v3546
  %v3548 = vpop.f32.mrf.mxu0
  %3549 = vmatprep.mubr.bf16.mxu0 0
  %3550 = vmatmul.mubr.bf16.gmra.mxu0 %v1022
  %v3551 = vpop.f32.mrf.mxu0
  %v3552 = vadd.f32 0.0, %v3551
  %v3553 = vpop.f32.mrf.mxu0
  %v3554 = vpop.f32.mrf.mxu0
  %v3555 = vadd.f32 0.0, %v3554
  %v3556 = vpop.f32.mrf.mxu0
  %3557 = vmatprep.mubr.bf16.mxu0 0
  %3558 = vmatmul.mubr.bf16.gmra.mxu0 %v3226
  %v3559 = vpop.f32.mrf.mxu0
  %v3560 = vadd.f32 0.0, %v3559
  %v3561 = vpop.f32.mrf.mxu0
  %v3562 = vpop.f32.mrf.mxu0
  %v3563 = vadd.f32 0.0, %v3562
  %v3564 = vpop.f32.mrf.mxu0
  %3565 = vdwg.mxu0
  %v3566 = vadd.f32 %v3092, %v3312
  %v3567 = vadd.f32 %v3093, %v3315
  %v3568 = vadd.f32 %v3094, %v3320
  %v3569 = vadd.f32 %v3095, %v3323
  %v3570 = vadd.f32 %v3096, %v3328
  %v3571 = vadd.f32 %v3097, %v3331
  %v3572 = vadd.f32 %v3098, %v3336
  %v3573 = vadd.f32 %v3099, %v3339
  %v3574 = vadd.f32 %v3100, %v3344
  %v3575 = vadd.f32 %v3101, %v3347
  %v3576 = vadd.f32 %v3102, %v3352
  %v3577 = vadd.f32 %v3103, %v3355
  %v3578 = vadd.f32 %v3104, %v3360
  %v3579 = vadd.f32 %v3105, %v3363
  %v3580 = vadd.f32 %v3106, %v3368
  %v3581 = vadd.f32 %v3107, %v3371
  %v3582 = vadd.f32 %v3108, %v3376
  %v3583 = vadd.f32 %v3109, %v3379
  %v3584 = vadd.f32 %v3110, %v3384
  %v3585 = vadd.f32 %v3111, %v3387
  %v3586 = vadd.f32 %v3112, %v3392
  %v3587 = vadd.f32 %v3113, %v3395
  %v3588 = vadd.f32 %v3114, %v3400
  %v3589 = vadd.f32 %v3115, %v3403
  %v3590 = vadd.f32 %v3116, %v3408
  %v3591 = vadd.f32 %v3117, %v3411
  %v3592 = vadd.f32 %v3118, %v3416
  %v3593 = vadd.f32 %v3119, %v3419
  %v3594 = vadd.f32 %v3120, %v3424
  %v3595 = vadd.f32 %v3121, %v3427
  %v3596 = vadd.f32 %v3122, %v3432
  %v3597 = vadd.f32 %v3123, %v3435
  %v3598 = vadd.f32 %v3124, %v3440
  %v3599 = vadd.f32 %v3125, %v3443
  %v3600 = vadd.f32 %v3126, %v3448
  %v3601 = vadd.f32 %v3127, %v3451
  %v3602 = vadd.f32 %v3128, %v3456
  %v3603 = vadd.f32 %v3129, %v3459
  %v3604 = vadd.f32 %v3130, %v3464
  %v3605 = vadd.f32 %v3131, %v3467
  %v3606 = vadd.f32 %v3132, %v3472
  %v3607 = vadd.f32 %v3133, %v3475
  %v3608 = vadd.f32 %v3134, %v3480
  %v3609 = vadd.f32 %v3135, %v3483
  %v3610 = vadd.f32 %v3136, %v3488
  %v3611 = vadd.f32 %v3137, %v3491
  %v3612 = vadd.f32 %v3138, %v3496
  %v3613 = vadd.f32 %v3139, %v3499
  %v3614 = vadd.f32 %v3140, %v3504
  %v3615 = vadd.f32 %v3141, %v3507
  %v3616 = vadd.f32 %v3142, %v3512
  %v3617 = vadd.f32 %v3143, %v3515
  %v3618 = vadd.f32 %v3144, %v3520
  %v3619 = vadd.f32 %v3145, %v3523
  %v3620 = vadd.f32 %v3146, %v3528
  %v3621 = vadd.f32 %v3147, %v3531
  %v3622 = vadd.f32 %v3148, %v3536
  %v3623 = vadd.f32 %v3149, %v3539
  %v3624 = vadd.f32 %v3150, %v3544
  %v3625 = vadd.f32 %v3151, %v3547
  %v3626 = vadd.f32 %v3152, %v3552
  %v3627 = vadd.f32 %v3153, %v3555
  %v3628 = vadd.f32 %v3154, %v3560
  %v3629 = vadd.f32 %v3155, %v3563
  %v3632 = vrot.slane %v63, 5
  %v3633 = vrot.slane %v3632, 4
  %v3634 = vrot.slane %v64, 5
  %v3635 = vsel %vm1955, %v3633, %v3634
  %v3636 = vrot.slane %v3634, 4
  %v3637 = vrot.slane %v65, 5
  %v3638 = vsel %vm1955, %v3636, %v3637
  %v3639 = vrot.slane %v117, 5
  %v3640 = vrot.slane %v3639, 4
  %v3641 = vrot.slane %v118, 5
  %v3642 = vsel %vm1955, %v3640, %v3641
  %v3643 = vrot.slane %v3641, 4
  %v3644 = vrot.slane %v119, 5
  %v3645 = vsel %vm1955, %v3643, %v3644
  %s3646 = scalar_lea.vmem %s1, 320
  %v3647 = vld [vmem:[%s3646] sm:$0xf]
  %v3648 = vld [vmem:[%s3646 + $0x4] sm:$0xf]
  %v3649 = vld [vmem:[%s3646 + $0x8] sm:$0xf]
  %v3650 = vld [vmem:[%s3646 + $0xc] sm:$0xf]
  %v3651 = vld [vmem:[%s3646 + $0x10] sm:$0xf]
  %v3652 = vld [vmem:[%s3646 + $0x14] sm:$0xf]
  %v3653 = vld [vmem:[%s3646 + $0x18] sm:$0xf]
  %v3654 = vld [vmem:[%s3646 + $0x1c] sm:$0xf]
  %v3655 = vld [vmem:[%s3646 + $0x20] sm:$0xf]
  %v3656 = vld [vmem:[%s3646 + $0x24] sm:$0xf]
  %v3657 = vld [vmem:[%s3646 + $0x28] sm:$0xf]
  %v3658 = vld [vmem:[%s3646 + $0x2c] sm:$0xf]
  %v3659 = vld [vmem:[%s3646 + $0x30] sm:$0xf]
  %v3660 = vld [vmem:[%s3646 + $0x34] sm:$0xf]
  %v3661 = vld [vmem:[%s3646 + $0x38] sm:$0xf]
  %v3662 = vld [vmem:[%s3646 + $0x3c] sm:$0xf]
  %v3663 = vunpack.c.l.b16 %v3635
  %v3664 = vunpack.c.l.b16 %v3638
  %v3665 = vunpack.c.l.b16 %v3642
  %v3666 = vunpack.c.l.b16 %v3645
  %v3667 = vpack.c.b16 %v3664, %v3663
  %v3668 = vpack.c.b16 %v3666, %v3665
  %v3687 = vunpack.c.l.b16 %v3647
  %v3688 = vunpack.c.l.b16 %v3648
  %v3689 = vunpack.c.l.b16 %v3649
  %v3690 = vunpack.c.l.b16 %v3650
  %v3691 = vunpack.c.l.b16 %v3651
  %v3692 = vunpack.c.l.b16 %v3652
  %v3693 = vunpack.c.l.b16 %v3653
  %v3694 = vunpack.c.l.b16 %v3654
  %v3695 = vunpack.c.l.b16 %v3655
  %v3696 = vunpack.c.l.b16 %v3656
  %v3697 = vunpack.c.l.b16 %v3657
  %v3698 = vunpack.c.l.b16 %v3658
  %v3699 = vunpack.c.l.b16 %v3659
  %v3700 = vunpack.c.l.b16 %v3660
  %v3701 = vunpack.c.l.b16 %v3661
  %v3702 = vunpack.c.l.b16 %v3662
  %v3703 = vpack.c.b16 %v3688, %v3687
  %v3704 = vpack.c.b16 %v3690, %v3689
  %v3705 = vpack.c.b16 %v3692, %v3691
  %v3706 = vpack.c.b16 %v3694, %v3693
  %v3707 = vpack.c.b16 %v3696, %v3695
  %v3708 = vpack.c.b16 %v3698, %v3697
  %v3709 = vpack.c.b16 %v3700, %v3699
  %v3710 = vpack.c.b16 %v3702, %v3701
  %3719 = vmatprep.subr.bf16.mxu0 0
  %3720 = vmatpush1.bf16.msra.mxu0 %v3710
  %3721 = vmatprep.subr.bf16.mxu0 0
  %3722 = vmatpush1.bf16.msra.mxu0 %v3709
  %3723 = vmatprep.subr.bf16.mxu0 0
  %3724 = vmatpush1.bf16.msra.mxu0 %v3708
  %3725 = vmatprep.subr.bf16.mxu0 0
  %3726 = vmatpush1.bf16.msra.mxu0 %v3707
  %3727 = vmatprep.subr.bf16.mxu0 0
  %3728 = vmatpush1.bf16.msra.mxu0 %v3706
  %3729 = vmatprep.subr.bf16.mxu0 0
  %3730 = vmatpush1.bf16.msra.mxu0 %v3705
  %3731 = vmatprep.subr.bf16.mxu0 0
  %3732 = vmatpush1.bf16.msra.mxu0 %v3704
  %3733 = vmatprep.subr.bf16.mxu0 0
  %3734 = vmatpush1.bf16.msra.mxu0 %v3703
  %3735 = vmatprep.subr.bf16.mxu0 0
  %3736 = vmatpush2.bf16.msra.mxu0 0
  %3737 = vmatprep.subr.bf16.mxu0 0
  %3738 = vmatpush2.bf16.msra.mxu0 0
  %3739 = vmatprep.subr.bf16.mxu0 0
  %3740 = vmatpush2.bf16.msra.mxu0 0
  %3741 = vmatprep.subr.bf16.mxu0 0
  %3742 = vmatpush2.bf16.msra.mxu0 0
  %3743 = vmatprep.subr.bf16.mxu0 0
  %3744 = vmatpush2.bf16.msra.mxu0 0
  %3745 = vmatprep.subr.bf16.mxu0 0
  %3746 = vmatpush2.bf16.msra.mxu0 0
  %3747 = vmatprep.subr.bf16.mxu0 0
  %3748 = vmatpush2.bf16.msra.mxu0 0
  %3749 = vmatprep.subr.bf16.mxu0 0
  %3750 = vmatpush2.bf16.msra.mxu0 0
  %3751 = vmatprep.mubr.bf16.mxu0 0
  %3752 = vmatmul.mubr.bf16.gmra.mxu0 %v2262
  %v3753 = vpop.f32.mrf.mxu0
  %v3754 = vadd.f32 0.0, %v3753
  %v3755 = vpop.f32.mrf.mxu0
  %v3756 = vpop.f32.mrf.mxu0
  %v3757 = vadd.f32 0.0, %v3756
  %v3758 = vpop.f32.mrf.mxu0
  %3759 = vmatprep.mubr.bf16.mxu0 0
  %3760 = vmatmul.mubr.bf16.gmra.mxu0 %v2263
  %v3761 = vpop.f32.mrf.mxu0
  %v3762 = vadd.f32 0.0, %v3761
  %v3763 = vpop.f32.mrf.mxu0
  %v3764 = vpop.f32.mrf.mxu0
  %v3765 = vadd.f32 0.0, %v3764
  %v3766 = vpop.f32.mrf.mxu0
  %3767 = vmatprep.mubr.bf16.mxu0 0
  %3768 = vmatmul.mubr.bf16.gmra.mxu0 %v2264
  %v3769 = vpop.f32.mrf.mxu0
  %v3770 = vadd.f32 0.0, %v3769
  %v3771 = vpop.f32.mrf.mxu0
  %v3772 = vpop.f32.mrf.mxu0
  %v3773 = vadd.f32 0.0, %v3772
  %v3774 = vpop.f32.mrf.mxu0
  %3775 = vmatprep.mubr.bf16.mxu0 0
  %3776 = vmatmul.mubr.bf16.gmra.mxu0 %v2265
  %v3777 = vpop.f32.mrf.mxu0
  %v3778 = vadd.f32 0.0, %v3777
  %v3779 = vpop.f32.mrf.mxu0
  %v3780 = vpop.f32.mrf.mxu0
  %v3781 = vadd.f32 0.0, %v3780
  %v3782 = vpop.f32.mrf.mxu0
  %3783 = vmatprep.mubr.bf16.mxu0 0
  %3784 = vmatmul.mubr.bf16.gmra.mxu0 %v2266
  %v3785 = vpop.f32.mrf.mxu0
  %v3786 = vadd.f32 0.0, %v3785
  %v3787 = vpop.f32.mrf.mxu0
  %v3788 = vpop.f32.mrf.mxu0
  %v3789 = vadd.f32 0.0, %v3788
  %v3790 = vpop.f32.mrf.mxu0
  %3791 = vmatprep.mubr.bf16.mxu0 0
  %3792 = vmatmul.mubr.bf16.gmra.mxu0 %v2267
  %v3793 = vpop.f32.mrf.mxu0
  %v3794 = vadd.f32 0.0, %v3793
  %v3795 = vpop.f32.mrf.mxu0
  %v3796 = vpop.f32.mrf.mxu0
  %v3797 = vadd.f32 0.0, %v3796
  %v3798 = vpop.f32.mrf.mxu0
  %3799 = vmatprep.mubr.bf16.mxu0 0
  %3800 = vmatmul.mubr.bf16.gmra.mxu0 %v2268
  %v3801 = vpop.f32.mrf.mxu0
  %v3802 = vadd.f32 0.0, %v3801
  %v3803 = vpop.f32.mrf.mxu0
  %v3804 = vpop.f32.mrf.mxu0
  %v3805 = vadd.f32 0.0, %v3804
  %v3806 = vpop.f32.mrf.mxu0
  %3807 = vmatprep.mubr.bf16.mxu0 0
  %3808 = vmatmul.mubr.bf16.gmra.mxu0 %v2269
  %v3809 = vpop.f32.mrf.mxu0
  %v3810 = vadd.f32 0.0, %v3809
  %v3811 = vpop.f32.mrf.mxu0
  %v3812 = vpop.f32.mrf.mxu0
  %v3813 = vadd.f32 0.0, %v3812
  %v3814 = vpop.f32.mrf.mxu0
  %3815 = vmatprep.mubr.bf16.mxu0 0
  %3816 = vmatmul.mubr.bf16.gmra.mxu0 %v2270
  %v3817 = vpop.f32.mrf.mxu0
  %v3818 = vadd.f32 0.0, %v3817
  %v3819 = vpop.f32.mrf.mxu0
  %v3820 = vpop.f32.mrf.mxu0
  %v3821 = vadd.f32 0.0, %v3820
  %v3822 = vpop.f32.mrf.mxu0
  %3823 = vmatprep.mubr.bf16.mxu0 0
  %3824 = vmatmul.mubr.bf16.gmra.mxu0 %v2271
  %v3825 = vpop.f32.mrf.mxu0
  %v3826 = vadd.f32 0.0, %v3825
  %v3827 = vpop.f32.mrf.mxu0
  %v3828 = vpop.f32.mrf.mxu0
  %v3829 = vadd.f32 0.0, %v3828
  %v3830 = vpop.f32.mrf.mxu0
  %3831 = vmatprep.mubr.bf16.mxu0 0
  %3832 = vmatmul.mubr.bf16.gmra.mxu0 %v2272
  %v3833 = vpop.f32.mrf.mxu0
  %v3834 = vadd.f32 0.0, %v3833
  %v3835 = vpop.f32.mrf.mxu0
  %v3836 = vpop.f32.mrf.mxu0
  %v3837 = vadd.f32 0.0, %v3836
  %v3838 = vpop.f32.mrf.mxu0
  %3839 = vmatprep.mubr.bf16.mxu0 0
  %3840 = vmatmul.mubr.bf16.gmra.mxu0 %v2273
  %v3841 = vpop.f32.mrf.mxu0
  %v3842 = vadd.f32 0.0, %v3841
  %v3843 = vpop.f32.mrf.mxu0
  %v3844 = vpop.f32.mrf.mxu0
  %v3845 = vadd.f32 0.0, %v3844
  %v3846 = vpop.f32.mrf.mxu0
  %3847 = vmatprep.mubr.bf16.mxu0 0
  %3848 = vmatmul.mubr.bf16.gmra.mxu0 %v2274
  %v3849 = vpop.f32.mrf.mxu0
  %v3850 = vadd.f32 0.0, %v3849
  %v3851 = vpop.f32.mrf.mxu0
  %v3852 = vpop.f32.mrf.mxu0
  %v3853 = vadd.f32 0.0, %v3852
  %v3854 = vpop.f32.mrf.mxu0
  %3855 = vmatprep.mubr.bf16.mxu0 0
  %3856 = vmatmul.mubr.bf16.gmra.mxu0 %v2275
  %v3857 = vpop.f32.mrf.mxu0
  %v3858 = vadd.f32 0.0, %v3857
  %v3859 = vpop.f32.mrf.mxu0
  %v3860 = vpop.f32.mrf.mxu0
  %v3861 = vadd.f32 0.0, %v3860
  %v3862 = vpop.f32.mrf.mxu0
  %3863 = vmatprep.mubr.bf16.mxu0 0
  %3864 = vmatmul.mubr.bf16.gmra.mxu0 %v2276
  %v3865 = vpop.f32.mrf.mxu0
  %v3866 = vadd.f32 0.0, %v3865
  %v3867 = vpop.f32.mrf.mxu0
  %v3868 = vpop.f32.mrf.mxu0
  %v3869 = vadd.f32 0.0, %v3868
  %v3870 = vpop.f32.mrf.mxu0
  %3871 = vmatprep.mubr.bf16.mxu0 0
  %3872 = vmatmul.mubr.bf16.gmra.mxu0 %v3667
  %v3873 = vpop.f32.mrf.mxu0
  %v3874 = vadd.f32 0.0, %v3873
  %v3875 = vpop.f32.mrf.mxu0
  %v3876 = vpop.f32.mrf.mxu0
  %v3877 = vadd.f32 0.0, %v3876
  %v3878 = vpop.f32.mrf.mxu0
  %3879 = vmatprep.mubr.bf16.mxu0 0
  %3880 = vmatmul.mubr.bf16.gmra.mxu0 %v2278
  %v3881 = vpop.f32.mrf.mxu0
  %v3882 = vadd.f32 0.0, %v3881
  %v3883 = vpop.f32.mrf.mxu0
  %v3884 = vpop.f32.mrf.mxu0
  %v3885 = vadd.f32 0.0, %v3884
  %v3886 = vpop.f32.mrf.mxu0
  %3887 = vmatprep.mubr.bf16.mxu0 0
  %3888 = vmatmul.mubr.bf16.gmra.mxu0 %v2279
  %v3889 = vpop.f32.mrf.mxu0
  %v3890 = vadd.f32 0.0, %v3889
  %v3891 = vpop.f32.mrf.mxu0
  %v3892 = vpop.f32.mrf.mxu0
  %v3893 = vadd.f32 0.0, %v3892
  %v3894 = vpop.f32.mrf.mxu0
  %3895 = vmatprep.mubr.bf16.mxu0 0
  %3896 = vmatmul.mubr.bf16.gmra.mxu0 %v2280
  %v3897 = vpop.f32.mrf.mxu0
  %v3898 = vadd.f32 0.0, %v3897
  %v3899 = vpop.f32.mrf.mxu0
  %v3900 = vpop.f32.mrf.mxu0
  %v3901 = vadd.f32 0.0, %v3900
  %v3902 = vpop.f32.mrf.mxu0
  %3903 = vmatprep.mubr.bf16.mxu0 0
  %3904 = vmatmul.mubr.bf16.gmra.mxu0 %v2281
  %v3905 = vpop.f32.mrf.mxu0
  %v3906 = vadd.f32 0.0, %v3905
  %v3907 = vpop.f32.mrf.mxu0
  %v3908 = vpop.f32.mrf.mxu0
  %v3909 = vadd.f32 0.0, %v3908
  %v3910 = vpop.f32.mrf.mxu0
  %3911 = vmatprep.mubr.bf16.mxu0 0
  %3912 = vmatmul.mubr.bf16.gmra.mxu0 %v2282
  %v3913 = vpop.f32.mrf.mxu0
  %v3914 = vadd.f32 0.0, %v3913
  %v3915 = vpop.f32.mrf.mxu0
  %v3916 = vpop.f32.mrf.mxu0
  %v3917 = vadd.f32 0.0, %v3916
  %v3918 = vpop.f32.mrf.mxu0
  %3919 = vmatprep.mubr.bf16.mxu0 0
  %3920 = vmatmul.mubr.bf16.gmra.mxu0 %v2283
  %v3921 = vpop.f32.mrf.mxu0
  %v3922 = vadd.f32 0.0, %v3921
  %v3923 = vpop.f32.mrf.mxu0
  %v3924 = vpop.f32.mrf.mxu0
  %v3925 = vadd.f32 0.0, %v3924
  %v3926 = vpop.f32.mrf.mxu0
  %3927 = vmatprep.mubr.bf16.mxu0 0
  %3928 = vmatmul.mubr.bf16.gmra.mxu0 %v2284
  %v3929 = vpop.f32.mrf.mxu0
  %v3930 = vadd.f32 0.0, %v3929
  %v3931 = vpop.f32.mrf.mxu0
  %v3932 = vpop.f32.mrf.mxu0
  %v3933 = vadd.f32 0.0, %v3932
  %v3934 = vpop.f32.mrf.mxu0
  %3935 = vmatprep.mubr.bf16.mxu0 0
  %3936 = vmatmul.mubr.bf16.gmra.mxu0 %v2285
  %v3937 = vpop.f32.mrf.mxu0
  %v3938 = vadd.f32 0.0, %v3937
  %v3939 = vpop.f32.mrf.mxu0
  %v3940 = vpop.f32.mrf.mxu0
  %v3941 = vadd.f32 0.0, %v3940
  %v3942 = vpop.f32.mrf.mxu0
  %3943 = vmatprep.mubr.bf16.mxu0 0
  %3944 = vmatmul.mubr.bf16.gmra.mxu0 %v2286
  %v3945 = vpop.f32.mrf.mxu0
  %v3946 = vadd.f32 0.0, %v3945
  %v3947 = vpop.f32.mrf.mxu0
  %v3948 = vpop.f32.mrf.mxu0
  %v3949 = vadd.f32 0.0, %v3948
  %v3950 = vpop.f32.mrf.mxu0
  %3951 = vmatprep.mubr.bf16.mxu0 0
  %3952 = vmatmul.mubr.bf16.gmra.mxu0 %v2287
  %v3953 = vpop.f32.mrf.mxu0
  %v3954 = vadd.f32 0.0, %v3953
  %v3955 = vpop.f32.mrf.mxu0
  %v3956 = vpop.f32.mrf.mxu0
  %v3957 = vadd.f32 0.0, %v3956
  %v3958 = vpop.f32.mrf.mxu0
  %3959 = vmatprep.mubr.bf16.mxu0 0
  %3960 = vmatmul.mubr.bf16.gmra.mxu0 %v2288
  %v3961 = vpop.f32.mrf.mxu0
  %v3962 = vadd.f32 0.0, %v3961
  %v3963 = vpop.f32.mrf.mxu0
  %v3964 = vpop.f32.mrf.mxu0
  %v3965 = vadd.f32 0.0, %v3964
  %v3966 = vpop.f32.mrf.mxu0
  %3967 = vmatprep.mubr.bf16.mxu0 0
  %3968 = vmatmul.mubr.bf16.gmra.mxu0 %v2289
  %v3969 = vpop.f32.mrf.mxu0
  %v3970 = vadd.f32 0.0, %v3969
  %v3971 = vpop.f32.mrf.mxu0
  %v3972 = vpop.f32.mrf.mxu0
  %v3973 = vadd.f32 0.0, %v3972
  %v3974 = vpop.f32.mrf.mxu0
  %3975 = vmatprep.mubr.bf16.mxu0 0
  %3976 = vmatmul.mubr.bf16.gmra.mxu0 %v2290
  %v3977 = vpop.f32.mrf.mxu0
  %v3978 = vadd.f32 0.0, %v3977
  %v3979 = vpop.f32.mrf.mxu0
  %v3980 = vpop.f32.mrf.mxu0
  %v3981 = vadd.f32 0.0, %v3980
  %v3982 = vpop.f32.mrf.mxu0
  %3983 = vmatprep.mubr.bf16.mxu0 0
  %3984 = vmatmul.mubr.bf16.gmra.mxu0 %v2291
  %v3985 = vpop.f32.mrf.mxu0
  %v3986 = vadd.f32 0.0, %v3985
  %v3987 = vpop.f32.mrf.mxu0
  %v3988 = vpop.f32.mrf.mxu0
  %v3989 = vadd.f32 0.0, %v3988
  %v3990 = vpop.f32.mrf.mxu0
  %3991 = vmatprep.mubr.bf16.mxu0 0
  %3992 = vmatmul.mubr.bf16.gmra.mxu0 %v2292
  %v3993 = vpop.f32.mrf.mxu0
  %v3994 = vadd.f32 0.0, %v3993
  %v3995 = vpop.f32.mrf.mxu0
  %v3996 = vpop.f32.mrf.mxu0
  %v3997 = vadd.f32 0.0, %v3996
  %v3998 = vpop.f32.mrf.mxu0
  %3999 = vmatprep.mubr.bf16.mxu0 0
  %4000 = vmatmul.mubr.bf16.gmra.mxu0 %v3668
  %v4001 = vpop.f32.mrf.mxu0
  %v4002 = vadd.f32 0.0, %v4001
  %v4003 = vpop.f32.mrf.mxu0
  %v4004 = vpop.f32.mrf.mxu0
  %v4005 = vadd.f32 0.0, %v4004
  %v4006 = vpop.f32.mrf.mxu0
  %4007 = vdwg.mxu0
  %v4008 = vadd.f32 %v3566, %v3754
  %v4009 = vadd.f32 %v3567, %v3757
  %v4010 = vadd.f32 %v3568, %v3762
  %v4011 = vadd.f32 %v3569, %v3765
  %v4012 = vadd.f32 %v3570, %v3770
  %v4013 = vadd.f32 %v3571, %v3773
  %v4014 = vadd.f32 %v3572, %v3778
  %v4015 = vadd.f32 %v3573, %v3781
  %v4016 = vadd.f32 %v3574, %v3786
  %v4017 = vadd.f32 %v3575, %v3789
  %v4018 = vadd.f32 %v3576, %v3794
  %v4019 = vadd.f32 %v3577, %v3797
  %v4020 = vadd.f32 %v3578, %v3802
  %v4021 = vadd.f32 %v3579, %v3805
  %v4022 = vadd.f32 %v3580, %v3810
  %v4023 = vadd.f32 %v3581, %v3813
  %v4024 = vadd.f32 %v3582, %v3818
  %v4025 = vadd.f32 %v3583, %v3821
  %v4026 = vadd.f32 %v3584, %v3826
  %v4027 = vadd.f32 %v3585, %v3829
  %v4028 = vadd.f32 %v3586, %v3834
  %v4029 = vadd.f32 %v3587, %v3837
  %v4030 = vadd.f32 %v3588, %v3842
  %v4031 = vadd.f32 %v3589, %v3845
  %v4032 = vadd.f32 %v3590, %v3850
  %v4033 = vadd.f32 %v3591, %v3853
  %v4034 = vadd.f32 %v3592, %v3858
  %v4035 = vadd.f32 %v3593, %v3861
  %v4036 = vadd.f32 %v3594, %v3866
  %v4037 = vadd.f32 %v3595, %v3869
  %v4038 = vadd.f32 %v3596, %v3874
  %v4039 = vadd.f32 %v3597, %v3877
  %v4040 = vadd.f32 %v3598, %v3882
  %v4041 = vadd.f32 %v3599, %v3885
  %v4042 = vadd.f32 %v3600, %v3890
  %v4043 = vadd.f32 %v3601, %v3893
  %v4044 = vadd.f32 %v3602, %v3898
  %v4045 = vadd.f32 %v3603, %v3901
  %v4046 = vadd.f32 %v3604, %v3906
  %v4047 = vadd.f32 %v3605, %v3909
  %v4048 = vadd.f32 %v3606, %v3914
  %v4049 = vadd.f32 %v3607, %v3917
  %v4050 = vadd.f32 %v3608, %v3922
  %v4051 = vadd.f32 %v3609, %v3925
  %v4052 = vadd.f32 %v3610, %v3930
  %v4053 = vadd.f32 %v3611, %v3933
  %v4054 = vadd.f32 %v3612, %v3938
  %v4055 = vadd.f32 %v3613, %v3941
  %v4056 = vadd.f32 %v3614, %v3946
  %v4057 = vadd.f32 %v3615, %v3949
  %v4058 = vadd.f32 %v3616, %v3954
  %v4059 = vadd.f32 %v3617, %v3957
  %v4060 = vadd.f32 %v3618, %v3962
  %v4061 = vadd.f32 %v3619, %v3965
  %v4062 = vadd.f32 %v3620, %v3970
  %v4063 = vadd.f32 %v3621, %v3973
  %v4064 = vadd.f32 %v3622, %v3978
  %v4065 = vadd.f32 %v3623, %v3981
  %v4066 = vadd.f32 %v3624, %v3986
  %v4067 = vadd.f32 %v3625, %v3989
  %v4068 = vadd.f32 %v3626, %v3994
  %v4069 = vadd.f32 %v3627, %v3997
  %v4070 = vadd.f32 %v3628, %v4002
  %v4071 = vadd.f32 %v3629, %v4005
  %s4072 = scalar_lea.vmem %s1, 384
  %v4073 = vld [vmem:[%s4072] sm:$0xf]
  %v4074 = vld [vmem:[%s4072 + $0x4] sm:$0xf]
  %v4075 = vld [vmem:[%s4072 + $0x8] sm:$0xf]
  %v4076 = vld [vmem:[%s4072 + $0xc] sm:$0xf]
  %v4077 = vld [vmem:[%s4072 + $0x10] sm:$0xf]
  %v4078 = vld [vmem:[%s4072 + $0x14] sm:$0xf]
  %v4079 = vld [vmem:[%s4072 + $0x18] sm:$0xf]
  %v4080 = vld [vmem:[%s4072 + $0x1c] sm:$0xf]
  %v4081 = vld [vmem:[%s4072 + $0x20] sm:$0xf]
  %v4082 = vld [vmem:[%s4072 + $0x24] sm:$0xf]
  %v4083 = vld [vmem:[%s4072 + $0x28] sm:$0xf]
  %v4084 = vld [vmem:[%s4072 + $0x2c] sm:$0xf]
  %v4085 = vld [vmem:[%s4072 + $0x30] sm:$0xf]
  %v4086 = vld [vmem:[%s4072 + $0x34] sm:$0xf]
  %v4087 = vld [vmem:[%s4072 + $0x38] sm:$0xf]
  %v4088 = vld [vmem:[%s4072 + $0x3c] sm:$0xf]
  %v4093 = vunpack.c.l.b16 %v66
  %v4094 = vunpack.c.l.b16 %v67
  %v4095 = vunpack.c.l.b16 %v120
  %v4096 = vunpack.c.l.b16 %v121
  %v4097 = vpack.c.b16 %v4094, %v4093
  %v4098 = vpack.c.b16 %v4096, %v4095
  %v4117 = vunpack.c.l.b16 %v4073
  %v4118 = vunpack.c.l.b16 %v4074
  %v4119 = vunpack.c.l.b16 %v4075
  %v4120 = vunpack.c.l.b16 %v4076
  %v4121 = vunpack.c.l.b16 %v4077
  %v4122 = vunpack.c.l.b16 %v4078
  %v4123 = vunpack.c.l.b16 %v4079
  %v4124 = vunpack.c.l.b16 %v4080
  %v4125 = vunpack.c.l.b16 %v4081
  %v4126 = vunpack.c.l.b16 %v4082
  %v4127 = vunpack.c.l.b16 %v4083
  %v4128 = vunpack.c.l.b16 %v4084
  %v4129 = vunpack.c.l.b16 %v4085
  %v4130 = vunpack.c.l.b16 %v4086
  %v4131 = vunpack.c.l.b16 %v4087
  %v4132 = vunpack.c.l.b16 %v4088
  %v4133 = vpack.c.b16 %v4118, %v4117
  %v4134 = vpack.c.b16 %v4120, %v4119
  %v4135 = vpack.c.b16 %v4122, %v4121
  %v4136 = vpack.c.b16 %v4124, %v4123
  %v4137 = vpack.c.b16 %v4126, %v4125
  %v4138 = vpack.c.b16 %v4128, %v4127
  %v4139 = vpack.c.b16 %v4130, %v4129
  %v4140 = vpack.c.b16 %v4132, %v4131
  %4149 = vmatprep.subr.bf16.mxu0 0
  %4150 = vmatpush1.bf16.msra.mxu0 %v4140
  %4151 = vmatprep.subr.bf16.mxu0 0
  %4152 = vmatpush1.bf16.msra.mxu0 %v4139
  %4153 = vmatprep.subr.bf16.mxu0 0
  %4154 = vmatpush1.bf16.msra.mxu0 %v4138
  %4155 = vmatprep.subr.bf16.mxu0 0
  %4156 = vmatpush1.bf16.msra.mxu0 %v4137
  %4157 = vmatprep.subr.bf16.mxu0 0
  %4158 = vmatpush1.bf16.msra.mxu0 %v4136
  %4159 = vmatprep.subr.bf16.mxu0 0
  %4160 = vmatpush1.bf16.msra.mxu0 %v4135
  %4161 = vmatprep.subr.bf16.mxu0 0
  %4162 = vmatpush1.bf16.msra.mxu0 %v4134
  %4163 = vmatprep.subr.bf16.mxu0 0
  %4164 = vmatpush1.bf16.msra.mxu0 %v4133
  %4165 = vmatprep.subr.bf16.mxu0 0
  %4166 = vmatpush2.bf16.msra.mxu0 0
  %4167 = vmatprep.subr.bf16.mxu0 0
  %4168 = vmatpush2.bf16.msra.mxu0 0
  %4169 = vmatprep.subr.bf16.mxu0 0
  %4170 = vmatpush2.bf16.msra.mxu0 0
  %4171 = vmatprep.subr.bf16.mxu0 0
  %4172 = vmatpush2.bf16.msra.mxu0 0
  %4173 = vmatprep.subr.bf16.mxu0 0
  %4174 = vmatpush2.bf16.msra.mxu0 0
  %4175 = vmatprep.subr.bf16.mxu0 0
  %4176 = vmatpush2.bf16.msra.mxu0 0
  %4177 = vmatprep.subr.bf16.mxu0 0
  %4178 = vmatpush2.bf16.msra.mxu0 0
  %4179 = vmatprep.subr.bf16.mxu0 0
  %4180 = vmatpush2.bf16.msra.mxu0 0
  %4181 = vmatprep.mubr.bf16.mxu0 0
  %4182 = vmatmul.mubr.bf16.gmra.mxu0 %v1522
  %v4183 = vpop.f32.mrf.mxu0
  %v4184 = vadd.f32 0.0, %v4183
  %v4185 = vpop.f32.mrf.mxu0
  %v4186 = vpop.f32.mrf.mxu0
  %v4187 = vadd.f32 0.0, %v4186
  %v4188 = vpop.f32.mrf.mxu0
  %4189 = vmatprep.mubr.bf16.mxu0 0
  %4190 = vmatmul.mubr.bf16.gmra.mxu0 %v1523
  %v4191 = vpop.f32.mrf.mxu0
  %v4192 = vadd.f32 0.0, %v4191
  %v4193 = vpop.f32.mrf.mxu0
  %v4194 = vpop.f32.mrf.mxu0
  %v4195 = vadd.f32 0.0, %v4194
  %v4196 = vpop.f32.mrf.mxu0
  %4197 = vmatprep.mubr.bf16.mxu0 0
  %4198 = vmatmul.mubr.bf16.gmra.mxu0 %v1524
  %v4199 = vpop.f32.mrf.mxu0
  %v4200 = vadd.f32 0.0, %v4199
  %v4201 = vpop.f32.mrf.mxu0
  %v4202 = vpop.f32.mrf.mxu0
  %v4203 = vadd.f32 0.0, %v4202
  %v4204 = vpop.f32.mrf.mxu0
  %4205 = vmatprep.mubr.bf16.mxu0 0
  %4206 = vmatmul.mubr.bf16.gmra.mxu0 %v1525
  %v4207 = vpop.f32.mrf.mxu0
  %v4208 = vadd.f32 0.0, %v4207
  %v4209 = vpop.f32.mrf.mxu0
  %v4210 = vpop.f32.mrf.mxu0
  %v4211 = vadd.f32 0.0, %v4210
  %v4212 = vpop.f32.mrf.mxu0
  %4213 = vmatprep.mubr.bf16.mxu0 0
  %4214 = vmatmul.mubr.bf16.gmra.mxu0 %v1526
  %v4215 = vpop.f32.mrf.mxu0
  %v4216 = vadd.f32 0.0, %v4215
  %v4217 = vpop.f32.mrf.mxu0
  %v4218 = vpop.f32.mrf.mxu0
  %v4219 = vadd.f32 0.0, %v4218
  %v4220 = vpop.f32.mrf.mxu0
  %4221 = vmatprep.mubr.bf16.mxu0 0
  %4222 = vmatmul.mubr.bf16.gmra.mxu0 %v1527
  %v4223 = vpop.f32.mrf.mxu0
  %v4224 = vadd.f32 0.0, %v4223
  %v4225 = vpop.f32.mrf.mxu0
  %v4226 = vpop.f32.mrf.mxu0
  %v4227 = vadd.f32 0.0, %v4226
  %v4228 = vpop.f32.mrf.mxu0
  %4229 = vmatprep.mubr.bf16.mxu0 0
  %4230 = vmatmul.mubr.bf16.gmra.mxu0 %v1528
  %v4231 = vpop.f32.mrf.mxu0
  %v4232 = vadd.f32 0.0, %v4231
  %v4233 = vpop.f32.mrf.mxu0
  %v4234 = vpop.f32.mrf.mxu0
  %v4235 = vadd.f32 0.0, %v4234
  %v4236 = vpop.f32.mrf.mxu0
  %4237 = vmatprep.mubr.bf16.mxu0 0
  %4238 = vmatmul.mubr.bf16.gmra.mxu0 %v1529
  %v4239 = vpop.f32.mrf.mxu0
  %v4240 = vadd.f32 0.0, %v4239
  %v4241 = vpop.f32.mrf.mxu0
  %v4242 = vpop.f32.mrf.mxu0
  %v4243 = vadd.f32 0.0, %v4242
  %v4244 = vpop.f32.mrf.mxu0
  %4245 = vmatprep.mubr.bf16.mxu0 0
  %4246 = vmatmul.mubr.bf16.gmra.mxu0 %v1530
  %v4247 = vpop.f32.mrf.mxu0
  %v4248 = vadd.f32 0.0, %v4247
  %v4249 = vpop.f32.mrf.mxu0
  %v4250 = vpop.f32.mrf.mxu0
  %v4251 = vadd.f32 0.0, %v4250
  %v4252 = vpop.f32.mrf.mxu0
  %4253 = vmatprep.mubr.bf16.mxu0 0
  %4254 = vmatmul.mubr.bf16.gmra.mxu0 %v1531
  %v4255 = vpop.f32.mrf.mxu0
  %v4256 = vadd.f32 0.0, %v4255
  %v4257 = vpop.f32.mrf.mxu0
  %v4258 = vpop.f32.mrf.mxu0
  %v4259 = vadd.f32 0.0, %v4258
  %v4260 = vpop.f32.mrf.mxu0
  %4261 = vmatprep.mubr.bf16.mxu0 0
  %4262 = vmatmul.mubr.bf16.gmra.mxu0 %v1532
  %v4263 = vpop.f32.mrf.mxu0
  %v4264 = vadd.f32 0.0, %v4263
  %v4265 = vpop.f32.mrf.mxu0
  %v4266 = vpop.f32.mrf.mxu0
  %v4267 = vadd.f32 0.0, %v4266
  %v4268 = vpop.f32.mrf.mxu0
  %4269 = vmatprep.mubr.bf16.mxu0 0
  %4270 = vmatmul.mubr.bf16.gmra.mxu0 %v1533
  %v4271 = vpop.f32.mrf.mxu0
  %v4272 = vadd.f32 0.0, %v4271
  %v4273 = vpop.f32.mrf.mxu0
  %v4274 = vpop.f32.mrf.mxu0
  %v4275 = vadd.f32 0.0, %v4274
  %v4276 = vpop.f32.mrf.mxu0
  %4277 = vmatprep.mubr.bf16.mxu0 0
  %4278 = vmatmul.mubr.bf16.gmra.mxu0 %v1534
  %v4279 = vpop.f32.mrf.mxu0
  %v4280 = vadd.f32 0.0, %v4279
  %v4281 = vpop.f32.mrf.mxu0
  %v4282 = vpop.f32.mrf.mxu0
  %v4283 = vadd.f32 0.0, %v4282
  %v4284 = vpop.f32.mrf.mxu0
  %4285 = vmatprep.mubr.bf16.mxu0 0
  %4286 = vmatmul.mubr.bf16.gmra.mxu0 %v1535
  %v4287 = vpop.f32.mrf.mxu0
  %v4288 = vadd.f32 0.0, %v4287
  %v4289 = vpop.f32.mrf.mxu0
  %v4290 = vpop.f32.mrf.mxu0
  %v4291 = vadd.f32 0.0, %v4290
  %v4292 = vpop.f32.mrf.mxu0
  %4293 = vmatprep.mubr.bf16.mxu0 0
  %4294 = vmatmul.mubr.bf16.gmra.mxu0 %v2751
  %v4295 = vpop.f32.mrf.mxu0
  %v4296 = vadd.f32 0.0, %v4295
  %v4297 = vpop.f32.mrf.mxu0
  %v4298 = vpop.f32.mrf.mxu0
  %v4299 = vadd.f32 0.0, %v4298
  %v4300 = vpop.f32.mrf.mxu0
  %4301 = vmatprep.mubr.bf16.mxu0 0
  %4302 = vmatmul.mubr.bf16.gmra.mxu0 %v4097
  %v4303 = vpop.f32.mrf.mxu0
  %v4304 = vadd.f32 0.0, %v4303
  %v4305 = vpop.f32.mrf.mxu0
  %v4306 = vpop.f32.mrf.mxu0
  %v4307 = vadd.f32 0.0, %v4306
  %v4308 = vpop.f32.mrf.mxu0
  %4309 = vmatprep.mubr.bf16.mxu0 0
  %4310 = vmatmul.mubr.bf16.gmra.mxu0 %v1538
  %v4311 = vpop.f32.mrf.mxu0
  %v4312 = vadd.f32 0.0, %v4311
  %v4313 = vpop.f32.mrf.mxu0
  %v4314 = vpop.f32.mrf.mxu0
  %v4315 = vadd.f32 0.0, %v4314
  %v4316 = vpop.f32.mrf.mxu0
  %4317 = vmatprep.mubr.bf16.mxu0 0
  %4318 = vmatmul.mubr.bf16.gmra.mxu0 %v1539
  %v4319 = vpop.f32.mrf.mxu0
  %v4320 = vadd.f32 0.0, %v4319
  %v4321 = vpop.f32.mrf.mxu0
  %v4322 = vpop.f32.mrf.mxu0
  %v4323 = vadd.f32 0.0, %v4322
  %v4324 = vpop.f32.mrf.mxu0
  %4325 = vmatprep.mubr.bf16.mxu0 0
  %4326 = vmatmul.mubr.bf16.gmra.mxu0 %v1540
  %v4327 = vpop.f32.mrf.mxu0
  %v4328 = vadd.f32 0.0, %v4327
  %v4329 = vpop.f32.mrf.mxu0
  %v4330 = vpop.f32.mrf.mxu0
  %v4331 = vadd.f32 0.0, %v4330
  %v4332 = vpop.f32.mrf.mxu0
  %4333 = vmatprep.mubr.bf16.mxu0 0
  %4334 = vmatmul.mubr.bf16.gmra.mxu0 %v1541
  %v4335 = vpop.f32.mrf.mxu0
  %v4336 = vadd.f32 0.0, %v4335
  %v4337 = vpop.f32.mrf.mxu0
  %v4338 = vpop.f32.mrf.mxu0
  %v4339 = vadd.f32 0.0, %v4338
  %v4340 = vpop.f32.mrf.mxu0
  %4341 = vmatprep.mubr.bf16.mxu0 0
  %4342 = vmatmul.mubr.bf16.gmra.mxu0 %v1542
  %v4343 = vpop.f32.mrf.mxu0
  %v4344 = vadd.f32 0.0, %v4343
  %v4345 = vpop.f32.mrf.mxu0
  %v4346 = vpop.f32.mrf.mxu0
  %v4347 = vadd.f32 0.0, %v4346
  %v4348 = vpop.f32.mrf.mxu0
  %4349 = vmatprep.mubr.bf16.mxu0 0
  %4350 = vmatmul.mubr.bf16.gmra.mxu0 %v1543
  %v4351 = vpop.f32.mrf.mxu0
  %v4352 = vadd.f32 0.0, %v4351
  %v4353 = vpop.f32.mrf.mxu0
  %v4354 = vpop.f32.mrf.mxu0
  %v4355 = vadd.f32 0.0, %v4354
  %v4356 = vpop.f32.mrf.mxu0
  %4357 = vmatprep.mubr.bf16.mxu0 0
  %4358 = vmatmul.mubr.bf16.gmra.mxu0 %v1544
  %v4359 = vpop.f32.mrf.mxu0
  %v4360 = vadd.f32 0.0, %v4359
  %v4361 = vpop.f32.mrf.mxu0
  %v4362 = vpop.f32.mrf.mxu0
  %v4363 = vadd.f32 0.0, %v4362
  %v4364 = vpop.f32.mrf.mxu0
  %4365 = vmatprep.mubr.bf16.mxu0 0
  %4366 = vmatmul.mubr.bf16.gmra.mxu0 %v1545
  %v4367 = vpop.f32.mrf.mxu0
  %v4368 = vadd.f32 0.0, %v4367
  %v4369 = vpop.f32.mrf.mxu0
  %v4370 = vpop.f32.mrf.mxu0
  %v4371 = vadd.f32 0.0, %v4370
  %v4372 = vpop.f32.mrf.mxu0
  %4373 = vmatprep.mubr.bf16.mxu0 0
  %4374 = vmatmul.mubr.bf16.gmra.mxu0 %v1546
  %v4375 = vpop.f32.mrf.mxu0
  %v4376 = vadd.f32 0.0, %v4375
  %v4377 = vpop.f32.mrf.mxu0
  %v4378 = vpop.f32.mrf.mxu0
  %v4379 = vadd.f32 0.0, %v4378
  %v4380 = vpop.f32.mrf.mxu0
  %4381 = vmatprep.mubr.bf16.mxu0 0
  %4382 = vmatmul.mubr.bf16.gmra.mxu0 %v1547
  %v4383 = vpop.f32.mrf.mxu0
  %v4384 = vadd.f32 0.0, %v4383
  %v4385 = vpop.f32.mrf.mxu0
  %v4386 = vpop.f32.mrf.mxu0
  %v4387 = vadd.f32 0.0, %v4386
  %v4388 = vpop.f32.mrf.mxu0
  %4389 = vmatprep.mubr.bf16.mxu0 0
  %4390 = vmatmul.mubr.bf16.gmra.mxu0 %v1548
  %v4391 = vpop.f32.mrf.mxu0
  %v4392 = vadd.f32 0.0, %v4391
  %v4393 = vpop.f32.mrf.mxu0
  %v4394 = vpop.f32.mrf.mxu0
  %v4395 = vadd.f32 0.0, %v4394
  %v4396 = vpop.f32.mrf.mxu0
  %4397 = vmatprep.mubr.bf16.mxu0 0
  %4398 = vmatmul.mubr.bf16.gmra.mxu0 %v1549
  %v4399 = vpop.f32.mrf.mxu0
  %v4400 = vadd.f32 0.0, %v4399
  %v4401 = vpop.f32.mrf.mxu0
  %v4402 = vpop.f32.mrf.mxu0
  %v4403 = vadd.f32 0.0, %v4402
  %v4404 = vpop.f32.mrf.mxu0
  %4405 = vmatprep.mubr.bf16.mxu0 0
  %4406 = vmatmul.mubr.bf16.gmra.mxu0 %v1550
  %v4407 = vpop.f32.mrf.mxu0
  %v4408 = vadd.f32 0.0, %v4407
  %v4409 = vpop.f32.mrf.mxu0
  %v4410 = vpop.f32.mrf.mxu0
  %v4411 = vadd.f32 0.0, %v4410
  %v4412 = vpop.f32.mrf.mxu0
  %4413 = vmatprep.mubr.bf16.mxu0 0
  %4414 = vmatmul.mubr.bf16.gmra.mxu0 %v1551
  %v4415 = vpop.f32.mrf.mxu0
  %v4416 = vadd.f32 0.0, %v4415
  %v4417 = vpop.f32.mrf.mxu0
  %v4418 = vpop.f32.mrf.mxu0
  %v4419 = vadd.f32 0.0, %v4418
  %v4420 = vpop.f32.mrf.mxu0
  %4421 = vmatprep.mubr.bf16.mxu0 0
  %4422 = vmatmul.mubr.bf16.gmra.mxu0 %v2752
  %v4423 = vpop.f32.mrf.mxu0
  %v4424 = vadd.f32 0.0, %v4423
  %v4425 = vpop.f32.mrf.mxu0
  %v4426 = vpop.f32.mrf.mxu0
  %v4427 = vadd.f32 0.0, %v4426
  %v4428 = vpop.f32.mrf.mxu0
  %4429 = vmatprep.mubr.bf16.mxu0 0
  %4430 = vmatmul.mubr.bf16.gmra.mxu0 %v4098
  %v4431 = vpop.f32.mrf.mxu0
  %v4432 = vadd.f32 0.0, %v4431
  %v4433 = vpop.f32.mrf.mxu0
  %v4434 = vpop.f32.mrf.mxu0
  %v4435 = vadd.f32 0.0, %v4434
  %v4436 = vpop.f32.mrf.mxu0
  %4437 = vdwg.mxu0
  %v4438 = vadd.f32 %v4008, %v4184
  %v4439 = vadd.f32 %v4009, %v4187
  %v4440 = vadd.f32 %v4010, %v4192
  %v4441 = vadd.f32 %v4011, %v4195
  %v4442 = vadd.f32 %v4012, %v4200
  %v4443 = vadd.f32 %v4013, %v4203
  %v4444 = vadd.f32 %v4014, %v4208
  %v4445 = vadd.f32 %v4015, %v4211
  %v4446 = vadd.f32 %v4016, %v4216
  %v4447 = vadd.f32 %v4017, %v4219
  %v4448 = vadd.f32 %v4018, %v4224
  %v4449 = vadd.f32 %v4019, %v4227
  %v4450 = vadd.f32 %v4020, %v4232
  %v4451 = vadd.f32 %v4021, %v4235
  %v4452 = vadd.f32 %v4022, %v4240
  %v4453 = vadd.f32 %v4023, %v4243
  %v4454 = vadd.f32 %v4024, %v4248
  %v4455 = vadd.f32 %v4025, %v4251
  %v4456 = vadd.f32 %v4026, %v4256
  %v4457 = vadd.f32 %v4027, %v4259
  %v4458 = vadd.f32 %v4028, %v4264
  %v4459 = vadd.f32 %v4029, %v4267
  %v4460 = vadd.f32 %v4030, %v4272
  %v4461 = vadd.f32 %v4031, %v4275
  %v4462 = vadd.f32 %v4032, %v4280
  %v4463 = vadd.f32 %v4033, %v4283
  %v4464 = vadd.f32 %v4034, %v4288
  %v4465 = vadd.f32 %v4035, %v4291
  %v4466 = vadd.f32 %v4036, %v4296
  %v4467 = vadd.f32 %v4037, %v4299
  %v4468 = vadd.f32 %v4038, %v4304
  %v4469 = vadd.f32 %v4039, %v4307
  %v4470 = vadd.f32 %v4040, %v4312
  %v4471 = vadd.f32 %v4041, %v4315
  %v4472 = vadd.f32 %v4042, %v4320
  %v4473 = vadd.f32 %v4043, %v4323
  %v4474 = vadd.f32 %v4044, %v4328
  %v4475 = vadd.f32 %v4045, %v4331
  %v4476 = vadd.f32 %v4046, %v4336
  %v4477 = vadd.f32 %v4047, %v4339
  %v4478 = vadd.f32 %v4048, %v4344
  %v4479 = vadd.f32 %v4049, %v4347
  %v4480 = vadd.f32 %v4050, %v4352
  %v4481 = vadd.f32 %v4051, %v4355
  %v4482 = vadd.f32 %v4052, %v4360
  %v4483 = vadd.f32 %v4053, %v4363
  %v4484 = vadd.f32 %v4054, %v4368
  %v4485 = vadd.f32 %v4055, %v4371
  %v4486 = vadd.f32 %v4056, %v4376
  %v4487 = vadd.f32 %v4057, %v4379
  %v4488 = vadd.f32 %v4058, %v4384
  %v4489 = vadd.f32 %v4059, %v4387
  %v4490 = vadd.f32 %v4060, %v4392
  %v4491 = vadd.f32 %v4061, %v4395
  %v4492 = vadd.f32 %v4062, %v4400
  %v4493 = vadd.f32 %v4063, %v4403
  %v4494 = vadd.f32 %v4064, %v4408
  %v4495 = vadd.f32 %v4065, %v4411
  %v4496 = vadd.f32 %v4066, %v4416
  %v4497 = vadd.f32 %v4067, %v4419
  %v4498 = vadd.f32 %v4068, %v4424
  %v4499 = vadd.f32 %v4069, %v4427
  %v4500 = vadd.f32 %v4070, %v4432
  %v4501 = vadd.f32 %v4071, %v4435
  %v4503 = vshrl.u32 %v66, 16
  %v4505 = vrot.slane %v4503, 4
  %v4506 = vshll.u32 %v66, 16
  %v4508 = vrot.slane %v4506, 5
  %v4509 = vor.u32 %v4505, %v4508
  %v4510 = vrot.slane %v4509, 4
  %v4512 = vshll.u32 %v67, 16
  %v4514 = vrot.slane %v4512, 5
  %v4515 = vsel %vm141, %v4510, %v4514
  %v4516 = vshrl.u32 %v67, 16
  %v4518 = vrot.slane %v4516, 4
  %v4519 = vor.u32 %v4518, %v4514
  %v4520 = vrot.slane %v4519, 4
  %v4522 = vshll.u32 %v68, 16
  %v4524 = vrot.slane %v4522, 5
  %v4525 = vsel %vm141, %v4520, %v4524
  %v4527 = vshrl.u32 %v120, 16
  %v4529 = vrot.slane %v4527, 4
  %v4530 = vshll.u32 %v120, 16
  %v4532 = vrot.slane %v4530, 5
  %v4533 = vor.u32 %v4529, %v4532
  %v4534 = vrot.slane %v4533, 4
  %v4536 = vshll.u32 %v121, 16
  %v4538 = vrot.slane %v4536, 5
  %v4539 = vsel %vm141, %v4534, %v4538
  %v4540 = vshrl.u32 %v121, 16
  %v4542 = vrot.slane %v4540, 4
  %v4543 = vor.u32 %v4542, %v4538
  %v4544 = vrot.slane %v4543, 4
  %v4546 = vshll.u32 %v122, 16
  %v4548 = vrot.slane %v4546, 5
  %v4549 = vsel %vm141, %v4544, %v4548
  %s4550 = scalar_lea.vmem %s1, 448
  %v4551 = vld [vmem:[%s4550] sm:$0xf]
  %v4552 = vld [vmem:[%s4550 + $0x4] sm:$0xf]
  %v4553 = vld [vmem:[%s4550 + $0x8] sm:$0xf]
  %v4554 = vld [vmem:[%s4550 + $0xc] sm:$0xf]
  %v4555 = vld [vmem:[%s4550 + $0x10] sm:$0xf]
  %v4556 = vld [vmem:[%s4550 + $0x14] sm:$0xf]
  %v4557 = vld [vmem:[%s4550 + $0x18] sm:$0xf]
  %v4558 = vld [vmem:[%s4550 + $0x1c] sm:$0xf]
  %v4559 = vld [vmem:[%s4550 + $0x20] sm:$0xf]
  %v4560 = vld [vmem:[%s4550 + $0x24] sm:$0xf]
  %v4561 = vld [vmem:[%s4550 + $0x28] sm:$0xf]
  %v4562 = vld [vmem:[%s4550 + $0x2c] sm:$0xf]
  %v4563 = vld [vmem:[%s4550 + $0x30] sm:$0xf]
  %v4564 = vld [vmem:[%s4550 + $0x34] sm:$0xf]
  %v4565 = vld [vmem:[%s4550 + $0x38] sm:$0xf]
  %v4566 = vld [vmem:[%s4550 + $0x3c] sm:$0xf]
  %v4567 = vunpack.c.l.b16 %v4515
  %v4568 = vunpack.c.l.b16 %v4525
  %v4569 = vunpack.c.l.b16 %v4539
  %v4570 = vunpack.c.l.b16 %v4549
  %v4571 = vpack.c.b16 %v4568, %v4567
  %v4572 = vpack.c.b16 %v4570, %v4569
  %v4591 = vunpack.c.l.b16 %v4551
  %v4592 = vunpack.c.l.b16 %v4552
  %v4593 = vunpack.c.l.b16 %v4553
  %v4594 = vunpack.c.l.b16 %v4554
  %v4595 = vunpack.c.l.b16 %v4555
  %v4596 = vunpack.c.l.b16 %v4556
  %v4597 = vunpack.c.l.b16 %v4557
  %v4598 = vunpack.c.l.b16 %v4558
  %v4599 = vunpack.c.l.b16 %v4559
  %v4600 = vunpack.c.l.b16 %v4560
  %v4601 = vunpack.c.l.b16 %v4561
  %v4602 = vunpack.c.l.b16 %v4562
  %v4603 = vunpack.c.l.b16 %v4563
  %v4604 = vunpack.c.l.b16 %v4564
  %v4605 = vunpack.c.l.b16 %v4565
  %v4606 = vunpack.c.l.b16 %v4566
  %v4607 = vpack.c.b16 %v4592, %v4591
  %v4608 = vpack.c.b16 %v4594, %v4593
  %v4609 = vpack.c.b16 %v4596, %v4595
  %v4610 = vpack.c.b16 %v4598, %v4597
  %v4611 = vpack.c.b16 %v4600, %v4599
  %v4612 = vpack.c.b16 %v4602, %v4601
  %v4613 = vpack.c.b16 %v4604, %v4603
  %v4614 = vpack.c.b16 %v4606, %v4605
  %4623 = vmatprep.subr.bf16.mxu0 0
  %4624 = vmatpush1.bf16.msra.mxu0 %v4614
  %4625 = vmatprep.subr.bf16.mxu0 0
  %4626 = vmatpush1.bf16.msra.mxu0 %v4613
  %4627 = vmatprep.subr.bf16.mxu0 0
  %4628 = vmatpush1.bf16.msra.mxu0 %v4612
  %4629 = vmatprep.subr.bf16.mxu0 0
  %4630 = vmatpush1.bf16.msra.mxu0 %v4611
  %4631 = vmatprep.subr.bf16.mxu0 0
  %4632 = vmatpush1.bf16.msra.mxu0 %v4610
  %4633 = vmatprep.subr.bf16.mxu0 0
  %4634 = vmatpush1.bf16.msra.mxu0 %v4609
  %4635 = vmatprep.subr.bf16.mxu0 0
  %4636 = vmatpush1.bf16.msra.mxu0 %v4608
  %4637 = vmatprep.subr.bf16.mxu0 0
  %4638 = vmatpush1.bf16.msra.mxu0 %v4607
  %4639 = vmatprep.subr.bf16.mxu0 0
  %4640 = vmatpush2.bf16.msra.mxu0 0
  %4641 = vmatprep.subr.bf16.mxu0 0
  %4642 = vmatpush2.bf16.msra.mxu0 0
  %4643 = vmatprep.subr.bf16.mxu0 0
  %4644 = vmatpush2.bf16.msra.mxu0 0
  %4645 = vmatprep.subr.bf16.mxu0 0
  %4646 = vmatpush2.bf16.msra.mxu0 0
  %4647 = vmatprep.subr.bf16.mxu0 0
  %4648 = vmatpush2.bf16.msra.mxu0 0
  %4649 = vmatprep.subr.bf16.mxu0 0
  %4650 = vmatpush2.bf16.msra.mxu0 0
  %4651 = vmatprep.subr.bf16.mxu0 0
  %4652 = vmatpush2.bf16.msra.mxu0 0
  %4653 = vmatprep.subr.bf16.mxu0 0
  %4654 = vmatpush2.bf16.msra.mxu0 0
  %4655 = vmatprep.mubr.bf16.mxu0 0
  %4656 = vmatmul.mubr.bf16.gmra.mxu0 %v993
  %v4657 = vpop.f32.mrf.mxu0
  %v4658 = vadd.f32 0.0, %v4657
  %v4659 = vpop.f32.mrf.mxu0
  %v4660 = vpop.f32.mrf.mxu0
  %v4661 = vadd.f32 0.0, %v4660
  %v4662 = vpop.f32.mrf.mxu0
  %4663 = vmatprep.mubr.bf16.mxu0 0
  %4664 = vmatmul.mubr.bf16.gmra.mxu0 %v994
  %v4665 = vpop.f32.mrf.mxu0
  %v4666 = vadd.f32 0.0, %v4665
  %v4667 = vpop.f32.mrf.mxu0
  %v4668 = vpop.f32.mrf.mxu0
  %v4669 = vadd.f32 0.0, %v4668
  %v4670 = vpop.f32.mrf.mxu0
  %4671 = vmatprep.mubr.bf16.mxu0 0
  %4672 = vmatmul.mubr.bf16.gmra.mxu0 %v995
  %v4673 = vpop.f32.mrf.mxu0
  %v4674 = vadd.f32 0.0, %v4673
  %v4675 = vpop.f32.mrf.mxu0
  %v4676 = vpop.f32.mrf.mxu0
  %v4677 = vadd.f32 0.0, %v4676
  %v4678 = vpop.f32.mrf.mxu0
  %4679 = vmatprep.mubr.bf16.mxu0 0
  %4680 = vmatmul.mubr.bf16.gmra.mxu0 %v996
  %v4681 = vpop.f32.mrf.mxu0
  %v4682 = vadd.f32 0.0, %v4681
  %v4683 = vpop.f32.mrf.mxu0
  %v4684 = vpop.f32.mrf.mxu0
  %v4685 = vadd.f32 0.0, %v4684
  %v4686 = vpop.f32.mrf.mxu0
  %4687 = vmatprep.mubr.bf16.mxu0 0
  %4688 = vmatmul.mubr.bf16.gmra.mxu0 %v997
  %v4689 = vpop.f32.mrf.mxu0
  %v4690 = vadd.f32 0.0, %v4689
  %v4691 = vpop.f32.mrf.mxu0
  %v4692 = vpop.f32.mrf.mxu0
  %v4693 = vadd.f32 0.0, %v4692
  %v4694 = vpop.f32.mrf.mxu0
  %4695 = vmatprep.mubr.bf16.mxu0 0
  %4696 = vmatmul.mubr.bf16.gmra.mxu0 %v998
  %v4697 = vpop.f32.mrf.mxu0
  %v4698 = vadd.f32 0.0, %v4697
  %v4699 = vpop.f32.mrf.mxu0
  %v4700 = vpop.f32.mrf.mxu0
  %v4701 = vadd.f32 0.0, %v4700
  %v4702 = vpop.f32.mrf.mxu0
  %4703 = vmatprep.mubr.bf16.mxu0 0
  %4704 = vmatmul.mubr.bf16.gmra.mxu0 %v999
  %v4705 = vpop.f32.mrf.mxu0
  %v4706 = vadd.f32 0.0, %v4705
  %v4707 = vpop.f32.mrf.mxu0
  %v4708 = vpop.f32.mrf.mxu0
  %v4709 = vadd.f32 0.0, %v4708
  %v4710 = vpop.f32.mrf.mxu0
  %4711 = vmatprep.mubr.bf16.mxu0 0
  %4712 = vmatmul.mubr.bf16.gmra.mxu0 %v1000
  %v4713 = vpop.f32.mrf.mxu0
  %v4714 = vadd.f32 0.0, %v4713
  %v4715 = vpop.f32.mrf.mxu0
  %v4716 = vpop.f32.mrf.mxu0
  %v4717 = vadd.f32 0.0, %v4716
  %v4718 = vpop.f32.mrf.mxu0
  %4719 = vmatprep.mubr.bf16.mxu0 0
  %4720 = vmatmul.mubr.bf16.gmra.mxu0 %v1001
  %v4721 = vpop.f32.mrf.mxu0
  %v4722 = vadd.f32 0.0, %v4721
  %v4723 = vpop.f32.mrf.mxu0
  %v4724 = vpop.f32.mrf.mxu0
  %v4725 = vadd.f32 0.0, %v4724
  %v4726 = vpop.f32.mrf.mxu0
  %4727 = vmatprep.mubr.bf16.mxu0 0
  %4728 = vmatmul.mubr.bf16.gmra.mxu0 %v1002
  %v4729 = vpop.f32.mrf.mxu0
  %v4730 = vadd.f32 0.0, %v4729
  %v4731 = vpop.f32.mrf.mxu0
  %v4732 = vpop.f32.mrf.mxu0
  %v4733 = vadd.f32 0.0, %v4732
  %v4734 = vpop.f32.mrf.mxu0
  %4735 = vmatprep.mubr.bf16.mxu0 0
  %4736 = vmatmul.mubr.bf16.gmra.mxu0 %v1003
  %v4737 = vpop.f32.mrf.mxu0
  %v4738 = vadd.f32 0.0, %v4737
  %v4739 = vpop.f32.mrf.mxu0
  %v4740 = vpop.f32.mrf.mxu0
  %v4741 = vadd.f32 0.0, %v4740
  %v4742 = vpop.f32.mrf.mxu0
  %4743 = vmatprep.mubr.bf16.mxu0 0
  %4744 = vmatmul.mubr.bf16.gmra.mxu0 %v1004
  %v4745 = vpop.f32.mrf.mxu0
  %v4746 = vadd.f32 0.0, %v4745
  %v4747 = vpop.f32.mrf.mxu0
  %v4748 = vpop.f32.mrf.mxu0
  %v4749 = vadd.f32 0.0, %v4748
  %v4750 = vpop.f32.mrf.mxu0
  %4751 = vmatprep.mubr.bf16.mxu0 0
  %4752 = vmatmul.mubr.bf16.gmra.mxu0 %v1005
  %v4753 = vpop.f32.mrf.mxu0
  %v4754 = vadd.f32 0.0, %v4753
  %v4755 = vpop.f32.mrf.mxu0
  %v4756 = vpop.f32.mrf.mxu0
  %v4757 = vadd.f32 0.0, %v4756
  %v4758 = vpop.f32.mrf.mxu0
  %4759 = vmatprep.mubr.bf16.mxu0 0
  %4760 = vmatmul.mubr.bf16.gmra.mxu0 %v1006
  %v4761 = vpop.f32.mrf.mxu0
  %v4762 = vadd.f32 0.0, %v4761
  %v4763 = vpop.f32.mrf.mxu0
  %v4764 = vpop.f32.mrf.mxu0
  %v4765 = vadd.f32 0.0, %v4764
  %v4766 = vpop.f32.mrf.mxu0
  %4767 = vmatprep.mubr.bf16.mxu0 0
  %4768 = vmatmul.mubr.bf16.gmra.mxu0 %v3225
  %v4769 = vpop.f32.mrf.mxu0
  %v4770 = vadd.f32 0.0, %v4769
  %v4771 = vpop.f32.mrf.mxu0
  %v4772 = vpop.f32.mrf.mxu0
  %v4773 = vadd.f32 0.0, %v4772
  %v4774 = vpop.f32.mrf.mxu0
  %4775 = vmatprep.mubr.bf16.mxu0 0
  %4776 = vmatmul.mubr.bf16.gmra.mxu0 %v4571
  %v4777 = vpop.f32.mrf.mxu0
  %v4778 = vadd.f32 0.0, %v4777
  %v4779 = vpop.f32.mrf.mxu0
  %v4780 = vpop.f32.mrf.mxu0
  %v4781 = vadd.f32 0.0, %v4780
  %v4782 = vpop.f32.mrf.mxu0
  %4783 = vmatprep.mubr.bf16.mxu0 0
  %4784 = vmatmul.mubr.bf16.gmra.mxu0 %v1009
  %v4785 = vpop.f32.mrf.mxu0
  %v4786 = vadd.f32 0.0, %v4785
  %v4787 = vpop.f32.mrf.mxu0
  %v4788 = vpop.f32.mrf.mxu0
  %v4789 = vadd.f32 0.0, %v4788
  %v4790 = vpop.f32.mrf.mxu0
  %4791 = vmatprep.mubr.bf16.mxu0 0
  %4792 = vmatmul.mubr.bf16.gmra.mxu0 %v1010
  %v4793 = vpop.f32.mrf.mxu0
  %v4794 = vadd.f32 0.0, %v4793
  %v4795 = vpop.f32.mrf.mxu0
  %v4796 = vpop.f32.mrf.mxu0
  %v4797 = vadd.f32 0.0, %v4796
  %v4798 = vpop.f32.mrf.mxu0
  %4799 = vmatprep.mubr.bf16.mxu0 0
  %4800 = vmatmul.mubr.bf16.gmra.mxu0 %v1011
  %v4801 = vpop.f32.mrf.mxu0
  %v4802 = vadd.f32 0.0, %v4801
  %v4803 = vpop.f32.mrf.mxu0
  %v4804 = vpop.f32.mrf.mxu0
  %v4805 = vadd.f32 0.0, %v4804
  %v4806 = vpop.f32.mrf.mxu0
  %4807 = vmatprep.mubr.bf16.mxu0 0
  %4808 = vmatmul.mubr.bf16.gmra.mxu0 %v1012
  %v4809 = vpop.f32.mrf.mxu0
  %v4810 = vadd.f32 0.0, %v4809
  %v4811 = vpop.f32.mrf.mxu0
  %v4812 = vpop.f32.mrf.mxu0
  %v4813 = vadd.f32 0.0, %v4812
  %v4814 = vpop.f32.mrf.mxu0
  %4815 = vmatprep.mubr.bf16.mxu0 0
  %4816 = vmatmul.mubr.bf16.gmra.mxu0 %v1013
  %v4817 = vpop.f32.mrf.mxu0
  %v4818 = vadd.f32 0.0, %v4817
  %v4819 = vpop.f32.mrf.mxu0
  %v4820 = vpop.f32.mrf.mxu0
  %v4821 = vadd.f32 0.0, %v4820
  %v4822 = vpop.f32.mrf.mxu0
  %4823 = vmatprep.mubr.bf16.mxu0 0
  %4824 = vmatmul.mubr.bf16.gmra.mxu0 %v1014
  %v4825 = vpop.f32.mrf.mxu0
  %v4826 = vadd.f32 0.0, %v4825
  %v4827 = vpop.f32.mrf.mxu0
  %v4828 = vpop.f32.mrf.mxu0
  %v4829 = vadd.f32 0.0, %v4828
  %v4830 = vpop.f32.mrf.mxu0
  %4831 = vmatprep.mubr.bf16.mxu0 0
  %4832 = vmatmul.mubr.bf16.gmra.mxu0 %v1015
  %v4833 = vpop.f32.mrf.mxu0
  %v4834 = vadd.f32 0.0, %v4833
  %v4835 = vpop.f32.mrf.mxu0
  %v4836 = vpop.f32.mrf.mxu0
  %v4837 = vadd.f32 0.0, %v4836
  %v4838 = vpop.f32.mrf.mxu0
  %4839 = vmatprep.mubr.bf16.mxu0 0
  %4840 = vmatmul.mubr.bf16.gmra.mxu0 %v1016
  %v4841 = vpop.f32.mrf.mxu0
  %v4842 = vadd.f32 0.0, %v4841
  %v4843 = vpop.f32.mrf.mxu0
  %v4844 = vpop.f32.mrf.mxu0
  %v4845 = vadd.f32 0.0, %v4844
  %v4846 = vpop.f32.mrf.mxu0
  %4847 = vmatprep.mubr.bf16.mxu0 0
  %4848 = vmatmul.mubr.bf16.gmra.mxu0 %v1017
  %v4849 = vpop.f32.mrf.mxu0
  %v4850 = vadd.f32 0.0, %v4849
  %v4851 = vpop.f32.mrf.mxu0
  %v4852 = vpop.f32.mrf.mxu0
  %v4853 = vadd.f32 0.0, %v4852
  %v4854 = vpop.f32.mrf.mxu0
  %4855 = vmatprep.mubr.bf16.mxu0 0
  %4856 = vmatmul.mubr.bf16.gmra.mxu0 %v1018
  %v4857 = vpop.f32.mrf.mxu0
  %v4858 = vadd.f32 0.0, %v4857
  %v4859 = vpop.f32.mrf.mxu0
  %v4860 = vpop.f32.mrf.mxu0
  %v4861 = vadd.f32 0.0, %v4860
  %v4862 = vpop.f32.mrf.mxu0
  %4863 = vmatprep.mubr.bf16.mxu0 0
  %4864 = vmatmul.mubr.bf16.gmra.mxu0 %v1019
  %v4865 = vpop.f32.mrf.mxu0
  %v4866 = vadd.f32 0.0, %v4865
  %v4867 = vpop.f32.mrf.mxu0
  %v4868 = vpop.f32.mrf.mxu0
  %v4869 = vadd.f32 0.0, %v4868
  %v4870 = vpop.f32.mrf.mxu0
  %4871 = vmatprep.mubr.bf16.mxu0 0
  %4872 = vmatmul.mubr.bf16.gmra.mxu0 %v1020
  %v4873 = vpop.f32.mrf.mxu0
  %v4874 = vadd.f32 0.0, %v4873
  %v4875 = vpop.f32.mrf.mxu0
  %v4876 = vpop.f32.mrf.mxu0
  %v4877 = vadd.f32 0.0, %v4876
  %v4878 = vpop.f32.mrf.mxu0
  %4879 = vmatprep.mubr.bf16.mxu0 0
  %4880 = vmatmul.mubr.bf16.gmra.mxu0 %v1021
  %v4881 = vpop.f32.mrf.mxu0
  %v4882 = vadd.f32 0.0, %v4881
  %v4883 = vpop.f32.mrf.mxu0
  %v4884 = vpop.f32.mrf.mxu0
  %v4885 = vadd.f32 0.0, %v4884
  %v4886 = vpop.f32.mrf.mxu0
  %4887 = vmatprep.mubr.bf16.mxu0 0
  %4888 = vmatmul.mubr.bf16.gmra.mxu0 %v1022
  %v4889 = vpop.f32.mrf.mxu0
  %v4890 = vadd.f32 0.0, %v4889
  %v4891 = vpop.f32.mrf.mxu0
  %v4892 = vpop.f32.mrf.mxu0
  %v4893 = vadd.f32 0.0, %v4892
  %v4894 = vpop.f32.mrf.mxu0
  %4895 = vmatprep.mubr.bf16.mxu0 0
  %4896 = vmatmul.mubr.bf16.gmra.mxu0 %v3226
  %v4897 = vpop.f32.mrf.mxu0
  %v4898 = vadd.f32 0.0, %v4897
  %v4899 = vpop.f32.mrf.mxu0
  %v4900 = vpop.f32.mrf.mxu0
  %v4901 = vadd.f32 0.0, %v4900
  %v4902 = vpop.f32.mrf.mxu0
  %4903 = vmatprep.mubr.bf16.mxu0 0
  %4904 = vmatmul.mubr.bf16.gmra.mxu0 %v4572
  %v4905 = vpop.f32.mrf.mxu0
  %v4906 = vadd.f32 0.0, %v4905
  %v4907 = vpop.f32.mrf.mxu0
  %v4908 = vpop.f32.mrf.mxu0
  %v4909 = vadd.f32 0.0, %v4908
  %v4910 = vpop.f32.mrf.mxu0
  %4911 = vdwg.mxu0
  %v4912 = vadd.f32 %v4438, %v4658
  %v4913 = vadd.f32 %v4439, %v4661
  %v4914 = vadd.f32 %v4440, %v4666
  %v4915 = vadd.f32 %v4441, %v4669
  %v4916 = vadd.f32 %v4442, %v4674
  %v4917 = vadd.f32 %v4443, %v4677
  %v4918 = vadd.f32 %v4444, %v4682
  %v4919 = vadd.f32 %v4445, %v4685
  %v4920 = vadd.f32 %v4446, %v4690
  %v4921 = vadd.f32 %v4447, %v4693
  %v4922 = vadd.f32 %v4448, %v4698
  %v4923 = vadd.f32 %v4449, %v4701
  %v4924 = vadd.f32 %v4450, %v4706
  %v4925 = vadd.f32 %v4451, %v4709
  %v4926 = vadd.f32 %v4452, %v4714
  %v4927 = vadd.f32 %v4453, %v4717
  %v4928 = vadd.f32 %v4454, %v4722
  %v4929 = vadd.f32 %v4455, %v4725
  %v4930 = vadd.f32 %v4456, %v4730
  %v4931 = vadd.f32 %v4457, %v4733
  %v4932 = vadd.f32 %v4458, %v4738
  %v4933 = vadd.f32 %v4459, %v4741
  %v4934 = vadd.f32 %v4460, %v4746
  %v4935 = vadd.f32 %v4461, %v4749
  %v4936 = vadd.f32 %v4462, %v4754
  %v4937 = vadd.f32 %v4463, %v4757
  %v4938 = vadd.f32 %v4464, %v4762
  %v4939 = vadd.f32 %v4465, %v4765
  %v4940 = vadd.f32 %v4466, %v4770
  %v4941 = vadd.f32 %v4467, %v4773
  %v4942 = vadd.f32 %v4468, %v4778
  %v4943 = vadd.f32 %v4469, %v4781
  %v4944 = vadd.f32 %v4470, %v4786
  %v4945 = vadd.f32 %v4471, %v4789
  %v4946 = vadd.f32 %v4472, %v4794
  %v4947 = vadd.f32 %v4473, %v4797
  %v4948 = vadd.f32 %v4474, %v4802
  %v4949 = vadd.f32 %v4475, %v4805
  %v4950 = vadd.f32 %v4476, %v4810
  %v4951 = vadd.f32 %v4477, %v4813
  %v4952 = vadd.f32 %v4478, %v4818
  %v4953 = vadd.f32 %v4479, %v4821
  %v4954 = vadd.f32 %v4480, %v4826
  %v4955 = vadd.f32 %v4481, %v4829
  %v4956 = vadd.f32 %v4482, %v4834
  %v4957 = vadd.f32 %v4483, %v4837
  %v4958 = vadd.f32 %v4484, %v4842
  %v4959 = vadd.f32 %v4485, %v4845
  %v4960 = vadd.f32 %v4486, %v4850
  %v4961 = vadd.f32 %v4487, %v4853
  %v4962 = vadd.f32 %v4488, %v4858
  %v4963 = vadd.f32 %v4489, %v4861
  %v4964 = vadd.f32 %v4490, %v4866
  %v4965 = vadd.f32 %v4491, %v4869
  %v4966 = vadd.f32 %v4492, %v4874
  %v4967 = vadd.f32 %v4493, %v4877
  %v4968 = vadd.f32 %v4494, %v4882
  %v4969 = vadd.f32 %v4495, %v4885
  %v4970 = vadd.f32 %v4496, %v4890
  %v4971 = vadd.f32 %v4497, %v4893
  %v4972 = vadd.f32 %v4498, %v4898
  %v4973 = vadd.f32 %v4499, %v4901
  %v4974 = vadd.f32 %v4500, %v4906
  %v4975 = vadd.f32 %v4501, %v4909
  %v4978 = vrot.slane %v66, 5
  %v4979 = vrot.slane %v4978, 4
  %v4980 = vrot.slane %v67, 5
  %v4981 = vsel %vm1955, %v4979, %v4980
  %v4982 = vrot.slane %v4980, 4
  %v4983 = vrot.slane %v68, 5
  %v4984 = vsel %vm1955, %v4982, %v4983
  %v4985 = vrot.slane %v120, 5
  %v4986 = vrot.slane %v4985, 4
  %v4987 = vrot.slane %v121, 5
  %v4988 = vsel %vm1955, %v4986, %v4987
  %v4989 = vrot.slane %v4987, 4
  %v4990 = vrot.slane %v122, 5
  %v4991 = vsel %vm1955, %v4989, %v4990
  %s4992 = scalar_lea.vmem %s1, 512
  %v4993 = vld [vmem:[%s4992] sm:$0xf]
  %v4994 = vld [vmem:[%s4992 + $0x4] sm:$0xf]
  %v4995 = vld [vmem:[%s4992 + $0x8] sm:$0xf]
  %v4996 = vld [vmem:[%s4992 + $0xc] sm:$0xf]
  %v4997 = vld [vmem:[%s4992 + $0x10] sm:$0xf]
  %v4998 = vld [vmem:[%s4992 + $0x14] sm:$0xf]
  %v4999 = vld [vmem:[%s4992 + $0x18] sm:$0xf]
  %v5000 = vld [vmem:[%s4992 + $0x1c] sm:$0xf]
  %v5001 = vld [vmem:[%s4992 + $0x20] sm:$0xf]
  %v5002 = vld [vmem:[%s4992 + $0x24] sm:$0xf]
  %v5003 = vld [vmem:[%s4992 + $0x28] sm:$0xf]
  %v5004 = vld [vmem:[%s4992 + $0x2c] sm:$0xf]
  %v5005 = vld [vmem:[%s4992 + $0x30] sm:$0xf]
  %v5006 = vld [vmem:[%s4992 + $0x34] sm:$0xf]
  %v5007 = vld [vmem:[%s4992 + $0x38] sm:$0xf]
  %v5008 = vld [vmem:[%s4992 + $0x3c] sm:$0xf]
  %v5009 = vunpack.c.l.b16 %v4981
  %v5010 = vunpack.c.l.b16 %v4984
  %v5011 = vunpack.c.l.b16 %v4988
  %v5012 = vunpack.c.l.b16 %v4991
  %v5013 = vpack.c.b16 %v5010, %v5009
  %v5014 = vpack.c.b16 %v5012, %v5011
  %v5033 = vunpack.c.l.b16 %v4993
  %v5034 = vunpack.c.l.b16 %v4994
  %v5035 = vunpack.c.l.b16 %v4995
  %v5036 = vunpack.c.l.b16 %v4996
  %v5037 = vunpack.c.l.b16 %v4997
  %v5038 = vunpack.c.l.b16 %v4998
  %v5039 = vunpack.c.l.b16 %v4999
  %v5040 = vunpack.c.l.b16 %v5000
  %v5041 = vunpack.c.l.b16 %v5001
  %v5042 = vunpack.c.l.b16 %v5002
  %v5043 = vunpack.c.l.b16 %v5003
  %v5044 = vunpack.c.l.b16 %v5004
  %v5045 = vunpack.c.l.b16 %v5005
  %v5046 = vunpack.c.l.b16 %v5006
  %v5047 = vunpack.c.l.b16 %v5007
  %v5048 = vunpack.c.l.b16 %v5008
  %v5049 = vpack.c.b16 %v5034, %v5033
  %v5050 = vpack.c.b16 %v5036, %v5035
  %v5051 = vpack.c.b16 %v5038, %v5037
  %v5052 = vpack.c.b16 %v5040, %v5039
  %v5053 = vpack.c.b16 %v5042, %v5041
  %v5054 = vpack.c.b16 %v5044, %v5043
  %v5055 = vpack.c.b16 %v5046, %v5045
  %v5056 = vpack.c.b16 %v5048, %v5047
  %5065 = vmatprep.subr.bf16.mxu0 0
  %5066 = vmatpush1.bf16.msra.mxu0 %v5056
  %5067 = vmatprep.subr.bf16.mxu0 0
  %5068 = vmatpush1.bf16.msra.mxu0 %v5055
  %5069 = vmatprep.subr.bf16.mxu0 0
  %5070 = vmatpush1.bf16.msra.mxu0 %v5054
  %5071 = vmatprep.subr.bf16.mxu0 0
  %5072 = vmatpush1.bf16.msra.mxu0 %v5053
  %5073 = vmatprep.subr.bf16.mxu0 0
  %5074 = vmatpush1.bf16.msra.mxu0 %v5052
  %5075 = vmatprep.subr.bf16.mxu0 0
  %5076 = vmatpush1.bf16.msra.mxu0 %v5051
  %5077 = vmatprep.subr.bf16.mxu0 0
  %5078 = vmatpush1.bf16.msra.mxu0 %v5050
  %5079 = vmatprep.subr.bf16.mxu0 0
  %5080 = vmatpush1.bf16.msra.mxu0 %v5049
  %5081 = vmatprep.subr.bf16.mxu0 0
  %5082 = vmatpush2.bf16.msra.mxu0 0
  %5083 = vmatprep.subr.bf16.mxu0 0
  %5084 = vmatpush2.bf16.msra.mxu0 0
  %5085 = vmatprep.subr.bf16.mxu0 0
  %5086 = vmatpush2.bf16.msra.mxu0 0
  %5087 = vmatprep.subr.bf16.mxu0 0
  %5088 = vmatpush2.bf16.msra.mxu0 0
  %5089 = vmatprep.subr.bf16.mxu0 0
  %5090 = vmatpush2.bf16.msra.mxu0 0
  %5091 = vmatprep.subr.bf16.mxu0 0
  %5092 = vmatpush2.bf16.msra.mxu0 0
  %5093 = vmatprep.subr.bf16.mxu0 0
  %5094 = vmatpush2.bf16.msra.mxu0 0
  %5095 = vmatprep.subr.bf16.mxu0 0
  %5096 = vmatpush2.bf16.msra.mxu0 0
  %5097 = vmatprep.mubr.bf16.mxu0 0
  %5098 = vmatmul.mubr.bf16.gmra.mxu0 %v2263
  %v5099 = vpop.f32.mrf.mxu0
  %v5100 = vadd.f32 0.0, %v5099
  %v5101 = vpop.f32.mrf.mxu0
  %v5102 = vpop.f32.mrf.mxu0
  %v5103 = vadd.f32 0.0, %v5102
  %v5104 = vpop.f32.mrf.mxu0
  %5105 = vmatprep.mubr.bf16.mxu0 0
  %5106 = vmatmul.mubr.bf16.gmra.mxu0 %v2264
  %v5107 = vpop.f32.mrf.mxu0
  %v5108 = vadd.f32 0.0, %v5107
  %v5109 = vpop.f32.mrf.mxu0
  %v5110 = vpop.f32.mrf.mxu0
  %v5111 = vadd.f32 0.0, %v5110
  %v5112 = vpop.f32.mrf.mxu0
  %5113 = vmatprep.mubr.bf16.mxu0 0
  %5114 = vmatmul.mubr.bf16.gmra.mxu0 %v2265
  %v5115 = vpop.f32.mrf.mxu0
  %v5116 = vadd.f32 0.0, %v5115
  %v5117 = vpop.f32.mrf.mxu0
  %v5118 = vpop.f32.mrf.mxu0
  %v5119 = vadd.f32 0.0, %v5118
  %v5120 = vpop.f32.mrf.mxu0
  %5121 = vmatprep.mubr.bf16.mxu0 0
  %5122 = vmatmul.mubr.bf16.gmra.mxu0 %v2266
  %v5123 = vpop.f32.mrf.mxu0
  %v5124 = vadd.f32 0.0, %v5123
  %v5125 = vpop.f32.mrf.mxu0
  %v5126 = vpop.f32.mrf.mxu0
  %v5127 = vadd.f32 0.0, %v5126
  %v5128 = vpop.f32.mrf.mxu0
  %5129 = vmatprep.mubr.bf16.mxu0 0
  %5130 = vmatmul.mubr.bf16.gmra.mxu0 %v2267
  %v5131 = vpop.f32.mrf.mxu0
  %v5132 = vadd.f32 0.0, %v5131
  %v5133 = vpop.f32.mrf.mxu0
  %v5134 = vpop.f32.mrf.mxu0
  %v5135 = vadd.f32 0.0, %v5134
  %v5136 = vpop.f32.mrf.mxu0
  %5137 = vmatprep.mubr.bf16.mxu0 0
  %5138 = vmatmul.mubr.bf16.gmra.mxu0 %v2268
  %v5139 = vpop.f32.mrf.mxu0
  %v5140 = vadd.f32 0.0, %v5139
  %v5141 = vpop.f32.mrf.mxu0
  %v5142 = vpop.f32.mrf.mxu0
  %v5143 = vadd.f32 0.0, %v5142
  %v5144 = vpop.f32.mrf.mxu0
  %5145 = vmatprep.mubr.bf16.mxu0 0
  %5146 = vmatmul.mubr.bf16.gmra.mxu0 %v2269
  %v5147 = vpop.f32.mrf.mxu0
  %v5148 = vadd.f32 0.0, %v5147
  %v5149 = vpop.f32.mrf.mxu0
  %v5150 = vpop.f32.mrf.mxu0
  %v5151 = vadd.f32 0.0, %v5150
  %v5152 = vpop.f32.mrf.mxu0
  %5153 = vmatprep.mubr.bf16.mxu0 0
  %5154 = vmatmul.mubr.bf16.gmra.mxu0 %v2270
  %v5155 = vpop.f32.mrf.mxu0
  %v5156 = vadd.f32 0.0, %v5155
  %v5157 = vpop.f32.mrf.mxu0
  %v5158 = vpop.f32.mrf.mxu0
  %v5159 = vadd.f32 0.0, %v5158
  %v5160 = vpop.f32.mrf.mxu0
  %5161 = vmatprep.mubr.bf16.mxu0 0
  %5162 = vmatmul.mubr.bf16.gmra.mxu0 %v2271
  %v5163 = vpop.f32.mrf.mxu0
  %v5164 = vadd.f32 0.0, %v5163
  %v5165 = vpop.f32.mrf.mxu0
  %v5166 = vpop.f32.mrf.mxu0
  %v5167 = vadd.f32 0.0, %v5166
  %v5168 = vpop.f32.mrf.mxu0
  %5169 = vmatprep.mubr.bf16.mxu0 0
  %5170 = vmatmul.mubr.bf16.gmra.mxu0 %v2272
  %v5171 = vpop.f32.mrf.mxu0
  %v5172 = vadd.f32 0.0, %v5171
  %v5173 = vpop.f32.mrf.mxu0
  %v5174 = vpop.f32.mrf.mxu0
  %v5175 = vadd.f32 0.0, %v5174
  %v5176 = vpop.f32.mrf.mxu0
  %5177 = vmatprep.mubr.bf16.mxu0 0
  %5178 = vmatmul.mubr.bf16.gmra.mxu0 %v2273
  %v5179 = vpop.f32.mrf.mxu0
  %v5180 = vadd.f32 0.0, %v5179
  %v5181 = vpop.f32.mrf.mxu0
  %v5182 = vpop.f32.mrf.mxu0
  %v5183 = vadd.f32 0.0, %v5182
  %v5184 = vpop.f32.mrf.mxu0
  %5185 = vmatprep.mubr.bf16.mxu0 0
  %5186 = vmatmul.mubr.bf16.gmra.mxu0 %v2274
  %v5187 = vpop.f32.mrf.mxu0
  %v5188 = vadd.f32 0.0, %v5187
  %v5189 = vpop.f32.mrf.mxu0
  %v5190 = vpop.f32.mrf.mxu0
  %v5191 = vadd.f32 0.0, %v5190
  %v5192 = vpop.f32.mrf.mxu0
  %5193 = vmatprep.mubr.bf16.mxu0 0
  %5194 = vmatmul.mubr.bf16.gmra.mxu0 %v2275
  %v5195 = vpop.f32.mrf.mxu0
  %v5196 = vadd.f32 0.0, %v5195
  %v5197 = vpop.f32.mrf.mxu0
  %v5198 = vpop.f32.mrf.mxu0
  %v5199 = vadd.f32 0.0, %v5198
  %v5200 = vpop.f32.mrf.mxu0
  %5201 = vmatprep.mubr.bf16.mxu0 0
  %5202 = vmatmul.mubr.bf16.gmra.mxu0 %v2276
  %v5203 = vpop.f32.mrf.mxu0
  %v5204 = vadd.f32 0.0, %v5203
  %v5205 = vpop.f32.mrf.mxu0
  %v5206 = vpop.f32.mrf.mxu0
  %v5207 = vadd.f32 0.0, %v5206
  %v5208 = vpop.f32.mrf.mxu0
  %5209 = vmatprep.mubr.bf16.mxu0 0
  %5210 = vmatmul.mubr.bf16.gmra.mxu0 %v3667
  %v5211 = vpop.f32.mrf.mxu0
  %v5212 = vadd.f32 0.0, %v5211
  %v5213 = vpop.f32.mrf.mxu0
  %v5214 = vpop.f32.mrf.mxu0
  %v5215 = vadd.f32 0.0, %v5214
  %v5216 = vpop.f32.mrf.mxu0
  %5217 = vmatprep.mubr.bf16.mxu0 0
  %5218 = vmatmul.mubr.bf16.gmra.mxu0 %v5013
  %v5219 = vpop.f32.mrf.mxu0
  %v5220 = vadd.f32 0.0, %v5219
  %v5221 = vpop.f32.mrf.mxu0
  %v5222 = vpop.f32.mrf.mxu0
  %v5223 = vadd.f32 0.0, %v5222
  %v5224 = vpop.f32.mrf.mxu0
  %5225 = vmatprep.mubr.bf16.mxu0 0
  %5226 = vmatmul.mubr.bf16.gmra.mxu0 %v2279
  %v5227 = vpop.f32.mrf.mxu0
  %v5228 = vadd.f32 0.0, %v5227
  %v5229 = vpop.f32.mrf.mxu0
  %v5230 = vpop.f32.mrf.mxu0
  %v5231 = vadd.f32 0.0, %v5230
  %v5232 = vpop.f32.mrf.mxu0
  %5233 = vmatprep.mubr.bf16.mxu0 0
  %5234 = vmatmul.mubr.bf16.gmra.mxu0 %v2280
  %v5235 = vpop.f32.mrf.mxu0
  %v5236 = vadd.f32 0.0, %v5235
  %v5237 = vpop.f32.mrf.mxu0
  %v5238 = vpop.f32.mrf.mxu0
  %v5239 = vadd.f32 0.0, %v5238
  %v5240 = vpop.f32.mrf.mxu0
  %5241 = vmatprep.mubr.bf16.mxu0 0
  %5242 = vmatmul.mubr.bf16.gmra.mxu0 %v2281
  %v5243 = vpop.f32.mrf.mxu0
  %v5244 = vadd.f32 0.0, %v5243
  %v5245 = vpop.f32.mrf.mxu0
  %v5246 = vpop.f32.mrf.mxu0
  %v5247 = vadd.f32 0.0, %v5246
  %v5248 = vpop.f32.mrf.mxu0
  %5249 = vmatprep.mubr.bf16.mxu0 0
  %5250 = vmatmul.mubr.bf16.gmra.mxu0 %v2282
  %v5251 = vpop.f32.mrf.mxu0
  %v5252 = vadd.f32 0.0, %v5251
  %v5253 = vpop.f32.mrf.mxu0
  %v5254 = vpop.f32.mrf.mxu0
  %v5255 = vadd.f32 0.0, %v5254
  %v5256 = vpop.f32.mrf.mxu0
  %5257 = vmatprep.mubr.bf16.mxu0 0
  %5258 = vmatmul.mubr.bf16.gmra.mxu0 %v2283
  %v5259 = vpop.f32.mrf.mxu0
  %v5260 = vadd.f32 0.0, %v5259
  %v5261 = vpop.f32.mrf.mxu0
  %v5262 = vpop.f32.mrf.mxu0
  %v5263 = vadd.f32 0.0, %v5262
  %v5264 = vpop.f32.mrf.mxu0
  %5265 = vmatprep.mubr.bf16.mxu0 0
  %5266 = vmatmul.mubr.bf16.gmra.mxu0 %v2284
  %v5267 = vpop.f32.mrf.mxu0
  %v5268 = vadd.f32 0.0, %v5267
  %v5269 = vpop.f32.mrf.mxu0
  %v5270 = vpop.f32.mrf.mxu0
  %v5271 = vadd.f32 0.0, %v5270
  %v5272 = vpop.f32.mrf.mxu0
  %5273 = vmatprep.mubr.bf16.mxu0 0
  %5274 = vmatmul.mubr.bf16.gmra.mxu0 %v2285
  %v5275 = vpop.f32.mrf.mxu0
  %v5276 = vadd.f32 0.0, %v5275
  %v5277 = vpop.f32.mrf.mxu0
  %v5278 = vpop.f32.mrf.mxu0
  %v5279 = vadd.f32 0.0, %v5278
  %v5280 = vpop.f32.mrf.mxu0
  %5281 = vmatprep.mubr.bf16.mxu0 0
  %5282 = vmatmul.mubr.bf16.gmra.mxu0 %v2286
  %v5283 = vpop.f32.mrf.mxu0
  %v5284 = vadd.f32 0.0, %v5283
  %v5285 = vpop.f32.mrf.mxu0
  %v5286 = vpop.f32.mrf.mxu0
  %v5287 = vadd.f32 0.0, %v5286
  %v5288 = vpop.f32.mrf.mxu0
  %5289 = vmatprep.mubr.bf16.mxu0 0
  %5290 = vmatmul.mubr.bf16.gmra.mxu0 %v2287
  %v5291 = vpop.f32.mrf.mxu0
  %v5292 = vadd.f32 0.0, %v5291
  %v5293 = vpop.f32.mrf.mxu0
  %v5294 = vpop.f32.mrf.mxu0
  %v5295 = vadd.f32 0.0, %v5294
  %v5296 = vpop.f32.mrf.mxu0
  %5297 = vmatprep.mubr.bf16.mxu0 0
  %5298 = vmatmul.mubr.bf16.gmra.mxu0 %v2288
  %v5299 = vpop.f32.mrf.mxu0
  %v5300 = vadd.f32 0.0, %v5299
  %v5301 = vpop.f32.mrf.mxu0
  %v5302 = vpop.f32.mrf.mxu0
  %v5303 = vadd.f32 0.0, %v5302
  %v5304 = vpop.f32.mrf.mxu0
  %5305 = vmatprep.mubr.bf16.mxu0 0
  %5306 = vmatmul.mubr.bf16.gmra.mxu0 %v2289
  %v5307 = vpop.f32.mrf.mxu0
  %v5308 = vadd.f32 0.0, %v5307
  %v5309 = vpop.f32.mrf.mxu0
  %v5310 = vpop.f32.mrf.mxu0
  %v5311 = vadd.f32 0.0, %v5310
  %v5312 = vpop.f32.mrf.mxu0
  %5313 = vmatprep.mubr.bf16.mxu0 0
  %5314 = vmatmul.mubr.bf16.gmra.mxu0 %v2290
  %v5315 = vpop.f32.mrf.mxu0
  %v5316 = vadd.f32 0.0, %v5315
  %v5317 = vpop.f32.mrf.mxu0
  %v5318 = vpop.f32.mrf.mxu0
  %v5319 = vadd.f32 0.0, %v5318
  %v5320 = vpop.f32.mrf.mxu0
  %5321 = vmatprep.mubr.bf16.mxu0 0
  %5322 = vmatmul.mubr.bf16.gmra.mxu0 %v2291
  %v5323 = vpop.f32.mrf.mxu0
  %v5324 = vadd.f32 0.0, %v5323
  %v5325 = vpop.f32.mrf.mxu0
  %v5326 = vpop.f32.mrf.mxu0
  %v5327 = vadd.f32 0.0, %v5326
  %v5328 = vpop.f32.mrf.mxu0
  %5329 = vmatprep.mubr.bf16.mxu0 0
  %5330 = vmatmul.mubr.bf16.gmra.mxu0 %v2292
  %v5331 = vpop.f32.mrf.mxu0
  %v5332 = vadd.f32 0.0, %v5331
  %v5333 = vpop.f32.mrf.mxu0
  %v5334 = vpop.f32.mrf.mxu0
  %v5335 = vadd.f32 0.0, %v5334
  %v5336 = vpop.f32.mrf.mxu0
  %5337 = vmatprep.mubr.bf16.mxu0 0
  %5338 = vmatmul.mubr.bf16.gmra.mxu0 %v3668
  %v5339 = vpop.f32.mrf.mxu0
  %v5340 = vadd.f32 0.0, %v5339
  %v5341 = vpop.f32.mrf.mxu0
  %v5342 = vpop.f32.mrf.mxu0
  %v5343 = vadd.f32 0.0, %v5342
  %v5344 = vpop.f32.mrf.mxu0
  %5345 = vmatprep.mubr.bf16.mxu0 0
  %5346 = vmatmul.mubr.bf16.gmra.mxu0 %v5014
  %v5347 = vpop.f32.mrf.mxu0
  %v5348 = vadd.f32 0.0, %v5347
  %v5349 = vpop.f32.mrf.mxu0
  %v5350 = vpop.f32.mrf.mxu0
  %v5351 = vadd.f32 0.0, %v5350
  %v5352 = vpop.f32.mrf.mxu0
  %5353 = vdwg.mxu0
  %v5354 = vadd.f32 %v4912, %v5100
  %v5355 = vadd.f32 %v4913, %v5103
  %v5356 = vadd.f32 %v4914, %v5108
  %v5357 = vadd.f32 %v4915, %v5111
  %v5358 = vadd.f32 %v4916, %v5116
  %v5359 = vadd.f32 %v4917, %v5119
  %v5360 = vadd.f32 %v4918, %v5124
  %v5361 = vadd.f32 %v4919, %v5127
  %v5362 = vadd.f32 %v4920, %v5132
  %v5363 = vadd.f32 %v4921, %v5135
  %v5364 = vadd.f32 %v4922, %v5140
  %v5365 = vadd.f32 %v4923, %v5143
  %v5366 = vadd.f32 %v4924, %v5148
  %v5367 = vadd.f32 %v4925, %v5151
  %v5368 = vadd.f32 %v4926, %v5156
  %v5369 = vadd.f32 %v4927, %v5159
  %v5370 = vadd.f32 %v4928, %v5164
  %v5371 = vadd.f32 %v4929, %v5167
  %v5372 = vadd.f32 %v4930, %v5172
  %v5373 = vadd.f32 %v4931, %v5175
  %v5374 = vadd.f32 %v4932, %v5180
  %v5375 = vadd.f32 %v4933, %v5183
  %v5376 = vadd.f32 %v4934, %v5188
  %v5377 = vadd.f32 %v4935, %v5191
  %v5378 = vadd.f32 %v4936, %v5196
  %v5379 = vadd.f32 %v4937, %v5199
  %v5380 = vadd.f32 %v4938, %v5204
  %v5381 = vadd.f32 %v4939, %v5207
  %v5382 = vadd.f32 %v4940, %v5212
  %v5383 = vadd.f32 %v4941, %v5215
  %v5384 = vadd.f32 %v4942, %v5220
  %v5385 = vadd.f32 %v4943, %v5223
  %v5386 = vadd.f32 %v4944, %v5228
  %v5387 = vadd.f32 %v4945, %v5231
  %v5388 = vadd.f32 %v4946, %v5236
  %v5389 = vadd.f32 %v4947, %v5239
  %v5390 = vadd.f32 %v4948, %v5244
  %v5391 = vadd.f32 %v4949, %v5247
  %v5392 = vadd.f32 %v4950, %v5252
  %v5393 = vadd.f32 %v4951, %v5255
  %v5394 = vadd.f32 %v4952, %v5260
  %v5395 = vadd.f32 %v4953, %v5263
  %v5396 = vadd.f32 %v4954, %v5268
  %v5397 = vadd.f32 %v4955, %v5271
  %v5398 = vadd.f32 %v4956, %v5276
  %v5399 = vadd.f32 %v4957, %v5279
  %v5400 = vadd.f32 %v4958, %v5284
  %v5401 = vadd.f32 %v4959, %v5287
  %v5402 = vadd.f32 %v4960, %v5292
  %v5403 = vadd.f32 %v4961, %v5295
  %v5404 = vadd.f32 %v4962, %v5300
  %v5405 = vadd.f32 %v4963, %v5303
  %v5406 = vadd.f32 %v4964, %v5308
  %v5407 = vadd.f32 %v4965, %v5311
  %v5408 = vadd.f32 %v4966, %v5316
  %v5409 = vadd.f32 %v4967, %v5319
  %v5410 = vadd.f32 %v4968, %v5324
  %v5411 = vadd.f32 %v4969, %v5327
  %v5412 = vadd.f32 %v4970, %v5332
  %v5413 = vadd.f32 %v4971, %v5335
  %v5414 = vadd.f32 %v4972, %v5340
  %v5415 = vadd.f32 %v4973, %v5343
  %v5416 = vadd.f32 %v4974, %v5348
  %v5417 = vadd.f32 %v4975, %v5351
  %v5418 = vpack.c.bf16 %v5355, %v5354
  %v5419 = vpack.c.bf16 %v5357, %v5356
  %v5420 = vpack.c.bf16 %v5359, %v5358
  %v5421 = vpack.c.bf16 %v5361, %v5360
  %v5422 = vpack.c.bf16 %v5363, %v5362
  %v5423 = vpack.c.bf16 %v5365, %v5364
  %v5424 = vpack.c.bf16 %v5367, %v5366
  %v5425 = vpack.c.bf16 %v5369, %v5368
  %v5426 = vpack.c.bf16 %v5371, %v5370
  %v5427 = vpack.c.bf16 %v5373, %v5372
  %v5428 = vpack.c.bf16 %v5375, %v5374
  %v5429 = vpack.c.bf16 %v5377, %v5376
  %v5430 = vpack.c.bf16 %v5379, %v5378
  %v5431 = vpack.c.bf16 %v5381, %v5380
  %v5432 = vpack.c.bf16 %v5383, %v5382
  %v5433 = vpack.c.bf16 %v5385, %v5384
  %v5434 = vpack.c.bf16 %v5387, %v5386
  %v5435 = vpack.c.bf16 %v5389, %v5388
  %v5436 = vpack.c.bf16 %v5391, %v5390
  %v5437 = vpack.c.bf16 %v5393, %v5392
  %v5438 = vpack.c.bf16 %v5395, %v5394
  %v5439 = vpack.c.bf16 %v5397, %v5396
  %v5440 = vpack.c.bf16 %v5399, %v5398
  %v5441 = vpack.c.bf16 %v5401, %v5400
  %v5442 = vpack.c.bf16 %v5403, %v5402
  %v5443 = vpack.c.bf16 %v5405, %v5404
  %v5444 = vpack.c.bf16 %v5407, %v5406
  %v5445 = vpack.c.bf16 %v5409, %v5408
  %v5446 = vpack.c.bf16 %v5411, %v5410
  %v5447 = vpack.c.bf16 %v5413, %v5412
  %v5448 = vpack.c.bf16 %v5415, %v5414
  %v5449 = vpack.c.bf16 %v5417, %v5416
  %v5482 = vunpack.c.l.b16 %v5418
  %v5483 = vunpack.c.h.b16 %v5418
  %v5484 = vunpack.c.l.b16 %v5419
  %v5485 = vunpack.c.h.b16 %v5419
  %v5486 = vunpack.c.l.b16 %v5420
  %v5487 = vunpack.c.h.b16 %v5420
  %v5488 = vunpack.c.l.b16 %v5421
  %v5489 = vunpack.c.h.b16 %v5421
  %v5490 = vunpack.c.l.b16 %v5422
  %v5491 = vunpack.c.h.b16 %v5422
  %v5492 = vunpack.c.l.b16 %v5423
  %v5493 = vunpack.c.h.b16 %v5423
  %v5494 = vunpack.c.l.b16 %v5424
  %v5495 = vunpack.c.h.b16 %v5424
  %v5496 = vunpack.c.l.b16 %v5425
  %v5497 = vunpack.c.h.b16 %v5425
  %v5498 = vunpack.c.l.b16 %v5426
  %v5499 = vunpack.c.h.b16 %v5426
  %v5500 = vunpack.c.l.b16 %v5427
  %v5501 = vunpack.c.h.b16 %v5427
  %v5502 = vunpack.c.l.b16 %v5428
  %v5503 = vunpack.c.h.b16 %v5428
  %v5504 = vunpack.c.l.b16 %v5429
  %v5505 = vunpack.c.h.b16 %v5429
  %v5506 = vunpack.c.l.b16 %v5430
  %v5507 = vunpack.c.h.b16 %v5430
  %v5508 = vunpack.c.l.b16 %v5431
  %v5509 = vunpack.c.h.b16 %v5431
  %v5510 = vunpack.c.l.b16 %v5432
  %v5511 = vunpack.c.h.b16 %v5432
  %v5512 = vunpack.c.l.b16 %v5433
  %v5513 = vunpack.c.h.b16 %v5433
  %v5514 = vunpack.c.l.b16 %v5434
  %v5515 = vunpack.c.h.b16 %v5434
  %v5516 = vunpack.c.l.b16 %v5435
  %v5517 = vunpack.c.h.b16 %v5435
  %v5518 = vunpack.c.l.b16 %v5436
  %v5519 = vunpack.c.h.b16 %v5436
  %v5520 = vunpack.c.l.b16 %v5437
  %v5521 = vunpack.c.h.b16 %v5437
  %v5522 = vunpack.c.l.b16 %v5438
  %v5523 = vunpack.c.h.b16 %v5438
  %v5524 = vunpack.c.l.b16 %v5439
  %v5525 = vunpack.c.h.b16 %v5439
  %v5526 = vunpack.c.l.b16 %v5440
  %v5527 = vunpack.c.h.b16 %v5440
  %v5528 = vunpack.c.l.b16 %v5441
  %v5529 = vunpack.c.h.b16 %v5441
  %v5530 = vunpack.c.l.b16 %v5442
  %v5531 = vunpack.c.h.b16 %v5442
  %v5532 = vunpack.c.l.b16 %v5443
  %v5533 = vunpack.c.h.b16 %v5443
  %v5534 = vunpack.c.l.b16 %v5444
  %v5535 = vunpack.c.h.b16 %v5444
  %v5536 = vunpack.c.l.b16 %v5445
  %v5537 = vunpack.c.h.b16 %v5445
  %v5538 = vunpack.c.l.b16 %v5446
  %v5539 = vunpack.c.h.b16 %v5446
  %v5540 = vunpack.c.l.b16 %v5447
  %v5541 = vunpack.c.h.b16 %v5447
  %v5542 = vunpack.c.l.b16 %v5448
  %v5543 = vunpack.c.h.b16 %v5448
  %v5544 = vunpack.c.l.b16 %v5449
  %v5545 = vunpack.c.h.b16 %v5449
  %v5546 = vpack.c.b16 %v5482, %v5482
  %v5547 = vpack.c.b16 %v5483, %v5483
  %v5548 = vpack.c.b16 %v5484, %v5484
  %v5549 = vpack.c.b16 %v5485, %v5485
  %v5550 = vpack.c.b16 %v5486, %v5486
  %v5551 = vpack.c.b16 %v5487, %v5487
  %v5552 = vpack.c.b16 %v5488, %v5488
  %v5553 = vpack.c.b16 %v5489, %v5489
  %v5554 = vpack.c.b16 %v5490, %v5490
  %v5555 = vpack.c.b16 %v5491, %v5491
  %v5556 = vpack.c.b16 %v5492, %v5492
  %v5557 = vpack.c.b16 %v5493, %v5493
  %v5558 = vpack.c.b16 %v5494, %v5494
  %v5559 = vpack.c.b16 %v5495, %v5495
  %v5560 = vpack.c.b16 %v5496, %v5496
  %v5561 = vpack.c.b16 %v5497, %v5497
  %v5562 = vpack.c.b16 %v5498, %v5498
  %v5563 = vpack.c.b16 %v5499, %v5499
  %v5564 = vpack.c.b16 %v5500, %v5500
  %v5565 = vpack.c.b16 %v5501, %v5501
  %v5566 = vpack.c.b16 %v5502, %v5502
  %v5567 = vpack.c.b16 %v5503, %v5503
  %v5568 = vpack.c.b16 %v5504, %v5504
  %v5569 = vpack.c.b16 %v5505, %v5505
  %v5570 = vpack.c.b16 %v5506, %v5506
  %v5571 = vpack.c.b16 %v5507, %v5507
  %v5572 = vpack.c.b16 %v5508, %v5508
  %v5573 = vpack.c.b16 %v5509, %v5509
  %v5574 = vpack.c.b16 %v5510, %v5510
  %v5575 = vpack.c.b16 %v5511, %v5511
  %v5576 = vpack.c.b16 %v5512, %v5512
  %v5577 = vpack.c.b16 %v5513, %v5513
  %v5578 = vpack.c.b16 %v5514, %v5514
  %v5579 = vpack.c.b16 %v5515, %v5515
  %v5580 = vpack.c.b16 %v5516, %v5516
  %v5581 = vpack.c.b16 %v5517, %v5517
  %v5582 = vpack.c.b16 %v5518, %v5518
  %v5583 = vpack.c.b16 %v5519, %v5519
  %v5584 = vpack.c.b16 %v5520, %v5520
  %v5585 = vpack.c.b16 %v5521, %v5521
  %v5586 = vpack.c.b16 %v5522, %v5522
  %v5587 = vpack.c.b16 %v5523, %v5523
  %v5588 = vpack.c.b16 %v5524, %v5524
  %v5589 = vpack.c.b16 %v5525, %v5525
  %v5590 = vpack.c.b16 %v5526, %v5526
  %v5591 = vpack.c.b16 %v5527, %v5527
  %v5592 = vpack.c.b16 %v5528, %v5528
  %v5593 = vpack.c.b16 %v5529, %v5529
  %v5594 = vpack.c.b16 %v5530, %v5530
  %v5595 = vpack.c.b16 %v5531, %v5531
  %v5596 = vpack.c.b16 %v5532, %v5532
  %v5597 = vpack.c.b16 %v5533, %v5533
  %v5598 = vpack.c.b16 %v5534, %v5534
  %v5599 = vpack.c.b16 %v5535, %v5535
  %v5600 = vpack.c.b16 %v5536, %v5536
  %v5601 = vpack.c.b16 %v5537, %v5537
  %v5602 = vpack.c.b16 %v5538, %v5538
  %v5603 = vpack.c.b16 %v5539, %v5539
  %v5604 = vpack.c.b16 %v5540, %v5540
  %v5605 = vpack.c.b16 %v5541, %v5541
  %v5606 = vpack.c.b16 %v5542, %v5542
  %v5607 = vpack.c.b16 %v5543, %v5543
  %v5608 = vpack.c.b16 %v5544, %v5544
  %v5609 = vpack.c.b16 %v5545, %v5545
  %5674 = vst [vmem:[%s2] sm:$0xf] %v5546
  %5675 = vst [vmem:[%s2 + $0x4] sm:$0xf] %v5547
  %5676 = vst [vmem:[%s2 + $0x8] sm:$0xf] %v5548
  %5677 = vst [vmem:[%s2 + $0xc] sm:$0xf] %v5549
  %5678 = vst [vmem:[%s2 + $0x10] sm:$0xf] %v5550
  %5679 = vst [vmem:[%s2 + $0x14] sm:$0xf] %v5551
  %5680 = vst [vmem:[%s2 + $0x18] sm:$0xf] %v5552
  %5681 = vst [vmem:[%s2 + $0x1c] sm:$0xf] %v5553
  %5682 = vst [vmem:[%s2 + $0x20] sm:$0xf] %v5554
  %5683 = vst [vmem:[%s2 + $0x24] sm:$0xf] %v5555
  %5684 = vst [vmem:[%s2 + $0x28] sm:$0xf] %v5556
  %5685 = vst [vmem:[%s2 + $0x2c] sm:$0xf] %v5557
  %5686 = vst [vmem:[%s2 + $0x30] sm:$0xf] %v5558
  %5687 = vst [vmem:[%s2 + $0x34] sm:$0xf] %v5559
  %5688 = vst [vmem:[%s2 + $0x38] sm:$0xf] %v5560
  %5689 = vst [vmem:[%s2 + $0x3c] sm:$0xf] %v5561
  %5690 = vst [vmem:[%s2 + $0x40] sm:$0xf] %v5562
  %5691 = vst [vmem:[%s2 + $0x44] sm:$0xf] %v5563
  %5692 = vst [vmem:[%s2 + $0x48] sm:$0xf] %v5564
  %5693 = vst [vmem:[%s2 + $0x4c] sm:$0xf] %v5565
  %5694 = vst [vmem:[%s2 + $0x50] sm:$0xf] %v5566
  %5695 = vst [vmem:[%s2 + $0x54] sm:$0xf] %v5567
  %5696 = vst [vmem:[%s2 + $0x58] sm:$0xf] %v5568
  %5697 = vst [vmem:[%s2 + $0x5c] sm:$0xf] %v5569
  %5698 = vst [vmem:[%s2 + $0x60] sm:$0xf] %v5570
  %5699 = vst [vmem:[%s2 + $0x64] sm:$0xf] %v5571
  %5700 = vst [vmem:[%s2 + $0x68] sm:$0xf] %v5572
  %5701 = vst [vmem:[%s2 + $0x6c] sm:$0xf] %v5573
  %5702 = vst [vmem:[%s2 + $0x70] sm:$0xf] %v5574
  %5703 = vst [vmem:[%s2 + $0x74] sm:$0xf] %v5575
  %5704 = vst [vmem:[%s2 + $0x78] sm:$0xf] %v5576
  %5705 = vst [vmem:[%s2 + $0x7c] sm:$0xf] %v5577
  %5706 = vst [vmem:[%s2 + $0x80] sm:$0xf] %v5578
  %5707 = vst [vmem:[%s2 + $0x84] sm:$0xf] %v5579
  %5708 = vst [vmem:[%s2 + $0x88] sm:$0xf] %v5580
  %5709 = vst [vmem:[%s2 + $0x8c] sm:$0xf] %v5581
  %5710 = vst [vmem:[%s2 + $0x90] sm:$0xf] %v5582
  %5711 = vst [vmem:[%s2 + $0x94] sm:$0xf] %v5583
  %5712 = vst [vmem:[%s2 + $0x98] sm:$0xf] %v5584
  %5713 = vst [vmem:[%s2 + $0x9c] sm:$0xf] %v5585
  %5714 = vst [vmem:[%s2 + $0xa0] sm:$0xf] %v5586
  %5715 = vst [vmem:[%s2 + $0xa4] sm:$0xf] %v5587
  %5716 = vst [vmem:[%s2 + $0xa8] sm:$0xf] %v5588
  %5717 = vst [vmem:[%s2 + $0xac] sm:$0xf] %v5589
  %5718 = vst [vmem:[%s2 + $0xb0] sm:$0xf] %v5590
  %5719 = vst [vmem:[%s2 + $0xb4] sm:$0xf] %v5591
  %5720 = vst [vmem:[%s2 + $0xb8] sm:$0xf] %v5592
  %5721 = vst [vmem:[%s2 + $0xbc] sm:$0xf] %v5593
  %5722 = vst [vmem:[%s2 + $0xc0] sm:$0xf] %v5594
  %5723 = vst [vmem:[%s2 + $0xc4] sm:$0xf] %v5595
  %5724 = vst [vmem:[%s2 + $0xc8] sm:$0xf] %v5596
  %5725 = vst [vmem:[%s2 + $0xcc] sm:$0xf] %v5597
  %5726 = vst [vmem:[%s2 + $0xd0] sm:$0xf] %v5598
  %5727 = vst [vmem:[%s2 + $0xd4] sm:$0xf] %v5599
  %5728 = vst [vmem:[%s2 + $0xd8] sm:$0xf] %v5600
  %5729 = vst [vmem:[%s2 + $0xdc] sm:$0xf] %v5601
  %5730 = vst [vmem:[%s2 + $0xe0] sm:$0xf] %v5602
  %5731 = vst [vmem:[%s2 + $0xe4] sm:$0xf] %v5603
  %5732 = vst [vmem:[%s2 + $0xe8] sm:$0xf] %v5604
  %5733 = vst [vmem:[%s2 + $0xec] sm:$0xf] %v5605
  %5734 = vst [vmem:[%s2 + $0xf0] sm:$0xf] %v5606
  %5735 = vst [vmem:[%s2 + $0xf4] sm:$0xf] %v5607
  %5736 = vst [vmem:[%s2 + $0xf8] sm:$0xf] %v5608
  %5737 = vst [vmem:[%s2 + $0xfc] sm:$0xf] %v5609
  %v5738 = vadd.f32 %v5354, %v5355
  %v5739 = vadd.f32 %v5738, %v5356
  %v5740 = vadd.f32 %v5739, %v5357
  %v5741 = vadd.f32 %v5740, %v5358
  %v5742 = vadd.f32 %v5741, %v5359
  %v5743 = vadd.f32 %v5742, %v5360
  %v5744 = vadd.f32 %v5743, %v5361
  %v5745 = vadd.f32 %v5744, %v5362
  %v5746 = vadd.f32 %v5745, %v5363
  %v5747 = vadd.f32 %v5746, %v5364
  %v5748 = vadd.f32 %v5747, %v5365
  %v5749 = vadd.f32 %v5748, %v5366
  %v5750 = vadd.f32 %v5749, %v5367
  %v5751 = vadd.f32 %v5750, %v5368
  %v5752 = vadd.f32 %v5751, %v5369
  %v5753 = vadd.f32 %v5752, %v5370
  %v5754 = vadd.f32 %v5753, %v5371
  %v5755 = vadd.f32 %v5754, %v5372
  %v5756 = vadd.f32 %v5755, %v5373
  %v5757 = vadd.f32 %v5756, %v5374
  %v5758 = vadd.f32 %v5757, %v5375
  %v5759 = vadd.f32 %v5758, %v5376
  %v5760 = vadd.f32 %v5759, %v5377
  %v5761 = vadd.f32 %v5760, %v5378
  %v5762 = vadd.f32 %v5761, %v5379
  %v5763 = vadd.f32 %v5762, %v5380
  %v5764 = vadd.f32 %v5763, %v5381
  %v5765 = vadd.f32 %v5764, %v5382
  %v5766 = vadd.f32 %v5765, %v5383
  %v5767 = vadd.f32 %v5766, %v5384
  %v5768 = vadd.f32 %v5767, %v5385
  %v5769 = vadd.f32 %v5768, %v5386
  %v5770 = vadd.f32 %v5769, %v5387
  %v5771 = vadd.f32 %v5770, %v5388
  %v5772 = vadd.f32 %v5771, %v5389
  %v5773 = vadd.f32 %v5772, %v5390
  %v5774 = vadd.f32 %v5773, %v5391
  %v5775 = vadd.f32 %v5774, %v5392
  %v5776 = vadd.f32 %v5775, %v5393
  %v5777 = vadd.f32 %v5776, %v5394
  %v5778 = vadd.f32 %v5777, %v5395
  %v5779 = vadd.f32 %v5778, %v5396
  %v5780 = vadd.f32 %v5779, %v5397
  %v5781 = vadd.f32 %v5780, %v5398
  %v5782 = vadd.f32 %v5781, %v5399
  %v5783 = vadd.f32 %v5782, %v5400
  %v5784 = vadd.f32 %v5783, %v5401
  %v5785 = vadd.f32 %v5784, %v5402
  %v5786 = vadd.f32 %v5785, %v5403
  %v5787 = vadd.f32 %v5786, %v5404
  %v5788 = vadd.f32 %v5787, %v5405
  %v5789 = vadd.f32 %v5788, %v5406
  %v5790 = vadd.f32 %v5789, %v5407
  %v5791 = vadd.f32 %v5790, %v5408
  %v5792 = vadd.f32 %v5791, %v5409
  %v5793 = vadd.f32 %v5792, %v5410
  %v5794 = vadd.f32 %v5793, %v5411
  %v5795 = vadd.f32 %v5794, %v5412
  %v5796 = vadd.f32 %v5795, %v5413
  %v5797 = vadd.f32 %v5796, %v5414
  %v5798 = vadd.f32 %v5797, %v5415
  %v5799 = vadd.f32 %v5798, %v5416
  %v5800 = vadd.f32 %v5799, %v5417
  %v5801 = vrot.slane %v5800, 4
  %v5802 = vadd.f32 %v5800, %v5801
  %v5803 = vrot.slane %v5802, 2
  %v5804 = vadd.f32 %v5802, %v5803
  %v5805 = vrot.slane %v5804, 1
  %v5806 = vadd.f32 %v5804, %v5805
  %5807 = vst [vmem:[%s3] sm:$0x1] %v5806
  %v5808 = vmul.f32 %v5354, %v5354
  %v5809 = vmul.f32 %v5355, %v5355
  %v5810 = vmul.f32 %v5356, %v5356
  %v5811 = vmul.f32 %v5357, %v5357
  %v5812 = vmul.f32 %v5358, %v5358
  %v5813 = vmul.f32 %v5359, %v5359
  %v5814 = vmul.f32 %v5360, %v5360
  %v5815 = vmul.f32 %v5361, %v5361
  %v5816 = vmul.f32 %v5362, %v5362
  %v5817 = vmul.f32 %v5363, %v5363
  %v5818 = vmul.f32 %v5364, %v5364
  %v5819 = vmul.f32 %v5365, %v5365
  %v5820 = vmul.f32 %v5366, %v5366
  %v5821 = vmul.f32 %v5367, %v5367
  %v5822 = vmul.f32 %v5368, %v5368
  %v5823 = vmul.f32 %v5369, %v5369
  %v5824 = vmul.f32 %v5370, %v5370
  %v5825 = vmul.f32 %v5371, %v5371
  %v5826 = vmul.f32 %v5372, %v5372
  %v5827 = vmul.f32 %v5373, %v5373
  %v5828 = vmul.f32 %v5374, %v5374
  %v5829 = vmul.f32 %v5375, %v5375
  %v5830 = vmul.f32 %v5376, %v5376
  %v5831 = vmul.f32 %v5377, %v5377
  %v5832 = vmul.f32 %v5378, %v5378
  %v5833 = vmul.f32 %v5379, %v5379
  %v5834 = vmul.f32 %v5380, %v5380
  %v5835 = vmul.f32 %v5381, %v5381
  %v5836 = vmul.f32 %v5382, %v5382
  %v5837 = vmul.f32 %v5383, %v5383
  %v5838 = vmul.f32 %v5384, %v5384
  %v5839 = vmul.f32 %v5385, %v5385
  %v5840 = vmul.f32 %v5386, %v5386
  %v5841 = vmul.f32 %v5387, %v5387
  %v5842 = vmul.f32 %v5388, %v5388
  %v5843 = vmul.f32 %v5389, %v5389
  %v5844 = vmul.f32 %v5390, %v5390
  %v5845 = vmul.f32 %v5391, %v5391
  %v5846 = vmul.f32 %v5392, %v5392
  %v5847 = vmul.f32 %v5393, %v5393
  %v5848 = vmul.f32 %v5394, %v5394
  %v5849 = vmul.f32 %v5395, %v5395
  %v5850 = vmul.f32 %v5396, %v5396
  %v5851 = vmul.f32 %v5397, %v5397
  %v5852 = vmul.f32 %v5398, %v5398
  %v5853 = vmul.f32 %v5399, %v5399
  %v5854 = vmul.f32 %v5400, %v5400
  %v5855 = vmul.f32 %v5401, %v5401
  %v5856 = vmul.f32 %v5402, %v5402
  %v5857 = vmul.f32 %v5403, %v5403
  %v5858 = vmul.f32 %v5404, %v5404
  %v5859 = vmul.f32 %v5405, %v5405
  %v5860 = vmul.f32 %v5406, %v5406
  %v5861 = vmul.f32 %v5407, %v5407
  %v5862 = vmul.f32 %v5408, %v5408
  %v5863 = vmul.f32 %v5409, %v5409
  %v5864 = vmul.f32 %v5410, %v5410
  %v5865 = vmul.f32 %v5411, %v5411
  %v5866 = vmul.f32 %v5412, %v5412
  %v5867 = vmul.f32 %v5413, %v5413
  %v5868 = vmul.f32 %v5414, %v5414
  %v5869 = vmul.f32 %v5415, %v5415
  %v5870 = vmul.f32 %v5416, %v5416
  %v5871 = vmul.f32 %v5417, %v5417
  %v5872 = vadd.f32 %v5808, %v5809
  %v5873 = vadd.f32 %v5872, %v5810
  %v5874 = vadd.f32 %v5873, %v5811
  %v5875 = vadd.f32 %v5874, %v5812
  %v5876 = vadd.f32 %v5875, %v5813
  %v5877 = vadd.f32 %v5876, %v5814
  %v5878 = vadd.f32 %v5877, %v5815
  %v5879 = vadd.f32 %v5878, %v5816
  %v5880 = vadd.f32 %v5879, %v5817
  %v5881 = vadd.f32 %v5880, %v5818
  %v5882 = vadd.f32 %v5881, %v5819
  %v5883 = vadd.f32 %v5882, %v5820
  %v5884 = vadd.f32 %v5883, %v5821
  %v5885 = vadd.f32 %v5884, %v5822
  %v5886 = vadd.f32 %v5885, %v5823
  %v5887 = vadd.f32 %v5886, %v5824
  %v5888 = vadd.f32 %v5887, %v5825
  %v5889 = vadd.f32 %v5888, %v5826
  %v5890 = vadd.f32 %v5889, %v5827
  %v5891 = vadd.f32 %v5890, %v5828
  %v5892 = vadd.f32 %v5891, %v5829
  %v5893 = vadd.f32 %v5892, %v5830
  %v5894 = vadd.f32 %v5893, %v5831
  %v5895 = vadd.f32 %v5894, %v5832
  %v5896 = vadd.f32 %v5895, %v5833
  %v5897 = vadd.f32 %v5896, %v5834
  %v5898 = vadd.f32 %v5897, %v5835
  %v5899 = vadd.f32 %v5898, %v5836
  %v5900 = vadd.f32 %v5899, %v5837
  %v5901 = vadd.f32 %v5900, %v5838
  %v5902 = vadd.f32 %v5901, %v5839
  %v5903 = vadd.f32 %v5902, %v5840
  %v5904 = vadd.f32 %v5903, %v5841
  %v5905 = vadd.f32 %v5904, %v5842
  %v5906 = vadd.f32 %v5905, %v5843
  %v5907 = vadd.f32 %v5906, %v5844
  %v5908 = vadd.f32 %v5907, %v5845
  %v5909 = vadd.f32 %v5908, %v5846
  %v5910 = vadd.f32 %v5909, %v5847
  %v5911 = vadd.f32 %v5910, %v5848
  %v5912 = vadd.f32 %v5911, %v5849
  %v5913 = vadd.f32 %v5912, %v5850
  %v5914 = vadd.f32 %v5913, %v5851
  %v5915 = vadd.f32 %v5914, %v5852
  %v5916 = vadd.f32 %v5915, %v5853
  %v5917 = vadd.f32 %v5916, %v5854
  %v5918 = vadd.f32 %v5917, %v5855
  %v5919 = vadd.f32 %v5918, %v5856
  %v5920 = vadd.f32 %v5919, %v5857
  %v5921 = vadd.f32 %v5920, %v5858
  %v5922 = vadd.f32 %v5921, %v5859
  %v5923 = vadd.f32 %v5922, %v5860
  %v5924 = vadd.f32 %v5923, %v5861
  %v5925 = vadd.f32 %v5924, %v5862
  %v5926 = vadd.f32 %v5925, %v5863
  %v5927 = vadd.f32 %v5926, %v5864
  %v5928 = vadd.f32 %v5927, %v5865
  %v5929 = vadd.f32 %v5928, %v5866
  %v5930 = vadd.f32 %v5929, %v5867
  %v5931 = vadd.f32 %v5930, %v5868
  %v5932 = vadd.f32 %v5931, %v5869
  %v5933 = vadd.f32 %v5932, %v5870
  %v5934 = vadd.f32 %v5933, %v5871
  %v5935 = vrot.slane %v5934, 4
  %v5936 = vadd.f32 %v5934, %v5935
  %v5937 = vrot.slane %v5936, 2
  %v5938 = vadd.f32 %v5936, %v5937
  %v5939 = vrot.slane %v5938, 1
  %v5940 = vadd.f32 %v5938, %v5939
  %5941 = vst [vmem:[%s4] sm:$0x1] %v5940
  // Predicated region
  $region10: #{residual_block_forward_nhwc.3} parent=0 // pred_check
    _
  $region11: #{residual_block_forward_nhwc.3} parent=0 // pred_check_branch
    %5943 = sbr.rel (0) target = $region13
  $region12: #{residual_block_forward_nhwc.3} parent=0 // pred_region
    _
  $region13: #{residual_block_forward_nhwc.3} parent=0 // pred_fallthru
    _
  // Predicated region
  $region14: #{residual_block_forward_nhwc.3} parent=0 // pred_check
    _
  $region15: #{residual_block_forward_nhwc.3} parent=0 // pred_check_branch
    %5945 = sbr.rel (0) target = $region17
  $region16: #{residual_block_forward_nhwc.3} parent=0 // pred_region
    _
  $region17: #{residual_block_forward_nhwc.3} parent=0 // pred_fallthru
    _
  // Predicated region
  $region18: #{residual_block_forward_nhwc.3} parent=0 // pred_check
    _
  $region19: #{residual_block_forward_nhwc.3} parent=0 // pred_check_branch
    %5947 = sbr.rel (0) target = $region21
  $region20: #{residual_block_forward_nhwc.3} parent=0 // pred_region
    _
  $region21: #{residual_block_forward_nhwc.3} parent=0 // pred_fallthru
    _
  // Predicated region
  $region22: #{residual_block_forward_nhwc.3} parent=0 // pred_check
    _
  $region23: #{residual_block_forward_nhwc.3} parent=0 // pred_check_branch
    %5949 = sbr.rel (0) target = $region25
  $region24: #{residual_block_forward_nhwc.3} parent=0 // pred_region
    _
  $region25: #{residual_block_forward_nhwc.3} parent=0 // pred_fallthru
    _
  // Predicated region
  $region26: #{residual_block_forward_nhwc.3} parent=0 // pred_check
    _
  $region27: #{residual_block_forward_nhwc.3} parent=0 // pred_check_branch
    %5951 = sbr.rel (0) target = $region29
  $region28: #{residual_block_forward_nhwc.3} parent=0 // pred_region
    _
  $region29: #{residual_block_forward_nhwc.3} parent=0 // pred_fallthru
    _
  // Predicated region
  $region30: #{residual_block_forward_nhwc.3} parent=0 // pred_check
    _
  $region31: #{residual_block_forward_nhwc.3} parent=0 // pred_check_branch
    %5953 = sbr.rel (0) target = $region33
  $region32: #{residual_block_forward_nhwc.3} parent=0 // pred_region
    _
  $region33: #{residual_block_forward_nhwc.3} parent=0 // pred_fallthru
    _

// kernel: residual_block_forward_nhwc.4
$region0: #{residual_block_forward_nhwc.4}
  #allocation0 [shape = 'u32[]', space=smem, size = 0x4, offset = 0x4, fixed_abs, tag = 'smem constant byte address 0x4 - core index']
  #allocation1 [shape = 'u32[144,128]{1,0:T(1,128)}', space=vmem, size = 0x12000, scoped, tag = 'internal scratch']
  #allocation2 [shape = 'bf16[2,18,18,128]{3,2,1,0:T(8,128)(2,1)}', space=vmem, size = 0x36000, scoped, tag = 'scratch operand']
  %s0 = inlined_call_operand.vmem [shape: bf16[2,16,16,128], index: 0, kind: input, shape index: {}]
  %s1 = inlined_call_operand.vmem [shape: f32[1,128], index: 1, kind: input, shape index: {}]
  %s2 = inlined_call_operand.vmem [shape: f32[1,128], index: 2, kind: input, shape index: {}]
  %s3 = inlined_call_operand.vmem [shape: bf16[9,128,128], index: 3, kind: input, shape index: {}]
  %s4 = inlined_call_operand.vmem [shape: bf16[2,16,16,128], index: 4, kind: output, shape index: {0}]
  %s5 = inlined_call_operand.vmem [shape: f32[1,1,128], index: 5, kind: output, shape index: {1}]
  %s6 = inlined_call_operand.vmem [shape: f32[1,1,128], index: 6, kind: output, shape index: {2}]
  %7 = xla_tuple %s4, %s5, %s6
  %s8 = sld [smem:[#allocation0]]
  $region42: #{residual_block_forward_nhwc.4} parent=0
    _
  %s10 = ssub.s32 1, %s8
  %s11 = scalar_select 0, %s10, %s8
  // Predicated region
  $region2: #{residual_block_forward_nhwc.4} parent=0 // pred_check
    _
  $region3: #{residual_block_forward_nhwc.4} parent=0 // pred_check_branch
    %13 = sbr.rel (0) target = $region5
  $region4: #{residual_block_forward_nhwc.4} parent=0 // pred_region
    _
  $region5: #{residual_block_forward_nhwc.4} parent=0 // pred_fallthru
    _
  // Predicated region
  $region6: #{residual_block_forward_nhwc.4} parent=0 // pred_check
    _
  $region7: #{residual_block_forward_nhwc.4} parent=0 // pred_check_branch
    %15 = sbr.rel (0) target = $region9
  $region8: #{residual_block_forward_nhwc.4} parent=0 // pred_region
    _
  $region9: #{residual_block_forward_nhwc.4} parent=0 // pred_fallthru
    _
  // Predicated region
  $region10: #{residual_block_forward_nhwc.4} parent=0 // pred_check
    _
  $region11: #{residual_block_forward_nhwc.4} parent=0 // pred_check_branch
    %17 = sbr.rel (0) target = $region13
  $region12: #{residual_block_forward_nhwc.4} parent=0 // pred_region
    _
  $region13: #{residual_block_forward_nhwc.4} parent=0 // pred_fallthru
    _
  // Predicated region
  $region14: #{residual_block_forward_nhwc.4} parent=0 // pred_check
    _
  $region15: #{residual_block_forward_nhwc.4} parent=0 // pred_check_branch
    %19 = sbr.rel (0) target = $region17
  $region16: #{residual_block_forward_nhwc.4} parent=0 // pred_region
    _
  $region17: #{residual_block_forward_nhwc.4} parent=0 // pred_fallthru
    _
  %v21 = vld [vmem:[%s0] sm:$0xf]
  %v22 = vld [vmem:[%s0 + $0x4] sm:$0xf]
  %v23 = vld [vmem:[%s0 + $0x8] sm:$0xf]
  %v24 = vld [vmem:[%s0 + $0xc] sm:$0xf]
  %v25 = vld [vmem:[%s0 + $0x10] sm:$0xf]
  %v26 = vld [vmem:[%s0 + $0x14] sm:$0xf]
  %v27 = vld [vmem:[%s0 + $0x18] sm:$0xf]
  %v28 = vld [vmem:[%s0 + $0x1c] sm:$0xf]
  %v29 = vld [vmem:[%s0 + $0x20] sm:$0xf]
  %v30 = vld [vmem:[%s0 + $0x24] sm:$0xf]
  %v31 = vld [vmem:[%s0 + $0x28] sm:$0xf]
  %v32 = vld [vmem:[%s0 + $0x2c] sm:$0xf]
  %v33 = vld [vmem:[%s0 + $0x30] sm:$0xf]
  %v34 = vld [vmem:[%s0 + $0x34] sm:$0xf]
  %v35 = vld [vmem:[%s0 + $0x38] sm:$0xf]
  %v36 = vld [vmem:[%s0 + $0x3c] sm:$0xf]
  %v37 = vld [vmem:[%s0 + $0x40] sm:$0xf]
  %v38 = vld [vmem:[%s0 + $0x44] sm:$0xf]
  %v39 = vld [vmem:[%s0 + $0x48] sm:$0xf]
  %v40 = vld [vmem:[%s0 + $0x4c] sm:$0xf]
  %v41 = vld [vmem:[%s0 + $0x50] sm:$0xf]
  %v42 = vld [vmem:[%s0 + $0x54] sm:$0xf]
  %v43 = vld [vmem:[%s0 + $0x58] sm:$0xf]
  %v44 = vld [vmem:[%s0 + $0x5c] sm:$0xf]
  %v45 = vld [vmem:[%s0 + $0x60] sm:$0xf]
  %v46 = vld [vmem:[%s0 + $0x64] sm:$0xf]
  %v47 = vld [vmem:[%s0 + $0x68] sm:$0xf]
  %v48 = vld [vmem:[%s0 + $0x6c] sm:$0xf]
  %v49 = vld [vmem:[%s0 + $0x70] sm:$0xf]
  %v50 = vld [vmem:[%s0 + $0x74] sm:$0xf]
  %v51 = vld [vmem:[%s0 + $0x78] sm:$0xf]
  %v52 = vld [vmem:[%s0 + $0x7c] sm:$0xf]
  %v53 = vld [vmem:[%s0 + $0x80] sm:$0xf]
  %v54 = vld [vmem:[%s0 + $0x84] sm:$0xf]
  %v55 = vld [vmem:[%s0 + $0x88] sm:$0xf]
  %v56 = vld [vmem:[%s0 + $0x8c] sm:$0xf]
  %v57 = vld [vmem:[%s0 + $0x90] sm:$0xf]
  %v58 = vld [vmem:[%s0 + $0x94] sm:$0xf]
  %v59 = vld [vmem:[%s0 + $0x98] sm:$0xf]
  %v60 = vld [vmem:[%s0 + $0x9c] sm:$0xf]
  %v61 = vld [vmem:[%s0 + $0xa0] sm:$0xf]
  %v62 = vld [vmem:[%s0 + $0xa4] sm:$0xf]
  %v63 = vld [vmem:[%s0 + $0xa8] sm:$0xf]
  %v64 = vld [vmem:[%s0 + $0xac] sm:$0xf]
  %v65 = vld [vmem:[%s0 + $0xb0] sm:$0xf]
  %v66 = vld [vmem:[%s0 + $0xb4] sm:$0xf]
  %v67 = vld [vmem:[%s0 + $0xb8] sm:$0xf]
  %v68 = vld [vmem:[%s0 + $0xbc] sm:$0xf]
  %v69 = vld [vmem:[%s0 + $0xc0] sm:$0xf]
  %v70 = vld [vmem:[%s0 + $0xc4] sm:$0xf]
  %v71 = vld [vmem:[%s0 + $0xc8] sm:$0xf]
  %v72 = vld [vmem:[%s0 + $0xcc] sm:$0xf]
  %v73 = vld [vmem:[%s0 + $0xd0] sm:$0xf]
  %v74 = vld [vmem:[%s0 + $0xd4] sm:$0xf]
  %v75 = vld [vmem:[%s0 + $0xd8] sm:$0xf]
  %v76 = vld [vmem:[%s0 + $0xdc] sm:$0xf]
  %v77 = vld [vmem:[%s0 + $0xe0] sm:$0xf]
  %v78 = vld [vmem:[%s0 + $0xe4] sm:$0xf]
  %v79 = vld [vmem:[%s0 + $0xe8] sm:$0xf]
  %v80 = vld [vmem:[%s0 + $0xec] sm:$0xf]
  %v81 = vld [vmem:[%s0 + $0xf0] sm:$0xf]
  %v82 = vld [vmem:[%s0 + $0xf4] sm:$0xf]
  %v83 = vld [vmem:[%s0 + $0xf8] sm:$0xf]
  %v84 = vld [vmem:[%s0 + $0xfc] sm:$0xf]
  %v85 = vunpack.c.l.bf16 %v21
  %v86 = vunpack.c.l.bf16 %v22
  %v87 = vunpack.c.l.bf16 %v23
  %v88 = vunpack.c.l.bf16 %v24
  %v89 = vunpack.c.l.bf16 %v25
  %v90 = vunpack.c.l.bf16 %v26
  %v91 = vunpack.c.l.bf16 %v27
  %v92 = vunpack.c.l.bf16 %v28
  %v93 = vunpack.c.l.bf16 %v29
  %v94 = vunpack.c.l.bf16 %v30
  %v95 = vunpack.c.l.bf16 %v31
  %v96 = vunpack.c.l.bf16 %v32
  %v97 = vunpack.c.l.bf16 %v33
  %v98 = vunpack.c.l.bf16 %v34
  %v99 = vunpack.c.l.bf16 %v35
  %v100 = vunpack.c.l.bf16 %v36
  %v101 = vunpack.c.l.bf16 %v37
  %v102 = vunpack.c.l.bf16 %v38
  %v103 = vunpack.c.l.bf16 %v39
  %v104 = vunpack.c.l.bf16 %v40
  %v105 = vunpack.c.l.bf16 %v41
  %v106 = vunpack.c.l.bf16 %v42
  %v107 = vunpack.c.l.bf16 %v43
  %v108 = vunpack.c.l.bf16 %v44
  %v109 = vunpack.c.l.bf16 %v45
  %v110 = vunpack.c.l.bf16 %v46
  %v111 = vunpack.c.l.bf16 %v47
  %v112 = vunpack.c.l.bf16 %v48
  %v113 = vunpack.c.l.bf16 %v49
  %v114 = vunpack.c.l.bf16 %v50
  %v115 = vunpack.c.l.bf16 %v51
  %v116 = vunpack.c.l.bf16 %v52
  %v117 = vunpack.c.l.bf16 %v53
  %v118 = vunpack.c.l.bf16 %v54
  %v119 = vunpack.c.l.bf16 %v55
  %v120 = vunpack.c.l.bf16 %v56
  %v121 = vunpack.c.l.bf16 %v57
  %v122 = vunpack.c.l.bf16 %v58
  %v123 = vunpack.c.l.bf16 %v59
  %v124 = vunpack.c.l.bf16 %v60
  %v125 = vunpack.c.l.bf16 %v61
  %v126 = vunpack.c.l.bf16 %v62
  %v127 = vunpack.c.l.bf16 %v63
  %v128 = vunpack.c.l.bf16 %v64
  %v129 = vunpack.c.l.bf16 %v65
  %v130 = vunpack.c.l.bf16 %v66
  %v131 = vunpack.c.l.bf16 %v67
  %v132 = vunpack.c.l.bf16 %v68
  %v133 = vunpack.c.l.bf16 %v69
  %v134 = vunpack.c.l.bf16 %v70
  %v135 = vunpack.c.l.bf16 %v71
  %v136 = vunpack.c.l.bf16 %v72
  %v137 = vunpack.c.l.bf16 %v73
  %v138 = vunpack.c.l.bf16 %v74
  %v139 = vunpack.c.l.bf16 %v75
  %v140 = vunpack.c.l.bf16 %v76
  %v141 = vunpack.c.l.bf16 %v77
  %v142 = vunpack.c.l.bf16 %v78
  %v143 = vunpack.c.l.bf16 %v79
  %v144 = vunpack.c.l.bf16 %v80
  %v145 = vunpack.c.l.bf16 %v81
  %v146 = vunpack.c.l.bf16 %v82
  %v147 = vunpack.c.l.bf16 %v83
  %v148 = vunpack.c.l.bf16 %v84
  %v149 = vld [vmem:[%s1] sm:$0x1]
  %v151 = vlaneseq
  %v152 = vshrl.u32 %v151, 7
  %v153 = vsub.s32 0, %v152
  %v154 = vrot.slane %v149, %v153
  %v156 = vmul.f32 %v85, %v154
  %v157 = vmul.f32 %v86, %v154
  %v158 = vmul.f32 %v87, %v154
  %v159 = vmul.f32 %v88, %v154
  %v160 = vmul.f32 %v89, %v154
  %v161 = vmul.f32 %v90, %v154
  %v162 = vmul.f32 %v91, %v154
  %v163 = vmul.f32 %v92, %v154
  %v164 = vmul.f32 %v93, %v154
  %v165 = vmul.f32 %v94, %v154
  %v166 = vmul.f32 %v95, %v154
  %v167 = vmul.f32 %v96, %v154
  %v168 = vmul.f32 %v97, %v154
  %v169 = vmul.f32 %v98, %v154
  %v170 = vmul.f32 %v99, %v154
  %v171 = vmul.f32 %v100, %v154
  %v172 = vmul.f32 %v101, %v154
  %v173 = vmul.f32 %v102, %v154
  %v174 = vmul.f32 %v103, %v154
  %v175 = vmul.f32 %v104, %v154
  %v176 = vmul.f32 %v105, %v154
  %v177 = vmul.f32 %v106, %v154
  %v178 = vmul.f32 %v107, %v154
  %v179 = vmul.f32 %v108, %v154
  %v180 = vmul.f32 %v109, %v154
  %v181 = vmul.f32 %v110, %v154
  %v182 = vmul.f32 %v111, %v154
  %v183 = vmul.f32 %v112, %v154
  %v184 = vmul.f32 %v113, %v154
  %v185 = vmul.f32 %v114, %v154
  %v186 = vmul.f32 %v115, %v154
  %v187 = vmul.f32 %v116, %v154
  %v188 = vmul.f32 %v117, %v154
  %v189 = vmul.f32 %v118, %v154
  %v190 = vmul.f32 %v119, %v154
  %v191 = vmul.f32 %v120, %v154
  %v192 = vmul.f32 %v121, %v154
  %v193 = vmul.f32 %v122, %v154
  %v194 = vmul.f32 %v123, %v154
  %v195 = vmul.f32 %v124, %v154
  %v196 = vmul.f32 %v125, %v154
  %v197 = vmul.f32 %v126, %v154
  %v198 = vmul.f32 %v127, %v154
  %v199 = vmul.f32 %v128, %v154
  %v200 = vmul.f32 %v129, %v154
  %v201 = vmul.f32 %v130, %v154
  %v202 = vmul.f32 %v131, %v154
  %v203 = vmul.f32 %v132, %v154
  %v204 = vmul.f32 %v133, %v154
  %v205 = vmul.f32 %v134, %v154
  %v206 = vmul.f32 %v135, %v154
  %v207 = vmul.f32 %v136, %v154
  %v208 = vmul.f32 %v137, %v154
  %v209 = vmul.f32 %v138, %v154
  %v210 = vmul.f32 %v139, %v154
  %v211 = vmul.f32 %v140, %v154
  %v212 = vmul.f32 %v141, %v154
  %v213 = vmul.f32 %v142, %v154
  %v214 = vmul.f32 %v143, %v154
  %v215 = vmul.f32 %v144, %v154
  %v216 = vmul.f32 %v145, %v154
  %v217 = vmul.f32 %v146, %v154
  %v218 = vmul.f32 %v147, %v154
  %v219 = vmul.f32 %v148, %v154
  %v220 = vld [vmem:[%s2] sm:$0x1]
  %v222 = vlaneseq
  %v223 = vshrl.u32 %v222, 7
  %v224 = vsub.s32 0, %v223
  %v225 = vrot.slane %v220, %v224
  %v227 = vadd.f32 %v156, %v225
  %v228 = vadd.f32 %v157, %v225
  %v229 = vadd.f32 %v158, %v225
  %v230 = vadd.f32 %v159, %v225
  %v231 = vadd.f32 %v160, %v225
  %v232 = vadd.f32 %v161, %v225
  %v233 = vadd.f32 %v162, %v225
  %v234 = vadd.f32 %v163, %v225
  %v235 = vadd.f32 %v164, %v225
  %v236 = vadd.f32 %v165, %v225
  %v237 = vadd.f32 %v166, %v225
  %v238 = vadd.f32 %v167, %v225
  %v239 = vadd.f32 %v168, %v225
  %v240 = vadd.f32 %v169, %v225
  %v241 = vadd.f32 %v170, %v225
  %v242 = vadd.f32 %v171, %v225
  %v243 = vadd.f32 %v172, %v225
  %v244 = vadd.f32 %v173, %v225
  %v245 = vadd.f32 %v174, %v225
  %v246 = vadd.f32 %v175, %v225
  %v247 = vadd.f32 %v176, %v225
  %v248 = vadd.f32 %v177, %v225
  %v249 = vadd.f32 %v178, %v225
  %v250 = vadd.f32 %v179, %v225
  %v251 = vadd.f32 %v180, %v225
  %v252 = vadd.f32 %v181, %v225
  %v253 = vadd.f32 %v182, %v225
  %v254 = vadd.f32 %v183, %v225
  %v255 = vadd.f32 %v184, %v225
  %v256 = vadd.f32 %v185, %v225
  %v257 = vadd.f32 %v186, %v225
  %v258 = vadd.f32 %v187, %v225
  %v259 = vadd.f32 %v188, %v225
  %v260 = vadd.f32 %v189, %v225
  %v261 = vadd.f32 %v190, %v225
  %v262 = vadd.f32 %v191, %v225
  %v263 = vadd.f32 %v192, %v225
  %v264 = vadd.f32 %v193, %v225
  %v265 = vadd.f32 %v194, %v225
  %v266 = vadd.f32 %v195, %v225
  %v267 = vadd.f32 %v196, %v225
  %v268 = vadd.f32 %v197, %v225
  %v269 = vadd.f32 %v198, %v225
  %v270 = vadd.f32 %v199, %v225
  %v271 = vadd.f32 %v200, %v225
  %v272 = vadd.f32 %v201, %v225
  %v273 = vadd.f32 %v202, %v225
  %v274 = vadd.f32 %v203, %v225
  %v275 = vadd.f32 %v204, %v225
  %v276 = vadd.f32 %v205, %v225
  %v277 = vadd.f32 %v206, %v225
  %v278 = vadd.f32 %v207, %v225
  %v279 = vadd.f32 %v208, %v225
  %v280 = vadd.f32 %v209, %v225
  %v281 = vadd.f32 %v210, %v225
  %v282 = vadd.f32 %v211, %v225
  %v283 = vadd.f32 %v212, %v225
  %v284 = vadd.f32 %v213, %v225
  %v285 = vadd.f32 %v214, %v225
  %v286 = vadd.f32 %v215, %v225
  %v287 = vadd.f32 %v216, %v225
  %v288 = vadd.f32 %v217, %v225
  %v289 = vadd.f32 %v218, %v225
  %v290 = vadd.f32 %v219, %v225
  %v291 = vmax.f32 %v227, 0.0
  %v292 = vmax.f32 %v228, 0.0
  %v293 = vmax.f32 %v229, 0.0
  %v294 = vmax.f32 %v230, 0.0
  %v295 = vmax.f32 %v231, 0.0
  %v296 = vmax.f32 %v232, 0.0
  %v297 = vmax.f32 %v233, 0.0
  %v298 = vmax.f32 %v234, 0.0
  %v299 = vmax.f32 %v235, 0.0
  %v300 = vmax.f32 %v236, 0.0
  %v301 = vmax.f32 %v237, 0.0
  %v302 = vmax.f32 %v238, 0.0
  %v303 = vmax.f32 %v239, 0.0
  %v304 = vmax.f32 %v240, 0.0
  %v305 = vmax.f32 %v241, 0.0
  %v306 = vmax.f32 %v242, 0.0
  %v307 = vmax.f32 %v243, 0.0
  %v308 = vmax.f32 %v244, 0.0
  %v309 = vmax.f32 %v245, 0.0
  %v310 = vmax.f32 %v246, 0.0
  %v311 = vmax.f32 %v247, 0.0
  %v312 = vmax.f32 %v248, 0.0
  %v313 = vmax.f32 %v249, 0.0
  %v314 = vmax.f32 %v250, 0.0
  %v315 = vmax.f32 %v251, 0.0
  %v316 = vmax.f32 %v252, 0.0
  %v317 = vmax.f32 %v253, 0.0
  %v318 = vmax.f32 %v254, 0.0
  %v319 = vmax.f32 %v255, 0.0
  %v320 = vmax.f32 %v256, 0.0
  %v321 = vmax.f32 %v257, 0.0
  %v322 = vmax.f32 %v258, 0.0
  %v323 = vmax.f32 %v259, 0.0
  %v324 = vmax.f32 %v260, 0.0
  %v325 = vmax.f32 %v261, 0.0
  %v326 = vmax.f32 %v262, 0.0
  %v327 = vmax.f32 %v263, 0.0
  %v328 = vmax.f32 %v264, 0.0
  %v329 = vmax.f32 %v265, 0.0
  %v330 = vmax.f32 %v266, 0.0
  %v331 = vmax.f32 %v267, 0.0
  %v332 = vmax.f32 %v268, 0.0
  %v333 = vmax.f32 %v269, 0.0
  %v334 = vmax.f32 %v270, 0.0
  %v335 = vmax.f32 %v271, 0.0
  %v336 = vmax.f32 %v272, 0.0
  %v337 = vmax.f32 %v273, 0.0
  %v338 = vmax.f32 %v274, 0.0
  %v339 = vmax.f32 %v275, 0.0
  %v340 = vmax.f32 %v276, 0.0
  %v341 = vmax.f32 %v277, 0.0
  %v342 = vmax.f32 %v278, 0.0
  %v343 = vmax.f32 %v279, 0.0
  %v344 = vmax.f32 %v280, 0.0
  %v345 = vmax.f32 %v281, 0.0
  %v346 = vmax.f32 %v282, 0.0
  %v347 = vmax.f32 %v283, 0.0
  %v348 = vmax.f32 %v284, 0.0
  %v349 = vmax.f32 %v285, 0.0
  %v350 = vmax.f32 %v286, 0.0
  %v351 = vmax.f32 %v287, 0.0
  %v352 = vmax.f32 %v288, 0.0
  %v353 = vmax.f32 %v289, 0.0
  %v354 = vmax.f32 %v290, 0.0
  %v355 = vpack.c.bf16 %v292, %v291
  %v356 = vpack.c.bf16 %v294, %v293
  %v357 = vpack.c.bf16 %v296, %v295
  %v358 = vpack.c.bf16 %v298, %v297
  %v359 = vpack.c.bf16 %v300, %v299
  %v360 = vpack.c.bf16 %v302, %v301
  %v361 = vpack.c.bf16 %v304, %v303
  %v362 = vpack.c.bf16 %v306, %v305
  %v363 = vpack.c.bf16 %v308, %v307
  %v364 = vpack.c.bf16 %v310, %v309
  %v365 = vpack.c.bf16 %v312, %v311
  %v366 = vpack.c.bf16 %v314, %v313
  %v367 = vpack.c.bf16 %v316, %v315
  %v368 = vpack.c.bf16 %v318, %v317
  %v369 = vpack.c.bf16 %v320, %v319
  %v370 = vpack.c.bf16 %v322, %v321
  %v371 = vpack.c.bf16 %v324, %v323
  %v372 = vpack.c.bf16 %v326, %v325
  %v373 = vpack.c.bf16 %v328, %v327
  %v374 = vpack.c.bf16 %v330, %v329
  %v375 = vpack.c.bf16 %v332, %v331
  %v376 = vpack.c.bf16 %v334, %v333
  %v377 = vpack.c.bf16 %v336, %v335
  %v378 = vpack.c.bf16 %v338, %v337
  %v379 = vpack.c.bf16 %v340, %v339
  %v380 = vpack.c.bf16 %v342, %v341
  %v381 = vpack.c.bf16 %v344, %v343
  %v382 = vpack.c.bf16 %v346, %v345
  %v383 = vpack.c.bf16 %v348, %v347
  %v384 = vpack.c.bf16 %v350, %v349
  %v385 = vpack.c.bf16 %v352, %v351
  %v386 = vpack.c.bf16 %v354, %v353
  %387 = vst [vmem:[#allocation2] sm:$0xf] 0
  %388 = vst [vmem:[#allocation2 + $0x4] sm:$0xf] 0
  %389 = vst [vmem:[#allocation2 + $0x8] sm:$0x1] 0
  %390 = vst [vmem:[#allocation2 + $0xc] sm:$0xf] 0
  %391 = vst [vmem:[#allocation2 + $0x10] sm:$0xf] 0
  %392 = vst [vmem:[#allocation2 + $0x14] sm:$0x1] 0
  %393 = vst [vmem:[#allocation2 + $0x18] sm:$0xf] 0
  %394 = vst [vmem:[#allocation2 + $0x1c] sm:$0xf] 0
  %395 = vst [vmem:[#allocation2 + $0x20] sm:$0x1] 0
  %396 = vst [vmem:[#allocation2 + $0x24] sm:$0xf] 0
  %397 = vst [vmem:[#allocation2 + $0x28] sm:$0xf] 0
  %398 = vst [vmem:[#allocation2 + $0x2c] sm:$0x1] 0
  %399 = vst [vmem:[#allocation2 + $0x30] sm:$0xf] 0
  %400 = vst [vmem:[#allocation2 + $0x34] sm:$0xf] 0
  %401 = vst [vmem:[#allocation2 + $0x38] sm:$0x1] 0
  %402 = vst [vmem:[#allocation2 + $0x3c] sm:$0xf] 0
  %403 = vst [vmem:[#allocation2 + $0x40] sm:$0xf] 0
  %404 = vst [vmem:[#allocation2 + $0x44] sm:$0x1] 0
  %405 = vst [vmem:[#allocation2 + $0x48] sm:$0xf] 0
  %406 = vst [vmem:[#allocation2 + $0x4c] sm:$0xf] 0
  %407 = vst [vmem:[#allocation2 + $0x50] sm:$0x1] 0
  %408 = vst [vmem:[#allocation2 + $0x54] sm:$0xf] 0
  %409 = vst [vmem:[#allocation2 + $0x58] sm:$0xf] 0
  %410 = vst [vmem:[#allocation2 + $0x5c] sm:$0x1] 0
  %411 = vst [vmem:[#allocation2 + $0x60] sm:$0xf] 0
  %412 = vst [vmem:[#allocation2 + $0x64] sm:$0xf] 0
  %413 = vst [vmem:[#allocation2 + $0x68] sm:$0x1] 0
  %414 = vst [vmem:[#allocation2 + $0x6c] sm:$0xf] 0
  %415 = vst [vmem:[#allocation2 + $0x70] sm:$0xf] 0
  %416 = vst [vmem:[#allocation2 + $0x74] sm:$0x1] 0
  %417 = vst [vmem:[#allocation2 + $0x78] sm:$0xf] 0
  %418 = vst [vmem:[#allocation2 + $0x7c] sm:$0xf] 0
  %419 = vst [vmem:[#allocation2 + $0x80] sm:$0x1] 0
  %420 = vst [vmem:[#allocation2 + $0x84] sm:$0xf] 0
  %421 = vst [vmem:[#allocation2 + $0x88] sm:$0xf] 0
  %422 = vst [vmem:[#allocation2 + $0x8c] sm:$0x1] 0
  %423 = vst [vmem:[#allocation2 + $0x90] sm:$0xf] 0
  %424 = vst [vmem:[#allocation2 + $0x94] sm:$0xf] 0
  %425 = vst [vmem:[#allocation2 + $0x98] sm:$0x1] 0
  %426 = vst [vmem:[#allocation2 + $0x9c] sm:$0xf] 0
  %427 = vst [vmem:[#allocation2 + $0xa0] sm:$0xf] 0
  %428 = vst [vmem:[#allocation2 + $0xa4] sm:$0x1] 0
  %429 = vst [vmem:[#allocation2 + $0xa8] sm:$0xf] 0
  %430 = vst [vmem:[#allocation2 + $0xac] sm:$0xf] 0
  %431 = vst [vmem:[#allocation2 + $0xb0] sm:$0x1] 0
  %432 = vst [vmem:[#allocation2 + $0xb4] sm:$0xf] 0
  %433 = vst [vmem:[#allocation2 + $0xb8] sm:$0xf] 0
  %434 = vst [vmem:[#allocation2 + $0xbc] sm:$0x1] 0
  %435 = vst [vmem:[#allocation2 + $0xc0] sm:$0xf] 0
  %436 = vst [vmem:[#allocation2 + $0xc4] sm:$0xf] 0
  %437 = vst [vmem:[#allocation2 + $0xc8] sm:$0x1] 0
  %438 = vst [vmem:[#allocation2 + $0xcc] sm:$0xf] 0
  %439 = vst [vmem:[#allocation2 + $0xd0] sm:$0xf] 0
  %440 = vst [vmem:[#allocation2 + $0xd4] sm:$0x1] 0
  %441 = vst [vmem:[#allocation2 + $0xd8] sm:$0xf] 0
  %442 = vst [vmem:[#allocation2 + $0xdc] sm:$0xf] 0
  %443 = vst [vmem:[#allocation2 + $0xe0] sm:$0x1] 0
  %444 = vst [vmem:[#allocation2 + $0xe4] sm:$0xf] 0
  %445 = vst [vmem:[#allocation2 + $0xe8] sm:$0xf] 0
  %446 = vst [vmem:[#allocation2 + $0xec] sm:$0x1] 0
  %447 = vst [vmem:[#allocation2 + $0xf0] sm:$0xf] 0
  %448 = vst [vmem:[#allocation2 + $0xf4] sm:$0xf] 0
  %449 = vst [vmem:[#allocation2 + $0xf8] sm:$0x1] 0
  %450 = vst [vmem:[#allocation2 + $0xfc] sm:$0xf] 0
  %451 = vst [vmem:[#allocation2 + $0x100] sm:$0xf] 0
  %452 = vst [vmem:[#allocation2 + $0x104] sm:$0x1] 0
  %453 = vst [vmem:[#allocation2 + $0x108] sm:$0xf] 0
  %454 = vst [vmem:[#allocation2 + $0x10c] sm:$0xf] 0
  %455 = vst [vmem:[#allocation2 + $0x110] sm:$0x1] 0
  %456 = vst [vmem:[#allocation2 + $0x114] sm:$0xf] 0
  %457 = vst [vmem:[#allocation2 + $0x118] sm:$0xf] 0
  %458 = vst [vmem:[#allocation2 + $0x11c] sm:$0x1] 0
  %459 = vst [vmem:[#allocation2 + $0x120] sm:$0xf] 0
  %460 = vst [vmem:[#allocation2 + $0x124] sm:$0xf] 0
  %461 = vst [vmem:[#allocation2 + $0x128] sm:$0x1] 0
  %462 = vst [vmem:[#allocation2 + $0x12c] sm:$0xf] 0
  %463 = vst [vmem:[#allocation2 + $0x130] sm:$0xf] 0
  %464 = vst [vmem:[#allocation2 + $0x134] sm:$0x1] 0
  %465 = vst [vmem:[#allocation2 + $0x138] sm:$0xf] 0
  %466 = vst [vmem:[#allocation2 + $0x13c] sm:$0xf] 0
  %467 = vst [vmem:[#allocation2 + $0x140] sm:$0x1] 0
  %468 = vst [vmem:[#allocation2 + $0x144] sm:$0xf] 0
  %469 = vst [vmem:[#allocation2 + $0x148] sm:$0xf] 0
  %470 = vst [vmem:[#allocation2 + $0x14c] sm:$0x1] 0
  %471 = vst [vmem:[#allocation2 + $0x150] sm:$0xf] 0
  %472 = vst [vmem:[#allocation2 + $0x154] sm:$0xf] 0
  %473 = vst [vmem:[#allocation2 + $0x158] sm:$0x1] 0
  %474 = vst [vmem:[#allocation2 + $0x15c] sm:$0xf] 0
  %475 = vst [vmem:[#allocation2 + $0x160] sm:$0xf] 0
  %476 = vst [vmem:[#allocation2 + $0x164] sm:$0x1] 0
  %477 = vst [vmem:[#allocation2 + $0x168] sm:$0xf] 0
  %478 = vst [vmem:[#allocation2 + $0x16c] sm:$0xf] 0
  %479 = vst [vmem:[#allocation2 + $0x170] sm:$0x1] 0
  %480 = vst [vmem:[#allocation2 + $0x174] sm:$0xf] 0
  %481 = vst [vmem:[#allocation2 + $0x178] sm:$0xf] 0
  %482 = vst [vmem:[#allocation2 + $0x17c] sm:$0x1] 0
  %483 = vst [vmem:[#allocation2 + $0x180] sm:$0xf] 0
  %484 = vst [vmem:[#allocation2 + $0x184] sm:$0xf] 0
  %485 = vst [vmem:[#allocation2 + $0x188] sm:$0x1] 0
  %486 = vst [vmem:[#allocation2 + $0x18c] sm:$0xf] 0
  %487 = vst [vmem:[#allocation2 + $0x190] sm:$0xf] 0
  %488 = vst [vmem:[#allocation2 + $0x194] sm:$0x1] 0
  %489 = vst [vmem:[#allocation2 + $0x198] sm:$0xf] 0
  %490 = vst [vmem:[#allocation2 + $0x19c] sm:$0xf] 0
  %491 = vst [vmem:[#allocation2 + $0x1a0] sm:$0x1] 0
  %492 = vst [vmem:[#allocation2 + $0x1a4] sm:$0xf] 0
  %493 = vst [vmem:[#allocation2 + $0x1a8] sm:$0xf] 0
  %494 = vst [vmem:[#allocation2 + $0x1ac] sm:$0x1] 0
  %v527 = vunpack.c.l.b16 %v355
  %v528 = vunpack.c.h.b16 %v355
  %v529 = vunpack.c.l.b16 %v356
  %v530 = vunpack.c.h.b16 %v356
  %v531 = vunpack.c.l.b16 %v357
  %v532 = vunpack.c.h.b16 %v357
  %v533 = vunpack.c.l.b16 %v358
  %v534 = vunpack.c.h.b16 %v358
  %v535 = vunpack.c.l.b16 %v359
  %v536 = vunpack.c.h.b16 %v359
  %v537 = vunpack.c.l.b16 %v360
  %v538 = vunpack.c.h.b16 %v360
  %v539 = vunpack.c.l.b16 %v361
  %v540 = vunpack.c.h.b16 %v361
  %v541 = vunpack.c.l.b16 %v362
  %v542 = vunpack.c.h.b16 %v362
  %v543 = vunpack.c.l.b16 %v363
  %v544 = vunpack.c.h.b16 %v363
  %v545 = vunpack.c.l.b16 %v364
  %v546 = vunpack.c.h.b16 %v364
  %v547 = vunpack.c.l.b16 %v365
  %v548 = vunpack.c.h.b16 %v365
  %v549 = vunpack.c.l.b16 %v366
  %v550 = vunpack.c.h.b16 %v366
  %v551 = vunpack.c.l.b16 %v367
  %v552 = vunpack.c.h.b16 %v367
  %v553 = vunpack.c.l.b16 %v368
  %v554 = vunpack.c.h.b16 %v368
  %v555 = vunpack.c.l.b16 %v369
  %v556 = vunpack.c.h.b16 %v369
  %v557 = vunpack.c.l.b16 %v370
  %v558 = vunpack.c.h.b16 %v370
  %v559 = vunpack.c.l.b16 %v371
  %v560 = vunpack.c.h.b16 %v371
  %v561 = vunpack.c.l.b16 %v372
  %v562 = vunpack.c.h.b16 %v372
  %v563 = vunpack.c.l.b16 %v373
  %v564 = vunpack.c.h.b16 %v373
  %v565 = vunpack.c.l.b16 %v374
  %v566 = vunpack.c.h.b16 %v374
  %v567 = vunpack.c.l.b16 %v375
  %v568 = vunpack.c.h.b16 %v375
  %v569 = vunpack.c.l.b16 %v376
  %v570 = vunpack.c.h.b16 %v376
  %v571 = vunpack.c.l.b16 %v377
  %v572 = vunpack.c.h.b16 %v377
  %v573 = vunpack.c.l.b16 %v378
  %v574 = vunpack.c.h.b16 %v378
  %v575 = vunpack.c.l.b16 %v379
  %v576 = vunpack.c.h.b16 %v379
  %v577 = vunpack.c.l.b16 %v380
  %v578 = vunpack.c.h.b16 %v380
  %v579 = vunpack.c.l.b16 %v381
  %v580 = vunpack.c.h.b16 %v381
  %v581 = vunpack.c.l.b16 %v382
  %v582 = vunpack.c.h.b16 %v382
  %v583 = vunpack.c.l.b16 %v383
  %v584 = vunpack.c.h.b16 %v383
  %v585 = vunpack.c.l.b16 %v384
  %v586 = vunpack.c.h.b16 %v384
  %v587 = vunpack.c.l.b16 %v385
  %v588 = vunpack.c.h.b16 %v385
  %v589 = vunpack.c.l.b16 %v386
  %v590 = vunpack.c.h.b16 %v386
  %v591 = vpack.c.b16 %v527, %v527
  %v592 = vpack.c.b16 %v528, %v528
  %v593 = vpack.c.b16 %v529, %v529
  %v594 = vpack.c.b16 %v530, %v530
  %v595 = vpack.c.b16 %v531, %v531
  %v596 = vpack.c.b16 %v532, %v532
  %v597 = vpack.c.b16 %v533, %v533
  %v598 = vpack.c.b16 %v534, %v534
  %v599 = vpack.c.b16 %v535, %v535
  %v600 = vpack.c.b16 %v536, %v536
  %v601 = vpack.c.b16 %v537, %v537
  %v602 = vpack.c.b16 %v538, %v538
  %v603 = vpack.c.b16 %v539, %v539
  %v604 = vpack.c.b16 %v540, %v540
  %v605 = vpack.c.b16 %v541, %v541
  %v606 = vpack.c.b16 %v542, %v542
  %v607 = vpack.c.b16 %v543, %v543
  %v608 = vpack.c.b16 %v544, %v544
  %v609 = vpack.c.b16 %v545, %v545
  %v610 = vpack.c.b16 %v546, %v546
  %v611 = vpack.c.b16 %v547, %v547
  %v612 = vpack.c.b16 %v548, %v548
  %v613 = vpack.c.b16 %v549, %v549
  %v614 = vpack.c.b16 %v550, %v550
  %v615 = vpack.c.b16 %v551, %v551
  %v616 = vpack.c.b16 %v552, %v552
  %v617 = vpack.c.b16 %v553, %v553
  %v618 = vpack.c.b16 %v554, %v554
  %v619 = vpack.c.b16 %v555, %v555
  %v620 = vpack.c.b16 %v556, %v556
  %v621 = vpack.c.b16 %v557, %v557
  %v622 = vpack.c.b16 %v558, %v558
  %v623 = vpack.c.b16 %v559, %v559
  %v624 = vpack.c.b16 %v560, %v560
  %v625 = vpack.c.b16 %v561, %v561
  %v626 = vpack.c.b16 %v562, %v562
  %v627 = vpack.c.b16 %v563, %v563
  %v628 = vpack.c.b16 %v564, %v564
  %v629 = vpack.c.b16 %v565, %v565
  %v630 = vpack.c.b16 %v566, %v566
  %v631 = vpack.c.b16 %v567, %v567
  %v632 = vpack.c.b16 %v568, %v568
  %v633 = vpack.c.b16 %v569, %v569
  %v634 = vpack.c.b16 %v570, %v570
  %v635 = vpack.c.b16 %v571, %v571
  %v636 = vpack.c.b16 %v572, %v572
  %v637 = vpack.c.b16 %v573, %v573
  %v638 = vpack.c.b16 %v574, %v574
  %v639 = vpack.c.b16 %v575, %v575
  %v640 = vpack.c.b16 %v576, %v576
  %v641 = vpack.c.b16 %v577, %v577
  %v642 = vpack.c.b16 %v578, %v578
  %v643 = vpack.c.b16 %v579, %v579
  %v644 = vpack.c.b16 %v580, %v580
  %v645 = vpack.c.b16 %v581, %v581
  %v646 = vpack.c.b16 %v582, %v582
  %v647 = vpack.c.b16 %v583, %v583
  %v648 = vpack.c.b16 %v584, %v584
  %v649 = vpack.c.b16 %v585, %v585
  %v650 = vpack.c.b16 %v586, %v586
  %v651 = vpack.c.b16 %v587, %v587
  %v652 = vpack.c.b16 %v588, %v588
  %v653 = vpack.c.b16 %v589, %v589
  %v654 = vpack.c.b16 %v590, %v590
  %vm655 = vsmask.f32 256
  %vm656 = vsmask.f32 4368
  %vm657 = vmor %vm655, %vm656
  %v659 = vshrl.u32 %v591, 16
  %v661 = vrot.slane %v659, 7
  %v662 = vshll.u32 %v591, 16
  %v664 = vor.u32 %v661, %v662
  %v665 = vrot.slane %v661, 4
  %v667 = vshrl.u32 %v592, 16
  %v669 = vrot.slane %v667, 7
  %v670 = vshll.u32 %v592, 16
  %v672 = vor.u32 %v669, %v670
  %v673 = vsel %vm657, %v665, %v672
  %v674 = vrot.slane %v669, 4
  %v676 = vshrl.u32 %v593, 16
  %v678 = vrot.slane %v676, 7
  %v679 = vshll.u32 %v593, 16
  %v681 = vor.u32 %v678, %v679
  %v682 = vrot.slane %v678, 4
  %v684 = vshrl.u32 %v594, 16
  %v686 = vrot.slane %v684, 7
  %v687 = vshll.u32 %v594, 16
  %v689 = vor.u32 %v686, %v687
  %v690 = vsel %vm657, %v682, %v689
  %v691 = vrot.slane %v686, 4
  %v693 = vshrl.u32 %v595, 16
  %v695 = vrot.slane %v693, 7
  %v696 = vshll.u32 %v595, 16
  %v698 = vor.u32 %v695, %v696
  %v699 = vrot.slane %v695, 4
  %v701 = vshrl.u32 %v596, 16
  %v703 = vrot.slane %v701, 7
  %v704 = vshll.u32 %v596, 16
  %v706 = vor.u32 %v703, %v704
  %v707 = vsel %vm657, %v699, %v706
  %v708 = vrot.slane %v703, 4
  %v710 = vshrl.u32 %v597, 16
  %v712 = vrot.slane %v710, 7
  %v713 = vshll.u32 %v597, 16
  %v715 = vor.u32 %v712, %v713
  %v716 = vrot.slane %v712, 4
  %v718 = vshrl.u32 %v598, 16
  %v720 = vrot.slane %v718, 7
  %v721 = vshll.u32 %v598, 16
  %v723 = vor.u32 %v720, %v721
  %v724 = vsel %vm657, %v716, %v723
  %v725 = vrot.slane %v720, 4
  %v727 = vshrl.u32 %v599, 16
  %v729 = vrot.slane %v727, 7
  %v730 = vshll.u32 %v599, 16
  %v732 = vor.u32 %v729, %v730
  %v733 = vrot.slane %v729, 4
  %v735 = vshrl.u32 %v600, 16
  %v737 = vrot.slane %v735, 7
  %v738 = vshll.u32 %v600, 16
  %v740 = vor.u32 %v737, %v738
  %v741 = vsel %vm657, %v733, %v740
  %v742 = vrot.slane %v737, 4
  %v744 = vshrl.u32 %v601, 16
  %v746 = vrot.slane %v744, 7
  %v747 = vshll.u32 %v601, 16
  %v749 = vor.u32 %v746, %v747
  %v750 = vrot.slane %v746, 4
  %v752 = vshrl.u32 %v602, 16
  %v754 = vrot.slane %v752, 7
  %v755 = vshll.u32 %v602, 16
  %v757 = vor.u32 %v754, %v755
  %v758 = vsel %vm657, %v750, %v757
  %v759 = vrot.slane %v754, 4
  %v761 = vshrl.u32 %v603, 16
  %v763 = vrot.slane %v761, 7
  %v764 = vshll.u32 %v603, 16
  %v766 = vor.u32 %v763, %v764
  %v767 = vrot.slane %v763, 4
  %v769 = vshrl.u32 %v604, 16
  %v771 = vrot.slane %v769, 7
  %v772 = vshll.u32 %v604, 16
  %v774 = vor.u32 %v771, %v772
  %v775 = vsel %vm657, %v767, %v774
  %v776 = vrot.slane %v771, 4
  %v778 = vshrl.u32 %v605, 16
  %v780 = vrot.slane %v778, 7
  %v781 = vshll.u32 %v605, 16
  %v783 = vor.u32 %v780, %v781
  %v784 = vrot.slane %v780, 4
  %v786 = vshrl.u32 %v606, 16
  %v788 = vrot.slane %v786, 7
  %v789 = vshll.u32 %v606, 16
  %v791 = vor.u32 %v788, %v789
  %v792 = vsel %vm657, %v784, %v791
  %v793 = vrot.slane %v788, 4
  %v795 = vshrl.u32 %v607, 16
  %v797 = vrot.slane %v795, 7
  %v798 = vshll.u32 %v607, 16
  %v800 = vor.u32 %v797, %v798
  %v801 = vrot.slane %v797, 4
  %v803 = vshrl.u32 %v608, 16
  %v805 = vrot.slane %v803, 7
  %v806 = vshll.u32 %v608, 16
  %v808 = vor.u32 %v805, %v806
  %v809 = vsel %vm657, %v801, %v808
  %v810 = vrot.slane %v805, 4
  %v812 = vshrl.u32 %v609, 16
  %v814 = vrot.slane %v812, 7
  %v815 = vshll.u32 %v609, 16
  %v817 = vor.u32 %v814, %v815
  %v818 = vrot.slane %v814, 4
  %v820 = vshrl.u32 %v610, 16
  %v822 = vrot.slane %v820, 7
  %v823 = vshll.u32 %v610, 16
  %v825 = vor.u32 %v822, %v823
  %v826 = vsel %vm657, %v818, %v825
  %v827 = vrot.slane %v822, 4
  %v829 = vshrl.u32 %v611, 16
  %v831 = vrot.slane %v829, 7
  %v832 = vshll.u32 %v611, 16
  %v834 = vor.u32 %v831, %v832
  %v835 = vrot.slane %v831, 4
  %v837 = vshrl.u32 %v612, 16
  %v839 = vrot.slane %v837, 7
  %v840 = vshll.u32 %v612, 16
  %v842 = vor.u32 %v839, %v840
  %v843 = vsel %vm657, %v835, %v842
  %v844 = vrot.slane %v839, 4
  %v846 = vshrl.u32 %v613, 16
  %v848 = vrot.slane %v846, 7
  %v849 = vshll.u32 %v613, 16
  %v851 = vor.u32 %v848, %v849
  %v852 = vrot.slane %v848, 4
  %v854 = vshrl.u32 %v614, 16
  %v856 = vrot.slane %v854, 7
  %v857 = vshll.u32 %v614, 16
  %v859 = vor.u32 %v856, %v857
  %v860 = vsel %vm657, %v852, %v859
  %v861 = vrot.slane %v856, 4
  %v863 = vshrl.u32 %v615, 16
  %v865 = vrot.slane %v863, 7
  %v866 = vshll.u32 %v615, 16
  %v868 = vor.u32 %v865, %v866
  %v869 = vrot.slane %v865, 4
  %v871 = vshrl.u32 %v616, 16
  %v873 = vrot.slane %v871, 7
  %v874 = vshll.u32 %v616, 16
  %v876 = vor.u32 %v873, %v874
  %v877 = vsel %vm657, %v869, %v876
  %v878 = vrot.slane %v873, 4
  %v880 = vshrl.u32 %v617, 16
  %v882 = vrot.slane %v880, 7
  %v883 = vshll.u32 %v617, 16
  %v885 = vor.u32 %v882, %v883
  %v886 = vrot.slane %v882, 4
  %v888 = vshrl.u32 %v618, 16
  %v890 = vrot.slane %v888, 7
  %v891 = vshll.u32 %v618, 16
  %v893 = vor.u32 %v890, %v891
  %v894 = vsel %vm657, %v886, %v893
  %v895 = vrot.slane %v890, 4
  %v897 = vshrl.u32 %v619, 16
  %v899 = vrot.slane %v897, 7
  %v900 = vshll.u32 %v619, 16
  %v902 = vor.u32 %v899, %v900
  %v903 = vrot.slane %v899, 4
  %v905 = vshrl.u32 %v620, 16
  %v907 = vrot.slane %v905, 7
  %v908 = vshll.u32 %v620, 16
  %v910 = vor.u32 %v907, %v908
  %v911 = vsel %vm657, %v903, %v910
  %v912 = vrot.slane %v907, 4
  %v914 = vshrl.u32 %v621, 16
  %v916 = vrot.slane %v914, 7
  %v917 = vshll.u32 %v621, 16
  %v919 = vor.u32 %v916, %v917
  %v920 = vrot.slane %v916, 4
  %v922 = vshrl.u32 %v622, 16
  %v924 = vrot.slane %v922, 7
  %v925 = vshll.u32 %v622, 16
  %v927 = vor.u32 %v924, %v925
  %v928 = vsel %vm657, %v920, %v927
  %v929 = vrot.slane %v924, 4
  %v931 = vshrl.u32 %v623, 16
  %v933 = vrot.slane %v931, 7
  %v934 = vshll.u32 %v623, 16
  %v936 = vor.u32 %v933, %v934
  %v937 = vrot.slane %v933, 4
  %v939 = vshrl.u32 %v624, 16
  %v941 = vrot.slane %v939, 7
  %v942 = vshll.u32 %v624, 16
  %v944 = vor.u32 %v941, %v942
  %v945 = vsel %vm657, %v937, %v944
  %v946 = vrot.slane %v941, 4
  %v948 = vshrl.u32 %v625, 16
  %v950 = vrot.slane %v948, 7
  %v951 = vshll.u32 %v625, 16
  %v953 = vor.u32 %v950, %v951
  %v954 = vrot.slane %v950, 4
  %v956 = vshrl.u32 %v626, 16
  %v958 = vrot.slane %v956, 7
  %v959 = vshll.u32 %v626, 16
  %v961 = vor.u32 %v958, %v959
  %v962 = vsel %vm657, %v954, %v961
  %v963 = vrot.slane %v958, 4
  %v965 = vshrl.u32 %v627, 16
  %v967 = vrot.slane %v965, 7
  %v968 = vshll.u32 %v627, 16
  %v970 = vor.u32 %v967, %v968
  %v971 = vrot.slane %v967, 4
  %v973 = vshrl.u32 %v628, 16
  %v975 = vrot.slane %v973, 7
  %v976 = vshll.u32 %v628, 16
  %v978 = vor.u32 %v975, %v976
  %v979 = vsel %vm657, %v971, %v978
  %v980 = vrot.slane %v975, 4
  %v982 = vshrl.u32 %v629, 16
  %v984 = vrot.slane %v982, 7
  %v985 = vshll.u32 %v629, 16
  %v987 = vor.u32 %v984, %v985
  %v988 = vrot.slane %v984, 4
  %v990 = vshrl.u32 %v630, 16
  %v992 = vrot.slane %v990, 7
  %v993 = vshll.u32 %v630, 16
  %v995 = vor.u32 %v992, %v993
  %v996 = vsel %vm657, %v988, %v995
  %v997 = vrot.slane %v992, 4
  %v999 = vshrl.u32 %v631, 16
  %v1001 = vrot.slane %v999, 7
  %v1002 = vshll.u32 %v631, 16
  %v1004 = vor.u32 %v1001, %v1002
  %v1005 = vrot.slane %v1001, 4
  %v1007 = vshrl.u32 %v632, 16
  %v1009 = vrot.slane %v1007, 7
  %v1010 = vshll.u32 %v632, 16
  %v1012 = vor.u32 %v1009, %v1010
  %v1013 = vsel %vm657, %v1005, %v1012
  %v1014 = vrot.slane %v1009, 4
  %v1016 = vshrl.u32 %v633, 16
  %v1018 = vrot.slane %v1016, 7
  %v1019 = vshll.u32 %v633, 16
  %v1021 = vor.u32 %v1018, %v1019
  %v1022 = vrot.slane %v1018, 4
  %v1024 = vshrl.u32 %v634, 16
  %v1026 = vrot.slane %v1024, 7
  %v1027 = vshll.u32 %v634, 16
  %v1029 = vor.u32 %v1026, %v1027
  %v1030 = vsel %vm657, %v1022, %v1029
  %v1031 = vrot.slane %v1026, 4
  %v1033 = vshrl.u32 %v635, 16
  %v1035 = vrot.slane %v1033, 7
  %v1036 = vshll.u32 %v635, 16
  %v1038 = vor.u32 %v1035, %v1036
  %v1039 = vrot.slane %v1035, 4
  %v1041 = vshrl.u32 %v636, 16
  %v1043 = vrot.slane %v1041, 7
  %v1044 = vshll.u32 %v636, 16
  %v1046 = vor.u32 %v1043, %v1044
  %v1047 = vsel %vm657, %v1039, %v1046
  %v1048 = vrot.slane %v1043, 4
  %v1050 = vshrl.u32 %v637, 16
  %v1052 = vrot.slane %v1050, 7
  %v1053 = vshll.u32 %v637, 16
  %v1055 = vor.u32 %v1052, %v1053
  %v1056 = vrot.slane %v1052, 4
  %v1058 = vshrl.u32 %v638, 16
  %v1060 = vrot.slane %v1058, 7
  %v1061 = vshll.u32 %v638, 16
  %v1063 = vor.u32 %v1060, %v1061
  %v1064 = vsel %vm657, %v1056, %v1063
  %v1065 = vrot.slane %v1060, 4
  %v1067 = vshrl.u32 %v639, 16
  %v1069 = vrot.slane %v1067, 7
  %v1070 = vshll.u32 %v639, 16
  %v1072 = vor.u32 %v1069, %v1070
  %v1073 = vrot.slane %v1069, 4
  %v1075 = vshrl.u32 %v640, 16
  %v1077 = vrot.slane %v1075, 7
  %v1078 = vshll.u32 %v640, 16
  %v1080 = vor.u32 %v1077, %v1078
  %v1081 = vsel %vm657, %v1073, %v1080
  %v1082 = vrot.slane %v1077, 4
  %v1084 = vshrl.u32 %v641, 16
  %v1086 = vrot.slane %v1084, 7
  %v1087 = vshll.u32 %v641, 16
  %v1089 = vor.u32 %v1086, %v1087
  %v1090 = vrot.slane %v1086, 4
  %v1092 = vshrl.u32 %v642, 16
  %v1094 = vrot.slane %v1092, 7
  %v1095 = vshll.u32 %v642, 16
  %v1097 = vor.u32 %v1094, %v1095
  %v1098 = vsel %vm657, %v1090, %v1097
  %v1099 = vrot.slane %v1094, 4
  %v1101 = vshrl.u32 %v643, 16
  %v1103 = vrot.slane %v1101, 7
  %v1104 = vshll.u32 %v643, 16
  %v1106 = vor.u32 %v1103, %v1104
  %v1107 = vrot.slane %v1103, 4
  %v1109 = vshrl.u32 %v644, 16
  %v1111 = vrot.slane %v1109, 7
  %v1112 = vshll.u32 %v644, 16
  %v1114 = vor.u32 %v1111, %v1112
  %v1115 = vsel %vm657, %v1107, %v1114
  %v1116 = vrot.slane %v1111, 4
  %v1118 = vshrl.u32 %v645, 16
  %v1120 = vrot.slane %v1118, 7
  %v1121 = vshll.u32 %v645, 16
  %v1123 = vor.u32 %v1120, %v1121
  %v1124 = vrot.slane %v1120, 4
  %v1126 = vshrl.u32 %v646, 16
  %v1128 = vrot.slane %v1126, 7
  %v1129 = vshll.u32 %v646, 16
  %v1131 = vor.u32 %v1128, %v1129
  %v1132 = vsel %vm657, %v1124, %v1131
  %v1133 = vrot.slane %v1128, 4
  %v1135 = vshrl.u32 %v647, 16
  %v1137 = vrot.slane %v1135, 7
  %v1138 = vshll.u32 %v647, 16
  %v1140 = vor.u32 %v1137, %v1138
  %v1141 = vrot.slane %v1137, 4
  %v1143 = vshrl.u32 %v648, 16
  %v1145 = vrot.slane %v1143, 7
  %v1146 = vshll.u32 %v648, 16
  %v1148 = vor.u32 %v1145, %v1146
  %v1149 = vsel %vm657, %v1141, %v1148
  %v1150 = vrot.slane %v1145, 4
  %v1152 = vshrl.u32 %v649, 16
  %v1154 = vrot.slane %v1152, 7
  %v1155 = vshll.u32 %v649, 16
  %v1157 = vor.u32 %v1154, %v1155
  %v1158 = vrot.slane %v1154, 4
  %v1160 = vshrl.u32 %v650, 16
  %v1162 = vrot.slane %v1160, 7
  %v1163 = vshll.u32 %v650, 16
  %v1165 = vor.u32 %v1162, %v1163
  %v1166 = vsel %vm657, %v1158, %v1165
  %v1167 = vrot.slane %v1162, 4
  %v1169 = vshrl.u32 %v651, 16
  %v1171 = vrot.slane %v1169, 7
  %v1172 = vshll.u32 %v651, 16
  %v1174 = vor.u32 %v1171, %v1172
  %v1175 = vrot.slane %v1171, 4
  %v1177 = vshrl.u32 %v652, 16
  %v1179 = vrot.slane %v1177, 7
  %v1180 = vshll.u32 %v652, 16
  %v1182 = vor.u32 %v1179, %v1180
  %v1183 = vsel %vm657, %v1175, %v1182
  %v1184 = vrot.slane %v1179, 4
  %v1186 = vshrl.u32 %v653, 16
  %v1188 = vrot.slane %v1186, 7
  %v1189 = vshll.u32 %v653, 16
  %v1191 = vor.u32 %v1188, %v1189
  %v1192 = vrot.slane %v1188, 4
  %v1194 = vshrl.u32 %v654, 16
  %v1196 = vrot.slane %v1194, 7
  %v1197 = vshll.u32 %v654, 16
  %v1199 = vor.u32 %v1196, %v1197
  %v1200 = vsel %vm657, %v1192, %v1199
  %v1201 = vrot.slane %v1196, 4
  %s1298 = scalar_lea.vmem [#allocation2], 12
  %vm1299 = vcmask 1043456
  %vm1300 = vsmask.f32 7938
  %vm1301 = vmand %vm1299, %vm1300
  %v1302 = vld [vmem:[%s1298] sm:$0xf]
  %v1303 = vsel %vm1301, %v664, %v1302
  %1304 = vst [vmem:[%s1298] sm:$0xf] %v1303
  %1305 = vst [vmem:[%s1298 + $0x4] sm:$0xf] %v673
  %vm1306 = vcmask 1040384
  %vm1307 = vmand %vm1306, %vm655
  %v1308 = vld [vmem:[%s1298 + $0x8] sm:$0x1]
  %v1309 = vsel %vm1307, %v674, %v1308
  %1310 = vst [vmem:[%s1298 + $0x8] sm:$0x1] %v1309
  %v1311 = vld [vmem:[%s1298 + $0xc] sm:$0xf]
  %v1312 = vsel %vm1301, %v681, %v1311
  %1313 = vst [vmem:[%s1298 + $0xc] sm:$0xf] %v1312
  %1314 = vst [vmem:[%s1298 + $0x10] sm:$0xf] %v690
  %v1315 = vld [vmem:[%s1298 + $0x14] sm:$0x1]
  %v1316 = vsel %vm1307, %v691, %v1315
  %1317 = vst [vmem:[%s1298 + $0x14] sm:$0x1] %v1316
  %v1318 = vld [vmem:[%s1298 + $0x18] sm:$0xf]
  %v1319 = vsel %vm1301, %v698, %v1318
  %1320 = vst [vmem:[%s1298 + $0x18] sm:$0xf] %v1319
  %1321 = vst [vmem:[%s1298 + $0x1c] sm:$0xf] %v707
  %v1322 = vld [vmem:[%s1298 + $0x20] sm:$0x1]
  %v1323 = vsel %vm1307, %v708, %v1322
  %1324 = vst [vmem:[%s1298 + $0x20] sm:$0x1] %v1323
  %v1325 = vld [vmem:[%s1298 + $0x24] sm:$0xf]
  %v1326 = vsel %vm1301, %v715, %v1325
  %1327 = vst [vmem:[%s1298 + $0x24] sm:$0xf] %v1326
  %1328 = vst [vmem:[%s1298 + $0x28] sm:$0xf] %v724
  %v1329 = vld [vmem:[%s1298 + $0x2c] sm:$0x1]
  %v1330 = vsel %vm1307, %v725, %v1329
  %1331 = vst [vmem:[%s1298 + $0x2c] sm:$0x1] %v1330
  %v1332 = vld [vmem:[%s1298 + $0x30] sm:$0xf]
  %v1333 = vsel %vm1301, %v732, %v1332
  %1334 = vst [vmem:[%s1298 + $0x30] sm:$0xf] %v1333
  %1335 = vst [vmem:[%s1298 + $0x34] sm:$0xf] %v741
  %v1336 = vld [vmem:[%s1298 + $0x38] sm:$0x1]
  %v1337 = vsel %vm1307, %v742, %v1336
  %1338 = vst [vmem:[%s1298 + $0x38] sm:$0x1] %v1337
  %v1339 = vld [vmem:[%s1298 + $0x3c] sm:$0xf]
  %v1340 = vsel %vm1301, %v749, %v1339
  %1341 = vst [vmem:[%s1298 + $0x3c] sm:$0xf] %v1340
  %1342 = vst [vmem:[%s1298 + $0x40] sm:$0xf] %v758
  %v1343 = vld [vmem:[%s1298 + $0x44] sm:$0x1]
  %v1344 = vsel %vm1307, %v759, %v1343
  %1345 = vst [vmem:[%s1298 + $0x44] sm:$0x1] %v1344
  %v1346 = vld [vmem:[%s1298 + $0x48] sm:$0xf]
  %v1347 = vsel %vm1301, %v766, %v1346
  %1348 = vst [vmem:[%s1298 + $0x48] sm:$0xf] %v1347
  %1349 = vst [vmem:[%s1298 + $0x4c] sm:$0xf] %v775
  %v1350 = vld [vmem:[%s1298 + $0x50] sm:$0x1]
  %v1351 = vsel %vm1307, %v776, %v1350
  %1352 = vst [vmem:[%s1298 + $0x50] sm:$0x1] %v1351
  %v1353 = vld [vmem:[%s1298 + $0x54] sm:$0xf]
  %v1354 = vsel %vm1301, %v783, %v1353
  %1355 = vst [vmem:[%s1298 + $0x54] sm:$0xf] %v1354
  %1356 = vst [vmem:[%s1298 + $0x58] sm:$0xf] %v792
  %v1357 = vld [vmem:[%s1298 + $0x5c] sm:$0x1]
  %v1358 = vsel %vm1307, %v793, %v1357
  %1359 = vst [vmem:[%s1298 + $0x5c] sm:$0x1] %v1358
  %v1360 = vld [vmem:[%s1298 + $0x60] sm:$0xf]
  %v1361 = vsel %vm1301, %v800, %v1360
  %1362 = vst [vmem:[%s1298 + $0x60] sm:$0xf] %v1361
  %1363 = vst [vmem:[%s1298 + $0x64] sm:$0xf] %v809
  %v1364 = vld [vmem:[%s1298 + $0x68] sm:$0x1]
  %v1365 = vsel %vm1307, %v810, %v1364
  %1366 = vst [vmem:[%s1298 + $0x68] sm:$0x1] %v1365
  %v1367 = vld [vmem:[%s1298 + $0x6c] sm:$0xf]
  %v1368 = vsel %vm1301, %v817, %v1367
  %1369 = vst [vmem:[%s1298 + $0x6c] sm:$0xf] %v1368
  %1370 = vst [vmem:[%s1298 + $0x70] sm:$0xf] %v826
  %v1371 = vld [vmem:[%s1298 + $0x74] sm:$0x1]
  %v1372 = vsel %vm1307, %v827, %v1371
  %1373 = vst [vmem:[%s1298 + $0x74] sm:$0x1] %v1372
  %v1374 = vld [vmem:[%s1298 + $0x78] sm:$0xf]
  %v1375 = vsel %vm1301, %v834, %v1374
  %1376 = vst [vmem:[%s1298 + $0x78] sm:$0xf] %v1375
  %1377 = vst [vmem:[%s1298 + $0x7c] sm:$0xf] %v843
  %v1378 = vld [vmem:[%s1298 + $0x80] sm:$0x1]
  %v1379 = vsel %vm1307, %v844, %v1378
  %1380 = vst [vmem:[%s1298 + $0x80] sm:$0x1] %v1379
  %v1381 = vld [vmem:[%s1298 + $0x84] sm:$0xf]
  %v1382 = vsel %vm1301, %v851, %v1381
  %1383 = vst [vmem:[%s1298 + $0x84] sm:$0xf] %v1382
  %1384 = vst [vmem:[%s1298 + $0x88] sm:$0xf] %v860
  %v1385 = vld [vmem:[%s1298 + $0x8c] sm:$0x1]
  %v1386 = vsel %vm1307, %v861, %v1385
  %1387 = vst [vmem:[%s1298 + $0x8c] sm:$0x1] %v1386
  %v1388 = vld [vmem:[%s1298 + $0x90] sm:$0xf]
  %v1389 = vsel %vm1301, %v868, %v1388
  %1390 = vst [vmem:[%s1298 + $0x90] sm:$0xf] %v1389
  %1391 = vst [vmem:[%s1298 + $0x94] sm:$0xf] %v877
  %v1392 = vld [vmem:[%s1298 + $0x98] sm:$0x1]
  %v1393 = vsel %vm1307, %v878, %v1392
  %1394 = vst [vmem:[%s1298 + $0x98] sm:$0x1] %v1393
  %v1395 = vld [vmem:[%s1298 + $0x9c] sm:$0xf]
  %v1396 = vsel %vm1301, %v885, %v1395
  %1397 = vst [vmem:[%s1298 + $0x9c] sm:$0xf] %v1396
  %1398 = vst [vmem:[%s1298 + $0xa0] sm:$0xf] %v894
  %v1399 = vld [vmem:[%s1298 + $0xa4] sm:$0x1]
  %v1400 = vsel %vm1307, %v895, %v1399
  %1401 = vst [vmem:[%s1298 + $0xa4] sm:$0x1] %v1400
  %v1402 = vld [vmem:[%s1298 + $0xa8] sm:$0xf]
  %v1403 = vsel %vm1301, %v902, %v1402
  %1404 = vst [vmem:[%s1298 + $0xa8] sm:$0xf] %v1403
  %1405 = vst [vmem:[%s1298 + $0xac] sm:$0xf] %v911
  %v1406 = vld [vmem:[%s1298 + $0xb0] sm:$0x1]
  %v1407 = vsel %vm1307, %v912, %v1406
  %1408 = vst [vmem:[%s1298 + $0xb0] sm:$0x1] %v1407
  %v1409 = vld [vmem:[%s1298 + $0xb4] sm:$0xf]
  %v1410 = vsel %vm1301, %v919, %v1409
  %1411 = vst [vmem:[%s1298 + $0xb4] sm:$0xf] %v1410
  %1412 = vst [vmem:[%s1298 + $0xb8] sm:$0xf] %v928
  %v1413 = vld [vmem:[%s1298 + $0xbc] sm:$0x1]
  %v1414 = vsel %vm1307, %v929, %v1413
  %1415 = vst [vmem:[%s1298 + $0xbc] sm:$0x1] %v1414
  %v1416 = vld [vmem:[%s1298 + $0xd8] sm:$0xf]
  %v1417 = vsel %vm1301, %v936, %v1416
  %1418 = vst [vmem:[%s1298 + $0xd8] sm:$0xf] %v1417
  %1419 = vst [vmem:[%s1298 + $0xdc] sm:$0xf] %v945
  %v1420 = vld [vmem:[%s1298 + $0xe0] sm:$0x1]
  %v1421 = vsel %vm1307, %v946, %v1420
  %1422 = vst [vmem:[%s1298 + $0xe0] sm:$0x1] %v1421
  %v1423 = vld [vmem:[%s1298 + $0xe4] sm:$0xf]
  %v1424 = vsel %vm1301, %v953, %v1423
  %1425 = vst [vmem:[%s1298 + $0xe4] sm:$0xf] %v1424
  %1426 = vst [vmem:[%s1298 + $0xe8] sm:$0xf] %v962
  %v1427 = vld [vmem:[%s1298 + $0xec] sm:$0x1]
  %v1428 = vsel %vm1307, %v963, %v1427
  %1429 = vst [vmem:[%s1298 + $0xec] sm:$0x1] %v1428
  %v1430 = vld [vmem:[%s1298 + $0xf0] sm:$0xf]
  %v1431 = vsel %vm1301, %v970, %v1430
  %1432 = vst [vmem:[%s1298 + $0xf0] sm:$0xf] %v1431
  %1433 = vst [vmem:[%s1298 + $0xf4] sm:$0xf] %v979
  %v1434 = vld [vmem:[%s1298 + $0xf8] sm:$0x1]
  %v1435 = vsel %vm1307, %v980, %v1434
  %1436 = vst [vmem:[%s1298 + $0xf8] sm:$0x1] %v1435
  %v1437 = vld [vmem:[%s1298 + $0xfc] sm:$0xf]
  %v1438 = vsel %vm1301, %v987, %v1437
  %1439 = vst [vmem:[%s1298 + $0xfc] sm:$0xf] %v1438
  %1440 = vst [vmem:[%s1298 + $0x100] sm:$0xf] %v996
  %v1441 = vld [vmem:[%s1298 + $0x104] sm:$0x1]
  %v1442 = vsel %vm1307, %v997, %v1441
  %1443 = vst [vmem:[%s1298 + $0x104] sm:$0x1] %v1442
  %v1444 = vld [vmem:[%s1298 + $0x108] sm:$0xf]
  %v1445 = vsel %vm1301, %v1004, %v1444
  %1446 = vst [vmem:[%s1298 + $0x108] sm:$0xf] %v1445
  %1447 = vst [vmem:[%s1298 + $0x10c] sm:$0xf] %v1013
  %v1448 = vld [vmem:[%s1298 + $0x110] sm:$0x1]
  %v1449 = vsel %vm1307, %v1014, %v1448
  %1450 = vst [vmem:[%s1298 + $0x110] sm:$0x1] %v1449
  %v1451 = vld [vmem:[%s1298 + $0x114] sm:$0xf]
  %v1452 = vsel %vm1301, %v1021, %v1451
  %1453 = vst [vmem:[%s1298 + $0x114] sm:$0xf] %v1452
  %1454 = vst [vmem:[%s1298 + $0x118] sm:$0xf] %v1030
  %v1455 = vld [vmem:[%s1298 + $0x11c] sm:$0x1]
  %v1456 = vsel %vm1307, %v1031, %v1455
  %1457 = vst [vmem:[%s1298 + $0x11c] sm:$0x1] %v1456
  %v1458 = vld [vmem:[%s1298 + $0x120] sm:$0xf]
  %v1459 = vsel %vm1301, %v1038, %v1458
  %1460 = vst [vmem:[%s1298 + $0x120] sm:$0xf] %v1459
  %1461 = vst [vmem:[%s1298 + $0x124] sm:$0xf] %v1047
  %v1462 = vld [vmem:[%s1298 + $0x128] sm:$0x1]
  %v1463 = vsel %vm1307, %v1048, %v1462
  %1464 = vst [vmem:[%s1298 + $0x128] sm:$0x1] %v1463
  %v1465 = vld [vmem:[%s1298 + $0x12c] sm:$0xf]
  %v1466 = vsel %vm1301, %v1055, %v1465
  %1467 = vst [vmem:[%s1298 + $0x12c] sm:$0xf] %v1466
  %1468 = vst [vmem:[%s1298 + $0x130] sm:$0xf] %v1064
  %v1469 = vld [vmem:[%s1298 + $0x134] sm:$0x1]
  %v1470 = vsel %vm1307, %v1065, %v1469
  %1471 = vst [vmem:[%s1298 + $0x134] sm:$0x1] %v1470
  %v1472 = vld [vmem:[%s1298 + $0x138] sm:$0xf]
  %v1473 = vsel %vm1301, %v1072, %v1472
  %1474 = vst [vmem:[%s1298 + $0x138] sm:$0xf] %v1473
  %1475 = vst [vmem:[%s1298 + $0x13c] sm:$0xf] %v1081
  %v1476 = vld [vmem:[%s1298 + $0x140] sm:$0x1]
  %v1477 = vsel %vm1307, %v1082, %v1476
  %1478 = vst [vmem:[%s1298 + $0x140] sm:$0x1] %v1477
  %v1479 = vld [vmem:[%s1298 + $0x144] sm:$0xf]
  %v1480 = vsel %vm1301, %v1089, %v1479
  %1481 = vst [vmem:[%s1298 + $0x144] sm:$0xf] %v1480
  %1482 = vst [vmem:[%s1298 + $0x148] sm:$0xf] %v1098
  %v1483 = vld [vmem:[%s1298 + $0x14c] sm:$0x1]
  %v1484 = vsel %vm1307, %v1099, %v1483
  %1485 = vst [vmem:[%s1298 + $0x14c] sm:$0x1] %v1484
  %v1486 = vld [vmem:[%s1298 + $0x150] sm:$0xf]
  %v1487 = vsel %vm1301, %v1106, %v1486
  %1488 = vst [vmem:[%s1298 + $0x150] sm:$0xf] %v1487
  %1489 = vst [vmem:[%s1298 + $0x154] sm:$0xf] %v1115
  %v1490 = vld [vmem:[%s1298 + $0x158] sm:$0x1]
  %v1491 = vsel %vm1307, %v1116, %v1490
  %1492 = vst [vmem:[%s1298 + $0x158] sm:$0x1] %v1491
  %v1493 = vld [vmem:[%s1298 + $0x15c] sm:$0xf]
  %v1494 = vsel %vm1301, %v1123, %v1493
  %1495 = vst [vmem:[%s1298 + $0x15c] sm:$0xf] %v1494
  %1496 = vst [vmem:[%s1298 + $0x160] sm:$0xf] %v1132
  %v1497 = vld [vmem:[%s1298 + $0x164] sm:$0x1]
  %v1498 = vsel %vm1307, %v1133, %v1497
  %1499 = vst [vmem:[%s1298 + $0x164] sm:$0x1] %v1498
  %v1500 = vld [vmem:[%s1298 + $0x168] sm:$0xf]
  %v1501 = vsel %vm1301, %v1140, %v1500
  %1502 = vst [vmem:[%s1298 + $0x168] sm:$0xf] %v1501
  %1503 = vst [vmem:[%s1298 + $0x16c] sm:$0xf] %v1149
  %v1504 = vld [vmem:[%s1298 + $0x170] sm:$0x1]
  %v1505 = vsel %vm1307, %v1150, %v1504
  %1506 = vst [vmem:[%s1298 + $0x170] sm:$0x1] %v1505
  %v1507 = vld [vmem:[%s1298 + $0x174] sm:$0xf]
  %v1508 = vsel %vm1301, %v1157, %v1507
  %1509 = vst [vmem:[%s1298 + $0x174] sm:$0xf] %v1508
  %1510 = vst [vmem:[%s1298 + $0x178] sm:$0xf] %v1166
  %v1511 = vld [vmem:[%s1298 + $0x17c] sm:$0x1]
  %v1512 = vsel %vm1307, %v1167, %v1511
  %1513 = vst [vmem:[%s1298 + $0x17c] sm:$0x1] %v1512
  %v1514 = vld [vmem:[%s1298 + $0x180] sm:$0xf]
  %v1515 = vsel %vm1301, %v1174, %v1514
  %1516 = vst [vmem:[%s1298 + $0x180] sm:$0xf] %v1515
  %1517 = vst [vmem:[%s1298 + $0x184] sm:$0xf] %v1183
  %v1518 = vld [vmem:[%s1298 + $0x188] sm:$0x1]
  %v1519 = vsel %vm1307, %v1184, %v1518
  %1520 = vst [vmem:[%s1298 + $0x188] sm:$0x1] %v1519
  %v1521 = vld [vmem:[%s1298 + $0x18c] sm:$0xf]
  %v1522 = vsel %vm1301, %v1191, %v1521
  %1523 = vst [vmem:[%s1298 + $0x18c] sm:$0xf] %v1522
  %1524 = vst [vmem:[%s1298 + $0x190] sm:$0xf] %v1200
  %v1525 = vld [vmem:[%s1298 + $0x194] sm:$0x1]
  %v1526 = vsel %vm1307, %v1201, %v1525
  %1527 = vst [vmem:[%s1298 + $0x194] sm:$0x1] %v1526
  %v1528 = vld [vmem:[#allocation2] sm:$0xf]
  %v1529 = vld [vmem:[#allocation2 + $0x4] sm:$0xf]
  %v1530 = vld [vmem:[#allocation2 + $0x8] sm:$0x1]
  %v1531 = vld [vmem:[#allocation2 + $0xc] sm:$0xf]
  %v1532 = vld [vmem:[#allocation2 + $0x10] sm:$0xf]
  %v1533 = vld [vmem:[#allocation2 + $0x14] sm:$0x1]
  %v1534 = vld [vmem:[#allocation2 + $0x18] sm:$0xf]
  %v1535 = vld [vmem:[#allocation2 + $0x1c] sm:$0xf]
  %v1536 = vld [vmem:[#allocation2 + $0x20] sm:$0x1]
  %v1537 = vld [vmem:[#allocation2 + $0x24] sm:$0xf]
  %v1538 = vld [vmem:[#allocation2 + $0x28] sm:$0xf]
  %v1539 = vld [vmem:[#allocation2 + $0x2c] sm:$0x1]
  %v1540 = vld [vmem:[#allocation2 + $0x30] sm:$0xf]
  %v1541 = vld [vmem:[#allocation2 + $0x34] sm:$0xf]
  %v1542 = vld [vmem:[#allocation2 + $0x38] sm:$0x1]
  %v1543 = vld [vmem:[#allocation2 + $0x3c] sm:$0xf]
  %v1544 = vld [vmem:[#allocation2 + $0x40] sm:$0xf]
  %v1545 = vld [vmem:[#allocation2 + $0x44] sm:$0x1]
  %v1546 = vld [vmem:[#allocation2 + $0x48] sm:$0xf]
  %v1547 = vld [vmem:[#allocation2 + $0x4c] sm:$0xf]
  %v1548 = vld [vmem:[#allocation2 + $0x50] sm:$0x1]
  %v1549 = vld [vmem:[#allocation2 + $0x54] sm:$0xf]
  %v1550 = vld [vmem:[#allocation2 + $0x58] sm:$0xf]
  %v1551 = vld [vmem:[#allocation2 + $0x5c] sm:$0x1]
  %v1552 = vld [vmem:[#allocation2 + $0x60] sm:$0xf]
  %v1553 = vld [vmem:[#allocation2 + $0x64] sm:$0xf]
  %v1554 = vld [vmem:[#allocation2 + $0x68] sm:$0x1]
  %v1555 = vld [vmem:[#allocation2 + $0x6c] sm:$0xf]
  %v1556 = vld [vmem:[#allocation2 + $0x70] sm:$0xf]
  %v1557 = vld [vmem:[#allocation2 + $0x74] sm:$0x1]
  %v1558 = vld [vmem:[#allocation2 + $0x78] sm:$0xf]
  %v1559 = vld [vmem:[#allocation2 + $0x7c] sm:$0xf]
  %v1560 = vld [vmem:[#allocation2 + $0x80] sm:$0x1]
  %v1561 = vld [vmem:[#allocation2 + $0x84] sm:$0xf]
  %v1562 = vld [vmem:[#allocation2 + $0x88] sm:$0xf]
  %v1563 = vld [vmem:[#allocation2 + $0x8c] sm:$0x1]
  %v1564 = vld [vmem:[#allocation2 + $0x90] sm:$0xf]
  %v1565 = vld [vmem:[#allocation2 + $0x94] sm:$0xf]
  %v1566 = vld [vmem:[#allocation2 + $0x98] sm:$0x1]
  %v1567 = vld [vmem:[#allocation2 + $0x9c] sm:$0xf]
  %v1568 = vld [vmem:[#allocation2 + $0xa0] sm:$0xf]
  %v1569 = vld [vmem:[#allocation2 + $0xa4] sm:$0x1]
  %v1570 = vld [vmem:[#allocation2 + $0xa8] sm:$0xf]
  %v1571 = vld [vmem:[#allocation2 + $0xac] sm:$0xf]
  %v1572 = vld [vmem:[#allocation2 + $0xb0] sm:$0x1]
  %v1573 = vld [vmem:[#allocation2 + $0xb4] sm:$0xf]
  %v1574 = vld [vmem:[#allocation2 + $0xb8] sm:$0xf]
  %v1575 = vld [vmem:[#allocation2 + $0xbc] sm:$0x1]
  %v1576 = vld [vmem:[#allocation2 + $0xc0] sm:$0xf]
  %v1577 = vld [vmem:[#allocation2 + $0xc4] sm:$0xf]
  %v1578 = vld [vmem:[#allocation2 + $0xc8] sm:$0x1]
  %v1579 = vld [vmem:[#allocation2 + $0xcc] sm:$0xf]
  %v1580 = vld [vmem:[#allocation2 + $0xd0] sm:$0xf]
  %v1581 = vld [vmem:[#allocation2 + $0xd4] sm:$0x1]
  %v1582 = vld [vmem:[#allocation2 + $0xd8] sm:$0xf]
  %v1583 = vld [vmem:[#allocation2 + $0xdc] sm:$0xf]
  %v1584 = vld [vmem:[#allocation2 + $0xe0] sm:$0x1]
  %v1585 = vld [vmem:[#allocation2 + $0xe4] sm:$0xf]
  %v1586 = vld [vmem:[#allocation2 + $0xe8] sm:$0xf]
  %v1587 = vld [vmem:[#allocation2 + $0xec] sm:$0x1]
  %v1588 = vld [vmem:[#allocation2 + $0xf0] sm:$0xf]
  %v1589 = vld [vmem:[#allocation2 + $0xf4] sm:$0xf]
  %v1590 = vld [vmem:[#allocation2 + $0xf8] sm:$0x1]
  %v1591 = vld [vmem:[#allocation2 + $0xfc] sm:$0xf]
  %v1592 = vld [vmem:[#allocation2 + $0x100] sm:$0xf]
  %v1593 = vld [vmem:[#allocation2 + $0x104] sm:$0x1]
  %v1594 = vld [vmem:[#allocation2 + $0x108] sm:$0xf]
  %v1595 = vld [vmem:[#allocation2 + $0x10c] sm:$0xf]
  %v1596 = vld [vmem:[#allocation2 + $0x110] sm:$0x1]
  %v1597 = vld [vmem:[#allocation2 + $0x114] sm:$0xf]
  %v1598 = vld [vmem:[#allocation2 + $0x118] sm:$0xf]
  %v1599 = vld [vmem:[#allocation2 + $0x11c] sm:$0x1]
  %v1600 = vld [vmem:[#allocation2 + $0x120] sm:$0xf]
  %v1601 = vld [vmem:[#allocation2 + $0x124] sm:$0xf]
  %v1602 = vld [vmem:[#allocation2 + $0x128] sm:$0x1]
  %v1603 = vld [vmem:[#allocation2 + $0x12c] sm:$0xf]
  %v1604 = vld [vmem:[#allocation2 + $0x130] sm:$0xf]
  %v1605 = vld [vmem:[#allocation2 + $0x134] sm:$0x1]
  %v1606 = vld [vmem:[#allocation2 + $0x138] sm:$0xf]
  %v1607 = vld [vmem:[#allocation2 + $0x13c] sm:$0xf]
  %v1608 = vld [vmem:[#allocation2 + $0x140] sm:$0x1]
  %v1609 = vld [vmem:[#allocation2 + $0x144] sm:$0xf]
  %v1610 = vld [vmem:[#allocation2 + $0x148] sm:$0xf]
  %v1611 = vld [vmem:[#allocation2 + $0x14c] sm:$0x1]
  %v1612 = vld [vmem:[#allocation2 + $0x150] sm:$0xf]
  %v1613 = vld [vmem:[#allocation2 + $0x154] sm:$0xf]
  %v1614 = vld [vmem:[#allocation2 + $0x158] sm:$0x1]
  %v1615 = vld [vmem:[#allocation2 + $0x15c] sm:$0xf]
  %v1616 = vld [vmem:[#allocation2 + $0x160] sm:$0xf]
  %v1617 = vld [vmem:[#allocation2 + $0x164] sm:$0x1]
  %v1618 = vld [vmem:[#allocation2 + $0x168] sm:$0xf]
  %v1619 = vld [vmem:[#allocation2 + $0x16c] sm:$0xf]
  %v1620 = vld [vmem:[#allocation2 + $0x170] sm:$0x1]
  %v1621 = vld [vmem:[#allocation2 + $0x174] sm:$0xf]
  %v1622 = vld [vmem:[#allocation2 + $0x178] sm:$0xf]
  %v1623 = vld [vmem:[#allocation2 + $0x17c] sm:$0x1]
  %v1624 = vld [vmem:[#allocation2 + $0x180] sm:$0xf]
  %v1625 = vld [vmem:[#allocation2 + $0x184] sm:$0xf]
  %v1626 = vld [vmem:[#allocation2 + $0x188] sm:$0x1]
  %v1627 = vld [vmem:[#allocation2 + $0x18c] sm:$0xf]
  %v1628 = vld [vmem:[#allocation2 + $0x190] sm:$0xf]
  %v1629 = vld [vmem:[#allocation2 + $0x194] sm:$0x1]
  %v1630 = vld [vmem:[#allocation2 + $0x198] sm:$0xf]
  %v1631 = vld [vmem:[#allocation2 + $0x19c] sm:$0xf]
  %v1632 = vld [vmem:[#allocation2 + $0x1a0] sm:$0x1]
  %v1633 = vld [vmem:[#allocation2 + $0x1a4] sm:$0xf]
  %v1634 = vld [vmem:[#allocation2 + $0x1a8] sm:$0xf]
  %v1635 = vld [vmem:[#allocation2 + $0x1ac] sm:$0x1]
  %v1636 = vld [vmem:[%s3] sm:$0xf]
  %v1637 = vld [vmem:[%s3 + $0x4] sm:$0xf]
  %v1638 = vld [vmem:[%s3 + $0x8] sm:$0xf]
  %v1639 = vld [vmem:[%s3 + $0xc] sm:$0xf]
  %v1640 = vld [vmem:[%s3 + $0x10] sm:$0xf]
  %v1641 = vld [vmem:[%s3 + $0x14] sm:$0xf]
  %v1642 = vld [vmem:[%s3 + $0x18] sm:$0xf]
  %v1643 = vld [vmem:[%s3 + $0x1c] sm:$0xf]
  %v1644 = vld [vmem:[%s3 + $0x20] sm:$0xf]
  %v1645 = vld [vmem:[%s3 + $0x24] sm:$0xf]
  %v1646 = vld [vmem:[%s3 + $0x28] sm:$0xf]
  %v1647 = vld [vmem:[%s3 + $0x2c] sm:$0xf]
  %v1648 = vld [vmem:[%s3 + $0x30] sm:$0xf]
  %v1649 = vld [vmem:[%s3 + $0x34] sm:$0xf]
  %v1650 = vld [vmem:[%s3 + $0x38] sm:$0xf]
  %v1651 = vld [vmem:[%s3 + $0x3c] sm:$0xf]
  %vm1652 = vsmask.f32 3328
  %vm1653 = vsmask.f32 7440
  %vm1654 = vmor %vm1652, %vm1653
  %v1656 = vshrl.u32 %v1528, 16
  %v1658 = vrot.slane %v1656, 4
  %v1659 = vshll.u32 %v1528, 16
  %v1661 = vrot.slane %v1659, 5
  %v1662 = vor.u32 %v1658, %v1661
  %v1663 = vrot.slane %v1662, 4
  %v1665 = vshll.u32 %v1529, 16
  %v1667 = vrot.slane %v1665, 5
  %v1668 = vsel %vm1654, %v1663, %v1667
  %v1669 = vshrl.u32 %v1529, 16
  %v1671 = vrot.slane %v1669, 4
  %v1672 = vor.u32 %v1671, %v1667
  %v1673 = vrot.slane %v1672, 4
  %v1675 = vshll.u32 %v1530, 16
  %v1677 = vrot.slane %v1675, 5
  %v1678 = vsel %vm1654, %v1673, %v1677
  %v1680 = vshrl.u32 %v1531, 16
  %v1682 = vrot.slane %v1680, 4
  %v1683 = vshll.u32 %v1531, 16
  %v1685 = vrot.slane %v1683, 5
  %v1686 = vor.u32 %v1682, %v1685
  %v1687 = vrot.slane %v1686, 4
  %v1689 = vshll.u32 %v1532, 16
  %v1691 = vrot.slane %v1689, 5
  %v1692 = vsel %vm1654, %v1687, %v1691
  %v1693 = vshrl.u32 %v1532, 16
  %v1695 = vrot.slane %v1693, 4
  %v1696 = vor.u32 %v1695, %v1691
  %v1697 = vrot.slane %v1696, 4
  %v1699 = vshll.u32 %v1533, 16
  %v1701 = vrot.slane %v1699, 5
  %v1702 = vsel %vm1654, %v1697, %v1701
  %v1704 = vshrl.u32 %v1534, 16
  %v1706 = vrot.slane %v1704, 4
  %v1707 = vshll.u32 %v1534, 16
  %v1709 = vrot.slane %v1707, 5
  %v1710 = vor.u32 %v1706, %v1709
  %v1711 = vrot.slane %v1710, 4
  %v1713 = vshll.u32 %v1535, 16
  %v1715 = vrot.slane %v1713, 5
  %v1716 = vsel %vm1654, %v1711, %v1715
  %v1717 = vshrl.u32 %v1535, 16
  %v1719 = vrot.slane %v1717, 4
  %v1720 = vor.u32 %v1719, %v1715
  %v1721 = vrot.slane %v1720, 4
  %v1723 = vshll.u32 %v1536, 16
  %v1725 = vrot.slane %v1723, 5
  %v1726 = vsel %vm1654, %v1721, %v1725
  %v1728 = vshrl.u32 %v1537, 16
  %v1730 = vrot.slane %v1728, 4
  %v1731 = vshll.u32 %v1537, 16
  %v1733 = vrot.slane %v1731, 5
  %v1734 = vor.u32 %v1730, %v1733
  %v1735 = vrot.slane %v1734, 4
  %v1737 = vshll.u32 %v1538, 16
  %v1739 = vrot.slane %v1737, 5
  %v1740 = vsel %vm1654, %v1735, %v1739
  %v1741 = vshrl.u32 %v1538, 16
  %v1743 = vrot.slane %v1741, 4
  %v1744 = vor.u32 %v1743, %v1739
  %v1745 = vrot.slane %v1744, 4
  %v1747 = vshll.u32 %v1539, 16
  %v1749 = vrot.slane %v1747, 5
  %v1750 = vsel %vm1654, %v1745, %v1749
  %v1752 = vshrl.u32 %v1540, 16
  %v1754 = vrot.slane %v1752, 4
  %v1755 = vshll.u32 %v1540, 16
  %v1757 = vrot.slane %v1755, 5
  %v1758 = vor.u32 %v1754, %v1757
  %v1759 = vrot.slane %v1758, 4
  %v1761 = vshll.u32 %v1541, 16
  %v1763 = vrot.slane %v1761, 5
  %v1764 = vsel %vm1654, %v1759, %v1763
  %v1765 = vshrl.u32 %v1541, 16
  %v1767 = vrot.slane %v1765, 4
  %v1768 = vor.u32 %v1767, %v1763
  %v1769 = vrot.slane %v1768, 4
  %v1771 = vshll.u32 %v1542, 16
  %v1773 = vrot.slane %v1771, 5
  %v1774 = vsel %vm1654, %v1769, %v1773
  %v1776 = vshrl.u32 %v1543, 16
  %v1778 = vrot.slane %v1776, 4
  %v1779 = vshll.u32 %v1543, 16
  %v1781 = vrot.slane %v1779, 5
  %v1782 = vor.u32 %v1778, %v1781
  %v1783 = vrot.slane %v1782, 4
  %v1785 = vshll.u32 %v1544, 16
  %v1787 = vrot.slane %v1785, 5
  %v1788 = vsel %vm1654, %v1783, %v1787
  %v1789 = vshrl.u32 %v1544, 16
  %v1791 = vrot.slane %v1789, 4
  %v1792 = vor.u32 %v1791, %v1787
  %v1793 = vrot.slane %v1792, 4
  %v1795 = vshll.u32 %v1545, 16
  %v1797 = vrot.slane %v1795, 5
  %v1798 = vsel %vm1654, %v1793, %v1797
  %v1800 = vshrl.u32 %v1546, 16
  %v1802 = vrot.slane %v1800, 4
  %v1803 = vshll.u32 %v1546, 16
  %v1805 = vrot.slane %v1803, 5
  %v1806 = vor.u32 %v1802, %v1805
  %v1807 = vrot.slane %v1806, 4
  %v1809 = vshll.u32 %v1547, 16
  %v1811 = vrot.slane %v1809, 5
  %v1812 = vsel %vm1654, %v1807, %v1811
  %v1813 = vshrl.u32 %v1547, 16
  %v1815 = vrot.slane %v1813, 4
  %v1816 = vor.u32 %v1815, %v1811
  %v1817 = vrot.slane %v1816, 4
  %v1819 = vshll.u32 %v1548, 16
  %v1821 = vrot.slane %v1819, 5
  %v1822 = vsel %vm1654, %v1817, %v1821
  %v1824 = vshrl.u32 %v1549, 16
  %v1826 = vrot.slane %v1824, 4
  %v1827 = vshll.u32 %v1549, 16
  %v1829 = vrot.slane %v1827, 5
  %v1830 = vor.u32 %v1826, %v1829
  %v1831 = vrot.slane %v1830, 4
  %v1833 = vshll.u32 %v1550, 16
  %v1835 = vrot.slane %v1833, 5
  %v1836 = vsel %vm1654, %v1831, %v1835
  %v1837 = vshrl.u32 %v1550, 16
  %v1839 = vrot.slane %v1837, 4
  %v1840 = vor.u32 %v1839, %v1835
  %v1841 = vrot.slane %v1840, 4
  %v1843 = vshll.u32 %v1551, 16
  %v1845 = vrot.slane %v1843, 5
  %v1846 = vsel %vm1654, %v1841, %v1845
  %v1848 = vshrl.u32 %v1552, 16
  %v1850 = vrot.slane %v1848, 4
  %v1851 = vshll.u32 %v1552, 16
  %v1853 = vrot.slane %v1851, 5
  %v1854 = vor.u32 %v1850, %v1853
  %v1855 = vrot.slane %v1854, 4
  %v1857 = vshll.u32 %v1553, 16
  %v1859 = vrot.slane %v1857, 5
  %v1860 = vsel %vm1654, %v1855, %v1859
  %v1861 = vshrl.u32 %v1553, 16
  %v1863 = vrot.slane %v1861, 4
  %v1864 = vor.u32 %v1863, %v1859
  %v1865 = vrot.slane %v1864, 4
  %v1867 = vshll.u32 %v1554, 16
  %v1869 = vrot.slane %v1867, 5
  %v1870 = vsel %vm1654, %v1865, %v1869
  %v1872 = vshrl.u32 %v1555, 16
  %v1874 = vrot.slane %v1872, 4
  %v1875 = vshll.u32 %v1555, 16
  %v1877 = vrot.slane %v1875, 5
  %v1878 = vor.u32 %v1874, %v1877
  %v1879 = vrot.slane %v1878, 4
  %v1881 = vshll.u32 %v1556, 16
  %v1883 = vrot.slane %v1881, 5
  %v1884 = vsel %vm1654, %v1879, %v1883
  %v1885 = vshrl.u32 %v1556, 16
  %v1887 = vrot.slane %v1885, 4
  %v1888 = vor.u32 %v1887, %v1883
  %v1889 = vrot.slane %v1888, 4
  %v1891 = vshll.u32 %v1557, 16
  %v1893 = vrot.slane %v1891, 5
  %v1894 = vsel %vm1654, %v1889, %v1893
  %v1896 = vshrl.u32 %v1558, 16
  %v1898 = vrot.slane %v1896, 4
  %v1899 = vshll.u32 %v1558, 16
  %v1901 = vrot.slane %v1899, 5
  %v1902 = vor.u32 %v1898, %v1901
  %v1903 = vrot.slane %v1902, 4
  %v1905 = vshll.u32 %v1559, 16
  %v1907 = vrot.slane %v1905, 5
  %v1908 = vsel %vm1654, %v1903, %v1907
  %v1909 = vshrl.u32 %v1559, 16
  %v1911 = vrot.slane %v1909, 4
  %v1912 = vor.u32 %v1911, %v1907
  %v1913 = vrot.slane %v1912, 4
  %v1915 = vshll.u32 %v1560, 16
  %v1917 = vrot.slane %v1915, 5
  %v1918 = vsel %vm1654, %v1913, %v1917
  %v1920 = vshrl.u32 %v1561, 16
  %v1922 = vrot.slane %v1920, 4
  %v1923 = vshll.u32 %v1561, 16
  %v1925 = vrot.slane %v1923, 5
  %v1926 = vor.u32 %v1922, %v1925
  %v1927 = vrot.slane %v1926, 4
  %v1929 = vshll.u32 %v1562, 16
  %v1931 = vrot.slane %v1929, 5
  %v1932 = vsel %vm1654, %v1927, %v1931
  %v1933 = vshrl.u32 %v1562, 16
  %v1935 = vrot.slane %v1933, 4
  %v1936 = vor.u32 %v1935, %v1931
  %v1937 = vrot.slane %v1936, 4
  %v1939 = vshll.u32 %v1563, 16
  %v1941 = vrot.slane %v1939, 5
  %v1942 = vsel %vm1654, %v1937, %v1941
  %v1944 = vshrl.u32 %v1564, 16
  %v1946 = vrot.slane %v1944, 4
  %v1947 = vshll.u32 %v1564, 16
  %v1949 = vrot.slane %v1947, 5
  %v1950 = vor.u32 %v1946, %v1949
  %v1951 = vrot.slane %v1950, 4
  %v1953 = vshll.u32 %v1565, 16
  %v1955 = vrot.slane %v1953, 5
  %v1956 = vsel %vm1654, %v1951, %v1955
  %v1957 = vshrl.u32 %v1565, 16
  %v1959 = vrot.slane %v1957, 4
  %v1960 = vor.u32 %v1959, %v1955
  %v1961 = vrot.slane %v1960, 4
  %v1963 = vshll.u32 %v1566, 16
  %v1965 = vrot.slane %v1963, 5
  %v1966 = vsel %vm1654, %v1961, %v1965
  %v1968 = vshrl.u32 %v1567, 16
  %v1970 = vrot.slane %v1968, 4
  %v1971 = vshll.u32 %v1567, 16
  %v1973 = vrot.slane %v1971, 5
  %v1974 = vor.u32 %v1970, %v1973
  %v1975 = vrot.slane %v1974, 4
  %v1977 = vshll.u32 %v1568, 16
  %v1979 = vrot.slane %v1977, 5
  %v1980 = vsel %vm1654, %v1975, %v1979
  %v1981 = vshrl.u32 %v1568, 16
  %v1983 = vrot.slane %v1981, 4
  %v1984 = vor.u32 %v1983, %v1979
  %v1985 = vrot.slane %v1984, 4
  %v1987 = vshll.u32 %v1569, 16
  %v1989 = vrot.slane %v1987, 5
  %v1990 = vsel %vm1654, %v1985, %v1989
  %v1992 = vshrl.u32 %v1570, 16
  %v1994 = vrot.slane %v1992, 4
  %v1995 = vshll.u32 %v1570, 16
  %v1997 = vrot.slane %v1995, 5
  %v1998 = vor.u32 %v1994, %v1997
  %v1999 = vrot.slane %v1998, 4
  %v2001 = vshll.u32 %v1571, 16
  %v2003 = vrot.slane %v2001, 5
  %v2004 = vsel %vm1654, %v1999, %v2003
  %v2005 = vshrl.u32 %v1571, 16
  %v2007 = vrot.slane %v2005, 4
  %v2008 = vor.u32 %v2007, %v2003
  %v2009 = vrot.slane %v2008, 4
  %v2011 = vshll.u32 %v1572, 16
  %v2013 = vrot.slane %v2011, 5
  %v2014 = vsel %vm1654, %v2009, %v2013
  %v2016 = vshrl.u32 %v1573, 16
  %v2018 = vrot.slane %v2016, 4
  %v2019 = vshll.u32 %v1573, 16
  %v2021 = vrot.slane %v2019, 5
  %v2022 = vor.u32 %v2018, %v2021
  %v2023 = vrot.slane %v2022, 4
  %v2025 = vshll.u32 %v1574, 16
  %v2027 = vrot.slane %v2025, 5
  %v2028 = vsel %vm1654, %v2023, %v2027
  %v2029 = vshrl.u32 %v1574, 16
  %v2031 = vrot.slane %v2029, 4
  %v2032 = vor.u32 %v2031, %v2027
  %v2033 = vrot.slane %v2032, 4
  %v2035 = vshll.u32 %v1575, 16
  %v2037 = vrot.slane %v2035, 5
  %v2038 = vsel %vm1654, %v2033, %v2037
  %v2040 = vshrl.u32 %v1582, 16
  %v2042 = vrot.slane %v2040, 4
  %v2043 = vshll.u32 %v1582, 16
  %v2045 = vrot.slane %v2043, 5
  %v2046 = vor.u32 %v2042, %v2045
  %v2047 = vrot.slane %v2046, 4
  %v2049 = vshll.u32 %v1583, 16
  %v2051 = vrot.slane %v2049, 5
  %v2052 = vsel %vm1654, %v2047, %v2051
  %v2053 = vshrl.u32 %v1583, 16
  %v2055 = vrot.slane %v2053, 4
  %v2056 = vor.u32 %v2055, %v2051
  %v2057 = vrot.slane %v2056, 4
  %v2059 = vshll.u32 %v1584, 16
  %v2061 = vrot.slane %v2059, 5
  %v2062 = vsel %vm1654, %v2057, %v2061
  %v2064 = vshrl.u32 %v1585, 16
  %v2066 = vrot.slane %v2064, 4
  %v2067 = vshll.u32 %v1585, 16
  %v2069 = vrot.slane %v2067, 5
  %v2070 = vor.u32 %v2066, %v2069
  %v2071 = vrot.slane %v2070, 4
  %v2073 = vshll.u32 %v1586, 16
  %v2075 = vrot.slane %v2073, 5
  %v2076 = vsel %vm1654, %v2071, %v2075
  %v2077 = vshrl.u32 %v1586, 16
  %v2079 = vrot.slane %v2077, 4
  %v2080 = vor.u32 %v2079, %v2075
  %v2081 = vrot.slane %v2080, 4
  %v2083 = vshll.u32 %v1587, 16
  %v2085 = vrot.slane %v2083, 5
  %v2086 = vsel %vm1654, %v2081, %v2085
  %v2088 = vshrl.u32 %v1588, 16
  %v2090 = vrot.slane %v2088, 4
  %v2091 = vshll.u32 %v1588, 16
  %v2093 = vrot.slane %v2091, 5
  %v2094 = vor.u32 %v2090, %v2093
  %v2095 = vrot.slane %v2094, 4
  %v2097 = vshll.u32 %v1589, 16
  %v2099 = vrot.slane %v2097, 5
  %v2100 = vsel %vm1654, %v2095, %v2099
  %v2101 = vshrl.u32 %v1589, 16
  %v2103 = vrot.slane %v2101, 4
  %v2104 = vor.u32 %v2103, %v2099
  %v2105 = vrot.slane %v2104, 4
  %v2107 = vshll.u32 %v1590, 16
  %v2109 = vrot.slane %v2107, 5
  %v2110 = vsel %vm1654, %v2105, %v2109
  %v2112 = vshrl.u32 %v1591, 16
  %v2114 = vrot.slane %v2112, 4
  %v2115 = vshll.u32 %v1591, 16
  %v2117 = vrot.slane %v2115, 5
  %v2118 = vor.u32 %v2114, %v2117
  %v2119 = vrot.slane %v2118, 4
  %v2121 = vshll.u32 %v1592, 16
  %v2123 = vrot.slane %v2121, 5
  %v2124 = vsel %vm1654, %v2119, %v2123
  %v2125 = vshrl.u32 %v1592, 16
  %v2127 = vrot.slane %v2125, 4
  %v2128 = vor.u32 %v2127, %v2123
  %v2129 = vrot.slane %v2128, 4
  %v2131 = vshll.u32 %v1593, 16
  %v2133 = vrot.slane %v2131, 5
  %v2134 = vsel %vm1654, %v2129, %v2133
  %v2136 = vshrl.u32 %v1594, 16
  %v2138 = vrot.slane %v2136, 4
  %v2139 = vshll.u32 %v1594, 16
  %v2141 = vrot.slane %v2139, 5
  %v2142 = vor.u32 %v2138, %v2141
  %v2143 = vrot.slane %v2142, 4
  %v2145 = vshll.u32 %v1595, 16
  %v2147 = vrot.slane %v2145, 5
  %v2148 = vsel %vm1654, %v2143, %v2147
  %v2149 = vshrl.u32 %v1595, 16
  %v2151 = vrot.slane %v2149, 4
  %v2152 = vor.u32 %v2151, %v2147
  %v2153 = vrot.slane %v2152, 4
  %v2155 = vshll.u32 %v1596, 16
  %v2157 = vrot.slane %v2155, 5
  %v2158 = vsel %vm1654, %v2153, %v2157
  %v2160 = vshrl.u32 %v1597, 16
  %v2162 = vrot.slane %v2160, 4
  %v2163 = vshll.u32 %v1597, 16
  %v2165 = vrot.slane %v2163, 5
  %v2166 = vor.u32 %v2162, %v2165
  %v2167 = vrot.slane %v2166, 4
  %v2169 = vshll.u32 %v1598, 16
  %v2171 = vrot.slane %v2169, 5
  %v2172 = vsel %vm1654, %v2167, %v2171
  %v2173 = vshrl.u32 %v1598, 16
  %v2175 = vrot.slane %v2173, 4
  %v2176 = vor.u32 %v2175, %v2171
  %v2177 = vrot.slane %v2176, 4
  %v2179 = vshll.u32 %v1599, 16
  %v2181 = vrot.slane %v2179, 5
  %v2182 = vsel %vm1654, %v2177, %v2181
  %v2184 = vshrl.u32 %v1600, 16
  %v2186 = vrot.slane %v2184, 4
  %v2187 = vshll.u32 %v1600, 16
  %v2189 = vrot.slane %v2187, 5
  %v2190 = vor.u32 %v2186, %v2189
  %v2191 = vrot.slane %v2190, 4
  %v2193 = vshll.u32 %v1601, 16
  %v2195 = vrot.slane %v2193, 5
  %v2196 = vsel %vm1654, %v2191, %v2195
  %v2197 = vshrl.u32 %v1601, 16
  %v2199 = vrot.slane %v2197, 4
  %v2200 = vor.u32 %v2199, %v2195
  %v2201 = vrot.slane %v2200, 4
  %v2203 = vshll.u32 %v1602, 16
  %v2205 = vrot.slane %v2203, 5
  %v2206 = vsel %vm1654, %v2201, %v2205
  %v2208 = vshrl.u32 %v1603, 16
  %v2210 = vrot.slane %v2208, 4
  %v2211 = vshll.u32 %v1603, 16
  %v2213 = vrot.slane %v2211, 5
  %v2214 = vor.u32 %v2210, %v2213
  %v2215 = vrot.slane %v2214, 4
  %v2217 = vshll.u32 %v1604, 16
  %v2219 = vrot.slane %v2217, 5
  %v2220 = vsel %vm1654, %v2215, %v2219
  %v2221 = vshrl.u32 %v1604, 16
  %v2223 = vrot.slane %v2221, 4
  %v2224 = vor.u32 %v2223, %v2219
  %v2225 = vrot.slane %v2224, 4
  %v2227 = vshll.u32 %v1605, 16
  %v2229 = vrot.slane %v2227, 5
  %v2230 = vsel %vm1654, %v2225, %v2229
  %v2232 = vshrl.u32 %v1606, 16
  %v2234 = vrot.slane %v2232, 4
  %v2235 = vshll.u32 %v1606, 16
  %v2237 = vrot.slane %v2235, 5
  %v2238 = vor.u32 %v2234, %v2237
  %v2239 = vrot.slane %v2238, 4
  %v2241 = vshll.u32 %v1607, 16
  %v2243 = vrot.slane %v2241, 5
  %v2244 = vsel %vm1654, %v2239, %v2243
  %v2245 = vshrl.u32 %v1607, 16
  %v2247 = vrot.slane %v2245, 4
  %v2248 = vor.u32 %v2247, %v2243
  %v2249 = vrot.slane %v2248, 4
  %v2251 = vshll.u32 %v1608, 16
  %v2253 = vrot.slane %v2251, 5
  %v2254 = vsel %vm1654, %v2249, %v2253
  %v2256 = vshrl.u32 %v1609, 16
  %v2258 = vrot.slane %v2256, 4
  %v2259 = vshll.u32 %v1609, 16
  %v2261 = vrot.slane %v2259, 5
  %v2262 = vor.u32 %v2258, %v2261
  %v2263 = vrot.slane %v2262, 4
  %v2265 = vshll.u32 %v1610, 16
  %v2267 = vrot.slane %v2265, 5
  %v2268 = vsel %vm1654, %v2263, %v2267
  %v2269 = vshrl.u32 %v1610, 16
  %v2271 = vrot.slane %v2269, 4
  %v2272 = vor.u32 %v2271, %v2267
  %v2273 = vrot.slane %v2272, 4
  %v2275 = vshll.u32 %v1611, 16
  %v2277 = vrot.slane %v2275, 5
  %v2278 = vsel %vm1654, %v2273, %v2277
  %v2280 = vshrl.u32 %v1612, 16
  %v2282 = vrot.slane %v2280, 4
  %v2283 = vshll.u32 %v1612, 16
  %v2285 = vrot.slane %v2283, 5
  %v2286 = vor.u32 %v2282, %v2285
  %v2287 = vrot.slane %v2286, 4
  %v2289 = vshll.u32 %v1613, 16
  %v2291 = vrot.slane %v2289, 5
  %v2292 = vsel %vm1654, %v2287, %v2291
  %v2293 = vshrl.u32 %v1613, 16
  %v2295 = vrot.slane %v2293, 4
  %v2296 = vor.u32 %v2295, %v2291
  %v2297 = vrot.slane %v2296, 4
  %v2299 = vshll.u32 %v1614, 16
  %v2301 = vrot.slane %v2299, 5
  %v2302 = vsel %vm1654, %v2297, %v2301
  %v2304 = vshrl.u32 %v1615, 16
  %v2306 = vrot.slane %v2304, 4
  %v2307 = vshll.u32 %v1615, 16
  %v2309 = vrot.slane %v2307, 5
  %v2310 = vor.u32 %v2306, %v2309
  %v2311 = vrot.slane %v2310, 4
  %v2313 = vshll.u32 %v1616, 16
  %v2315 = vrot.slane %v2313, 5
  %v2316 = vsel %vm1654, %v2311, %v2315
  %v2317 = vshrl.u32 %v1616, 16
  %v2319 = vrot.slane %v2317, 4
  %v2320 = vor.u32 %v2319, %v2315
  %v2321 = vrot.slane %v2320, 4
  %v2323 = vshll.u32 %v1617, 16
  %v2325 = vrot.slane %v2323, 5
  %v2326 = vsel %vm1654, %v2321, %v2325
  %v2328 = vshrl.u32 %v1618, 16
  %v2330 = vrot.slane %v2328, 4
  %v2331 = vshll.u32 %v1618, 16
  %v2333 = vrot.slane %v2331, 5
  %v2334 = vor.u32 %v2330, %v2333
  %v2335 = vrot.slane %v2334, 4
  %v2337 = vshll.u32 %v1619, 16
  %v2339 = vrot.slane %v2337, 5
  %v2340 = vsel %vm1654, %v2335, %v2339
  %v2341 = vshrl.u32 %v1619, 16
  %v2343 = vrot.slane %v2341, 4
  %v2344 = vor.u32 %v2343, %v2339
  %v2345 = vrot.slane %v2344, 4
  %v2347 = vshll.u32 %v1620, 16
  %v2349 = vrot.slane %v2347, 5
  %v2350 = vsel %vm1654, %v2345, %v2349
  %v2352 = vshrl.u32 %v1621, 16
  %v2354 = vrot.slane %v2352, 4
  %v2355 = vshll.u32 %v1621, 16
  %v2357 = vrot.slane %v2355, 5
  %v2358 = vor.u32 %v2354, %v2357
  %v2359 = vrot.slane %v2358, 4
  %v2361 = vshll.u32 %v1622, 16
  %v2363 = vrot.slane %v2361, 5
  %v2364 = vsel %vm1654, %v2359, %v2363
  %v2365 = vshrl.u32 %v1622, 16
  %v2367 = vrot.slane %v2365, 4
  %v2368 = vor.u32 %v2367, %v2363
  %v2369 = vrot.slane %v2368, 4
  %v2371 = vshll.u32 %v1623, 16
  %v2373 = vrot.slane %v2371, 5
  %v2374 = vsel %vm1654, %v2369, %v2373
  %v2376 = vshrl.u32 %v1624, 16
  %v2378 = vrot.slane %v2376, 4
  %v2379 = vshll.u32 %v1624, 16
  %v2381 = vrot.slane %v2379, 5
  %v2382 = vor.u32 %v2378, %v2381
  %v2383 = vrot.slane %v2382, 4
  %v2385 = vshll.u32 %v1625, 16
  %v2387 = vrot.slane %v2385, 5
  %v2388 = vsel %vm1654, %v2383, %v2387
  %v2389 = vshrl.u32 %v1625, 16
  %v2391 = vrot.slane %v2389, 4
  %v2392 = vor.u32 %v2391, %v2387
  %v2393 = vrot.slane %v2392, 4
  %v2395 = vshll.u32 %v1626, 16
  %v2397 = vrot.slane %v2395, 5
  %v2398 = vsel %vm1654, %v2393, %v2397
  %v2400 = vshrl.u32 %v1627, 16
  %v2402 = vrot.slane %v2400, 4
  %v2403 = vshll.u32 %v1627, 16
  %v2405 = vrot.slane %v2403, 5
  %v2406 = vor.u32 %v2402, %v2405
  %v2407 = vrot.slane %v2406, 4
  %v2409 = vshll.u32 %v1628, 16
  %v2411 = vrot.slane %v2409, 5
  %v2412 = vsel %vm1654, %v2407, %v2411
  %v2413 = vshrl.u32 %v1628, 16
  %v2415 = vrot.slane %v2413, 4
  %v2416 = vor.u32 %v2415, %v2411
  %v2417 = vrot.slane %v2416, 4
  %v2419 = vshll.u32 %v1629, 16
  %v2421 = vrot.slane %v2419, 5
  %v2422 = vsel %vm1654, %v2417, %v2421
  %s2423 = scalar_lea.vmem %s3, 64
  %v2424 = vld [vmem:[%s2423] sm:$0xf]
  %v2425 = vld [vmem:[%s2423 + $0x4] sm:$0xf]
  %v2426 = vld [vmem:[%s2423 + $0x8] sm:$0xf]
  %v2427 = vld [vmem:[%s2423 + $0xc] sm:$0xf]
  %v2428 = vld [vmem:[%s2423 + $0x10] sm:$0xf]
  %v2429 = vld [vmem:[%s2423 + $0x14] sm:$0xf]
  %v2430 = vld [vmem:[%s2423 + $0x18] sm:$0xf]
  %v2431 = vld [vmem:[%s2423 + $0x1c] sm:$0xf]
  %v2432 = vld [vmem:[%s2423 + $0x20] sm:$0xf]
  %v2433 = vld [vmem:[%s2423 + $0x24] sm:$0xf]
  %v2434 = vld [vmem:[%s2423 + $0x28] sm:$0xf]
  %v2435 = vld [vmem:[%s2423 + $0x2c] sm:$0xf]
  %v2436 = vld [vmem:[%s2423 + $0x30] sm:$0xf]
  %v2437 = vld [vmem:[%s2423 + $0x34] sm:$0xf]
  %v2438 = vld [vmem:[%s2423 + $0x38] sm:$0xf]
  %v2439 = vld [vmem:[%s2423 + $0x3c] sm:$0xf]
  %v2440 = vunpack.c.l.b16 %v1668
  %v2441 = vunpack.c.l.b16 %v1678
  %v2442 = vunpack.c.l.b16 %v1692
  %v2443 = vunpack.c.l.b16 %v1702
  %v2444 = vunpack.c.l.b16 %v1716
  %v2445 = vunpack.c.l.b16 %v1726
  %v2446 = vunpack.c.l.b16 %v1740
  %v2447 = vunpack.c.l.b16 %v1750
  %v2448 = vunpack.c.l.b16 %v1764
  %v2449 = vunpack.c.l.b16 %v1774
  %v2450 = vunpack.c.l.b16 %v1788
  %v2451 = vunpack.c.l.b16 %v1798
  %v2452 = vunpack.c.l.b16 %v1812
  %v2453 = vunpack.c.l.b16 %v1822
  %v2454 = vunpack.c.l.b16 %v1836
  %v2455 = vunpack.c.l.b16 %v1846
  %v2456 = vunpack.c.l.b16 %v1860
  %v2457 = vunpack.c.l.b16 %v1870
  %v2458 = vunpack.c.l.b16 %v1884
  %v2459 = vunpack.c.l.b16 %v1894
  %v2460 = vunpack.c.l.b16 %v1908
  %v2461 = vunpack.c.l.b16 %v1918
  %v2462 = vunpack.c.l.b16 %v1932
  %v2463 = vunpack.c.l.b16 %v1942
  %v2464 = vunpack.c.l.b16 %v1956
  %v2465 = vunpack.c.l.b16 %v1966
  %v2466 = vunpack.c.l.b16 %v1980
  %v2467 = vunpack.c.l.b16 %v1990
  %v2468 = vunpack.c.l.b16 %v2004
  %v2469 = vunpack.c.l.b16 %v2014
  %v2470 = vunpack.c.l.b16 %v2028
  %v2471 = vunpack.c.l.b16 %v2038
  %v2472 = vunpack.c.l.b16 %v2052
  %v2473 = vunpack.c.l.b16 %v2062
  %v2474 = vunpack.c.l.b16 %v2076
  %v2475 = vunpack.c.l.b16 %v2086
  %v2476 = vunpack.c.l.b16 %v2100
  %v2477 = vunpack.c.l.b16 %v2110
  %v2478 = vunpack.c.l.b16 %v2124
  %v2479 = vunpack.c.l.b16 %v2134
  %v2480 = vunpack.c.l.b16 %v2148
  %v2481 = vunpack.c.l.b16 %v2158
  %v2482 = vunpack.c.l.b16 %v2172
  %v2483 = vunpack.c.l.b16 %v2182
  %v2484 = vunpack.c.l.b16 %v2196
  %v2485 = vunpack.c.l.b16 %v2206
  %v2486 = vunpack.c.l.b16 %v2220
  %v2487 = vunpack.c.l.b16 %v2230
  %v2488 = vunpack.c.l.b16 %v2244
  %v2489 = vunpack.c.l.b16 %v2254
  %v2490 = vunpack.c.l.b16 %v2268
  %v2491 = vunpack.c.l.b16 %v2278
  %v2492 = vunpack.c.l.b16 %v2292
  %v2493 = vunpack.c.l.b16 %v2302
  %v2494 = vunpack.c.l.b16 %v2316
  %v2495 = vunpack.c.l.b16 %v2326
  %v2496 = vunpack.c.l.b16 %v2340
  %v2497 = vunpack.c.l.b16 %v2350
  %v2498 = vunpack.c.l.b16 %v2364
  %v2499 = vunpack.c.l.b16 %v2374
  %v2500 = vunpack.c.l.b16 %v2388
  %v2501 = vunpack.c.l.b16 %v2398
  %v2502 = vunpack.c.l.b16 %v2412
  %v2503 = vunpack.c.l.b16 %v2422
  %v2504 = vpack.c.b16 %v2441, %v2440
  %v2505 = vpack.c.b16 %v2443, %v2442
  %v2506 = vpack.c.b16 %v2445, %v2444
  %v2507 = vpack.c.b16 %v2447, %v2446
  %v2508 = vpack.c.b16 %v2449, %v2448
  %v2509 = vpack.c.b16 %v2451, %v2450
  %v2510 = vpack.c.b16 %v2453, %v2452
  %v2511 = vpack.c.b16 %v2455, %v2454
  %v2512 = vpack.c.b16 %v2457, %v2456
  %v2513 = vpack.c.b16 %v2459, %v2458
  %v2514 = vpack.c.b16 %v2461, %v2460
  %v2515 = vpack.c.b16 %v2463, %v2462
  %v2516 = vpack.c.b16 %v2465, %v2464
  %v2517 = vpack.c.b16 %v2467, %v2466
  %v2518 = vpack.c.b16 %v2469, %v2468
  %v2519 = vpack.c.b16 %v2471, %v2470
  %v2520 = vpack.c.b16 %v2473, %v2472
  %v2521 = vpack.c.b16 %v2475, %v2474
  %v2522 = vpack.c.b16 %v2477, %v2476
  %v2523 = vpack.c.b16 %v2479, %v2478
  %v2524 = vpack.c.b16 %v2481, %v2480
  %v2525 = vpack.c.b16 %v2483, %v2482
  %v2526 = vpack.c.b16 %v2485, %v2484
  %v2527 = vpack.c.b16 %v2487, %v2486
  %v2528 = vpack.c.b16 %v2489, %v2488
  %v2529 = vpack.c.b16 %v2491, %v2490
  %v2530 = vpack.c.b16 %v2493, %v2492
  %v2531 = vpack.c.b16 %v2495, %v2494
  %v2532 = vpack.c.b16 %v2497, %v2496
  %v2533 = vpack.c.b16 %v2499, %v2498
  %v2534 = vpack.c.b16 %v2501, %v2500
  %v2535 = vpack.c.b16 %v2503, %v2502
  %v2584 = vunpack.c.l.b16 %v2424
  %v2585 = vunpack.c.l.b16 %v2425
  %v2586 = vunpack.c.l.b16 %v2426
  %v2587 = vunpack.c.l.b16 %v2427
  %v2588 = vunpack.c.l.b16 %v2428
  %v2589 = vunpack.c.l.b16 %v2429
  %v2590 = vunpack.c.l.b16 %v2430
  %v2591 = vunpack.c.l.b16 %v2431
  %v2592 = vunpack.c.l.b16 %v2432
  %v2593 = vunpack.c.l.b16 %v2433
  %v2594 = vunpack.c.l.b16 %v2434
  %v2595 = vunpack.c.l.b16 %v2435
  %v2596 = vunpack.c.l.b16 %v2436
  %v2597 = vunpack.c.l.b16 %v2437
  %v2598 = vunpack.c.l.b16 %v2438
  %v2599 = vunpack.c.l.b16 %v2439
  %v2600 = vpack.c.b16 %v2585, %v2584
  %v2601 = vpack.c.b16 %v2587, %v2586
  %v2602 = vpack.c.b16 %v2589, %v2588
  %v2603 = vpack.c.b16 %v2591, %v2590
  %v2604 = vpack.c.b16 %v2593, %v2592
  %v2605 = vpack.c.b16 %v2595, %v2594
  %v2606 = vpack.c.b16 %v2597, %v2596
  %v2607 = vpack.c.b16 %v2599, %v2598
  %2616 = vmatprep.subr.bf16.mxu0 0
  %2617 = vmatpush1.bf16.msra.mxu0 %v2607
  %2618 = vmatprep.subr.bf16.mxu0 0
  %2619 = vmatpush1.bf16.msra.mxu0 %v2606
  %2620 = vmatprep.subr.bf16.mxu0 0
  %2621 = vmatpush1.bf16.msra.mxu0 %v2605
  %2622 = vmatprep.subr.bf16.mxu0 0
  %2623 = vmatpush1.bf16.msra.mxu0 %v2604
  %2624 = vmatprep.subr.bf16.mxu0 0
  %2625 = vmatpush1.bf16.msra.mxu0 %v2603
  %2626 = vmatprep.subr.bf16.mxu0 0
  %2627 = vmatpush1.bf16.msra.mxu0 %v2602
  %2628 = vmatprep.subr.bf16.mxu0 0
  %2629 = vmatpush1.bf16.msra.mxu0 %v2601
  %2630 = vmatprep.subr.bf16.mxu0 0
  %2631 = vmatpush1.bf16.msra.mxu0 %v2600
  %2632 = vmatprep.subr.bf16.mxu0 0
  %2633 = vmatpush2.bf16.msra.mxu0 0
  %2634 = vmatprep.subr.bf16.mxu0 0
  %2635 = vmatpush2.bf16.msra.mxu0 0
  %2636 = vmatprep.subr.bf16.mxu0 0
  %2637 = vmatpush2.bf16.msra.mxu0 0
  %2638 = vmatprep.subr.bf16.mxu0 0
  %2639 = vmatpush2.bf16.msra.mxu0 0
  %2640 = vmatprep.subr.bf16.mxu0 0
  %2641 = vmatpush2.bf16.msra.mxu0 0
  %2642 = vmatprep.subr.bf16.mxu0 0
  %2643 = vmatpush2.bf16.msra.mxu0 0
  %2644 = vmatprep.subr.bf16.mxu0 0
  %2645 = vmatpush2.bf16.msra.mxu0 0
  %2646 = vmatprep.subr.bf16.mxu0 0
  %2647 = vmatpush2.bf16.msra.mxu0 0
  %2648 = vmatprep.mubr.bf16.mxu0 0
  %2649 = vmatmul.mubr.bf16.gmra.mxu0 %v2504
  %v2650 = vpop.f32.mrf.mxu0
  %v2651 = vadd.f32 0.0, %v2650
  %v2652 = vpop.f32.mrf.mxu0
  %v2653 = vpop.f32.mrf.mxu0
  %v2654 = vadd.f32 0.0, %v2653
  %v2655 = vpop.f32.mrf.mxu0
  %2656 = vmatprep.mubr.bf16.mxu0 0
  %2657 = vmatmul.mubr.bf16.gmra.mxu0 %v2505
  %v2658 = vpop.f32.mrf.mxu0
  %v2659 = vadd.f32 0.0, %v2658
  %v2660 = vpop.f32.mrf.mxu0
  %v2661 = vpop.f32.mrf.mxu0
  %v2662 = vadd.f32 0.0, %v2661
  %v2663 = vpop.f32.mrf.mxu0
  %2664 = vmatprep.mubr.bf16.mxu0 0
  %2665 = vmatmul.mubr.bf16.gmra.mxu0 %v2506
  %v2666 = vpop.f32.mrf.mxu0
  %v2667 = vadd.f32 0.0, %v2666
  %v2668 = vpop.f32.mrf.mxu0
  %v2669 = vpop.f32.mrf.mxu0
  %v2670 = vadd.f32 0.0, %v2669
  %v2671 = vpop.f32.mrf.mxu0
  %2672 = vmatprep.mubr.bf16.mxu0 0
  %2673 = vmatmul.mubr.bf16.gmra.mxu0 %v2507
  %v2674 = vpop.f32.mrf.mxu0
  %v2675 = vadd.f32 0.0, %v2674
  %v2676 = vpop.f32.mrf.mxu0
  %v2677 = vpop.f32.mrf.mxu0
  %v2678 = vadd.f32 0.0, %v2677
  %v2679 = vpop.f32.mrf.mxu0
  %2680 = vmatprep.mubr.bf16.mxu0 0
  %2681 = vmatmul.mubr.bf16.gmra.mxu0 %v2508
  %v2682 = vpop.f32.mrf.mxu0
  %v2683 = vadd.f32 0.0, %v2682
  %v2684 = vpop.f32.mrf.mxu0
  %v2685 = vpop.f32.mrf.mxu0
  %v2686 = vadd.f32 0.0, %v2685
  %v2687 = vpop.f32.mrf.mxu0
  %2688 = vmatprep.mubr.bf16.mxu0 0
  %2689 = vmatmul.mubr.bf16.gmra.mxu0 %v2509
  %v2690 = vpop.f32.mrf.mxu0
  %v2691 = vadd.f32 0.0, %v2690
  %v2692 = vpop.f32.mrf.mxu0
  %v2693 = vpop.f32.mrf.mxu0
  %v2694 = vadd.f32 0.0, %v2693
  %v2695 = vpop.f32.mrf.mxu0
  %2696 = vmatprep.mubr.bf16.mxu0 0
  %2697 = vmatmul.mubr.bf16.gmra.mxu0 %v2510
  %v2698 = vpop.f32.mrf.mxu0
  %v2699 = vadd.f32 0.0, %v2698
  %v2700 = vpop.f32.mrf.mxu0
  %v2701 = vpop.f32.mrf.mxu0
  %v2702 = vadd.f32 0.0, %v2701
  %v2703 = vpop.f32.mrf.mxu0
  %2704 = vmatprep.mubr.bf16.mxu0 0
  %2705 = vmatmul.mubr.bf16.gmra.mxu0 %v2511
  %v2706 = vpop.f32.mrf.mxu0
  %v2707 = vadd.f32 0.0, %v2706
  %v2708 = vpop.f32.mrf.mxu0
  %v2709 = vpop.f32.mrf.mxu0
  %v2710 = vadd.f32 0.0, %v2709
  %v2711 = vpop.f32.mrf.mxu0
  %2712 = vmatprep.mubr.bf16.mxu0 0
  %2713 = vmatmul.mubr.bf16.gmra.mxu0 %v2512
  %v2714 = vpop.f32.mrf.mxu0
  %v2715 = vadd.f32 0.0, %v2714
  %v2716 = vpop.f32.mrf.mxu0
  %v2717 = vpop.f32.mrf.mxu0
  %v2718 = vadd.f32 0.0, %v2717
  %v2719 = vpop.f32.mrf.mxu0
  %2720 = vmatprep.mubr.bf16.mxu0 0
  %2721 = vmatmul.mubr.bf16.gmra.mxu0 %v2513
  %v2722 = vpop.f32.mrf.mxu0
  %v2723 = vadd.f32 0.0, %v2722
  %v2724 = vpop.f32.mrf.mxu0
  %v2725 = vpop.f32.mrf.mxu0
  %v2726 = vadd.f32 0.0, %v2725
  %v2727 = vpop.f32.mrf.mxu0
  %2728 = vmatprep.mubr.bf16.mxu0 0
  %2729 = vmatmul.mubr.bf16.gmra.mxu0 %v2514
  %v2730 = vpop.f32.mrf.mxu0
  %v2731 = vadd.f32 0.0, %v2730
  %v2732 = vpop.f32.mrf.mxu0
  %v2733 = vpop.f32.mrf.mxu0
  %v2734 = vadd.f32 0.0, %v2733
  %v2735 = vpop.f32.mrf.mxu0
  %2736 = vmatprep.mubr.bf16.mxu0 0
  %2737 = vmatmul.mubr.bf16.gmra.mxu0 %v2515
  %v2738 = vpop.f32.mrf.mxu0
  %v2739 = vadd.f32 0.0, %v2738
  %v2740 = vpop.f32.mrf.mxu0
  %v2741 = vpop.f32.mrf.mxu0
  %v2742 = vadd.f32 0.0, %v2741
  %v2743 = vpop.f32.mrf.mxu0
  %2744 = vmatprep.mubr.bf16.mxu0 0
  %2745 = vmatmul.mubr.bf16.gmra.mxu0 %v2516
  %v2746 = vpop.f32.mrf.mxu0
  %v2747 = vadd.f32 0.0, %v2746
  %v2748 = vpop.f32.mrf.mxu0
  %v2749 = vpop.f32.mrf.mxu0
  %v2750 = vadd.f32 0.0, %v2749
  %v2751 = vpop.f32.mrf.mxu0
  %2752 = vmatprep.mubr.bf16.mxu0 0
  %2753 = vmatmul.mubr.bf16.gmra.mxu0 %v2517
  %v2754 = vpop.f32.mrf.mxu0
  %v2755 = vadd.f32 0.0, %v2754
  %v2756 = vpop.f32.mrf.mxu0
  %v2757 = vpop.f32.mrf.mxu0
  %v2758 = vadd.f32 0.0, %v2757
  %v2759 = vpop.f32.mrf.mxu0
  %2760 = vmatprep.mubr.bf16.mxu0 0
  %2761 = vmatmul.mubr.bf16.gmra.mxu0 %v2518
  %v2762 = vpop.f32.mrf.mxu0
  %v2763 = vadd.f32 0.0, %v2762
  %v2764 = vpop.f32.mrf.mxu0
  %v2765 = vpop.f32.mrf.mxu0
  %v2766 = vadd.f32 0.0, %v2765
  %v2767 = vpop.f32.mrf.mxu0
  %2768 = vmatprep.mubr.bf16.mxu0 0
  %2769 = vmatmul.mubr.bf16.gmra.mxu0 %v2519
  %v2770 = vpop.f32.mrf.mxu0
  %v2771 = vadd.f32 0.0, %v2770
  %v2772 = vpop.f32.mrf.mxu0
  %v2773 = vpop.f32.mrf.mxu0
  %v2774 = vadd.f32 0.0, %v2773
  %v2775 = vpop.f32.mrf.mxu0
  %2776 = vmatprep.mubr.bf16.mxu0 0
  %2777 = vmatmul.mubr.bf16.gmra.mxu0 %v2520
  %v2778 = vpop.f32.mrf.mxu0
  %v2779 = vadd.f32 0.0, %v2778
  %v2780 = vpop.f32.mrf.mxu0
  %v2781 = vpop.f32.mrf.mxu0
  %v2782 = vadd.f32 0.0, %v2781
  %v2783 = vpop.f32.mrf.mxu0
  %2784 = vmatprep.mubr.bf16.mxu0 0
  %2785 = vmatmul.mubr.bf16.gmra.mxu0 %v2521
  %v2786 = vpop.f32.mrf.mxu0
  %v2787 = vadd.f32 0.0, %v2786
  %v2788 = vpop.f32.mrf.mxu0
  %v2789 = vpop.f32.mrf.mxu0
  %v2790 = vadd.f32 0.0, %v2789
  %v2791 = vpop.f32.mrf.mxu0
  %2792 = vmatprep.mubr.bf16.mxu0 0
  %2793 = vmatmul.mubr.bf16.gmra.mxu0 %v2522
  %v2794 = vpop.f32.mrf.mxu0
  %v2795 = vadd.f32 0.0, %v2794
  %v2796 = vpop.f32.mrf.mxu0
  %v2797 = vpop.f32.mrf.mxu0
  %v2798 = vadd.f32 0.0, %v2797
  %v2799 = vpop.f32.mrf.mxu0
  %2800 = vmatprep.mubr.bf16.mxu0 0
  %2801 = vmatmul.mubr.bf16.gmra.mxu0 %v2523
  %v2802 = vpop.f32.mrf.mxu0
  %v2803 = vadd.f32 0.0, %v2802
  %v2804 = vpop.f32.mrf.mxu0
  %v2805 = vpop.f32.mrf.mxu0
  %v2806 = vadd.f32 0.0, %v2805
  %v2807 = vpop.f32.mrf.mxu0
  %2808 = vmatprep.mubr.bf16.mxu0 0
  %2809 = vmatmul.mubr.bf16.gmra.mxu0 %v2524
  %v2810 = vpop.f32.mrf.mxu0
  %v2811 = vadd.f32 0.0, %v2810
  %v2812 = vpop.f32.mrf.mxu0
  %v2813 = vpop.f32.mrf.mxu0
  %v2814 = vadd.f32 0.0, %v2813
  %v2815 = vpop.f32.mrf.mxu0
  %2816 = vmatprep.mubr.bf16.mxu0 0
  %2817 = vmatmul.mubr.bf16.gmra.mxu0 %v2525
  %v2818 = vpop.f32.mrf.mxu0
  %v2819 = vadd.f32 0.0, %v2818
  %v2820 = vpop.f32.mrf.mxu0
  %v2821 = vpop.f32.mrf.mxu0
  %v2822 = vadd.f32 0.0, %v2821
  %v2823 = vpop.f32.mrf.mxu0
  %2824 = vmatprep.mubr.bf16.mxu0 0
  %2825 = vmatmul.mubr.bf16.gmra.mxu0 %v2526
  %v2826 = vpop.f32.mrf.mxu0
  %v2827 = vadd.f32 0.0, %v2826
  %v2828 = vpop.f32.mrf.mxu0
  %v2829 = vpop.f32.mrf.mxu0
  %v2830 = vadd.f32 0.0, %v2829
  %v2831 = vpop.f32.mrf.mxu0
  %2832 = vmatprep.mubr.bf16.mxu0 0
  %2833 = vmatmul.mubr.bf16.gmra.mxu0 %v2527
  %v2834 = vpop.f32.mrf.mxu0
  %v2835 = vadd.f32 0.0, %v2834
  %v2836 = vpop.f32.mrf.mxu0
  %v2837 = vpop.f32.mrf.mxu0
  %v2838 = vadd.f32 0.0, %v2837
  %v2839 = vpop.f32.mrf.mxu0
  %2840 = vmatprep.mubr.bf16.mxu0 0
  %2841 = vmatmul.mubr.bf16.gmra.mxu0 %v2528
  %v2842 = vpop.f32.mrf.mxu0
  %v2843 = vadd.f32 0.0, %v2842
  %v2844 = vpop.f32.mrf.mxu0
  %v2845 = vpop.f32.mrf.mxu0
  %v2846 = vadd.f32 0.0, %v2845
  %v2847 = vpop.f32.mrf.mxu0
  %2848 = vmatprep.mubr.bf16.mxu0 0
  %2849 = vmatmul.mubr.bf16.gmra.mxu0 %v2529
  %v2850 = vpop.f32.mrf.mxu0
  %v2851 = vadd.f32 0.0, %v2850
  %v2852 = vpop.f32.mrf.mxu0
  %v2853 = vpop.f32.mrf.mxu0
  %v2854 = vadd.f32 0.0, %v2853
  %v2855 = vpop.f32.mrf.mxu0
  %2856 = vmatprep.mubr.bf16.mxu0 0
  %2857 = vmatmul.mubr.bf16.gmra.mxu0 %v2530
  %v2858 = vpop.f32.mrf.mxu0
  %v2859 = vadd.f32 0.0, %v2858
  %v2860 = vpop.f32.mrf.mxu0
  %v2861 = vpop.f32.mrf.mxu0
  %v2862 = vadd.f32 0.0, %v2861
  %v2863 = vpop.f32.mrf.mxu0
  %2864 = vmatprep.mubr.bf16.mxu0 0
  %2865 = vmatmul.mubr.bf16.gmra.mxu0 %v2531
  %v2866 = vpop.f32.mrf.mxu0
  %v2867 = vadd.f32 0.0, %v2866
  %v2868 = vpop.f32.mrf.mxu0
  %v2869 = vpop.f32.mrf.mxu0
  %v2870 = vadd.f32 0.0, %v2869
  %v2871 = vpop.f32.mrf.mxu0
  %2872 = vmatprep.mubr.bf16.mxu0 0
  %2873 = vmatmul.mubr.bf16.gmra.mxu0 %v2532
  %v2874 = vpop.f32.mrf.mxu0
  %v2875 = vadd.f32 0.0, %v2874
  %v2876 = vpop.f32.mrf.mxu0
  %v2877 = vpop.f32.mrf.mxu0
  %v2878 = vadd.f32 0.0, %v2877
  %v2879 = vpop.f32.mrf.mxu0
  %2880 = vmatprep.mubr.bf16.mxu0 0
  %2881 = vmatmul.mubr.bf16.gmra.mxu0 %v2533
  %v2882 = vpop.f32.mrf.mxu0
  %v2883 = vadd.f32 0.0, %v2882
  %v2884 = vpop.f32.mrf.mxu0
  %v2885 = vpop.f32.mrf.mxu0
  %v2886 = vadd.f32 0.0, %v2885
  %v2887 = vpop.f32.mrf.mxu0
  %2888 = vmatprep.mubr.bf16.mxu0 0
  %2889 = vmatmul.mubr.bf16.gmra.mxu0 %v2534
  %v2890 = vpop.f32.mrf.mxu0
  %v2891 = vadd.f32 0.0, %v2890
  %v2892 = vpop.f32.mrf.mxu0
  %v2893 = vpop.f32.mrf.mxu0
  %v2894 = vadd.f32 0.0, %v2893
  %v2895 = vpop.f32.mrf.mxu0
  %2896 = vmatprep.mubr.bf16.mxu0 0
  %2897 = vmatmul.mubr.bf16.gmra.mxu0 %v2535
  %v2898 = vpop.f32.mrf.mxu0
  %v2899 = vadd.f32 0.0, %v2898
  %v2900 = vpop.f32.mrf.mxu0
  %v2901 = vpop.f32.mrf.mxu0
  %v2902 = vadd.f32 0.0, %v2901
  %v2903 = vpop.f32.mrf.mxu0
  %2904 = vdwg.mxu0
  %v2969 = vunpack.c.l.b16 %v1528
  %v2970 = vunpack.c.l.b16 %v1529
  %v2971 = vunpack.c.l.b16 %v1531
  %v2972 = vunpack.c.l.b16 %v1532
  %v2973 = vunpack.c.l.b16 %v1534
  %v2974 = vunpack.c.l.b16 %v1535
  %v2975 = vunpack.c.l.b16 %v1537
  %v2976 = vunpack.c.l.b16 %v1538
  %v2977 = vunpack.c.l.b16 %v1540
  %v2978 = vunpack.c.l.b16 %v1541
  %v2979 = vunpack.c.l.b16 %v1543
  %v2980 = vunpack.c.l.b16 %v1544
  %v2981 = vunpack.c.l.b16 %v1546
  %v2982 = vunpack.c.l.b16 %v1547
  %v2983 = vunpack.c.l.b16 %v1549
  %v2984 = vunpack.c.l.b16 %v1550
  %v2985 = vunpack.c.l.b16 %v1552
  %v2986 = vunpack.c.l.b16 %v1553
  %v2987 = vunpack.c.l.b16 %v1555
  %v2988 = vunpack.c.l.b16 %v1556
  %v2989 = vunpack.c.l.b16 %v1558
  %v2990 = vunpack.c.l.b16 %v1559
  %v2991 = vunpack.c.l.b16 %v1561
  %v2992 = vunpack.c.l.b16 %v1562
  %v2993 = vunpack.c.l.b16 %v1564
  %v2994 = vunpack.c.l.b16 %v1565
  %v2995 = vunpack.c.l.b16 %v1567
  %v2996 = vunpack.c.l.b16 %v1568
  %v2997 = vunpack.c.l.b16 %v1570
  %v2998 = vunpack.c.l.b16 %v1571
  %v2999 = vunpack.c.l.b16 %v1573
  %v3000 = vunpack.c.l.b16 %v1574
  %v3001 = vunpack.c.l.b16 %v1582
  %v3002 = vunpack.c.l.b16 %v1583
  %v3003 = vunpack.c.l.b16 %v1585
  %v3004 = vunpack.c.l.b16 %v1586
  %v3005 = vunpack.c.l.b16 %v1588
  %v3006 = vunpack.c.l.b16 %v1589
  %v3007 = vunpack.c.l.b16 %v1591
  %v3008 = vunpack.c.l.b16 %v1592
  %v3009 = vunpack.c.l.b16 %v1594
  %v3010 = vunpack.c.l.b16 %v1595
  %v3011 = vunpack.c.l.b16 %v1597
  %v3012 = vunpack.c.l.b16 %v1598
  %v3013 = vunpack.c.l.b16 %v1600
  %v3014 = vunpack.c.l.b16 %v1601
  %v3015 = vunpack.c.l.b16 %v1603
  %v3016 = vunpack.c.l.b16 %v1604
  %v3017 = vunpack.c.l.b16 %v1606
  %v3018 = vunpack.c.l.b16 %v1607
  %v3019 = vunpack.c.l.b16 %v1609
  %v3020 = vunpack.c.l.b16 %v1610
  %v3021 = vunpack.c.l.b16 %v1612
  %v3022 = vunpack.c.l.b16 %v1613
  %v3023 = vunpack.c.l.b16 %v1615
  %v3024 = vunpack.c.l.b16 %v1616
  %v3025 = vunpack.c.l.b16 %v1618
  %v3026 = vunpack.c.l.b16 %v1619
  %v3027 = vunpack.c.l.b16 %v1621
  %v3028 = vunpack.c.l.b16 %v1622
  %v3029 = vunpack.c.l.b16 %v1624
  %v3030 = vunpack.c.l.b16 %v1625
  %v3031 = vunpack.c.l.b16 %v1627
  %v3032 = vunpack.c.l.b16 %v1628
  %v3033 = vpack.c.b16 %v2970, %v2969
  %v3034 = vpack.c.b16 %v2972, %v2971
  %v3035 = vpack.c.b16 %v2974, %v2973
  %v3036 = vpack.c.b16 %v2976, %v2975
  %v3037 = vpack.c.b16 %v2978, %v2977
  %v3038 = vpack.c.b16 %v2980, %v2979
  %v3039 = vpack.c.b16 %v2982, %v2981
  %v3040 = vpack.c.b16 %v2984, %v2983
  %v3041 = vpack.c.b16 %v2986, %v2985
  %v3042 = vpack.c.b16 %v2988, %v2987
  %v3043 = vpack.c.b16 %v2990, %v2989
  %v3044 = vpack.c.b16 %v2992, %v2991
  %v3045 = vpack.c.b16 %v2994, %v2993
  %v3046 = vpack.c.b16 %v2996, %v2995
  %v3047 = vpack.c.b16 %v2998, %v2997
  %v3048 = vpack.c.b16 %v3000, %v2999
  %v3049 = vpack.c.b16 %v3002, %v3001
  %v3050 = vpack.c.b16 %v3004, %v3003
  %v3051 = vpack.c.b16 %v3006, %v3005
  %v3052 = vpack.c.b16 %v3008, %v3007
  %v3053 = vpack.c.b16 %v3010, %v3009
  %v3054 = vpack.c.b16 %v3012, %v3011
  %v3055 = vpack.c.b16 %v3014, %v3013
  %v3056 = vpack.c.b16 %v3016, %v3015
  %v3057 = vpack.c.b16 %v3018, %v3017
  %v3058 = vpack.c.b16 %v3020, %v3019
  %v3059 = vpack.c.b16 %v3022, %v3021
  %v3060 = vpack.c.b16 %v3024, %v3023
  %v3061 = vpack.c.b16 %v3026, %v3025
  %v3062 = vpack.c.b16 %v3028, %v3027
  %v3063 = vpack.c.b16 %v3030, %v3029
  %v3064 = vpack.c.b16 %v3032, %v3031
  %v3113 = vunpack.c.l.b16 %v1636
  %v3114 = vunpack.c.l.b16 %v1637
  %v3115 = vunpack.c.l.b16 %v1638
  %v3116 = vunpack.c.l.b16 %v1639
  %v3117 = vunpack.c.l.b16 %v1640
  %v3118 = vunpack.c.l.b16 %v1641
  %v3119 = vunpack.c.l.b16 %v1642
  %v3120 = vunpack.c.l.b16 %v1643
  %v3121 = vunpack.c.l.b16 %v1644
  %v3122 = vunpack.c.l.b16 %v1645
  %v3123 = vunpack.c.l.b16 %v1646
  %v3124 = vunpack.c.l.b16 %v1647
  %v3125 = vunpack.c.l.b16 %v1648
  %v3126 = vunpack.c.l.b16 %v1649
  %v3127 = vunpack.c.l.b16 %v1650
  %v3128 = vunpack.c.l.b16 %v1651
  %v3129 = vpack.c.b16 %v3114, %v3113
  %v3130 = vpack.c.b16 %v3116, %v3115
  %v3131 = vpack.c.b16 %v3118, %v3117
  %v3132 = vpack.c.b16 %v3120, %v3119
  %v3133 = vpack.c.b16 %v3122, %v3121
  %v3134 = vpack.c.b16 %v3124, %v3123
  %v3135 = vpack.c.b16 %v3126, %v3125
  %v3136 = vpack.c.b16 %v3128, %v3127
  %3145 = vmatprep.subr.bf16.mxu0 0
  %3146 = vmatpush1.bf16.msra.mxu0 %v3136
  %3147 = vmatprep.subr.bf16.mxu0 0
  %3148 = vmatpush1.bf16.msra.mxu0 %v3135
  %3149 = vmatprep.subr.bf16.mxu0 0
  %3150 = vmatpush1.bf16.msra.mxu0 %v3134
  %3151 = vmatprep.subr.bf16.mxu0 0
  %3152 = vmatpush1.bf16.msra.mxu0 %v3133
  %3153 = vmatprep.subr.bf16.mxu0 0
  %3154 = vmatpush1.bf16.msra.mxu0 %v3132
  %3155 = vmatprep.subr.bf16.mxu0 0
  %3156 = vmatpush1.bf16.msra.mxu0 %v3131
  %3157 = vmatprep.subr.bf16.mxu0 0
  %3158 = vmatpush1.bf16.msra.mxu0 %v3130
  %3159 = vmatprep.subr.bf16.mxu0 0
  %3160 = vmatpush1.bf16.msra.mxu0 %v3129
  %3161 = vmatprep.subr.bf16.mxu0 0
  %3162 = vmatpush2.bf16.msra.mxu0 0
  %3163 = vmatprep.subr.bf16.mxu0 0
  %3164 = vmatpush2.bf16.msra.mxu0 0
  %3165 = vmatprep.subr.bf16.mxu0 0
  %3166 = vmatpush2.bf16.msra.mxu0 0
  %3167 = vmatprep.subr.bf16.mxu0 0
  %3168 = vmatpush2.bf16.msra.mxu0 0
  %3169 = vmatprep.subr.bf16.mxu0 0
  %3170 = vmatpush2.bf16.msra.mxu0 0
  %3171 = vmatprep.subr.bf16.mxu0 0
  %3172 = vmatpush2.bf16.msra.mxu0 0
  %3173 = vmatprep.subr.bf16.mxu0 0
  %3174 = vmatpush2.bf16.msra.mxu0 0
  %3175 = vmatprep.subr.bf16.mxu0 0
  %3176 = vmatpush2.bf16.msra.mxu0 0
  %3177 = vmatprep.mubr.bf16.mxu0 0
  %3178 = vmatmul.mubr.bf16.gmra.mxu0 %v3033
  %v3179 = vpop.f32.mrf.mxu0
  %v3180 = vadd.f32 %v2651, %v3179
  %v3181 = vpop.f32.mrf.mxu0
  %v3182 = vpop.f32.mrf.mxu0
  %v3183 = vadd.f32 %v2654, %v3182
  %v3184 = vpop.f32.mrf.mxu0
  %3185 = vmatprep.mubr.bf16.mxu0 0
  %3186 = vmatmul.mubr.bf16.gmra.mxu0 %v3034
  %v3187 = vpop.f32.mrf.mxu0
  %v3188 = vadd.f32 %v2659, %v3187
  %v3189 = vpop.f32.mrf.mxu0
  %v3190 = vpop.f32.mrf.mxu0
  %v3191 = vadd.f32 %v2662, %v3190
  %v3192 = vpop.f32.mrf.mxu0
  %3193 = vmatprep.mubr.bf16.mxu0 0
  %3194 = vmatmul.mubr.bf16.gmra.mxu0 %v3035
  %v3195 = vpop.f32.mrf.mxu0
  %v3196 = vadd.f32 %v2667, %v3195
  %v3197 = vpop.f32.mrf.mxu0
  %v3198 = vpop.f32.mrf.mxu0
  %v3199 = vadd.f32 %v2670, %v3198
  %v3200 = vpop.f32.mrf.mxu0
  %3201 = vmatprep.mubr.bf16.mxu0 0
  %3202 = vmatmul.mubr.bf16.gmra.mxu0 %v3036
  %v3203 = vpop.f32.mrf.mxu0
  %v3204 = vadd.f32 %v2675, %v3203
  %v3205 = vpop.f32.mrf.mxu0
  %v3206 = vpop.f32.mrf.mxu0
  %v3207 = vadd.f32 %v2678, %v3206
  %v3208 = vpop.f32.mrf.mxu0
  %3209 = vmatprep.mubr.bf16.mxu0 0
  %3210 = vmatmul.mubr.bf16.gmra.mxu0 %v3037
  %v3211 = vpop.f32.mrf.mxu0
  %v3212 = vadd.f32 %v2683, %v3211
  %v3213 = vpop.f32.mrf.mxu0
  %v3214 = vpop.f32.mrf.mxu0
  %v3215 = vadd.f32 %v2686, %v3214
  %v3216 = vpop.f32.mrf.mxu0
  %3217 = vmatprep.mubr.bf16.mxu0 0
  %3218 = vmatmul.mubr.bf16.gmra.mxu0 %v3038
  %v3219 = vpop.f32.mrf.mxu0
  %v3220 = vadd.f32 %v2691, %v3219
  %v3221 = vpop.f32.mrf.mxu0
  %v3222 = vpop.f32.mrf.mxu0
  %v3223 = vadd.f32 %v2694, %v3222
  %v3224 = vpop.f32.mrf.mxu0
  %3225 = vmatprep.mubr.bf16.mxu0 0
  %3226 = vmatmul.mubr.bf16.gmra.mxu0 %v3039
  %v3227 = vpop.f32.mrf.mxu0
  %v3228 = vadd.f32 %v2699, %v3227
  %v3229 = vpop.f32.mrf.mxu0
  %v3230 = vpop.f32.mrf.mxu0
  %v3231 = vadd.f32 %v2702, %v3230
  %v3232 = vpop.f32.mrf.mxu0
  %3233 = vmatprep.mubr.bf16.mxu0 0
  %3234 = vmatmul.mubr.bf16.gmra.mxu0 %v3040
  %v3235 = vpop.f32.mrf.mxu0
  %v3236 = vadd.f32 %v2707, %v3235
  %v3237 = vpop.f32.mrf.mxu0
  %v3238 = vpop.f32.mrf.mxu0
  %v3239 = vadd.f32 %v2710, %v3238
  %v3240 = vpop.f32.mrf.mxu0
  %3241 = vmatprep.mubr.bf16.mxu0 0
  %3242 = vmatmul.mubr.bf16.gmra.mxu0 %v3041
  %v3243 = vpop.f32.mrf.mxu0
  %v3244 = vadd.f32 %v2715, %v3243
  %v3245 = vpop.f32.mrf.mxu0
  %v3246 = vpop.f32.mrf.mxu0
  %v3247 = vadd.f32 %v2718, %v3246
  %v3248 = vpop.f32.mrf.mxu0
  %3249 = vmatprep.mubr.bf16.mxu0 0
  %3250 = vmatmul.mubr.bf16.gmra.mxu0 %v3042
  %v3251 = vpop.f32.mrf.mxu0
  %v3252 = vadd.f32 %v2723, %v3251
  %v3253 = vpop.f32.mrf.mxu0
  %v3254 = vpop.f32.mrf.mxu0
  %v3255 = vadd.f32 %v2726, %v3254
  %v3256 = vpop.f32.mrf.mxu0
  %3257 = vmatprep.mubr.bf16.mxu0 0
  %3258 = vmatmul.mubr.bf16.gmra.mxu0 %v3043
  %v3259 = vpop.f32.mrf.mxu0
  %v3260 = vadd.f32 %v2731, %v3259
  %v3261 = vpop.f32.mrf.mxu0
  %v3262 = vpop.f32.mrf.mxu0
  %v3263 = vadd.f32 %v2734, %v3262
  %v3264 = vpop.f32.mrf.mxu0
  %3265 = vmatprep.mubr.bf16.mxu0 0
  %3266 = vmatmul.mubr.bf16.gmra.mxu0 %v3044
  %v3267 = vpop.f32.mrf.mxu0
  %v3268 = vadd.f32 %v2739, %v3267
  %v3269 = vpop.f32.mrf.mxu0
  %v3270 = vpop.f32.mrf.mxu0
  %v3271 = vadd.f32 %v2742, %v3270
  %v3272 = vpop.f32.mrf.mxu0
  %3273 = vmatprep.mubr.bf16.mxu0 0
  %3274 = vmatmul.mubr.bf16.gmra.mxu0 %v3045
  %v3275 = vpop.f32.mrf.mxu0
  %v3276 = vadd.f32 %v2747, %v3275
  %v3277 = vpop.f32.mrf.mxu0
  %v3278 = vpop.f32.mrf.mxu0
  %v3279 = vadd.f32 %v2750, %v3278
  %v3280 = vpop.f32.mrf.mxu0
  %3281 = vmatprep.mubr.bf16.mxu0 0
  %3282 = vmatmul.mubr.bf16.gmra.mxu0 %v3046
  %v3283 = vpop.f32.mrf.mxu0
  %v3284 = vadd.f32 %v2755, %v3283
  %v3285 = vpop.f32.mrf.mxu0
  %v3286 = vpop.f32.mrf.mxu0
  %v3287 = vadd.f32 %v2758, %v3286
  %v3288 = vpop.f32.mrf.mxu0
  %3289 = vmatprep.mubr.bf16.mxu0 0
  %3290 = vmatmul.mubr.bf16.gmra.mxu0 %v3047
  %v3291 = vpop.f32.mrf.mxu0
  %v3292 = vadd.f32 %v2763, %v3291
  %v3293 = vpop.f32.mrf.mxu0
  %v3294 = vpop.f32.mrf.mxu0
  %v3295 = vadd.f32 %v2766, %v3294
  %v3296 = vpop.f32.mrf.mxu0
  %3297 = vmatprep.mubr.bf16.mxu0 0
  %3298 = vmatmul.mubr.bf16.gmra.mxu0 %v3048
  %v3299 = vpop.f32.mrf.mxu0
  %v3300 = vadd.f32 %v2771, %v3299
  %v3301 = vpop.f32.mrf.mxu0
  %v3302 = vpop.f32.mrf.mxu0
  %v3303 = vadd.f32 %v2774, %v3302
  %v3304 = vpop.f32.mrf.mxu0
  %3305 = vmatprep.mubr.bf16.mxu0 0
  %3306 = vmatmul.mubr.bf16.gmra.mxu0 %v3049
  %v3307 = vpop.f32.mrf.mxu0
  %v3308 = vadd.f32 %v2779, %v3307
  %v3309 = vpop.f32.mrf.mxu0
  %v3310 = vpop.f32.mrf.mxu0
  %v3311 = vadd.f32 %v2782, %v3310
  %v3312 = vpop.f32.mrf.mxu0
  %3313 = vmatprep.mubr.bf16.mxu0 0
  %3314 = vmatmul.mubr.bf16.gmra.mxu0 %v3050
  %v3315 = vpop.f32.mrf.mxu0
  %v3316 = vadd.f32 %v2787, %v3315
  %v3317 = vpop.f32.mrf.mxu0
  %v3318 = vpop.f32.mrf.mxu0
  %v3319 = vadd.f32 %v2790, %v3318
  %v3320 = vpop.f32.mrf.mxu0
  %3321 = vmatprep.mubr.bf16.mxu0 0
  %3322 = vmatmul.mubr.bf16.gmra.mxu0 %v3051
  %v3323 = vpop.f32.mrf.mxu0
  %v3324 = vadd.f32 %v2795, %v3323
  %v3325 = vpop.f32.mrf.mxu0
  %v3326 = vpop.f32.mrf.mxu0
  %v3327 = vadd.f32 %v2798, %v3326
  %v3328 = vpop.f32.mrf.mxu0
  %3329 = vmatprep.mubr.bf16.mxu0 0
  %3330 = vmatmul.mubr.bf16.gmra.mxu0 %v3052
  %v3331 = vpop.f32.mrf.mxu0
  %v3332 = vadd.f32 %v2803, %v3331
  %v3333 = vpop.f32.mrf.mxu0
  %v3334 = vpop.f32.mrf.mxu0
  %v3335 = vadd.f32 %v2806, %v3334
  %v3336 = vpop.f32.mrf.mxu0
  %3337 = vmatprep.mubr.bf16.mxu0 0
  %3338 = vmatmul.mubr.bf16.gmra.mxu0 %v3053
  %v3339 = vpop.f32.mrf.mxu0
  %v3340 = vadd.f32 %v2811, %v3339
  %v3341 = vpop.f32.mrf.mxu0
  %v3342 = vpop.f32.mrf.mxu0
  %v3343 = vadd.f32 %v2814, %v3342
  %v3344 = vpop.f32.mrf.mxu0
  %3345 = vmatprep.mubr.bf16.mxu0 0
  %3346 = vmatmul.mubr.bf16.gmra.mxu0 %v3054
  %v3347 = vpop.f32.mrf.mxu0
  %v3348 = vadd.f32 %v2819, %v3347
  %v3349 = vpop.f32.mrf.mxu0
  %v3350 = vpop.f32.mrf.mxu0
  %v3351 = vadd.f32 %v2822, %v3350
  %v3352 = vpop.f32.mrf.mxu0
  %3353 = vmatprep.mubr.bf16.mxu0 0
  %3354 = vmatmul.mubr.bf16.gmra.mxu0 %v3055
  %v3355 = vpop.f32.mrf.mxu0
  %v3356 = vadd.f32 %v2827, %v3355
  %v3357 = vpop.f32.mrf.mxu0
  %v3358 = vpop.f32.mrf.mxu0
  %v3359 = vadd.f32 %v2830, %v3358
  %v3360 = vpop.f32.mrf.mxu0
  %3361 = vmatprep.mubr.bf16.mxu0 0
  %3362 = vmatmul.mubr.bf16.gmra.mxu0 %v3056
  %v3363 = vpop.f32.mrf.mxu0
  %v3364 = vadd.f32 %v2835, %v3363
  %v3365 = vpop.f32.mrf.mxu0
  %v3366 = vpop.f32.mrf.mxu0
  %v3367 = vadd.f32 %v2838, %v3366
  %v3368 = vpop.f32.mrf.mxu0
  %3369 = vmatprep.mubr.bf16.mxu0 0
  %3370 = vmatmul.mubr.bf16.gmra.mxu0 %v3057
  %v3371 = vpop.f32.mrf.mxu0
  %v3372 = vadd.f32 %v2843, %v3371
  %v3373 = vpop.f32.mrf.mxu0
  %v3374 = vpop.f32.mrf.mxu0
  %v3375 = vadd.f32 %v2846, %v3374
  %v3376 = vpop.f32.mrf.mxu0
  %3377 = vmatprep.mubr.bf16.mxu0 0
  %3378 = vmatmul.mubr.bf16.gmra.mxu0 %v3058
  %v3379 = vpop.f32.mrf.mxu0
  %v3380 = vadd.f32 %v2851, %v3379
  %v3381 = vpop.f32.mrf.mxu0
  %v3382 = vpop.f32.mrf.mxu0
  %v3383 = vadd.f32 %v2854, %v3382
  %v3384 = vpop.f32.mrf.mxu0
  %3385 = vmatprep.mubr.bf16.mxu0 0
  %3386 = vmatmul.mubr.bf16.gmra.mxu0 %v3059
  %v3387 = vpop.f32.mrf.mxu0
  %v3388 = vadd.f32 %v2859, %v3387
  %v3389 = vpop.f32.mrf.mxu0
  %v3390 = vpop.f32.mrf.mxu0
  %v3391 = vadd.f32 %v2862, %v3390
  %v3392 = vpop.f32.mrf.mxu0
  %3393 = vmatprep.mubr.bf16.mxu0 0
  %3394 = vmatmul.mubr.bf16.gmra.mxu0 %v3060
  %v3395 = vpop.f32.mrf.mxu0
  %v3396 = vadd.f32 %v2867, %v3395
  %v3397 = vpop.f32.mrf.mxu0
  %v3398 = vpop.f32.mrf.mxu0
  %v3399 = vadd.f32 %v2870, %v3398
  %v3400 = vpop.f32.mrf.mxu0
  %3401 = vmatprep.mubr.bf16.mxu0 0
  %3402 = vmatmul.mubr.bf16.gmra.mxu0 %v3061
  %v3403 = vpop.f32.mrf.mxu0
  %v3404 = vadd.f32 %v2875, %v3403
  %v3405 = vpop.f32.mrf.mxu0
  %v3406 = vpop.f32.mrf.mxu0
  %v3407 = vadd.f32 %v2878, %v3406
  %v3408 = vpop.f32.mrf.mxu0
  %3409 = vmatprep.mubr.bf16.mxu0 0
  %3410 = vmatmul.mubr.bf16.gmra.mxu0 %v3062
  %v3411 = vpop.f32.mrf.mxu0
  %v3412 = vadd.f32 %v2883, %v3411
  %v3413 = vpop.f32.mrf.mxu0
  %v3414 = vpop.f32.mrf.mxu0
  %v3415 = vadd.f32 %v2886, %v3414
  %v3416 = vpop.f32.mrf.mxu0
  %3417 = vmatprep.mubr.bf16.mxu0 0
  %3418 = vmatmul.mubr.bf16.gmra.mxu0 %v3063
  %v3419 = vpop.f32.mrf.mxu0
  %v3420 = vadd.f32 %v2891, %v3419
  %v3421 = vpop.f32.mrf.mxu0
  %v3422 = vpop.f32.mrf.mxu0
  %v3423 = vadd.f32 %v2894, %v3422
  %v3424 = vpop.f32.mrf.mxu0
  %3425 = vmatprep.mubr.bf16.mxu0 0
  %3426 = vmatmul.mubr.bf16.gmra.mxu0 %v3064
  %v3427 = vpop.f32.mrf.mxu0
  %v3428 = vadd.f32 %v2899, %v3427
  %v3429 = vpop.f32.mrf.mxu0
  %v3430 = vpop.f32.mrf.mxu0
  %v3431 = vadd.f32 %v2902, %v3430
  %v3432 = vpop.f32.mrf.mxu0
  %3433 = vdwg.mxu0
  %vm3466 = vcmask 1042432
  %vm3467 = vcmask 1046532
  %vm3468 = vmor %vm3466, %vm3467
  %v3469 = vrot.slane %v1528, 5
  %v3470 = vrot.slane %v3469, 4
  %v3471 = vrot.slane %v1529, 5
  %v3472 = vsel %vm3468, %v3470, %v3471
  %v3473 = vrot.slane %v3471, 4
  %v3474 = vrot.slane %v1530, 5
  %v3475 = vsel %vm3468, %v3473, %v3474
  %v3476 = vrot.slane %v1531, 5
  %v3477 = vrot.slane %v3476, 4
  %v3478 = vrot.slane %v1532, 5
  %v3479 = vsel %vm3468, %v3477, %v3478
  %v3480 = vrot.slane %v3478, 4
  %v3481 = vrot.slane %v1533, 5
  %v3482 = vsel %vm3468, %v3480, %v3481
  %v3483 = vrot.slane %v1534, 5
  %v3484 = vrot.slane %v3483, 4
  %v3485 = vrot.slane %v1535, 5
  %v3486 = vsel %vm3468, %v3484, %v3485
  %v3487 = vrot.slane %v3485, 4
  %v3488 = vrot.slane %v1536, 5
  %v3489 = vsel %vm3468, %v3487, %v3488
  %v3490 = vrot.slane %v1537, 5
  %v3491 = vrot.slane %v3490, 4
  %v3492 = vrot.slane %v1538, 5
  %v3493 = vsel %vm3468, %v3491, %v3492
  %v3494 = vrot.slane %v3492, 4
  %v3495 = vrot.slane %v1539, 5
  %v3496 = vsel %vm3468, %v3494, %v3495
  %v3497 = vrot.slane %v1540, 5
  %v3498 = vrot.slane %v3497, 4
  %v3499 = vrot.slane %v1541, 5
  %v3500 = vsel %vm3468, %v3498, %v3499
  %v3501 = vrot.slane %v3499, 4
  %v3502 = vrot.slane %v1542, 5
  %v3503 = vsel %vm3468, %v3501, %v3502
  %v3504 = vrot.slane %v1543, 5
  %v3505 = vrot.slane %v3504, 4
  %v3506 = vrot.slane %v1544, 5
  %v3507 = vsel %vm3468, %v3505, %v3506
  %v3508 = vrot.slane %v3506, 4
  %v3509 = vrot.slane %v1545, 5
  %v3510 = vsel %vm3468, %v3508, %v3509
  %v3511 = vrot.slane %v1546, 5
  %v3512 = vrot.slane %v3511, 4
  %v3513 = vrot.slane %v1547, 5
  %v3514 = vsel %vm3468, %v3512, %v3513
  %v3515 = vrot.slane %v3513, 4
  %v3516 = vrot.slane %v1548, 5
  %v3517 = vsel %vm3468, %v3515, %v3516
  %v3518 = vrot.slane %v1549, 5
  %v3519 = vrot.slane %v3518, 4
  %v3520 = vrot.slane %v1550, 5
  %v3521 = vsel %vm3468, %v3519, %v3520
  %v3522 = vrot.slane %v3520, 4
  %v3523 = vrot.slane %v1551, 5
  %v3524 = vsel %vm3468, %v3522, %v3523
  %v3525 = vrot.slane %v1552, 5
  %v3526 = vrot.slane %v3525, 4
  %v3527 = vrot.slane %v1553, 5
  %v3528 = vsel %vm3468, %v3526, %v3527
  %v3529 = vrot.slane %v3527, 4
  %v3530 = vrot.slane %v1554, 5
  %v3531 = vsel %vm3468, %v3529, %v3530
  %v3532 = vrot.slane %v1555, 5
  %v3533 = vrot.slane %v3532, 4
  %v3534 = vrot.slane %v1556, 5
  %v3535 = vsel %vm3468, %v3533, %v3534
  %v3536 = vrot.slane %v3534, 4
  %v3537 = vrot.slane %v1557, 5
  %v3538 = vsel %vm3468, %v3536, %v3537
  %v3539 = vrot.slane %v1558, 5
  %v3540 = vrot.slane %v3539, 4
  %v3541 = vrot.slane %v1559, 5
  %v3542 = vsel %vm3468, %v3540, %v3541
  %v3543 = vrot.slane %v3541, 4
  %v3544 = vrot.slane %v1560, 5
  %v3545 = vsel %vm3468, %v3543, %v3544
  %v3546 = vrot.slane %v1561, 5
  %v3547 = vrot.slane %v3546, 4
  %v3548 = vrot.slane %v1562, 5
  %v3549 = vsel %vm3468, %v3547, %v3548
  %v3550 = vrot.slane %v3548, 4
  %v3551 = vrot.slane %v1563, 5
  %v3552 = vsel %vm3468, %v3550, %v3551
  %v3553 = vrot.slane %v1564, 5
  %v3554 = vrot.slane %v3553, 4
  %v3555 = vrot.slane %v1565, 5
  %v3556 = vsel %vm3468, %v3554, %v3555
  %v3557 = vrot.slane %v3555, 4
  %v3558 = vrot.slane %v1566, 5
  %v3559 = vsel %vm3468, %v3557, %v3558
  %v3560 = vrot.slane %v1567, 5
  %v3561 = vrot.slane %v3560, 4
  %v3562 = vrot.slane %v1568, 5
  %v3563 = vsel %vm3468, %v3561, %v3562
  %v3564 = vrot.slane %v3562, 4
  %v3565 = vrot.slane %v1569, 5
  %v3566 = vsel %vm3468, %v3564, %v3565
  %v3567 = vrot.slane %v1570, 5
  %v3568 = vrot.slane %v3567, 4
  %v3569 = vrot.slane %v1571, 5
  %v3570 = vsel %vm3468, %v3568, %v3569
  %v3571 = vrot.slane %v3569, 4
  %v3572 = vrot.slane %v1572, 5
  %v3573 = vsel %vm3468, %v3571, %v3572
  %v3574 = vrot.slane %v1573, 5
  %v3575 = vrot.slane %v3574, 4
  %v3576 = vrot.slane %v1574, 5
  %v3577 = vsel %vm3468, %v3575, %v3576
  %v3578 = vrot.slane %v3576, 4
  %v3579 = vrot.slane %v1575, 5
  %v3580 = vsel %vm3468, %v3578, %v3579
  %v3581 = vrot.slane %v1582, 5
  %v3582 = vrot.slane %v3581, 4
  %v3583 = vrot.slane %v1583, 5
  %v3584 = vsel %vm3468, %v3582, %v3583
  %v3585 = vrot.slane %v3583, 4
  %v3586 = vrot.slane %v1584, 5
  %v3587 = vsel %vm3468, %v3585, %v3586
  %v3588 = vrot.slane %v1585, 5
  %v3589 = vrot.slane %v3588, 4
  %v3590 = vrot.slane %v1586, 5
  %v3591 = vsel %vm3468, %v3589, %v3590
  %v3592 = vrot.slane %v3590, 4
  %v3593 = vrot.slane %v1587, 5
  %v3594 = vsel %vm3468, %v3592, %v3593
  %v3595 = vrot.slane %v1588, 5
  %v3596 = vrot.slane %v3595, 4
  %v3597 = vrot.slane %v1589, 5
  %v3598 = vsel %vm3468, %v3596, %v3597
  %v3599 = vrot.slane %v3597, 4
  %v3600 = vrot.slane %v1590, 5
  %v3601 = vsel %vm3468, %v3599, %v3600
  %v3602 = vrot.slane %v1591, 5
  %v3603 = vrot.slane %v3602, 4
  %v3604 = vrot.slane %v1592, 5
  %v3605 = vsel %vm3468, %v3603, %v3604
  %v3606 = vrot.slane %v3604, 4
  %v3607 = vrot.slane %v1593, 5
  %v3608 = vsel %vm3468, %v3606, %v3607
  %v3609 = vrot.slane %v1594, 5
  %v3610 = vrot.slane %v3609, 4
  %v3611 = vrot.slane %v1595, 5
  %v3612 = vsel %vm3468, %v3610, %v3611
  %v3613 = vrot.slane %v3611, 4
  %v3614 = vrot.slane %v1596, 5
  %v3615 = vsel %vm3468, %v3613, %v3614
  %v3616 = vrot.slane %v1597, 5
  %v3617 = vrot.slane %v3616, 4
  %v3618 = vrot.slane %v1598, 5
  %v3619 = vsel %vm3468, %v3617, %v3618
  %v3620 = vrot.slane %v3618, 4
  %v3621 = vrot.slane %v1599, 5
  %v3622 = vsel %vm3468, %v3620, %v3621
  %v3623 = vrot.slane %v1600, 5
  %v3624 = vrot.slane %v3623, 4
  %v3625 = vrot.slane %v1601, 5
  %v3626 = vsel %vm3468, %v3624, %v3625
  %v3627 = vrot.slane %v3625, 4
  %v3628 = vrot.slane %v1602, 5
  %v3629 = vsel %vm3468, %v3627, %v3628
  %v3630 = vrot.slane %v1603, 5
  %v3631 = vrot.slane %v3630, 4
  %v3632 = vrot.slane %v1604, 5
  %v3633 = vsel %vm3468, %v3631, %v3632
  %v3634 = vrot.slane %v3632, 4
  %v3635 = vrot.slane %v1605, 5
  %v3636 = vsel %vm3468, %v3634, %v3635
  %v3637 = vrot.slane %v1606, 5
  %v3638 = vrot.slane %v3637, 4
  %v3639 = vrot.slane %v1607, 5
  %v3640 = vsel %vm3468, %v3638, %v3639
  %v3641 = vrot.slane %v3639, 4
  %v3642 = vrot.slane %v1608, 5
  %v3643 = vsel %vm3468, %v3641, %v3642
  %v3644 = vrot.slane %v1609, 5
  %v3645 = vrot.slane %v3644, 4
  %v3646 = vrot.slane %v1610, 5
  %v3647 = vsel %vm3468, %v3645, %v3646
  %v3648 = vrot.slane %v3646, 4
  %v3649 = vrot.slane %v1611, 5
  %v3650 = vsel %vm3468, %v3648, %v3649
  %v3651 = vrot.slane %v1612, 5
  %v3652 = vrot.slane %v3651, 4
  %v3653 = vrot.slane %v1613, 5
  %v3654 = vsel %vm3468, %v3652, %v3653
  %v3655 = vrot.slane %v3653, 4
  %v3656 = vrot.slane %v1614, 5
  %v3657 = vsel %vm3468, %v3655, %v3656
  %v3658 = vrot.slane %v1615, 5
  %v3659 = vrot.slane %v3658, 4
  %v3660 = vrot.slane %v1616, 5
  %v3661 = vsel %vm3468, %v3659, %v3660
  %v3662 = vrot.slane %v3660, 4
  %v3663 = vrot.slane %v1617, 5
  %v3664 = vsel %vm3468, %v3662, %v3663
  %v3665 = vrot.slane %v1618, 5
  %v3666 = vrot.slane %v3665, 4
  %v3667 = vrot.slane %v1619, 5
  %v3668 = vsel %vm3468, %v3666, %v3667
  %v3669 = vrot.slane %v3667, 4
  %v3670 = vrot.slane %v1620, 5
  %v3671 = vsel %vm3468, %v3669, %v3670
  %v3672 = vrot.slane %v1621, 5
  %v3673 = vrot.slane %v3672, 4
  %v3674 = vrot.slane %v1622, 5
  %v3675 = vsel %vm3468, %v3673, %v3674
  %v3676 = vrot.slane %v3674, 4
  %v3677 = vrot.slane %v1623, 5
  %v3678 = vsel %vm3468, %v3676, %v3677
  %v3679 = vrot.slane %v1624, 5
  %v3680 = vrot.slane %v3679, 4
  %v3681 = vrot.slane %v1625, 5
  %v3682 = vsel %vm3468, %v3680, %v3681
  %v3683 = vrot.slane %v3681, 4
  %v3684 = vrot.slane %v1626, 5
  %v3685 = vsel %vm3468, %v3683, %v3684
  %v3686 = vrot.slane %v1627, 5
  %v3687 = vrot.slane %v3686, 4
  %v3688 = vrot.slane %v1628, 5
  %v3689 = vsel %vm3468, %v3687, %v3688
  %v3690 = vrot.slane %v3688, 4
  %v3691 = vrot.slane %v1629, 5
  %v3692 = vsel %vm3468, %v3690, %v3691
  %s3693 = scalar_lea.vmem %s3, 128
  %v3694 = vld [vmem:[%s3693] sm:$0xf]
  %v3695 = vld [vmem:[%s3693 + $0x4] sm:$0xf]
  %v3696 = vld [vmem:[%s3693 + $0x8] sm:$0xf]
  %v3697 = vld [vmem:[%s3693 + $0xc] sm:$0xf]
  %v3698 = vld [vmem:[%s3693 + $0x10] sm:$0xf]
  %v3699 = vld [vmem:[%s3693 + $0x14] sm:$0xf]
  %v3700 = vld [vmem:[%s3693 + $0x18] sm:$0xf]
  %v3701 = vld [vmem:[%s3693 + $0x1c] sm:$0xf]
  %v3702 = vld [vmem:[%s3693 + $0x20] sm:$0xf]
  %v3703 = vld [vmem:[%s3693 + $0x24] sm:$0xf]
  %v3704 = vld [vmem:[%s3693 + $0x28] sm:$0xf]
  %v3705 = vld [vmem:[%s3693 + $0x2c] sm:$0xf]
  %v3706 = vld [vmem:[%s3693 + $0x30] sm:$0xf]
  %v3707 = vld [vmem:[%s3693 + $0x34] sm:$0xf]
  %v3708 = vld [vmem:[%s3693 + $0x38] sm:$0xf]
  %v3709 = vld [vmem:[%s3693 + $0x3c] sm:$0xf]
  %v3710 = vunpack.c.l.b16 %v3472
  %v3711 = vunpack.c.l.b16 %v3475
  %v3712 = vunpack.c.l.b16 %v3479
  %v3713 = vunpack.c.l.b16 %v3482
  %v3714 = vunpack.c.l.b16 %v3486
  %v3715 = vunpack.c.l.b16 %v3489
  %v3716 = vunpack.c.l.b16 %v3493
  %v3717 = vunpack.c.l.b16 %v3496
  %v3718 = vunpack.c.l.b16 %v3500
  %v3719 = vunpack.c.l.b16 %v3503
  %v3720 = vunpack.c.l.b16 %v3507
  %v3721 = vunpack.c.l.b16 %v3510
  %v3722 = vunpack.c.l.b16 %v3514
  %v3723 = vunpack.c.l.b16 %v3517
  %v3724 = vunpack.c.l.b16 %v3521
  %v3725 = vunpack.c.l.b16 %v3524
  %v3726 = vunpack.c.l.b16 %v3528
  %v3727 = vunpack.c.l.b16 %v3531
  %v3728 = vunpack.c.l.b16 %v3535
  %v3729 = vunpack.c.l.b16 %v3538
  %v3730 = vunpack.c.l.b16 %v3542
  %v3731 = vunpack.c.l.b16 %v3545
  %v3732 = vunpack.c.l.b16 %v3549
  %v3733 = vunpack.c.l.b16 %v3552
  %v3734 = vunpack.c.l.b16 %v3556
  %v3735 = vunpack.c.l.b16 %v3559
  %v3736 = vunpack.c.l.b16 %v3563
  %v3737 = vunpack.c.l.b16 %v3566
  %v3738 = vunpack.c.l.b16 %v3570
  %v3739 = vunpack.c.l.b16 %v3573
  %v3740 = vunpack.c.l.b16 %v3577
  %v3741 = vunpack.c.l.b16 %v3580
  %v3742 = vunpack.c.l.b16 %v3584
  %v3743 = vunpack.c.l.b16 %v3587
  %v3744 = vunpack.c.l.b16 %v3591
  %v3745 = vunpack.c.l.b16 %v3594
  %v3746 = vunpack.c.l.b16 %v3598
  %v3747 = vunpack.c.l.b16 %v3601
  %v3748 = vunpack.c.l.b16 %v3605
  %v3749 = vunpack.c.l.b16 %v3608
  %v3750 = vunpack.c.l.b16 %v3612
  %v3751 = vunpack.c.l.b16 %v3615
  %v3752 = vunpack.c.l.b16 %v3619
  %v3753 = vunpack.c.l.b16 %v3622
  %v3754 = vunpack.c.l.b16 %v3626
  %v3755 = vunpack.c.l.b16 %v3629
  %v3756 = vunpack.c.l.b16 %v3633
  %v3757 = vunpack.c.l.b16 %v3636
  %v3758 = vunpack.c.l.b16 %v3640
  %v3759 = vunpack.c.l.b16 %v3643
  %v3760 = vunpack.c.l.b16 %v3647
  %v3761 = vunpack.c.l.b16 %v3650
  %v3762 = vunpack.c.l.b16 %v3654
  %v3763 = vunpack.c.l.b16 %v3657
  %v3764 = vunpack.c.l.b16 %v3661
  %v3765 = vunpack.c.l.b16 %v3664
  %v3766 = vunpack.c.l.b16 %v3668
  %v3767 = vunpack.c.l.b16 %v3671
  %v3768 = vunpack.c.l.b16 %v3675
  %v3769 = vunpack.c.l.b16 %v3678
  %v3770 = vunpack.c.l.b16 %v3682
  %v3771 = vunpack.c.l.b16 %v3685
  %v3772 = vunpack.c.l.b16 %v3689
  %v3773 = vunpack.c.l.b16 %v3692
  %v3774 = vpack.c.b16 %v3711, %v3710
  %v3775 = vpack.c.b16 %v3713, %v3712
  %v3776 = vpack.c.b16 %v3715, %v3714
  %v3777 = vpack.c.b16 %v3717, %v3716
  %v3778 = vpack.c.b16 %v3719, %v3718
  %v3779 = vpack.c.b16 %v3721, %v3720
  %v3780 = vpack.c.b16 %v3723, %v3722
  %v3781 = vpack.c.b16 %v3725, %v3724
  %v3782 = vpack.c.b16 %v3727, %v3726
  %v3783 = vpack.c.b16 %v3729, %v3728
  %v3784 = vpack.c.b16 %v3731, %v3730
  %v3785 = vpack.c.b16 %v3733, %v3732
  %v3786 = vpack.c.b16 %v3735, %v3734
  %v3787 = vpack.c.b16 %v3737, %v3736
  %v3788 = vpack.c.b16 %v3739, %v3738
  %v3789 = vpack.c.b16 %v3741, %v3740
  %v3790 = vpack.c.b16 %v3743, %v3742
  %v3791 = vpack.c.b16 %v3745, %v3744
  %v3792 = vpack.c.b16 %v3747, %v3746
  %v3793 = vpack.c.b16 %v3749, %v3748
  %v3794 = vpack.c.b16 %v3751, %v3750
  %v3795 = vpack.c.b16 %v3753, %v3752
  %v3796 = vpack.c.b16 %v3755, %v3754
  %v3797 = vpack.c.b16 %v3757, %v3756
  %v3798 = vpack.c.b16 %v3759, %v3758
  %v3799 = vpack.c.b16 %v3761, %v3760
  %v3800 = vpack.c.b16 %v3763, %v3762
  %v3801 = vpack.c.b16 %v3765, %v3764
  %v3802 = vpack.c.b16 %v3767, %v3766
  %v3803 = vpack.c.b16 %v3769, %v3768
  %v3804 = vpack.c.b16 %v3771, %v3770
  %v3805 = vpack.c.b16 %v3773, %v3772
  %v3854 = vunpack.c.l.b16 %v3694
  %v3855 = vunpack.c.l.b16 %v3695
  %v3856 = vunpack.c.l.b16 %v3696
  %v3857 = vunpack.c.l.b16 %v3697
  %v3858 = vunpack.c.l.b16 %v3698
  %v3859 = vunpack.c.l.b16 %v3699
  %v3860 = vunpack.c.l.b16 %v3700
  %v3861 = vunpack.c.l.b16 %v3701
  %v3862 = vunpack.c.l.b16 %v3702
  %v3863 = vunpack.c.l.b16 %v3703
  %v3864 = vunpack.c.l.b16 %v3704
  %v3865 = vunpack.c.l.b16 %v3705
  %v3866 = vunpack.c.l.b16 %v3706
  %v3867 = vunpack.c.l.b16 %v3707
  %v3868 = vunpack.c.l.b16 %v3708
  %v3869 = vunpack.c.l.b16 %v3709
  %v3870 = vpack.c.b16 %v3855, %v3854
  %v3871 = vpack.c.b16 %v3857, %v3856
  %v3872 = vpack.c.b16 %v3859, %v3858
  %v3873 = vpack.c.b16 %v3861, %v3860
  %v3874 = vpack.c.b16 %v3863, %v3862
  %v3875 = vpack.c.b16 %v3865, %v3864
  %v3876 = vpack.c.b16 %v3867, %v3866
  %v3877 = vpack.c.b16 %v3869, %v3868
  %3886 = vmatprep.subr.bf16.mxu0 0
  %3887 = vmatpush1.bf16.msra.mxu0 %v3877
  %3888 = vmatprep.subr.bf16.mxu0 0
  %3889 = vmatpush1.bf16.msra.mxu0 %v3876
  %3890 = vmatprep.subr.bf16.mxu0 0
  %3891 = vmatpush1.bf16.msra.mxu0 %v3875
  %3892 = vmatprep.subr.bf16.mxu0 0
  %3893 = vmatpush1.bf16.msra.mxu0 %v3874
  %3894 = vmatprep.subr.bf16.mxu0 0
  %3895 = vmatpush1.bf16.msra.mxu0 %v3873
  %3896 = vmatprep.subr.bf16.mxu0 0
  %3897 = vmatpush1.bf16.msra.mxu0 %v3872
  %3898 = vmatprep.subr.bf16.mxu0 0
  %3899 = vmatpush1.bf16.msra.mxu0 %v3871
  %3900 = vmatprep.subr.bf16.mxu0 0
  %3901 = vmatpush1.bf16.msra.mxu0 %v3870
  %3902 = vmatprep.subr.bf16.mxu0 0
  %3903 = vmatpush2.bf16.msra.mxu0 0
  %3904 = vmatprep.subr.bf16.mxu0 0
  %3905 = vmatpush2.bf16.msra.mxu0 0
  %3906 = vmatprep.subr.bf16.mxu0 0
  %3907 = vmatpush2.bf16.msra.mxu0 0
  %3908 = vmatprep.subr.bf16.mxu0 0
  %3909 = vmatpush2.bf16.msra.mxu0 0
  %3910 = vmatprep.subr.bf16.mxu0 0
  %3911 = vmatpush2.bf16.msra.mxu0 0
  %3912 = vmatprep.subr.bf16.mxu0 0
  %3913 = vmatpush2.bf16.msra.mxu0 0
  %3914 = vmatprep.subr.bf16.mxu0 0
  %3915 = vmatpush2.bf16.msra.mxu0 0
  %3916 = vmatprep.subr.bf16.mxu0 0
  %3917 = vmatpush2.bf16.msra.mxu0 0
  %3918 = vmatprep.mubr.bf16.mxu0 0
  %3919 = vmatmul.mubr.bf16.gmra.mxu0 %v3774
  %v3920 = vpop.f32.mrf.mxu0
  %v3921 = vadd.f32 0.0, %v3920
  %v3922 = vpop.f32.mrf.mxu0
  %v3923 = vpop.f32.mrf.mxu0
  %v3924 = vadd.f32 0.0, %v3923
  %v3925 = vpop.f32.mrf.mxu0
  %3926 = vmatprep.mubr.bf16.mxu0 0
  %3927 = vmatmul.mubr.bf16.gmra.mxu0 %v3775
  %v3928 = vpop.f32.mrf.mxu0
  %v3929 = vadd.f32 0.0, %v3928
  %v3930 = vpop.f32.mrf.mxu0
  %v3931 = vpop.f32.mrf.mxu0
  %v3932 = vadd.f32 0.0, %v3931
  %v3933 = vpop.f32.mrf.mxu0
  %3934 = vmatprep.mubr.bf16.mxu0 0
  %3935 = vmatmul.mubr.bf16.gmra.mxu0 %v3776
  %v3936 = vpop.f32.mrf.mxu0
  %v3937 = vadd.f32 0.0, %v3936
  %v3938 = vpop.f32.mrf.mxu0
  %v3939 = vpop.f32.mrf.mxu0
  %v3940 = vadd.f32 0.0, %v3939
  %v3941 = vpop.f32.mrf.mxu0
  %3942 = vmatprep.mubr.bf16.mxu0 0
  %3943 = vmatmul.mubr.bf16.gmra.mxu0 %v3777
  %v3944 = vpop.f32.mrf.mxu0
  %v3945 = vadd.f32 0.0, %v3944
  %v3946 = vpop.f32.mrf.mxu0
  %v3947 = vpop.f32.mrf.mxu0
  %v3948 = vadd.f32 0.0, %v3947
  %v3949 = vpop.f32.mrf.mxu0
  %3950 = vmatprep.mubr.bf16.mxu0 0
  %3951 = vmatmul.mubr.bf16.gmra.mxu0 %v3778
  %v3952 = vpop.f32.mrf.mxu0
  %v3953 = vadd.f32 0.0, %v3952
  %v3954 = vpop.f32.mrf.mxu0
  %v3955 = vpop.f32.mrf.mxu0
  %v3956 = vadd.f32 0.0, %v3955
  %v3957 = vpop.f32.mrf.mxu0
  %3958 = vmatprep.mubr.bf16.mxu0 0
  %3959 = vmatmul.mubr.bf16.gmra.mxu0 %v3779
  %v3960 = vpop.f32.mrf.mxu0
  %v3961 = vadd.f32 0.0, %v3960
  %v3962 = vpop.f32.mrf.mxu0
  %v3963 = vpop.f32.mrf.mxu0
  %v3964 = vadd.f32 0.0, %v3963
  %v3965 = vpop.f32.mrf.mxu0
  %3966 = vmatprep.mubr.bf16.mxu0 0
  %3967 = vmatmul.mubr.bf16.gmra.mxu0 %v3780
  %v3968 = vpop.f32.mrf.mxu0
  %v3969 = vadd.f32 0.0, %v3968
  %v3970 = vpop.f32.mrf.mxu0
  %v3971 = vpop.f32.mrf.mxu0
  %v3972 = vadd.f32 0.0, %v3971
  %v3973 = vpop.f32.mrf.mxu0
  %3974 = vmatprep.mubr.bf16.mxu0 0
  %3975 = vmatmul.mubr.bf16.gmra.mxu0 %v3781
  %v3976 = vpop.f32.mrf.mxu0
  %v3977 = vadd.f32 0.0, %v3976
  %v3978 = vpop.f32.mrf.mxu0
  %v3979 = vpop.f32.mrf.mxu0
  %v3980 = vadd.f32 0.0, %v3979
  %v3981 = vpop.f32.mrf.mxu0
  %3982 = vmatprep.mubr.bf16.mxu0 0
  %3983 = vmatmul.mubr.bf16.gmra.mxu0 %v3782
  %v3984 = vpop.f32.mrf.mxu0
  %v3985 = vadd.f32 0.0, %v3984
  %v3986 = vpop.f32.mrf.mxu0
  %v3987 = vpop.f32.mrf.mxu0
  %v3988 = vadd.f32 0.0, %v3987
  %v3989 = vpop.f32.mrf.mxu0
  %3990 = vmatprep.mubr.bf16.mxu0 0
  %3991 = vmatmul.mubr.bf16.gmra.mxu0 %v3783
  %v3992 = vpop.f32.mrf.mxu0
  %v3993 = vadd.f32 0.0, %v3992
  %v3994 = vpop.f32.mrf.mxu0
  %v3995 = vpop.f32.mrf.mxu0
  %v3996 = vadd.f32 0.0, %v3995
  %v3997 = vpop.f32.mrf.mxu0
  %3998 = vmatprep.mubr.bf16.mxu0 0
  %3999 = vmatmul.mubr.bf16.gmra.mxu0 %v3784
  %v4000 = vpop.f32.mrf.mxu0
  %v4001 = vadd.f32 0.0, %v4000
  %v4002 = vpop.f32.mrf.mxu0
  %v4003 = vpop.f32.mrf.mxu0
  %v4004 = vadd.f32 0.0, %v4003
  %v4005 = vpop.f32.mrf.mxu0
  %4006 = vmatprep.mubr.bf16.mxu0 0
  %4007 = vmatmul.mubr.bf16.gmra.mxu0 %v3785
  %v4008 = vpop.f32.mrf.mxu0
  %v4009 = vadd.f32 0.0, %v4008
  %v4010 = vpop.f32.mrf.mxu0
  %v4011 = vpop.f32.mrf.mxu0
  %v4012 = vadd.f32 0.0, %v4011
  %v4013 = vpop.f32.mrf.mxu0
  %4014 = vmatprep.mubr.bf16.mxu0 0
  %4015 = vmatmul.mubr.bf16.gmra.mxu0 %v3786
  %v4016 = vpop.f32.mrf.mxu0
  %v4017 = vadd.f32 0.0, %v4016
  %v4018 = vpop.f32.mrf.mxu0
  %v4019 = vpop.f32.mrf.mxu0
  %v4020 = vadd.f32 0.0, %v4019
  %v4021 = vpop.f32.mrf.mxu0
  %4022 = vmatprep.mubr.bf16.mxu0 0
  %4023 = vmatmul.mubr.bf16.gmra.mxu0 %v3787
  %v4024 = vpop.f32.mrf.mxu0
  %v4025 = vadd.f32 0.0, %v4024
  %v4026 = vpop.f32.mrf.mxu0
  %v4027 = vpop.f32.mrf.mxu0
  %v4028 = vadd.f32 0.0, %v4027
  %v4029 = vpop.f32.mrf.mxu0
  %4030 = vmatprep.mubr.bf16.mxu0 0
  %4031 = vmatmul.mubr.bf16.gmra.mxu0 %v3788
  %v4032 = vpop.f32.mrf.mxu0
  %v4033 = vadd.f32 0.0, %v4032
  %v4034 = vpop.f32.mrf.mxu0
  %v4035 = vpop.f32.mrf.mxu0
  %v4036 = vadd.f32 0.0, %v4035
  %v4037 = vpop.f32.mrf.mxu0
  %4038 = vmatprep.mubr.bf16.mxu0 0
  %4039 = vmatmul.mubr.bf16.gmra.mxu0 %v3789
  %v4040 = vpop.f32.mrf.mxu0
  %v4041 = vadd.f32 0.0, %v4040
  %v4042 = vpop.f32.mrf.mxu0
  %v4043 = vpop.f32.mrf.mxu0
  %v4044 = vadd.f32 0.0, %v4043
  %v4045 = vpop.f32.mrf.mxu0
  %4046 = vmatprep.mubr.bf16.mxu0 0
  %4047 = vmatmul.mubr.bf16.gmra.mxu0 %v3790
  %v4048 = vpop.f32.mrf.mxu0
  %v4049 = vadd.f32 0.0, %v4048
  %v4050 = vpop.f32.mrf.mxu0
  %v4051 = vpop.f32.mrf.mxu0
  %v4052 = vadd.f32 0.0, %v4051
  %v4053 = vpop.f32.mrf.mxu0
  %4054 = vmatprep.mubr.bf16.mxu0 0
  %4055 = vmatmul.mubr.bf16.gmra.mxu0 %v3791
  %v4056 = vpop.f32.mrf.mxu0
  %v4057 = vadd.f32 0.0, %v4056
  %v4058 = vpop.f32.mrf.mxu0
  %v4059 = vpop.f32.mrf.mxu0
  %v4060 = vadd.f32 0.0, %v4059
  %v4061 = vpop.f32.mrf.mxu0
  %4062 = vmatprep.mubr.bf16.mxu0 0
  %4063 = vmatmul.mubr.bf16.gmra.mxu0 %v3792
  %v4064 = vpop.f32.mrf.mxu0
  %v4065 = vadd.f32 0.0, %v4064
  %v4066 = vpop.f32.mrf.mxu0
  %v4067 = vpop.f32.mrf.mxu0
  %v4068 = vadd.f32 0.0, %v4067
  %v4069 = vpop.f32.mrf.mxu0
  %4070 = vmatprep.mubr.bf16.mxu0 0
  %4071 = vmatmul.mubr.bf16.gmra.mxu0 %v3793
  %v4072 = vpop.f32.mrf.mxu0
  %v4073 = vadd.f32 0.0, %v4072
  %v4074 = vpop.f32.mrf.mxu0
  %v4075 = vpop.f32.mrf.mxu0
  %v4076 = vadd.f32 0.0, %v4075
  %v4077 = vpop.f32.mrf.mxu0
  %4078 = vmatprep.mubr.bf16.mxu0 0
  %4079 = vmatmul.mubr.bf16.gmra.mxu0 %v3794
  %v4080 = vpop.f32.mrf.mxu0
  %v4081 = vadd.f32 0.0, %v4080
  %v4082 = vpop.f32.mrf.mxu0
  %v4083 = vpop.f32.mrf.mxu0
  %v4084 = vadd.f32 0.0, %v4083
  %v4085 = vpop.f32.mrf.mxu0
  %4086 = vmatprep.mubr.bf16.mxu0 0
  %4087 = vmatmul.mubr.bf16.gmra.mxu0 %v3795
  %v4088 = vpop.f32.mrf.mxu0
  %v4089 = vadd.f32 0.0, %v4088
  %v4090 = vpop.f32.mrf.mxu0
  %v4091 = vpop.f32.mrf.mxu0
  %v4092 = vadd.f32 0.0, %v4091
  %v4093 = vpop.f32.mrf.mxu0
  %4094 = vmatprep.mubr.bf16.mxu0 0
  %4095 = vmatmul.mubr.bf16.gmra.mxu0 %v3796
  %v4096 = vpop.f32.mrf.mxu0
  %v4097 = vadd.f32 0.0, %v4096
  %v4098 = vpop.f32.mrf.mxu0
  %v4099 = vpop.f32.mrf.mxu0
  %v4100 = vadd.f32 0.0, %v4099
  %v4101 = vpop.f32.mrf.mxu0
  %4102 = vmatprep.mubr.bf16.mxu0 0
  %4103 = vmatmul.mubr.bf16.gmra.mxu0 %v3797
  %v4104 = vpop.f32.mrf.mxu0
  %v4105 = vadd.f32 0.0, %v4104
  %v4106 = vpop.f32.mrf.mxu0
  %v4107 = vpop.f32.mrf.mxu0
  %v4108 = vadd.f32 0.0, %v4107
  %v4109 = vpop.f32.mrf.mxu0
  %4110 = vmatprep.mubr.bf16.mxu0 0
  %4111 = vmatmul.mubr.bf16.gmra.mxu0 %v3798
  %v4112 = vpop.f32.mrf.mxu0
  %v4113 = vadd.f32 0.0, %v4112
  %v4114 = vpop.f32.mrf.mxu0
  %v4115 = vpop.f32.mrf.mxu0
  %v4116 = vadd.f32 0.0, %v4115
  %v4117 = vpop.f32.mrf.mxu0
  %4118 = vmatprep.mubr.bf16.mxu0 0
  %4119 = vmatmul.mubr.bf16.gmra.mxu0 %v3799
  %v4120 = vpop.f32.mrf.mxu0
  %v4121 = vadd.f32 0.0, %v4120
  %v4122 = vpop.f32.mrf.mxu0
  %v4123 = vpop.f32.mrf.mxu0
  %v4124 = vadd.f32 0.0, %v4123
  %v4125 = vpop.f32.mrf.mxu0
  %4126 = vmatprep.mubr.bf16.mxu0 0
  %4127 = vmatmul.mubr.bf16.gmra.mxu0 %v3800
  %v4128 = vpop.f32.mrf.mxu0
  %v4129 = vadd.f32 0.0, %v4128
  %v4130 = vpop.f32.mrf.mxu0
  %v4131 = vpop.f32.mrf.mxu0
  %v4132 = vadd.f32 0.0, %v4131
  %v4133 = vpop.f32.mrf.mxu0
  %4134 = vmatprep.mubr.bf16.mxu0 0
  %4135 = vmatmul.mubr.bf16.gmra.mxu0 %v3801
  %v4136 = vpop.f32.mrf.mxu0
  %v4137 = vadd.f32 0.0, %v4136
  %v4138 = vpop.f32.mrf.mxu0
  %v4139 = vpop.f32.mrf.mxu0
  %v4140 = vadd.f32 0.0, %v4139
  %v4141 = vpop.f32.mrf.mxu0
  %4142 = vmatprep.mubr.bf16.mxu0 0
  %4143 = vmatmul.mubr.bf16.gmra.mxu0 %v3802
  %v4144 = vpop.f32.mrf.mxu0
  %v4145 = vadd.f32 0.0, %v4144
  %v4146 = vpop.f32.mrf.mxu0
  %v4147 = vpop.f32.mrf.mxu0
  %v4148 = vadd.f32 0.0, %v4147
  %v4149 = vpop.f32.mrf.mxu0
  %4150 = vmatprep.mubr.bf16.mxu0 0
  %4151 = vmatmul.mubr.bf16.gmra.mxu0 %v3803
  %v4152 = vpop.f32.mrf.mxu0
  %v4153 = vadd.f32 0.0, %v4152
  %v4154 = vpop.f32.mrf.mxu0
  %v4155 = vpop.f32.mrf.mxu0
  %v4156 = vadd.f32 0.0, %v4155
  %v4157 = vpop.f32.mrf.mxu0
  %4158 = vmatprep.mubr.bf16.mxu0 0
  %4159 = vmatmul.mubr.bf16.gmra.mxu0 %v3804
  %v4160 = vpop.f32.mrf.mxu0
  %v4161 = vadd.f32 0.0, %v4160
  %v4162 = vpop.f32.mrf.mxu0
  %v4163 = vpop.f32.mrf.mxu0
  %v4164 = vadd.f32 0.0, %v4163
  %v4165 = vpop.f32.mrf.mxu0
  %4166 = vmatprep.mubr.bf16.mxu0 0
  %4167 = vmatmul.mubr.bf16.gmra.mxu0 %v3805
  %v4168 = vpop.f32.mrf.mxu0
  %v4169 = vadd.f32 0.0, %v4168
  %v4170 = vpop.f32.mrf.mxu0
  %v4171 = vpop.f32.mrf.mxu0
  %v4172 = vadd.f32 0.0, %v4171
  %v4173 = vpop.f32.mrf.mxu0
  %4174 = vdwg.mxu0
  %v4175 = vadd.f32 %v3180, %v3921
  %v4176 = vadd.f32 %v3183, %v3924
  %v4177 = vadd.f32 %v3188, %v3929
  %v4178 = vadd.f32 %v3191, %v3932
  %v4179 = vadd.f32 %v3196, %v3937
  %v4180 = vadd.f32 %v3199, %v3940
  %v4181 = vadd.f32 %v3204, %v3945
  %v4182 = vadd.f32 %v3207, %v3948
  %v4183 = vadd.f32 %v3212, %v3953
  %v4184 = vadd.f32 %v3215, %v3956
  %v4185 = vadd.f32 %v3220, %v3961
  %v4186 = vadd.f32 %v3223, %v3964
  %v4187 = vadd.f32 %v3228, %v3969
  %v4188 = vadd.f32 %v3231, %v3972
  %v4189 = vadd.f32 %v3236, %v3977
  %v4190 = vadd.f32 %v3239, %v3980
  %v4191 = vadd.f32 %v3244, %v3985
  %v4192 = vadd.f32 %v3247, %v3988
  %v4193 = vadd.f32 %v3252, %v3993
  %v4194 = vadd.f32 %v3255, %v3996
  %v4195 = vadd.f32 %v3260, %v4001
  %v4196 = vadd.f32 %v3263, %v4004
  %v4197 = vadd.f32 %v3268, %v4009
  %v4198 = vadd.f32 %v3271, %v4012
  %v4199 = vadd.f32 %v3276, %v4017
  %v4200 = vadd.f32 %v3279, %v4020
  %v4201 = vadd.f32 %v3284, %v4025
  %v4202 = vadd.f32 %v3287, %v4028
  %v4203 = vadd.f32 %v3292, %v4033
  %v4204 = vadd.f32 %v3295, %v4036
  %v4205 = vadd.f32 %v3300, %v4041
  %v4206 = vadd.f32 %v3303, %v4044
  %v4207 = vadd.f32 %v3308, %v4049
  %v4208 = vadd.f32 %v3311, %v4052
  %v4209 = vadd.f32 %v3316, %v4057
  %v4210 = vadd.f32 %v3319, %v4060
  %v4211 = vadd.f32 %v3324, %v4065
  %v4212 = vadd.f32 %v3327, %v4068
  %v4213 = vadd.f32 %v3332, %v4073
  %v4214 = vadd.f32 %v3335, %v4076
  %v4215 = vadd.f32 %v3340, %v4081
  %v4216 = vadd.f32 %v3343, %v4084
  %v4217 = vadd.f32 %v3348, %v4089
  %v4218 = vadd.f32 %v3351, %v4092
  %v4219 = vadd.f32 %v3356, %v4097
  %v4220 = vadd.f32 %v3359, %v4100
  %v4221 = vadd.f32 %v3364, %v4105
  %v4222 = vadd.f32 %v3367, %v4108
  %v4223 = vadd.f32 %v3372, %v4113
  %v4224 = vadd.f32 %v3375, %v4116
  %v4225 = vadd.f32 %v3380, %v4121
  %v4226 = vadd.f32 %v3383, %v4124
  %v4227 = vadd.f32 %v3388, %v4129
  %v4228 = vadd.f32 %v3391, %v4132
  %v4229 = vadd.f32 %v3396, %v4137
  %v4230 = vadd.f32 %v3399, %v4140
  %v4231 = vadd.f32 %v3404, %v4145
  %v4232 = vadd.f32 %v3407, %v4148
  %v4233 = vadd.f32 %v3412, %v4153
  %v4234 = vadd.f32 %v3415, %v4156
  %v4235 = vadd.f32 %v3420, %v4161
  %v4236 = vadd.f32 %v3423, %v4164
  %v4237 = vadd.f32 %v3428, %v4169
  %v4238 = vadd.f32 %v3431, %v4172
  %s4239 = scalar_lea.vmem %s3, 192
  %v4240 = vld [vmem:[%s4239] sm:$0xf]
  %v4241 = vld [vmem:[%s4239 + $0x4] sm:$0xf]
  %v4242 = vld [vmem:[%s4239 + $0x8] sm:$0xf]
  %v4243 = vld [vmem:[%s4239 + $0xc] sm:$0xf]
  %v4244 = vld [vmem:[%s4239 + $0x10] sm:$0xf]
  %v4245 = vld [vmem:[%s4239 + $0x14] sm:$0xf]
  %v4246 = vld [vmem:[%s4239 + $0x18] sm:$0xf]
  %v4247 = vld [vmem:[%s4239 + $0x1c] sm:$0xf]
  %v4248 = vld [vmem:[%s4239 + $0x20] sm:$0xf]
  %v4249 = vld [vmem:[%s4239 + $0x24] sm:$0xf]
  %v4250 = vld [vmem:[%s4239 + $0x28] sm:$0xf]
  %v4251 = vld [vmem:[%s4239 + $0x2c] sm:$0xf]
  %v4252 = vld [vmem:[%s4239 + $0x30] sm:$0xf]
  %v4253 = vld [vmem:[%s4239 + $0x34] sm:$0xf]
  %v4254 = vld [vmem:[%s4239 + $0x38] sm:$0xf]
  %v4255 = vld [vmem:[%s4239 + $0x3c] sm:$0xf]
  %v4260 = vunpack.c.l.b16 %v1576
  %v4261 = vunpack.c.l.b16 %v1577
  %v4262 = vunpack.c.l.b16 %v1630
  %v4263 = vunpack.c.l.b16 %v1631
  %v4264 = vpack.c.b16 %v4261, %v4260
  %v4265 = vpack.c.b16 %v4263, %v4262
  %v4284 = vunpack.c.l.b16 %v4240
  %v4285 = vunpack.c.l.b16 %v4241
  %v4286 = vunpack.c.l.b16 %v4242
  %v4287 = vunpack.c.l.b16 %v4243
  %v4288 = vunpack.c.l.b16 %v4244
  %v4289 = vunpack.c.l.b16 %v4245
  %v4290 = vunpack.c.l.b16 %v4246
  %v4291 = vunpack.c.l.b16 %v4247
  %v4292 = vunpack.c.l.b16 %v4248
  %v4293 = vunpack.c.l.b16 %v4249
  %v4294 = vunpack.c.l.b16 %v4250
  %v4295 = vunpack.c.l.b16 %v4251
  %v4296 = vunpack.c.l.b16 %v4252
  %v4297 = vunpack.c.l.b16 %v4253
  %v4298 = vunpack.c.l.b16 %v4254
  %v4299 = vunpack.c.l.b16 %v4255
  %v4300 = vpack.c.b16 %v4285, %v4284
  %v4301 = vpack.c.b16 %v4287, %v4286
  %v4302 = vpack.c.b16 %v4289, %v4288
  %v4303 = vpack.c.b16 %v4291, %v4290
  %v4304 = vpack.c.b16 %v4293, %v4292
  %v4305 = vpack.c.b16 %v4295, %v4294
  %v4306 = vpack.c.b16 %v4297, %v4296
  %v4307 = vpack.c.b16 %v4299, %v4298
  %4316 = vmatprep.subr.bf16.mxu0 0
  %4317 = vmatpush1.bf16.msra.mxu0 %v4307
  %4318 = vmatprep.subr.bf16.mxu0 0
  %4319 = vmatpush1.bf16.msra.mxu0 %v4306
  %4320 = vmatprep.subr.bf16.mxu0 0
  %4321 = vmatpush1.bf16.msra.mxu0 %v4305
  %4322 = vmatprep.subr.bf16.mxu0 0
  %4323 = vmatpush1.bf16.msra.mxu0 %v4304
  %4324 = vmatprep.subr.bf16.mxu0 0
  %4325 = vmatpush1.bf16.msra.mxu0 %v4303
  %4326 = vmatprep.subr.bf16.mxu0 0
  %4327 = vmatpush1.bf16.msra.mxu0 %v4302
  %4328 = vmatprep.subr.bf16.mxu0 0
  %4329 = vmatpush1.bf16.msra.mxu0 %v4301
  %4330 = vmatprep.subr.bf16.mxu0 0
  %4331 = vmatpush1.bf16.msra.mxu0 %v4300
  %4332 = vmatprep.subr.bf16.mxu0 0
  %4333 = vmatpush2.bf16.msra.mxu0 0
  %4334 = vmatprep.subr.bf16.mxu0 0
  %4335 = vmatpush2.bf16.msra.mxu0 0
  %4336 = vmatprep.subr.bf16.mxu0 0
  %4337 = vmatpush2.bf16.msra.mxu0 0
  %4338 = vmatprep.subr.bf16.mxu0 0
  %4339 = vmatpush2.bf16.msra.mxu0 0
  %4340 = vmatprep.subr.bf16.mxu0 0
  %4341 = vmatpush2.bf16.msra.mxu0 0
  %4342 = vmatprep.subr.bf16.mxu0 0
  %4343 = vmatpush2.bf16.msra.mxu0 0
  %4344 = vmatprep.subr.bf16.mxu0 0
  %4345 = vmatpush2.bf16.msra.mxu0 0
  %4346 = vmatprep.subr.bf16.mxu0 0
  %4347 = vmatpush2.bf16.msra.mxu0 0
  %4348 = vmatprep.mubr.bf16.mxu0 0
  %4349 = vmatmul.mubr.bf16.gmra.mxu0 %v3034
  %v4350 = vpop.f32.mrf.mxu0
  %v4351 = vadd.f32 0.0, %v4350
  %v4352 = vpop.f32.mrf.mxu0
  %v4353 = vpop.f32.mrf.mxu0
  %v4354 = vadd.f32 0.0, %v4353
  %v4355 = vpop.f32.mrf.mxu0
  %4356 = vmatprep.mubr.bf16.mxu0 0
  %4357 = vmatmul.mubr.bf16.gmra.mxu0 %v3035
  %v4358 = vpop.f32.mrf.mxu0
  %v4359 = vadd.f32 0.0, %v4358
  %v4360 = vpop.f32.mrf.mxu0
  %v4361 = vpop.f32.mrf.mxu0
  %v4362 = vadd.f32 0.0, %v4361
  %v4363 = vpop.f32.mrf.mxu0
  %4364 = vmatprep.mubr.bf16.mxu0 0
  %4365 = vmatmul.mubr.bf16.gmra.mxu0 %v3036
  %v4366 = vpop.f32.mrf.mxu0
  %v4367 = vadd.f32 0.0, %v4366
  %v4368 = vpop.f32.mrf.mxu0
  %v4369 = vpop.f32.mrf.mxu0
  %v4370 = vadd.f32 0.0, %v4369
  %v4371 = vpop.f32.mrf.mxu0
  %4372 = vmatprep.mubr.bf16.mxu0 0
  %4373 = vmatmul.mubr.bf16.gmra.mxu0 %v3037
  %v4374 = vpop.f32.mrf.mxu0
  %v4375 = vadd.f32 0.0, %v4374
  %v4376 = vpop.f32.mrf.mxu0
  %v4377 = vpop.f32.mrf.mxu0
  %v4378 = vadd.f32 0.0, %v4377
  %v4379 = vpop.f32.mrf.mxu0
  %4380 = vmatprep.mubr.bf16.mxu0 0
  %4381 = vmatmul.mubr.bf16.gmra.mxu0 %v3038
  %v4382 = vpop.f32.mrf.mxu0
  %v4383 = vadd.f32 0.0, %v4382
  %v4384 = vpop.f32.mrf.mxu0
  %v4385 = vpop.f32.mrf.mxu0
  %v4386 = vadd.f32 0.0, %v4385
  %v4387 = vpop.f32.mrf.mxu0
  %4388 = vmatprep.mubr.bf16.mxu0 0
  %4389 = vmatmul.mubr.bf16.gmra.mxu0 %v3039
  %v4390 = vpop.f32.mrf.mxu0
  %v4391 = vadd.f32 0.0, %v4390
  %v4392 = vpop.f32.mrf.mxu0
  %v4393 = vpop.f32.mrf.mxu0
  %v4394 = vadd.f32 0.0, %v4393
  %v4395 = vpop.f32.mrf.mxu0
  %4396 = vmatprep.mubr.bf16.mxu0 0
  %4397 = vmatmul.mubr.bf16.gmra.mxu0 %v3040
  %v4398 = vpop.f32.mrf.mxu0
  %v4399 = vadd.f32 0.0, %v4398
  %v4400 = vpop.f32.mrf.mxu0
  %v4401 = vpop.f32.mrf.mxu0
  %v4402 = vadd.f32 0.0, %v4401
  %v4403 = vpop.f32.mrf.mxu0
  %4404 = vmatprep.mubr.bf16.mxu0 0
  %4405 = vmatmul.mubr.bf16.gmra.mxu0 %v3041
  %v4406 = vpop.f32.mrf.mxu0
  %v4407 = vadd.f32 0.0, %v4406
  %v4408 = vpop.f32.mrf.mxu0
  %v4409 = vpop.f32.mrf.mxu0
  %v4410 = vadd.f32 0.0, %v4409
  %v4411 = vpop.f32.mrf.mxu0
  %4412 = vmatprep.mubr.bf16.mxu0 0
  %4413 = vmatmul.mubr.bf16.gmra.mxu0 %v3042
  %v4414 = vpop.f32.mrf.mxu0
  %v4415 = vadd.f32 0.0, %v4414
  %v4416 = vpop.f32.mrf.mxu0
  %v4417 = vpop.f32.mrf.mxu0
  %v4418 = vadd.f32 0.0, %v4417
  %v4419 = vpop.f32.mrf.mxu0
  %4420 = vmatprep.mubr.bf16.mxu0 0
  %4421 = vmatmul.mubr.bf16.gmra.mxu0 %v3043
  %v4422 = vpop.f32.mrf.mxu0
  %v4423 = vadd.f32 0.0, %v4422
  %v4424 = vpop.f32.mrf.mxu0
  %v4425 = vpop.f32.mrf.mxu0
  %v4426 = vadd.f32 0.0, %v4425
  %v4427 = vpop.f32.mrf.mxu0
  %4428 = vmatprep.mubr.bf16.mxu0 0
  %4429 = vmatmul.mubr.bf16.gmra.mxu0 %v3044
  %v4430 = vpop.f32.mrf.mxu0
  %v4431 = vadd.f32 0.0, %v4430
  %v4432 = vpop.f32.mrf.mxu0
  %v4433 = vpop.f32.mrf.mxu0
  %v4434 = vadd.f32 0.0, %v4433
  %v4435 = vpop.f32.mrf.mxu0
  %4436 = vmatprep.mubr.bf16.mxu0 0
  %4437 = vmatmul.mubr.bf16.gmra.mxu0 %v3045
  %v4438 = vpop.f32.mrf.mxu0
  %v4439 = vadd.f32 0.0, %v4438
  %v4440 = vpop.f32.mrf.mxu0
  %v4441 = vpop.f32.mrf.mxu0
  %v4442 = vadd.f32 0.0, %v4441
  %v4443 = vpop.f32.mrf.mxu0
  %4444 = vmatprep.mubr.bf16.mxu0 0
  %4445 = vmatmul.mubr.bf16.gmra.mxu0 %v3046
  %v4446 = vpop.f32.mrf.mxu0
  %v4447 = vadd.f32 0.0, %v4446
  %v4448 = vpop.f32.mrf.mxu0
  %v4449 = vpop.f32.mrf.mxu0
  %v4450 = vadd.f32 0.0, %v4449
  %v4451 = vpop.f32.mrf.mxu0
  %4452 = vmatprep.mubr.bf16.mxu0 0
  %4453 = vmatmul.mubr.bf16.gmra.mxu0 %v3047
  %v4454 = vpop.f32.mrf.mxu0
  %v4455 = vadd.f32 0.0, %v4454
  %v4456 = vpop.f32.mrf.mxu0
  %v4457 = vpop.f32.mrf.mxu0
  %v4458 = vadd.f32 0.0, %v4457
  %v4459 = vpop.f32.mrf.mxu0
  %4460 = vmatprep.mubr.bf16.mxu0 0
  %4461 = vmatmul.mubr.bf16.gmra.mxu0 %v3048
  %v4462 = vpop.f32.mrf.mxu0
  %v4463 = vadd.f32 0.0, %v4462
  %v4464 = vpop.f32.mrf.mxu0
  %v4465 = vpop.f32.mrf.mxu0
  %v4466 = vadd.f32 0.0, %v4465
  %v4467 = vpop.f32.mrf.mxu0
  %4468 = vmatprep.mubr.bf16.mxu0 0
  %4469 = vmatmul.mubr.bf16.gmra.mxu0 %v4264
  %v4470 = vpop.f32.mrf.mxu0
  %v4471 = vadd.f32 0.0, %v4470
  %v4472 = vpop.f32.mrf.mxu0
  %v4473 = vpop.f32.mrf.mxu0
  %v4474 = vadd.f32 0.0, %v4473
  %v4475 = vpop.f32.mrf.mxu0
  %4476 = vmatprep.mubr.bf16.mxu0 0
  %4477 = vmatmul.mubr.bf16.gmra.mxu0 %v3050
  %v4478 = vpop.f32.mrf.mxu0
  %v4479 = vadd.f32 0.0, %v4478
  %v4480 = vpop.f32.mrf.mxu0
  %v4481 = vpop.f32.mrf.mxu0
  %v4482 = vadd.f32 0.0, %v4481
  %v4483 = vpop.f32.mrf.mxu0
  %4484 = vmatprep.mubr.bf16.mxu0 0
  %4485 = vmatmul.mubr.bf16.gmra.mxu0 %v3051
  %v4486 = vpop.f32.mrf.mxu0
  %v4487 = vadd.f32 0.0, %v4486
  %v4488 = vpop.f32.mrf.mxu0
  %v4489 = vpop.f32.mrf.mxu0
  %v4490 = vadd.f32 0.0, %v4489
  %v4491 = vpop.f32.mrf.mxu0
  %4492 = vmatprep.mubr.bf16.mxu0 0
  %4493 = vmatmul.mubr.bf16.gmra.mxu0 %v3052
  %v4494 = vpop.f32.mrf.mxu0
  %v4495 = vadd.f32 0.0, %v4494
  %v4496 = vpop.f32.mrf.mxu0
  %v4497 = vpop.f32.mrf.mxu0
  %v4498 = vadd.f32 0.0, %v4497
  %v4499 = vpop.f32.mrf.mxu0
  %4500 = vmatprep.mubr.bf16.mxu0 0
  %4501 = vmatmul.mubr.bf16.gmra.mxu0 %v3053
  %v4502 = vpop.f32.mrf.mxu0
  %v4503 = vadd.f32 0.0, %v4502
  %v4504 = vpop.f32.mrf.mxu0
  %v4505 = vpop.f32.mrf.mxu0
  %v4506 = vadd.f32 0.0, %v4505
  %v4507 = vpop.f32.mrf.mxu0
  %4508 = vmatprep.mubr.bf16.mxu0 0
  %4509 = vmatmul.mubr.bf16.gmra.mxu0 %v3054
  %v4510 = vpop.f32.mrf.mxu0
  %v4511 = vadd.f32 0.0, %v4510
  %v4512 = vpop.f32.mrf.mxu0
  %v4513 = vpop.f32.mrf.mxu0
  %v4514 = vadd.f32 0.0, %v4513
  %v4515 = vpop.f32.mrf.mxu0
  %4516 = vmatprep.mubr.bf16.mxu0 0
  %4517 = vmatmul.mubr.bf16.gmra.mxu0 %v3055
  %v4518 = vpop.f32.mrf.mxu0
  %v4519 = vadd.f32 0.0, %v4518
  %v4520 = vpop.f32.mrf.mxu0
  %v4521 = vpop.f32.mrf.mxu0
  %v4522 = vadd.f32 0.0, %v4521
  %v4523 = vpop.f32.mrf.mxu0
  %4524 = vmatprep.mubr.bf16.mxu0 0
  %4525 = vmatmul.mubr.bf16.gmra.mxu0 %v3056
  %v4526 = vpop.f32.mrf.mxu0
  %v4527 = vadd.f32 0.0, %v4526
  %v4528 = vpop.f32.mrf.mxu0
  %v4529 = vpop.f32.mrf.mxu0
  %v4530 = vadd.f32 0.0, %v4529
  %v4531 = vpop.f32.mrf.mxu0
  %4532 = vmatprep.mubr.bf16.mxu0 0
  %4533 = vmatmul.mubr.bf16.gmra.mxu0 %v3057
  %v4534 = vpop.f32.mrf.mxu0
  %v4535 = vadd.f32 0.0, %v4534
  %v4536 = vpop.f32.mrf.mxu0
  %v4537 = vpop.f32.mrf.mxu0
  %v4538 = vadd.f32 0.0, %v4537
  %v4539 = vpop.f32.mrf.mxu0
  %4540 = vmatprep.mubr.bf16.mxu0 0
  %4541 = vmatmul.mubr.bf16.gmra.mxu0 %v3058
  %v4542 = vpop.f32.mrf.mxu0
  %v4543 = vadd.f32 0.0, %v4542
  %v4544 = vpop.f32.mrf.mxu0
  %v4545 = vpop.f32.mrf.mxu0
  %v4546 = vadd.f32 0.0, %v4545
  %v4547 = vpop.f32.mrf.mxu0
  %4548 = vmatprep.mubr.bf16.mxu0 0
  %4549 = vmatmul.mubr.bf16.gmra.mxu0 %v3059
  %v4550 = vpop.f32.mrf.mxu0
  %v4551 = vadd.f32 0.0, %v4550
  %v4552 = vpop.f32.mrf.mxu0
  %v4553 = vpop.f32.mrf.mxu0
  %v4554 = vadd.f32 0.0, %v4553
  %v4555 = vpop.f32.mrf.mxu0
  %4556 = vmatprep.mubr.bf16.mxu0 0
  %4557 = vmatmul.mubr.bf16.gmra.mxu0 %v3060
  %v4558 = vpop.f32.mrf.mxu0
  %v4559 = vadd.f32 0.0, %v4558
  %v4560 = vpop.f32.mrf.mxu0
  %v4561 = vpop.f32.mrf.mxu0
  %v4562 = vadd.f32 0.0, %v4561
  %v4563 = vpop.f32.mrf.mxu0
  %4564 = vmatprep.mubr.bf16.mxu0 0
  %4565 = vmatmul.mubr.bf16.gmra.mxu0 %v3061
  %v4566 = vpop.f32.mrf.mxu0
  %v4567 = vadd.f32 0.0, %v4566
  %v4568 = vpop.f32.mrf.mxu0
  %v4569 = vpop.f32.mrf.mxu0
  %v4570 = vadd.f32 0.0, %v4569
  %v4571 = vpop.f32.mrf.mxu0
  %4572 = vmatprep.mubr.bf16.mxu0 0
  %4573 = vmatmul.mubr.bf16.gmra.mxu0 %v3062
  %v4574 = vpop.f32.mrf.mxu0
  %v4575 = vadd.f32 0.0, %v4574
  %v4576 = vpop.f32.mrf.mxu0
  %v4577 = vpop.f32.mrf.mxu0
  %v4578 = vadd.f32 0.0, %v4577
  %v4579 = vpop.f32.mrf.mxu0
  %4580 = vmatprep.mubr.bf16.mxu0 0
  %4581 = vmatmul.mubr.bf16.gmra.mxu0 %v3063
  %v4582 = vpop.f32.mrf.mxu0
  %v4583 = vadd.f32 0.0, %v4582
  %v4584 = vpop.f32.mrf.mxu0
  %v4585 = vpop.f32.mrf.mxu0
  %v4586 = vadd.f32 0.0, %v4585
  %v4587 = vpop.f32.mrf.mxu0
  %4588 = vmatprep.mubr.bf16.mxu0 0
  %4589 = vmatmul.mubr.bf16.gmra.mxu0 %v3064
  %v4590 = vpop.f32.mrf.mxu0
  %v4591 = vadd.f32 0.0, %v4590
  %v4592 = vpop.f32.mrf.mxu0
  %v4593 = vpop.f32.mrf.mxu0
  %v4594 = vadd.f32 0.0, %v4593
  %v4595 = vpop.f32.mrf.mxu0
  %4596 = vmatprep.mubr.bf16.mxu0 0
  %4597 = vmatmul.mubr.bf16.gmra.mxu0 %v4265
  %v4598 = vpop.f32.mrf.mxu0
  %v4599 = vadd.f32 0.0, %v4598
  %v4600 = vpop.f32.mrf.mxu0
  %v4601 = vpop.f32.mrf.mxu0
  %v4602 = vadd.f32 0.0, %v4601
  %v4603 = vpop.f32.mrf.mxu0
  %4604 = vdwg.mxu0
  %v4605 = vadd.f32 %v4175, %v4351
  %v4606 = vadd.f32 %v4176, %v4354
  %v4607 = vadd.f32 %v4177, %v4359
  %v4608 = vadd.f32 %v4178, %v4362
  %v4609 = vadd.f32 %v4179, %v4367
  %v4610 = vadd.f32 %v4180, %v4370
  %v4611 = vadd.f32 %v4181, %v4375
  %v4612 = vadd.f32 %v4182, %v4378
  %v4613 = vadd.f32 %v4183, %v4383
  %v4614 = vadd.f32 %v4184, %v4386
  %v4615 = vadd.f32 %v4185, %v4391
  %v4616 = vadd.f32 %v4186, %v4394
  %v4617 = vadd.f32 %v4187, %v4399
  %v4618 = vadd.f32 %v4188, %v4402
  %v4619 = vadd.f32 %v4189, %v4407
  %v4620 = vadd.f32 %v4190, %v4410
  %v4621 = vadd.f32 %v4191, %v4415
  %v4622 = vadd.f32 %v4192, %v4418
  %v4623 = vadd.f32 %v4193, %v4423
  %v4624 = vadd.f32 %v4194, %v4426
  %v4625 = vadd.f32 %v4195, %v4431
  %v4626 = vadd.f32 %v4196, %v4434
  %v4627 = vadd.f32 %v4197, %v4439
  %v4628 = vadd.f32 %v4198, %v4442
  %v4629 = vadd.f32 %v4199, %v4447
  %v4630 = vadd.f32 %v4200, %v4450
  %v4631 = vadd.f32 %v4201, %v4455
  %v4632 = vadd.f32 %v4202, %v4458
  %v4633 = vadd.f32 %v4203, %v4463
  %v4634 = vadd.f32 %v4204, %v4466
  %v4635 = vadd.f32 %v4205, %v4471
  %v4636 = vadd.f32 %v4206, %v4474
  %v4637 = vadd.f32 %v4207, %v4479
  %v4638 = vadd.f32 %v4208, %v4482
  %v4639 = vadd.f32 %v4209, %v4487
  %v4640 = vadd.f32 %v4210, %v4490
  %v4641 = vadd.f32 %v4211, %v4495
  %v4642 = vadd.f32 %v4212, %v4498
  %v4643 = vadd.f32 %v4213, %v4503
  %v4644 = vadd.f32 %v4214, %v4506
  %v4645 = vadd.f32 %v4215, %v4511
  %v4646 = vadd.f32 %v4216, %v4514
  %v4647 = vadd.f32 %v4217, %v4519
  %v4648 = vadd.f32 %v4218, %v4522
  %v4649 = vadd.f32 %v4219, %v4527
  %v4650 = vadd.f32 %v4220, %v4530
  %v4651 = vadd.f32 %v4221, %v4535
  %v4652 = vadd.f32 %v4222, %v4538
  %v4653 = vadd.f32 %v4223, %v4543
  %v4654 = vadd.f32 %v4224, %v4546
  %v4655 = vadd.f32 %v4225, %v4551
  %v4656 = vadd.f32 %v4226, %v4554
  %v4657 = vadd.f32 %v4227, %v4559
  %v4658 = vadd.f32 %v4228, %v4562
  %v4659 = vadd.f32 %v4229, %v4567
  %v4660 = vadd.f32 %v4230, %v4570
  %v4661 = vadd.f32 %v4231, %v4575
  %v4662 = vadd.f32 %v4232, %v4578
  %v4663 = vadd.f32 %v4233, %v4583
  %v4664 = vadd.f32 %v4234, %v4586
  %v4665 = vadd.f32 %v4235, %v4591
  %v4666 = vadd.f32 %v4236, %v4594
  %v4667 = vadd.f32 %v4237, %v4599
  %v4668 = vadd.f32 %v4238, %v4602
  %v4670 = vshrl.u32 %v1576, 16
  %v4672 = vrot.slane %v4670, 4
  %v4673 = vshll.u32 %v1576, 16
  %v4675 = vrot.slane %v4673, 5
  %v4676 = vor.u32 %v4672, %v4675
  %v4677 = vrot.slane %v4676, 4
  %v4679 = vshll.u32 %v1577, 16
  %v4681 = vrot.slane %v4679, 5
  %v4682 = vsel %vm1654, %v4677, %v4681
  %v4683 = vshrl.u32 %v1577, 16
  %v4685 = vrot.slane %v4683, 4
  %v4686 = vor.u32 %v4685, %v4681
  %v4687 = vrot.slane %v4686, 4
  %v4689 = vshll.u32 %v1578, 16
  %v4691 = vrot.slane %v4689, 5
  %v4692 = vsel %vm1654, %v4687, %v4691
  %v4694 = vshrl.u32 %v1630, 16
  %v4696 = vrot.slane %v4694, 4
  %v4697 = vshll.u32 %v1630, 16
  %v4699 = vrot.slane %v4697, 5
  %v4700 = vor.u32 %v4696, %v4699
  %v4701 = vrot.slane %v4700, 4
  %v4703 = vshll.u32 %v1631, 16
  %v4705 = vrot.slane %v4703, 5
  %v4706 = vsel %vm1654, %v4701, %v4705
  %v4707 = vshrl.u32 %v1631, 16
  %v4709 = vrot.slane %v4707, 4
  %v4710 = vor.u32 %v4709, %v4705
  %v4711 = vrot.slane %v4710, 4
  %v4713 = vshll.u32 %v1632, 16
  %v4715 = vrot.slane %v4713, 5
  %v4716 = vsel %vm1654, %v4711, %v4715
  %s4717 = scalar_lea.vmem %s3, 256
  %v4718 = vld [vmem:[%s4717] sm:$0xf]
  %v4719 = vld [vmem:[%s4717 + $0x4] sm:$0xf]
  %v4720 = vld [vmem:[%s4717 + $0x8] sm:$0xf]
  %v4721 = vld [vmem:[%s4717 + $0xc] sm:$0xf]
  %v4722 = vld [vmem:[%s4717 + $0x10] sm:$0xf]
  %v4723 = vld [vmem:[%s4717 + $0x14] sm:$0xf]
  %v4724 = vld [vmem:[%s4717 + $0x18] sm:$0xf]
  %v4725 = vld [vmem:[%s4717 + $0x1c] sm:$0xf]
  %v4726 = vld [vmem:[%s4717 + $0x20] sm:$0xf]
  %v4727 = vld [vmem:[%s4717 + $0x24] sm:$0xf]
  %v4728 = vld [vmem:[%s4717 + $0x28] sm:$0xf]
  %v4729 = vld [vmem:[%s4717 + $0x2c] sm:$0xf]
  %v4730 = vld [vmem:[%s4717 + $0x30] sm:$0xf]
  %v4731 = vld [vmem:[%s4717 + $0x34] sm:$0xf]
  %v4732 = vld [vmem:[%s4717 + $0x38] sm:$0xf]
  %v4733 = vld [vmem:[%s4717 + $0x3c] sm:$0xf]
  %v4734 = vunpack.c.l.b16 %v4682
  %v4735 = vunpack.c.l.b16 %v4692
  %v4736 = vunpack.c.l.b16 %v4706
  %v4737 = vunpack.c.l.b16 %v4716
  %v4738 = vpack.c.b16 %v4735, %v4734
  %v4739 = vpack.c.b16 %v4737, %v4736
  %v4758 = vunpack.c.l.b16 %v4718
  %v4759 = vunpack.c.l.b16 %v4719
  %v4760 = vunpack.c.l.b16 %v4720
  %v4761 = vunpack.c.l.b16 %v4721
  %v4762 = vunpack.c.l.b16 %v4722
  %v4763 = vunpack.c.l.b16 %v4723
  %v4764 = vunpack.c.l.b16 %v4724
  %v4765 = vunpack.c.l.b16 %v4725
  %v4766 = vunpack.c.l.b16 %v4726
  %v4767 = vunpack.c.l.b16 %v4727
  %v4768 = vunpack.c.l.b16 %v4728
  %v4769 = vunpack.c.l.b16 %v4729
  %v4770 = vunpack.c.l.b16 %v4730
  %v4771 = vunpack.c.l.b16 %v4731
  %v4772 = vunpack.c.l.b16 %v4732
  %v4773 = vunpack.c.l.b16 %v4733
  %v4774 = vpack.c.b16 %v4759, %v4758
  %v4775 = vpack.c.b16 %v4761, %v4760
  %v4776 = vpack.c.b16 %v4763, %v4762
  %v4777 = vpack.c.b16 %v4765, %v4764
  %v4778 = vpack.c.b16 %v4767, %v4766
  %v4779 = vpack.c.b16 %v4769, %v4768
  %v4780 = vpack.c.b16 %v4771, %v4770
  %v4781 = vpack.c.b16 %v4773, %v4772
  %4790 = vmatprep.subr.bf16.mxu0 0
  %4791 = vmatpush1.bf16.msra.mxu0 %v4781
  %4792 = vmatprep.subr.bf16.mxu0 0
  %4793 = vmatpush1.bf16.msra.mxu0 %v4780
  %4794 = vmatprep.subr.bf16.mxu0 0
  %4795 = vmatpush1.bf16.msra.mxu0 %v4779
  %4796 = vmatprep.subr.bf16.mxu0 0
  %4797 = vmatpush1.bf16.msra.mxu0 %v4778
  %4798 = vmatprep.subr.bf16.mxu0 0
  %4799 = vmatpush1.bf16.msra.mxu0 %v4777
  %4800 = vmatprep.subr.bf16.mxu0 0
  %4801 = vmatpush1.bf16.msra.mxu0 %v4776
  %4802 = vmatprep.subr.bf16.mxu0 0
  %4803 = vmatpush1.bf16.msra.mxu0 %v4775
  %4804 = vmatprep.subr.bf16.mxu0 0
  %4805 = vmatpush1.bf16.msra.mxu0 %v4774
  %4806 = vmatprep.subr.bf16.mxu0 0
  %4807 = vmatpush2.bf16.msra.mxu0 0
  %4808 = vmatprep.subr.bf16.mxu0 0
  %4809 = vmatpush2.bf16.msra.mxu0 0
  %4810 = vmatprep.subr.bf16.mxu0 0
  %4811 = vmatpush2.bf16.msra.mxu0 0
  %4812 = vmatprep.subr.bf16.mxu0 0
  %4813 = vmatpush2.bf16.msra.mxu0 0
  %4814 = vmatprep.subr.bf16.mxu0 0
  %4815 = vmatpush2.bf16.msra.mxu0 0
  %4816 = vmatprep.subr.bf16.mxu0 0
  %4817 = vmatpush2.bf16.msra.mxu0 0
  %4818 = vmatprep.subr.bf16.mxu0 0
  %4819 = vmatpush2.bf16.msra.mxu0 0
  %4820 = vmatprep.subr.bf16.mxu0 0
  %4821 = vmatpush2.bf16.msra.mxu0 0
  %4822 = vmatprep.mubr.bf16.mxu0 0
  %4823 = vmatmul.mubr.bf16.gmra.mxu0 %v2505
  %v4824 = vpop.f32.mrf.mxu0
  %v4825 = vadd.f32 0.0, %v4824
  %v4826 = vpop.f32.mrf.mxu0
  %v4827 = vpop.f32.mrf.mxu0
  %v4828 = vadd.f32 0.0, %v4827
  %v4829 = vpop.f32.mrf.mxu0
  %4830 = vmatprep.mubr.bf16.mxu0 0
  %4831 = vmatmul.mubr.bf16.gmra.mxu0 %v2506
  %v4832 = vpop.f32.mrf.mxu0
  %v4833 = vadd.f32 0.0, %v4832
  %v4834 = vpop.f32.mrf.mxu0
  %v4835 = vpop.f32.mrf.mxu0
  %v4836 = vadd.f32 0.0, %v4835
  %v4837 = vpop.f32.mrf.mxu0
  %4838 = vmatprep.mubr.bf16.mxu0 0
  %4839 = vmatmul.mubr.bf16.gmra.mxu0 %v2507
  %v4840 = vpop.f32.mrf.mxu0
  %v4841 = vadd.f32 0.0, %v4840
  %v4842 = vpop.f32.mrf.mxu0
  %v4843 = vpop.f32.mrf.mxu0
  %v4844 = vadd.f32 0.0, %v4843
  %v4845 = vpop.f32.mrf.mxu0
  %4846 = vmatprep.mubr.bf16.mxu0 0
  %4847 = vmatmul.mubr.bf16.gmra.mxu0 %v2508
  %v4848 = vpop.f32.mrf.mxu0
  %v4849 = vadd.f32 0.0, %v4848
  %v4850 = vpop.f32.mrf.mxu0
  %v4851 = vpop.f32.mrf.mxu0
  %v4852 = vadd.f32 0.0, %v4851
  %v4853 = vpop.f32.mrf.mxu0
  %4854 = vmatprep.mubr.bf16.mxu0 0
  %4855 = vmatmul.mubr.bf16.gmra.mxu0 %v2509
  %v4856 = vpop.f32.mrf.mxu0
  %v4857 = vadd.f32 0.0, %v4856
  %v4858 = vpop.f32.mrf.mxu0
  %v4859 = vpop.f32.mrf.mxu0
  %v4860 = vadd.f32 0.0, %v4859
  %v4861 = vpop.f32.mrf.mxu0
  %4862 = vmatprep.mubr.bf16.mxu0 0
  %4863 = vmatmul.mubr.bf16.gmra.mxu0 %v2510
  %v4864 = vpop.f32.mrf.mxu0
  %v4865 = vadd.f32 0.0, %v4864
  %v4866 = vpop.f32.mrf.mxu0
  %v4867 = vpop.f32.mrf.mxu0
  %v4868 = vadd.f32 0.0, %v4867
  %v4869 = vpop.f32.mrf.mxu0
  %4870 = vmatprep.mubr.bf16.mxu0 0
  %4871 = vmatmul.mubr.bf16.gmra.mxu0 %v2511
  %v4872 = vpop.f32.mrf.mxu0
  %v4873 = vadd.f32 0.0, %v4872
  %v4874 = vpop.f32.mrf.mxu0
  %v4875 = vpop.f32.mrf.mxu0
  %v4876 = vadd.f32 0.0, %v4875
  %v4877 = vpop.f32.mrf.mxu0
  %4878 = vmatprep.mubr.bf16.mxu0 0
  %4879 = vmatmul.mubr.bf16.gmra.mxu0 %v2512
  %v4880 = vpop.f32.mrf.mxu0
  %v4881 = vadd.f32 0.0, %v4880
  %v4882 = vpop.f32.mrf.mxu0
  %v4883 = vpop.f32.mrf.mxu0
  %v4884 = vadd.f32 0.0, %v4883
  %v4885 = vpop.f32.mrf.mxu0
  %4886 = vmatprep.mubr.bf16.mxu0 0
  %4887 = vmatmul.mubr.bf16.gmra.mxu0 %v2513
  %v4888 = vpop.f32.mrf.mxu0
  %v4889 = vadd.f32 0.0, %v4888
  %v4890 = vpop.f32.mrf.mxu0
  %v4891 = vpop.f32.mrf.mxu0
  %v4892 = vadd.f32 0.0, %v4891
  %v4893 = vpop.f32.mrf.mxu0
  %4894 = vmatprep.mubr.bf16.mxu0 0
  %4895 = vmatmul.mubr.bf16.gmra.mxu0 %v2514
  %v4896 = vpop.f32.mrf.mxu0
  %v4897 = vadd.f32 0.0, %v4896
  %v4898 = vpop.f32.mrf.mxu0
  %v4899 = vpop.f32.mrf.mxu0
  %v4900 = vadd.f32 0.0, %v4899
  %v4901 = vpop.f32.mrf.mxu0
  %4902 = vmatprep.mubr.bf16.mxu0 0
  %4903 = vmatmul.mubr.bf16.gmra.mxu0 %v2515
  %v4904 = vpop.f32.mrf.mxu0
  %v4905 = vadd.f32 0.0, %v4904
  %v4906 = vpop.f32.mrf.mxu0
  %v4907 = vpop.f32.mrf.mxu0
  %v4908 = vadd.f32 0.0, %v4907
  %v4909 = vpop.f32.mrf.mxu0
  %4910 = vmatprep.mubr.bf16.mxu0 0
  %4911 = vmatmul.mubr.bf16.gmra.mxu0 %v2516
  %v4912 = vpop.f32.mrf.mxu0
  %v4913 = vadd.f32 0.0, %v4912
  %v4914 = vpop.f32.mrf.mxu0
  %v4915 = vpop.f32.mrf.mxu0
  %v4916 = vadd.f32 0.0, %v4915
  %v4917 = vpop.f32.mrf.mxu0
  %4918 = vmatprep.mubr.bf16.mxu0 0
  %4919 = vmatmul.mubr.bf16.gmra.mxu0 %v2517
  %v4920 = vpop.f32.mrf.mxu0
  %v4921 = vadd.f32 0.0, %v4920
  %v4922 = vpop.f32.mrf.mxu0
  %v4923 = vpop.f32.mrf.mxu0
  %v4924 = vadd.f32 0.0, %v4923
  %v4925 = vpop.f32.mrf.mxu0
  %4926 = vmatprep.mubr.bf16.mxu0 0
  %4927 = vmatmul.mubr.bf16.gmra.mxu0 %v2518
  %v4928 = vpop.f32.mrf.mxu0
  %v4929 = vadd.f32 0.0, %v4928
  %v4930 = vpop.f32.mrf.mxu0
  %v4931 = vpop.f32.mrf.mxu0
  %v4932 = vadd.f32 0.0, %v4931
  %v4933 = vpop.f32.mrf.mxu0
  %4934 = vmatprep.mubr.bf16.mxu0 0
  %4935 = vmatmul.mubr.bf16.gmra.mxu0 %v2519
  %v4936 = vpop.f32.mrf.mxu0
  %v4937 = vadd.f32 0.0, %v4936
  %v4938 = vpop.f32.mrf.mxu0
  %v4939 = vpop.f32.mrf.mxu0
  %v4940 = vadd.f32 0.0, %v4939
  %v4941 = vpop.f32.mrf.mxu0
  %4942 = vmatprep.mubr.bf16.mxu0 0
  %4943 = vmatmul.mubr.bf16.gmra.mxu0 %v4738
  %v4944 = vpop.f32.mrf.mxu0
  %v4945 = vadd.f32 0.0, %v4944
  %v4946 = vpop.f32.mrf.mxu0
  %v4947 = vpop.f32.mrf.mxu0
  %v4948 = vadd.f32 0.0, %v4947
  %v4949 = vpop.f32.mrf.mxu0
  %4950 = vmatprep.mubr.bf16.mxu0 0
  %4951 = vmatmul.mubr.bf16.gmra.mxu0 %v2521
  %v4952 = vpop.f32.mrf.mxu0
  %v4953 = vadd.f32 0.0, %v4952
  %v4954 = vpop.f32.mrf.mxu0
  %v4955 = vpop.f32.mrf.mxu0
  %v4956 = vadd.f32 0.0, %v4955
  %v4957 = vpop.f32.mrf.mxu0
  %4958 = vmatprep.mubr.bf16.mxu0 0
  %4959 = vmatmul.mubr.bf16.gmra.mxu0 %v2522
  %v4960 = vpop.f32.mrf.mxu0
  %v4961 = vadd.f32 0.0, %v4960
  %v4962 = vpop.f32.mrf.mxu0
  %v4963 = vpop.f32.mrf.mxu0
  %v4964 = vadd.f32 0.0, %v4963
  %v4965 = vpop.f32.mrf.mxu0
  %4966 = vmatprep.mubr.bf16.mxu0 0
  %4967 = vmatmul.mubr.bf16.gmra.mxu0 %v2523
  %v4968 = vpop.f32.mrf.mxu0
  %v4969 = vadd.f32 0.0, %v4968
  %v4970 = vpop.f32.mrf.mxu0
  %v4971 = vpop.f32.mrf.mxu0
  %v4972 = vadd.f32 0.0, %v4971
  %v4973 = vpop.f32.mrf.mxu0
  %4974 = vmatprep.mubr.bf16.mxu0 0
  %4975 = vmatmul.mubr.bf16.gmra.mxu0 %v2524
  %v4976 = vpop.f32.mrf.mxu0
  %v4977 = vadd.f32 0.0, %v4976
  %v4978 = vpop.f32.mrf.mxu0
  %v4979 = vpop.f32.mrf.mxu0
  %v4980 = vadd.f32 0.0, %v4979
  %v4981 = vpop.f32.mrf.mxu0
  %4982 = vmatprep.mubr.bf16.mxu0 0
  %4983 = vmatmul.mubr.bf16.gmra.mxu0 %v2525
  %v4984 = vpop.f32.mrf.mxu0
  %v4985 = vadd.f32 0.0, %v4984
  %v4986 = vpop.f32.mrf.mxu0
  %v4987 = vpop.f32.mrf.mxu0
  %v4988 = vadd.f32 0.0, %v4987
  %v4989 = vpop.f32.mrf.mxu0
  %4990 = vmatprep.mubr.bf16.mxu0 0
  %4991 = vmatmul.mubr.bf16.gmra.mxu0 %v2526
  %v4992 = vpop.f32.mrf.mxu0
  %v4993 = vadd.f32 0.0, %v4992
  %v4994 = vpop.f32.mrf.mxu0
  %v4995 = vpop.f32.mrf.mxu0
  %v4996 = vadd.f32 0.0, %v4995
  %v4997 = vpop.f32.mrf.mxu0
  %4998 = vmatprep.mubr.bf16.mxu0 0
  %4999 = vmatmul.mubr.bf16.gmra.mxu0 %v2527
  %v5000 = vpop.f32.mrf.mxu0
  %v5001 = vadd.f32 0.0, %v5000
  %v5002 = vpop.f32.mrf.mxu0
  %v5003 = vpop.f32.mrf.mxu0
  %v5004 = vadd.f32 0.0, %v5003
  %v5005 = vpop.f32.mrf.mxu0
  %5006 = vmatprep.mubr.bf16.mxu0 0
  %5007 = vmatmul.mubr.bf16.gmra.mxu0 %v2528
  %v5008 = vpop.f32.mrf.mxu0
  %v5009 = vadd.f32 0.0, %v5008
  %v5010 = vpop.f32.mrf.mxu0
  %v5011 = vpop.f32.mrf.mxu0
  %v5012 = vadd.f32 0.0, %v5011
  %v5013 = vpop.f32.mrf.mxu0
  %5014 = vmatprep.mubr.bf16.mxu0 0
  %5015 = vmatmul.mubr.bf16.gmra.mxu0 %v2529
  %v5016 = vpop.f32.mrf.mxu0
  %v5017 = vadd.f32 0.0, %v5016
  %v5018 = vpop.f32.mrf.mxu0
  %v5019 = vpop.f32.mrf.mxu0
  %v5020 = vadd.f32 0.0, %v5019
  %v5021 = vpop.f32.mrf.mxu0
  %5022 = vmatprep.mubr.bf16.mxu0 0
  %5023 = vmatmul.mubr.bf16.gmra.mxu0 %v2530
  %v5024 = vpop.f32.mrf.mxu0
  %v5025 = vadd.f32 0.0, %v5024
  %v5026 = vpop.f32.mrf.mxu0
  %v5027 = vpop.f32.mrf.mxu0
  %v5028 = vadd.f32 0.0, %v5027
  %v5029 = vpop.f32.mrf.mxu0
  %5030 = vmatprep.mubr.bf16.mxu0 0
  %5031 = vmatmul.mubr.bf16.gmra.mxu0 %v2531
  %v5032 = vpop.f32.mrf.mxu0
  %v5033 = vadd.f32 0.0, %v5032
  %v5034 = vpop.f32.mrf.mxu0
  %v5035 = vpop.f32.mrf.mxu0
  %v5036 = vadd.f32 0.0, %v5035
  %v5037 = vpop.f32.mrf.mxu0
  %5038 = vmatprep.mubr.bf16.mxu0 0
  %5039 = vmatmul.mubr.bf16.gmra.mxu0 %v2532
  %v5040 = vpop.f32.mrf.mxu0
  %v5041 = vadd.f32 0.0, %v5040
  %v5042 = vpop.f32.mrf.mxu0
  %v5043 = vpop.f32.mrf.mxu0
  %v5044 = vadd.f32 0.0, %v5043
  %v5045 = vpop.f32.mrf.mxu0
  %5046 = vmatprep.mubr.bf16.mxu0 0
  %5047 = vmatmul.mubr.bf16.gmra.mxu0 %v2533
  %v5048 = vpop.f32.mrf.mxu0
  %v5049 = vadd.f32 0.0, %v5048
  %v5050 = vpop.f32.mrf.mxu0
  %v5051 = vpop.f32.mrf.mxu0
  %v5052 = vadd.f32 0.0, %v5051
  %v5053 = vpop.f32.mrf.mxu0
  %5054 = vmatprep.mubr.bf16.mxu0 0
  %5055 = vmatmul.mubr.bf16.gmra.mxu0 %v2534
  %v5056 = vpop.f32.mrf.mxu0
  %v5057 = vadd.f32 0.0, %v5056
  %v5058 = vpop.f32.mrf.mxu0
  %v5059 = vpop.f32.mrf.mxu0
  %v5060 = vadd.f32 0.0, %v5059
  %v5061 = vpop.f32.mrf.mxu0
  %5062 = vmatprep.mubr.bf16.mxu0 0
  %5063 = vmatmul.mubr.bf16.gmra.mxu0 %v2535
  %v5064 = vpop.f32.mrf.mxu0
  %v5065 = vadd.f32 0.0, %v5064
  %v5066 = vpop.f32.mrf.mxu0
  %v5067 = vpop.f32.mrf.mxu0
  %v5068 = vadd.f32 0.0, %v5067
  %v5069 = vpop.f32.mrf.mxu0
  %5070 = vmatprep.mubr.bf16.mxu0 0
  %5071 = vmatmul.mubr.bf16.gmra.mxu0 %v4739
  %v5072 = vpop.f32.mrf.mxu0
  %v5073 = vadd.f32 0.0, %v5072
  %v5074 = vpop.f32.mrf.mxu0
  %v5075 = vpop.f32.mrf.mxu0
  %v5076 = vadd.f32 0.0, %v5075
  %v5077 = vpop.f32.mrf.mxu0
  %5078 = vdwg.mxu0
  %v5079 = vadd.f32 %v4605, %v4825
  %v5080 = vadd.f32 %v4606, %v4828
  %v5081 = vadd.f32 %v4607, %v4833
  %v5082 = vadd.f32 %v4608, %v4836
  %v5083 = vadd.f32 %v4609, %v4841
  %v5084 = vadd.f32 %v4610, %v4844
  %v5085 = vadd.f32 %v4611, %v4849
  %v5086 = vadd.f32 %v4612, %v4852
  %v5087 = vadd.f32 %v4613, %v4857
  %v5088 = vadd.f32 %v4614, %v4860
  %v5089 = vadd.f32 %v4615, %v4865
  %v5090 = vadd.f32 %v4616, %v4868
  %v5091 = vadd.f32 %v4617, %v4873
  %v5092 = vadd.f32 %v4618, %v4876
  %v5093 = vadd.f32 %v4619, %v4881
  %v5094 = vadd.f32 %v4620, %v4884
  %v5095 = vadd.f32 %v4621, %v4889
  %v5096 = vadd.f32 %v4622, %v4892
  %v5097 = vadd.f32 %v4623, %v4897
  %v5098 = vadd.f32 %v4624, %v4900
  %v5099 = vadd.f32 %v4625, %v4905
  %v5100 = vadd.f32 %v4626, %v4908
  %v5101 = vadd.f32 %v4627, %v4913
  %v5102 = vadd.f32 %v4628, %v4916
  %v5103 = vadd.f32 %v4629, %v4921
  %v5104 = vadd.f32 %v4630, %v4924
  %v5105 = vadd.f32 %v4631, %v4929
  %v5106 = vadd.f32 %v4632, %v4932
  %v5107 = vadd.f32 %v4633, %v4937
  %v5108 = vadd.f32 %v4634, %v4940
  %v5109 = vadd.f32 %v4635, %v4945
  %v5110 = vadd.f32 %v4636, %v4948
  %v5111 = vadd.f32 %v4637, %v4953
  %v5112 = vadd.f32 %v4638, %v4956
  %v5113 = vadd.f32 %v4639, %v4961
  %v5114 = vadd.f32 %v4640, %v4964
  %v5115 = vadd.f32 %v4641, %v4969
  %v5116 = vadd.f32 %v4642, %v4972
  %v5117 = vadd.f32 %v4643, %v4977
  %v5118 = vadd.f32 %v4644, %v4980
  %v5119 = vadd.f32 %v4645, %v4985
  %v5120 = vadd.f32 %v4646, %v4988
  %v5121 = vadd.f32 %v4647, %v4993
  %v5122 = vadd.f32 %v4648, %v4996
  %v5123 = vadd.f32 %v4649, %v5001
  %v5124 = vadd.f32 %v4650, %v5004
  %v5125 = vadd.f32 %v4651, %v5009
  %v5126 = vadd.f32 %v4652, %v5012
  %v5127 = vadd.f32 %v4653, %v5017
  %v5128 = vadd.f32 %v4654, %v5020
  %v5129 = vadd.f32 %v4655, %v5025
  %v5130 = vadd.f32 %v4656, %v5028
  %v5131 = vadd.f32 %v4657, %v5033
  %v5132 = vadd.f32 %v4658, %v5036
  %v5133 = vadd.f32 %v4659, %v5041
  %v5134 = vadd.f32 %v4660, %v5044
  %v5135 = vadd.f32 %v4661, %v5049
  %v5136 = vadd.f32 %v4662, %v5052
  %v5137 = vadd.f32 %v4663, %v5057
  %v5138 = vadd.f32 %v4664, %v5060
  %v5139 = vadd.f32 %v4665, %v5065
  %v5140 = vadd.f32 %v4666, %v5068
  %v5141 = vadd.f32 %v4667, %v5073
  %v5142 = vadd.f32 %v4668, %v5076
  %v5145 = vrot.slane %v1576, 5
  %v5146 = vrot.slane %v5145, 4
  %v5147 = vrot.slane %v1577, 5
  %v5148 = vsel %vm3468, %v5146, %v5147
  %v5149 = vrot.slane %v5147, 4
  %v5150 = vrot.slane %v1578, 5
  %v5151 = vsel %vm3468, %v5149, %v5150
  %v5152 = vrot.slane %v1630, 5
  %v5153 = vrot.slane %v5152, 4
  %v5154 = vrot.slane %v1631, 5
  %v5155 = vsel %vm3468, %v5153, %v5154
  %v5156 = vrot.slane %v5154, 4
  %v5157 = vrot.slane %v1632, 5
  %v5158 = vsel %vm3468, %v5156, %v5157
  %s5159 = scalar_lea.vmem %s3, 320
  %v5160 = vld [vmem:[%s5159] sm:$0xf]
  %v5161 = vld [vmem:[%s5159 + $0x4] sm:$0xf]
  %v5162 = vld [vmem:[%s5159 + $0x8] sm:$0xf]
  %v5163 = vld [vmem:[%s5159 + $0xc] sm:$0xf]
  %v5164 = vld [vmem:[%s5159 + $0x10] sm:$0xf]
  %v5165 = vld [vmem:[%s5159 + $0x14] sm:$0xf]
  %v5166 = vld [vmem:[%s5159 + $0x18] sm:$0xf]
  %v5167 = vld [vmem:[%s5159 + $0x1c] sm:$0xf]
  %v5168 = vld [vmem:[%s5159 + $0x20] sm:$0xf]
  %v5169 = vld [vmem:[%s5159 + $0x24] sm:$0xf]
  %v5170 = vld [vmem:[%s5159 + $0x28] sm:$0xf]
  %v5171 = vld [vmem:[%s5159 + $0x2c] sm:$0xf]
  %v5172 = vld [vmem:[%s5159 + $0x30] sm:$0xf]
  %v5173 = vld [vmem:[%s5159 + $0x34] sm:$0xf]
  %v5174 = vld [vmem:[%s5159 + $0x38] sm:$0xf]
  %v5175 = vld [vmem:[%s5159 + $0x3c] sm:$0xf]
  %v5176 = vunpack.c.l.b16 %v5148
  %v5177 = vunpack.c.l.b16 %v5151
  %v5178 = vunpack.c.l.b16 %v5155
  %v5179 = vunpack.c.l.b16 %v5158
  %v5180 = vpack.c.b16 %v5177, %v5176
  %v5181 = vpack.c.b16 %v5179, %v5178
  %v5200 = vunpack.c.l.b16 %v5160
  %v5201 = vunpack.c.l.b16 %v5161
  %v5202 = vunpack.c.l.b16 %v5162
  %v5203 = vunpack.c.l.b16 %v5163
  %v5204 = vunpack.c.l.b16 %v5164
  %v5205 = vunpack.c.l.b16 %v5165
  %v5206 = vunpack.c.l.b16 %v5166
  %v5207 = vunpack.c.l.b16 %v5167
  %v5208 = vunpack.c.l.b16 %v5168
  %v5209 = vunpack.c.l.b16 %v5169
  %v5210 = vunpack.c.l.b16 %v5170
  %v5211 = vunpack.c.l.b16 %v5171
  %v5212 = vunpack.c.l.b16 %v5172
  %v5213 = vunpack.c.l.b16 %v5173
  %v5214 = vunpack.c.l.b16 %v5174
  %v5215 = vunpack.c.l.b16 %v5175
  %v5216 = vpack.c.b16 %v5201, %v5200
  %v5217 = vpack.c.b16 %v5203, %v5202
  %v5218 = vpack.c.b16 %v5205, %v5204
  %v5219 = vpack.c.b16 %v5207, %v5206
  %v5220 = vpack.c.b16 %v5209, %v5208
  %v5221 = vpack.c.b16 %v5211, %v5210
  %v5222 = vpack.c.b16 %v5213, %v5212
  %v5223 = vpack.c.b16 %v5215, %v5214
  %5232 = vmatprep.subr.bf16.mxu0 0
  %5233 = vmatpush1.bf16.msra.mxu0 %v5223
  %5234 = vmatprep.subr.bf16.mxu0 0
  %5235 = vmatpush1.bf16.msra.mxu0 %v5222
  %5236 = vmatprep.subr.bf16.mxu0 0
  %5237 = vmatpush1.bf16.msra.mxu0 %v5221
  %5238 = vmatprep.subr.bf16.mxu0 0
  %5239 = vmatpush1.bf16.msra.mxu0 %v5220
  %5240 = vmatprep.subr.bf16.mxu0 0
  %5241 = vmatpush1.bf16.msra.mxu0 %v5219
  %5242 = vmatprep.subr.bf16.mxu0 0
  %5243 = vmatpush1.bf16.msra.mxu0 %v5218
  %5244 = vmatprep.subr.bf16.mxu0 0
  %5245 = vmatpush1.bf16.msra.mxu0 %v5217
  %5246 = vmatprep.subr.bf16.mxu0 0
  %5247 = vmatpush1.bf16.msra.mxu0 %v5216
  %5248 = vmatprep.subr.bf16.mxu0 0
  %5249 = vmatpush2.bf16.msra.mxu0 0
  %5250 = vmatprep.subr.bf16.mxu0 0
  %5251 = vmatpush2.bf16.msra.mxu0 0
  %5252 = vmatprep.subr.bf16.mxu0 0
  %5253 = vmatpush2.bf16.msra.mxu0 0
  %5254 = vmatprep.subr.bf16.mxu0 0
  %5255 = vmatpush2.bf16.msra.mxu0 0
  %5256 = vmatprep.subr.bf16.mxu0 0
  %5257 = vmatpush2.bf16.msra.mxu0 0
  %5258 = vmatprep.subr.bf16.mxu0 0
  %5259 = vmatpush2.bf16.msra.mxu0 0
  %5260 = vmatprep.subr.bf16.mxu0 0
  %5261 = vmatpush2.bf16.msra.mxu0 0
  %5262 = vmatprep.subr.bf16.mxu0 0
  %5263 = vmatpush2.bf16.msra.mxu0 0
  %5264 = vmatprep.mubr.bf16.mxu0 0
  %5265 = vmatmul.mubr.bf16.gmra.mxu0 %v3775
  %v5266 = vpop.f32.mrf.mxu0
  %v5267 = vadd.f32 0.0, %v5266
  %v5268 = vpop.f32.mrf.mxu0
  %v5269 = vpop.f32.mrf.mxu0
  %v5270 = vadd.f32 0.0, %v5269
  %v5271 = vpop.f32.mrf.mxu0
  %5272 = vmatprep.mubr.bf16.mxu0 0
  %5273 = vmatmul.mubr.bf16.gmra.mxu0 %v3776
  %v5274 = vpop.f32.mrf.mxu0
  %v5275 = vadd.f32 0.0, %v5274
  %v5276 = vpop.f32.mrf.mxu0
  %v5277 = vpop.f32.mrf.mxu0
  %v5278 = vadd.f32 0.0, %v5277
  %v5279 = vpop.f32.mrf.mxu0
  %5280 = vmatprep.mubr.bf16.mxu0 0
  %5281 = vmatmul.mubr.bf16.gmra.mxu0 %v3777
  %v5282 = vpop.f32.mrf.mxu0
  %v5283 = vadd.f32 0.0, %v5282
  %v5284 = vpop.f32.mrf.mxu0
  %v5285 = vpop.f32.mrf.mxu0
  %v5286 = vadd.f32 0.0, %v5285
  %v5287 = vpop.f32.mrf.mxu0
  %5288 = vmatprep.mubr.bf16.mxu0 0
  %5289 = vmatmul.mubr.bf16.gmra.mxu0 %v3778
  %v5290 = vpop.f32.mrf.mxu0
  %v5291 = vadd.f32 0.0, %v5290
  %v5292 = vpop.f32.mrf.mxu0
  %v5293 = vpop.f32.mrf.mxu0
  %v5294 = vadd.f32 0.0, %v5293
  %v5295 = vpop.f32.mrf.mxu0
  %5296 = vmatprep.mubr.bf16.mxu0 0
  %5297 = vmatmul.mubr.bf16.gmra.mxu0 %v3779
  %v5298 = vpop.f32.mrf.mxu0
  %v5299 = vadd.f32 0.0, %v5298
  %v5300 = vpop.f32.mrf.mxu0
  %v5301 = vpop.f32.mrf.mxu0
  %v5302 = vadd.f32 0.0, %v5301
  %v5303 = vpop.f32.mrf.mxu0
  %5304 = vmatprep.mubr.bf16.mxu0 0
  %5305 = vmatmul.mubr.bf16.gmra.mxu0 %v3780
  %v5306 = vpop.f32.mrf.mxu0
  %v5307 = vadd.f32 0.0, %v5306
  %v5308 = vpop.f32.mrf.mxu0
  %v5309 = vpop.f32.mrf.mxu0
  %v5310 = vadd.f32 0.0, %v5309
  %v5311 = vpop.f32.mrf.mxu0
  %5312 = vmatprep.mubr.bf16.mxu0 0
  %5313 = vmatmul.mubr.bf16.gmra.mxu0 %v3781
  %v5314 = vpop.f32.mrf.mxu0
  %v5315 = vadd.f32 0.0, %v5314
  %v5316 = vpop.f32.mrf.mxu0
  %v5317 = vpop.f32.mrf.mxu0
  %v5318 = vadd.f32 0.0, %v5317
  %v5319 = vpop.f32.mrf.mxu0
  %5320 = vmatprep.mubr.bf16.mxu0 0
  %5321 = vmatmul.mubr.bf16.gmra.mxu0 %v3782
  %v5322 = vpop.f32.mrf.mxu0
  %v5323 = vadd.f32 0.0, %v5322
  %v5324 = vpop.f32.mrf.mxu0
  %v5325 = vpop.f32.mrf.mxu0
  %v5326 = vadd.f32 0.0, %v5325
  %v5327 = vpop.f32.mrf.mxu0
  %5328 = vmatprep.mubr.bf16.mxu0 0
  %5329 = vmatmul.mubr.bf16.gmra.mxu0 %v3783
  %v5330 = vpop.f32.mrf.mxu0
  %v5331 = vadd.f32 0.0, %v5330
  %v5332 = vpop.f32.mrf.mxu0
  %v5333 = vpop.f32.mrf.mxu0
  %v5334 = vadd.f32 0.0, %v5333
  %v5335 = vpop.f32.mrf.mxu0
  %5336 = vmatprep.mubr.bf16.mxu0 0
  %5337 = vmatmul.mubr.bf16.gmra.mxu0 %v3784
  %v5338 = vpop.f32.mrf.mxu0
  %v5339 = vadd.f32 0.0, %v5338
  %v5340 = vpop.f32.mrf.mxu0
  %v5341 = vpop.f32.mrf.mxu0
  %v5342 = vadd.f32 0.0, %v5341
  %v5343 = vpop.f32.mrf.mxu0
  %5344 = vmatprep.mubr.bf16.mxu0 0
  %5345 = vmatmul.mubr.bf16.gmra.mxu0 %v3785
  %v5346 = vpop.f32.mrf.mxu0
  %v5347 = vadd.f32 0.0, %v5346
  %v5348 = vpop.f32.mrf.mxu0
  %v5349 = vpop.f32.mrf.mxu0
  %v5350 = vadd.f32 0.0, %v5349
  %v5351 = vpop.f32.mrf.mxu0
  %5352 = vmatprep.mubr.bf16.mxu0 0
  %5353 = vmatmul.mubr.bf16.gmra.mxu0 %v3786
  %v5354 = vpop.f32.mrf.mxu0
  %v5355 = vadd.f32 0.0, %v5354
  %v5356 = vpop.f32.mrf.mxu0
  %v5357 = vpop.f32.mrf.mxu0
  %v5358 = vadd.f32 0.0, %v5357
  %v5359 = vpop.f32.mrf.mxu0
  %5360 = vmatprep.mubr.bf16.mxu0 0
  %5361 = vmatmul.mubr.bf16.gmra.mxu0 %v3787
  %v5362 = vpop.f32.mrf.mxu0
  %v5363 = vadd.f32 0.0, %v5362
  %v5364 = vpop.f32.mrf.mxu0
  %v5365 = vpop.f32.mrf.mxu0
  %v5366 = vadd.f32 0.0, %v5365
  %v5367 = vpop.f32.mrf.mxu0
  %5368 = vmatprep.mubr.bf16.mxu0 0
  %5369 = vmatmul.mubr.bf16.gmra.mxu0 %v3788
  %v5370 = vpop.f32.mrf.mxu0
  %v5371 = vadd.f32 0.0, %v5370
  %v5372 = vpop.f32.mrf.mxu0
  %v5373 = vpop.f32.mrf.mxu0
  %v5374 = vadd.f32 0.0, %v5373
  %v5375 = vpop.f32.mrf.mxu0
  %5376 = vmatprep.mubr.bf16.mxu0 0
  %5377 = vmatmul.mubr.bf16.gmra.mxu0 %v3789
  %v5378 = vpop.f32.mrf.mxu0
  %v5379 = vadd.f32 0.0, %v5378
  %v5380 = vpop.f32.mrf.mxu0
  %v5381 = vpop.f32.mrf.mxu0
  %v5382 = vadd.f32 0.0, %v5381
  %v5383 = vpop.f32.mrf.mxu0
  %5384 = vmatprep.mubr.bf16.mxu0 0
  %5385 = vmatmul.mubr.bf16.gmra.mxu0 %v5180
  %v5386 = vpop.f32.mrf.mxu0
  %v5387 = vadd.f32 0.0, %v5386
  %v5388 = vpop.f32.mrf.mxu0
  %v5389 = vpop.f32.mrf.mxu0
  %v5390 = vadd.f32 0.0, %v5389
  %v5391 = vpop.f32.mrf.mxu0
  %5392 = vmatprep.mubr.bf16.mxu0 0
  %5393 = vmatmul.mubr.bf16.gmra.mxu0 %v3791
  %v5394 = vpop.f32.mrf.mxu0
  %v5395 = vadd.f32 0.0, %v5394
  %v5396 = vpop.f32.mrf.mxu0
  %v5397 = vpop.f32.mrf.mxu0
  %v5398 = vadd.f32 0.0, %v5397
  %v5399 = vpop.f32.mrf.mxu0
  %5400 = vmatprep.mubr.bf16.mxu0 0
  %5401 = vmatmul.mubr.bf16.gmra.mxu0 %v3792
  %v5402 = vpop.f32.mrf.mxu0
  %v5403 = vadd.f32 0.0, %v5402
  %v5404 = vpop.f32.mrf.mxu0
  %v5405 = vpop.f32.mrf.mxu0
  %v5406 = vadd.f32 0.0, %v5405
  %v5407 = vpop.f32.mrf.mxu0
  %5408 = vmatprep.mubr.bf16.mxu0 0
  %5409 = vmatmul.mubr.bf16.gmra.mxu0 %v3793
  %v5410 = vpop.f32.mrf.mxu0
  %v5411 = vadd.f32 0.0, %v5410
  %v5412 = vpop.f32.mrf.mxu0
  %v5413 = vpop.f32.mrf.mxu0
  %v5414 = vadd.f32 0.0, %v5413
  %v5415 = vpop.f32.mrf.mxu0
  %5416 = vmatprep.mubr.bf16.mxu0 0
  %5417 = vmatmul.mubr.bf16.gmra.mxu0 %v3794
  %v5418 = vpop.f32.mrf.mxu0
  %v5419 = vadd.f32 0.0, %v5418
  %v5420 = vpop.f32.mrf.mxu0
  %v5421 = vpop.f32.mrf.mxu0
  %v5422 = vadd.f32 0.0, %v5421
  %v5423 = vpop.f32.mrf.mxu0
  %5424 = vmatprep.mubr.bf16.mxu0 0
  %5425 = vmatmul.mubr.bf16.gmra.mxu0 %v3795
  %v5426 = vpop.f32.mrf.mxu0
  %v5427 = vadd.f32 0.0, %v5426
  %v5428 = vpop.f32.mrf.mxu0
  %v5429 = vpop.f32.mrf.mxu0
  %v5430 = vadd.f32 0.0, %v5429
  %v5431 = vpop.f32.mrf.mxu0
  %5432 = vmatprep.mubr.bf16.mxu0 0
  %5433 = vmatmul.mubr.bf16.gmra.mxu0 %v3796
  %v5434 = vpop.f32.mrf.mxu0
  %v5435 = vadd.f32 0.0, %v5434
  %v5436 = vpop.f32.mrf.mxu0
  %v5437 = vpop.f32.mrf.mxu0
  %v5438 = vadd.f32 0.0, %v5437
  %v5439 = vpop.f32.mrf.mxu0
  %5440 = vmatprep.mubr.bf16.mxu0 0
  %5441 = vmatmul.mubr.bf16.gmra.mxu0 %v3797
  %v5442 = vpop.f32.mrf.mxu0
  %v5443 = vadd.f32 0.0, %v5442
  %v5444 = vpop.f32.mrf.mxu0
  %v5445 = vpop.f32.mrf.mxu0
  %v5446 = vadd.f32 0.0, %v5445
  %v5447 = vpop.f32.mrf.mxu0
  %5448 = vmatprep.mubr.bf16.mxu0 0
  %5449 = vmatmul.mubr.bf16.gmra.mxu0 %v3798
  %v5450 = vpop.f32.mrf.mxu0
  %v5451 = vadd.f32 0.0, %v5450
  %v5452 = vpop.f32.mrf.mxu0
  %v5453 = vpop.f32.mrf.mxu0
  %v5454 = vadd.f32 0.0, %v5453
  %v5455 = vpop.f32.mrf.mxu0
  %5456 = vmatprep.mubr.bf16.mxu0 0
  %5457 = vmatmul.mubr.bf16.gmra.mxu0 %v3799
  %v5458 = vpop.f32.mrf.mxu0
  %v5459 = vadd.f32 0.0, %v5458
  %v5460 = vpop.f32.mrf.mxu0
  %v5461 = vpop.f32.mrf.mxu0
  %v5462 = vadd.f32 0.0, %v5461
  %v5463 = vpop.f32.mrf.mxu0
  %5464 = vmatprep.mubr.bf16.mxu0 0
  %5465 = vmatmul.mubr.bf16.gmra.mxu0 %v3800
  %v5466 = vpop.f32.mrf.mxu0
  %v5467 = vadd.f32 0.0, %v5466
  %v5468 = vpop.f32.mrf.mxu0
  %v5469 = vpop.f32.mrf.mxu0
  %v5470 = vadd.f32 0.0, %v5469
  %v5471 = vpop.f32.mrf.mxu0
  %5472 = vmatprep.mubr.bf16.mxu0 0
  %5473 = vmatmul.mubr.bf16.gmra.mxu0 %v3801
  %v5474 = vpop.f32.mrf.mxu0
  %v5475 = vadd.f32 0.0, %v5474
  %v5476 = vpop.f32.mrf.mxu0
  %v5477 = vpop.f32.mrf.mxu0
  %v5478 = vadd.f32 0.0, %v5477
  %v5479 = vpop.f32.mrf.mxu0
  %5480 = vmatprep.mubr.bf16.mxu0 0
  %5481 = vmatmul.mubr.bf16.gmra.mxu0 %v3802
  %v5482 = vpop.f32.mrf.mxu0
  %v5483 = vadd.f32 0.0, %v5482
  %v5484 = vpop.f32.mrf.mxu0
  %v5485 = vpop.f32.mrf.mxu0
  %v5486 = vadd.f32 0.0, %v5485
  %v5487 = vpop.f32.mrf.mxu0
  %5488 = vmatprep.mubr.bf16.mxu0 0
  %5489 = vmatmul.mubr.bf16.gmra.mxu0 %v3803
  %v5490 = vpop.f32.mrf.mxu0
  %v5491 = vadd.f32 0.0, %v5490
  %v5492 = vpop.f32.mrf.mxu0
  %v5493 = vpop.f32.mrf.mxu0
  %v5494 = vadd.f32 0.0, %v5493
  %v5495 = vpop.f32.mrf.mxu0
  %5496 = vmatprep.mubr.bf16.mxu0 0
  %5497 = vmatmul.mubr.bf16.gmra.mxu0 %v3804
  %v5498 = vpop.f32.mrf.mxu0
  %v5499 = vadd.f32 0.0, %v5498
  %v5500 = vpop.f32.mrf.mxu0
  %v5501 = vpop.f32.mrf.mxu0
  %v5502 = vadd.f32 0.0, %v5501
  %v5503 = vpop.f32.mrf.mxu0
  %5504 = vmatprep.mubr.bf16.mxu0 0
  %5505 = vmatmul.mubr.bf16.gmra.mxu0 %v3805
  %v5506 = vpop.f32.mrf.mxu0
  %v5507 = vadd.f32 0.0, %v5506
  %v5508 = vpop.f32.mrf.mxu0
  %v5509 = vpop.f32.mrf.mxu0
  %v5510 = vadd.f32 0.0, %v5509
  %v5511 = vpop.f32.mrf.mxu0
  %5512 = vmatprep.mubr.bf16.mxu0 0
  %5513 = vmatmul.mubr.bf16.gmra.mxu0 %v5181
  %v5514 = vpop.f32.mrf.mxu0
  %v5515 = vadd.f32 0.0, %v5514
  %v5516 = vpop.f32.mrf.mxu0
  %v5517 = vpop.f32.mrf.mxu0
  %v5518 = vadd.f32 0.0, %v5517
  %v5519 = vpop.f32.mrf.mxu0
  %5520 = vdwg.mxu0
  %v5521 = vadd.f32 %v5079, %v5267
  %v5522 = vadd.f32 %v5080, %v5270
  %v5523 = vadd.f32 %v5081, %v5275
  %v5524 = vadd.f32 %v5082, %v5278
  %v5525 = vadd.f32 %v5083, %v5283
  %v5526 = vadd.f32 %v5084, %v5286
  %v5527 = vadd.f32 %v5085, %v5291
  %v5528 = vadd.f32 %v5086, %v5294
  %v5529 = vadd.f32 %v5087, %v5299
  %v5530 = vadd.f32 %v5088, %v5302
  %v5531 = vadd.f32 %v5089, %v5307
  %v5532 = vadd.f32 %v5090, %v5310
  %v5533 = vadd.f32 %v5091, %v5315
  %v5534 = vadd.f32 %v5092, %v5318
  %v5535 = vadd.f32 %v5093, %v5323
  %v5536 = vadd.f32 %v5094, %v5326
  %v5537 = vadd.f32 %v5095, %v5331
  %v5538 = vadd.f32 %v5096, %v5334
  %v5539 = vadd.f32 %v5097, %v5339
  %v5540 = vadd.f32 %v5098, %v5342
  %v5541 = vadd.f32 %v5099, %v5347
  %v5542 = vadd.f32 %v5100, %v5350
  %v5543 = vadd.f32 %v5101, %v5355
  %v5544 = vadd.f32 %v5102, %v5358
  %v5545 = vadd.f32 %v5103, %v5363
  %v5546 = vadd.f32 %v5104, %v5366
  %v5547 = vadd.f32 %v5105, %v5371
  %v5548 = vadd.f32 %v5106, %v5374
  %v5549 = vadd.f32 %v5107, %v5379
  %v5550 = vadd.f32 %v5108, %v5382
  %v5551 = vadd.f32 %v5109, %v5387
  %v5552 = vadd.f32 %v5110, %v5390
  %v5553 = vadd.f32 %v5111, %v5395
  %v5554 = vadd.f32 %v5112, %v5398
  %v5555 = vadd.f32 %v5113, %v5403
  %v5556 = vadd.f32 %v5114, %v5406
  %v5557 = vadd.f32 %v5115, %v5411
  %v5558 = vadd.f32 %v5116, %v5414
  %v5559 = vadd.f32 %v5117, %v5419
  %v5560 = vadd.f32 %v5118, %v5422
  %v5561 = vadd.f32 %v5119, %v5427
  %v5562 = vadd.f32 %v5120, %v5430
  %v5563 = vadd.f32 %v5121, %v5435
  %v5564 = vadd.f32 %v5122, %v5438
  %v5565 = vadd.f32 %v5123, %v5443
  %v5566 = vadd.f32 %v5124, %v5446
  %v5567 = vadd.f32 %v5125, %v5451
  %v5568 = vadd.f32 %v5126, %v5454
  %v5569 = vadd.f32 %v5127, %v5459
  %v5570 = vadd.f32 %v5128, %v5462
  %v5571 = vadd.f32 %v5129, %v5467
  %v5572 = vadd.f32 %v5130, %v5470
  %v5573 = vadd.f32 %v5131, %v5475
  %v5574 = vadd.f32 %v5132, %v5478
  %v5575 = vadd.f32 %v5133, %v5483
  %v5576 = vadd.f32 %v5134, %v5486
  %v5577 = vadd.f32 %v5135, %v5491
  %v5578 = vadd.f32 %v5136, %v5494
  %v5579 = vadd.f32 %v5137, %v5499
  %v5580 = vadd.f32 %v5138, %v5502
  %v5581 = vadd.f32 %v5139, %v5507
  %v5582 = vadd.f32 %v5140, %v5510
  %v5583 = vadd.f32 %v5141, %v5515
  %v5584 = vadd.f32 %v5142, %v5518
  %s5585 = scalar_lea.vmem %s3, 384
  %v5586 = vld [vmem:[%s5585] sm:$0xf]
  %v5587 = vld [vmem:[%s5585 + $0x4] sm:$0xf]
  %v5588 = vld [vmem:[%s5585 + $0x8] sm:$0xf]
  %v5589 = vld [vmem:[%s5585 + $0xc] sm:$0xf]
  %v5590 = vld [vmem:[%s5585 + $0x10] sm:$0xf]
  %v5591 = vld [vmem:[%s5585 + $0x14] sm:$0xf]
  %v5592 = vld [vmem:[%s5585 + $0x18] sm:$0xf]
  %v5593 = vld [vmem:[%s5585 + $0x1c] sm:$0xf]
  %v5594 = vld [vmem:[%s5585 + $0x20] sm:$0xf]
  %v5595 = vld [vmem:[%s5585 + $0x24] sm:$0xf]
  %v5596 = vld [vmem:[%s5585 + $0x28] sm:$0xf]
  %v5597 = vld [vmem:[%s5585 + $0x2c] sm:$0xf]
  %v5598 = vld [vmem:[%s5585 + $0x30] sm:$0xf]
  %v5599 = vld [vmem:[%s5585 + $0x34] sm:$0xf]
  %v5600 = vld [vmem:[%s5585 + $0x38] sm:$0xf]
  %v5601 = vld [vmem:[%s5585 + $0x3c] sm:$0xf]
  %v5606 = vunpack.c.l.b16 %v1579
  %v5607 = vunpack.c.l.b16 %v1580
  %v5608 = vunpack.c.l.b16 %v1633
  %v5609 = vunpack.c.l.b16 %v1634
  %v5610 = vpack.c.b16 %v5607, %v5606
  %v5611 = vpack.c.b16 %v5609, %v5608
  %v5630 = vunpack.c.l.b16 %v5586
  %v5631 = vunpack.c.l.b16 %v5587
  %v5632 = vunpack.c.l.b16 %v5588
  %v5633 = vunpack.c.l.b16 %v5589
  %v5634 = vunpack.c.l.b16 %v5590
  %v5635 = vunpack.c.l.b16 %v5591
  %v5636 = vunpack.c.l.b16 %v5592
  %v5637 = vunpack.c.l.b16 %v5593
  %v5638 = vunpack.c.l.b16 %v5594
  %v5639 = vunpack.c.l.b16 %v5595
  %v5640 = vunpack.c.l.b16 %v5596
  %v5641 = vunpack.c.l.b16 %v5597
  %v5642 = vunpack.c.l.b16 %v5598
  %v5643 = vunpack.c.l.b16 %v5599
  %v5644 = vunpack.c.l.b16 %v5600
  %v5645 = vunpack.c.l.b16 %v5601
  %v5646 = vpack.c.b16 %v5631, %v5630
  %v5647 = vpack.c.b16 %v5633, %v5632
  %v5648 = vpack.c.b16 %v5635, %v5634
  %v5649 = vpack.c.b16 %v5637, %v5636
  %v5650 = vpack.c.b16 %v5639, %v5638
  %v5651 = vpack.c.b16 %v5641, %v5640
  %v5652 = vpack.c.b16 %v5643, %v5642
  %v5653 = vpack.c.b16 %v5645, %v5644
  %5662 = vmatprep.subr.bf16.mxu0 0
  %5663 = vmatpush1.bf16.msra.mxu0 %v5653
  %5664 = vmatprep.subr.bf16.mxu0 0
  %5665 = vmatpush1.bf16.msra.mxu0 %v5652
  %5666 = vmatprep.subr.bf16.mxu0 0
  %5667 = vmatpush1.bf16.msra.mxu0 %v5651
  %5668 = vmatprep.subr.bf16.mxu0 0
  %5669 = vmatpush1.bf16.msra.mxu0 %v5650
  %5670 = vmatprep.subr.bf16.mxu0 0
  %5671 = vmatpush1.bf16.msra.mxu0 %v5649
  %5672 = vmatprep.subr.bf16.mxu0 0
  %5673 = vmatpush1.bf16.msra.mxu0 %v5648
  %5674 = vmatprep.subr.bf16.mxu0 0
  %5675 = vmatpush1.bf16.msra.mxu0 %v5647
  %5676 = vmatprep.subr.bf16.mxu0 0
  %5677 = vmatpush1.bf16.msra.mxu0 %v5646
  %5678 = vmatprep.subr.bf16.mxu0 0
  %5679 = vmatpush2.bf16.msra.mxu0 0
  %5680 = vmatprep.subr.bf16.mxu0 0
  %5681 = vmatpush2.bf16.msra.mxu0 0
  %5682 = vmatprep.subr.bf16.mxu0 0
  %5683 = vmatpush2.bf16.msra.mxu0 0
  %5684 = vmatprep.subr.bf16.mxu0 0
  %5685 = vmatpush2.bf16.msra.mxu0 0
  %5686 = vmatprep.subr.bf16.mxu0 0
  %5687 = vmatpush2.bf16.msra.mxu0 0
  %5688 = vmatprep.subr.bf16.mxu0 0
  %5689 = vmatpush2.bf16.msra.mxu0 0
  %5690 = vmatprep.subr.bf16.mxu0 0
  %5691 = vmatpush2.bf16.msra.mxu0 0
  %5692 = vmatprep.subr.bf16.mxu0 0
  %5693 = vmatpush2.bf16.msra.mxu0 0
  %5694 = vmatprep.mubr.bf16.mxu0 0
  %5695 = vmatmul.mubr.bf16.gmra.mxu0 %v3035
  %v5696 = vpop.f32.mrf.mxu0
  %v5697 = vadd.f32 0.0, %v5696
  %v5698 = vpop.f32.mrf.mxu0
  %v5699 = vpop.f32.mrf.mxu0
  %v5700 = vadd.f32 0.0, %v5699
  %v5701 = vpop.f32.mrf.mxu0
  %5702 = vmatprep.mubr.bf16.mxu0 0
  %5703 = vmatmul.mubr.bf16.gmra.mxu0 %v3036
  %v5704 = vpop.f32.mrf.mxu0
  %v5705 = vadd.f32 0.0, %v5704
  %v5706 = vpop.f32.mrf.mxu0
  %v5707 = vpop.f32.mrf.mxu0
  %v5708 = vadd.f32 0.0, %v5707
  %v5709 = vpop.f32.mrf.mxu0
  %5710 = vmatprep.mubr.bf16.mxu0 0
  %5711 = vmatmul.mubr.bf16.gmra.mxu0 %v3037
  %v5712 = vpop.f32.mrf.mxu0
  %v5713 = vadd.f32 0.0, %v5712
  %v5714 = vpop.f32.mrf.mxu0
  %v5715 = vpop.f32.mrf.mxu0
  %v5716 = vadd.f32 0.0, %v5715
  %v5717 = vpop.f32.mrf.mxu0
  %5718 = vmatprep.mubr.bf16.mxu0 0
  %5719 = vmatmul.mubr.bf16.gmra.mxu0 %v3038
  %v5720 = vpop.f32.mrf.mxu0
  %v5721 = vadd.f32 0.0, %v5720
  %v5722 = vpop.f32.mrf.mxu0
  %v5723 = vpop.f32.mrf.mxu0
  %v5724 = vadd.f32 0.0, %v5723
  %v5725 = vpop.f32.mrf.mxu0
  %5726 = vmatprep.mubr.bf16.mxu0 0
  %5727 = vmatmul.mubr.bf16.gmra.mxu0 %v3039
  %v5728 = vpop.f32.mrf.mxu0
  %v5729 = vadd.f32 0.0, %v5728
  %v5730 = vpop.f32.mrf.mxu0
  %v5731 = vpop.f32.mrf.mxu0
  %v5732 = vadd.f32 0.0, %v5731
  %v5733 = vpop.f32.mrf.mxu0
  %5734 = vmatprep.mubr.bf16.mxu0 0
  %5735 = vmatmul.mubr.bf16.gmra.mxu0 %v3040
  %v5736 = vpop.f32.mrf.mxu0
  %v5737 = vadd.f32 0.0, %v5736
  %v5738 = vpop.f32.mrf.mxu0
  %v5739 = vpop.f32.mrf.mxu0
  %v5740 = vadd.f32 0.0, %v5739
  %v5741 = vpop.f32.mrf.mxu0
  %5742 = vmatprep.mubr.bf16.mxu0 0
  %5743 = vmatmul.mubr.bf16.gmra.mxu0 %v3041
  %v5744 = vpop.f32.mrf.mxu0
  %v5745 = vadd.f32 0.0, %v5744
  %v5746 = vpop.f32.mrf.mxu0
  %v5747 = vpop.f32.mrf.mxu0
  %v5748 = vadd.f32 0.0, %v5747
  %v5749 = vpop.f32.mrf.mxu0
  %5750 = vmatprep.mubr.bf16.mxu0 0
  %5751 = vmatmul.mubr.bf16.gmra.mxu0 %v3042
  %v5752 = vpop.f32.mrf.mxu0
  %v5753 = vadd.f32 0.0, %v5752
  %v5754 = vpop.f32.mrf.mxu0
  %v5755 = vpop.f32.mrf.mxu0
  %v5756 = vadd.f32 0.0, %v5755
  %v5757 = vpop.f32.mrf.mxu0
  %5758 = vmatprep.mubr.bf16.mxu0 0
  %5759 = vmatmul.mubr.bf16.gmra.mxu0 %v3043
  %v5760 = vpop.f32.mrf.mxu0
  %v5761 = vadd.f32 0.0, %v5760
  %v5762 = vpop.f32.mrf.mxu0
  %v5763 = vpop.f32.mrf.mxu0
  %v5764 = vadd.f32 0.0, %v5763
  %v5765 = vpop.f32.mrf.mxu0
  %5766 = vmatprep.mubr.bf16.mxu0 0
  %5767 = vmatmul.mubr.bf16.gmra.mxu0 %v3044
  %v5768 = vpop.f32.mrf.mxu0
  %v5769 = vadd.f32 0.0, %v5768
  %v5770 = vpop.f32.mrf.mxu0
  %v5771 = vpop.f32.mrf.mxu0
  %v5772 = vadd.f32 0.0, %v5771
  %v5773 = vpop.f32.mrf.mxu0
  %5774 = vmatprep.mubr.bf16.mxu0 0
  %5775 = vmatmul.mubr.bf16.gmra.mxu0 %v3045
  %v5776 = vpop.f32.mrf.mxu0
  %v5777 = vadd.f32 0.0, %v5776
  %v5778 = vpop.f32.mrf.mxu0
  %v5779 = vpop.f32.mrf.mxu0
  %v5780 = vadd.f32 0.0, %v5779
  %v5781 = vpop.f32.mrf.mxu0
  %5782 = vmatprep.mubr.bf16.mxu0 0
  %5783 = vmatmul.mubr.bf16.gmra.mxu0 %v3046
  %v5784 = vpop.f32.mrf.mxu0
  %v5785 = vadd.f32 0.0, %v5784
  %v5786 = vpop.f32.mrf.mxu0
  %v5787 = vpop.f32.mrf.mxu0
  %v5788 = vadd.f32 0.0, %v5787
  %v5789 = vpop.f32.mrf.mxu0
  %5790 = vmatprep.mubr.bf16.mxu0 0
  %5791 = vmatmul.mubr.bf16.gmra.mxu0 %v3047
  %v5792 = vpop.f32.mrf.mxu0
  %v5793 = vadd.f32 0.0, %v5792
  %v5794 = vpop.f32.mrf.mxu0
  %v5795 = vpop.f32.mrf.mxu0
  %v5796 = vadd.f32 0.0, %v5795
  %v5797 = vpop.f32.mrf.mxu0
  %5798 = vmatprep.mubr.bf16.mxu0 0
  %5799 = vmatmul.mubr.bf16.gmra.mxu0 %v3048
  %v5800 = vpop.f32.mrf.mxu0
  %v5801 = vadd.f32 0.0, %v5800
  %v5802 = vpop.f32.mrf.mxu0
  %v5803 = vpop.f32.mrf.mxu0
  %v5804 = vadd.f32 0.0, %v5803
  %v5805 = vpop.f32.mrf.mxu0
  %5806 = vmatprep.mubr.bf16.mxu0 0
  %5807 = vmatmul.mubr.bf16.gmra.mxu0 %v4264
  %v5808 = vpop.f32.mrf.mxu0
  %v5809 = vadd.f32 0.0, %v5808
  %v5810 = vpop.f32.mrf.mxu0
  %v5811 = vpop.f32.mrf.mxu0
  %v5812 = vadd.f32 0.0, %v5811
  %v5813 = vpop.f32.mrf.mxu0
  %5814 = vmatprep.mubr.bf16.mxu0 0
  %5815 = vmatmul.mubr.bf16.gmra.mxu0 %v5610
  %v5816 = vpop.f32.mrf.mxu0
  %v5817 = vadd.f32 0.0, %v5816
  %v5818 = vpop.f32.mrf.mxu0
  %v5819 = vpop.f32.mrf.mxu0
  %v5820 = vadd.f32 0.0, %v5819
  %v5821 = vpop.f32.mrf.mxu0
  %5822 = vmatprep.mubr.bf16.mxu0 0
  %5823 = vmatmul.mubr.bf16.gmra.mxu0 %v3051
  %v5824 = vpop.f32.mrf.mxu0
  %v5825 = vadd.f32 0.0, %v5824
  %v5826 = vpop.f32.mrf.mxu0
  %v5827 = vpop.f32.mrf.mxu0
  %v5828 = vadd.f32 0.0, %v5827
  %v5829 = vpop.f32.mrf.mxu0
  %5830 = vmatprep.mubr.bf16.mxu0 0
  %5831 = vmatmul.mubr.bf16.gmra.mxu0 %v3052
  %v5832 = vpop.f32.mrf.mxu0
  %v5833 = vadd.f32 0.0, %v5832
  %v5834 = vpop.f32.mrf.mxu0
  %v5835 = vpop.f32.mrf.mxu0
  %v5836 = vadd.f32 0.0, %v5835
  %v5837 = vpop.f32.mrf.mxu0
  %5838 = vmatprep.mubr.bf16.mxu0 0
  %5839 = vmatmul.mubr.bf16.gmra.mxu0 %v3053
  %v5840 = vpop.f32.mrf.mxu0
  %v5841 = vadd.f32 0.0, %v5840
  %v5842 = vpop.f32.mrf.mxu0
  %v5843 = vpop.f32.mrf.mxu0
  %v5844 = vadd.f32 0.0, %v5843
  %v5845 = vpop.f32.mrf.mxu0
  %5846 = vmatprep.mubr.bf16.mxu0 0
  %5847 = vmatmul.mubr.bf16.gmra.mxu0 %v3054
  %v5848 = vpop.f32.mrf.mxu0
  %v5849 = vadd.f32 0.0, %v5848
  %v5850 = vpop.f32.mrf.mxu0
  %v5851 = vpop.f32.mrf.mxu0
  %v5852 = vadd.f32 0.0, %v5851
  %v5853 = vpop.f32.mrf.mxu0
  %5854 = vmatprep.mubr.bf16.mxu0 0
  %5855 = vmatmul.mubr.bf16.gmra.mxu0 %v3055
  %v5856 = vpop.f32.mrf.mxu0
  %v5857 = vadd.f32 0.0, %v5856
  %v5858 = vpop.f32.mrf.mxu0
  %v5859 = vpop.f32.mrf.mxu0
  %v5860 = vadd.f32 0.0, %v5859
  %v5861 = vpop.f32.mrf.mxu0
  %5862 = vmatprep.mubr.bf16.mxu0 0
  %5863 = vmatmul.mubr.bf16.gmra.mxu0 %v3056
  %v5864 = vpop.f32.mrf.mxu0
  %v5865 = vadd.f32 0.0, %v5864
  %v5866 = vpop.f32.mrf.mxu0
  %v5867 = vpop.f32.mrf.mxu0
  %v5868 = vadd.f32 0.0, %v5867
  %v5869 = vpop.f32.mrf.mxu0
  %5870 = vmatprep.mubr.bf16.mxu0 0
  %5871 = vmatmul.mubr.bf16.gmra.mxu0 %v3057
  %v5872 = vpop.f32.mrf.mxu0
  %v5873 = vadd.f32 0.0, %v5872
  %v5874 = vpop.f32.mrf.mxu0
  %v5875 = vpop.f32.mrf.mxu0
  %v5876 = vadd.f32 0.0, %v5875
  %v5877 = vpop.f32.mrf.mxu0
  %5878 = vmatprep.mubr.bf16.mxu0 0
  %5879 = vmatmul.mubr.bf16.gmra.mxu0 %v3058
  %v5880 = vpop.f32.mrf.mxu0
  %v5881 = vadd.f32 0.0, %v5880
  %v5882 = vpop.f32.mrf.mxu0
  %v5883 = vpop.f32.mrf.mxu0
  %v5884 = vadd.f32 0.0, %v5883
  %v5885 = vpop.f32.mrf.mxu0
  %5886 = vmatprep.mubr.bf16.mxu0 0
  %5887 = vmatmul.mubr.bf16.gmra.mxu0 %v3059
  %v5888 = vpop.f32.mrf.mxu0
  %v5889 = vadd.f32 0.0, %v5888
  %v5890 = vpop.f32.mrf.mxu0
  %v5891 = vpop.f32.mrf.mxu0
  %v5892 = vadd.f32 0.0, %v5891
  %v5893 = vpop.f32.mrf.mxu0
  %5894 = vmatprep.mubr.bf16.mxu0 0
  %5895 = vmatmul.mubr.bf16.gmra.mxu0 %v3060
  %v5896 = vpop.f32.mrf.mxu0
  %v5897 = vadd.f32 0.0, %v5896
  %v5898 = vpop.f32.mrf.mxu0
  %v5899 = vpop.f32.mrf.mxu0
  %v5900 = vadd.f32 0.0, %v5899
  %v5901 = vpop.f32.mrf.mxu0
  %5902 = vmatprep.mubr.bf16.mxu0 0
  %5903 = vmatmul.mubr.bf16.gmra.mxu0 %v3061
  %v5904 = vpop.f32.mrf.mxu0
  %v5905 = vadd.f32 0.0, %v5904
  %v5906 = vpop.f32.mrf.mxu0
  %v5907 = vpop.f32.mrf.mxu0
  %v5908 = vadd.f32 0.0, %v5907
  %v5909 = vpop.f32.mrf.mxu0
  %5910 = vmatprep.mubr.bf16.mxu0 0
  %5911 = vmatmul.mubr.bf16.gmra.mxu0 %v3062
  %v5912 = vpop.f32.mrf.mxu0
  %v5913 = vadd.f32 0.0, %v5912
  %v5914 = vpop.f32.mrf.mxu0
  %v5915 = vpop.f32.mrf.mxu0
  %v5916 = vadd.f32 0.0, %v5915
  %v5917 = vpop.f32.mrf.mxu0
  %5918 = vmatprep.mubr.bf16.mxu0 0
  %5919 = vmatmul.mubr.bf16.gmra.mxu0 %v3063
  %v5920 = vpop.f32.mrf.mxu0
  %v5921 = vadd.f32 0.0, %v5920
  %v5922 = vpop.f32.mrf.mxu0
  %v5923 = vpop.f32.mrf.mxu0
  %v5924 = vadd.f32 0.0, %v5923
  %v5925 = vpop.f32.mrf.mxu0
  %5926 = vmatprep.mubr.bf16.mxu0 0
  %5927 = vmatmul.mubr.bf16.gmra.mxu0 %v3064
  %v5928 = vpop.f32.mrf.mxu0
  %v5929 = vadd.f32 0.0, %v5928
  %v5930 = vpop.f32.mrf.mxu0
  %v5931 = vpop.f32.mrf.mxu0
  %v5932 = vadd.f32 0.0, %v5931
  %v5933 = vpop.f32.mrf.mxu0
  %5934 = vmatprep.mubr.bf16.mxu0 0
  %5935 = vmatmul.mubr.bf16.gmra.mxu0 %v4265
  %v5936 = vpop.f32.mrf.mxu0
  %v5937 = vadd.f32 0.0, %v5936
  %v5938 = vpop.f32.mrf.mxu0
  %v5939 = vpop.f32.mrf.mxu0
  %v5940 = vadd.f32 0.0, %v5939
  %v5941 = vpop.f32.mrf.mxu0
  %5942 = vmatprep.mubr.bf16.mxu0 0
  %5943 = vmatmul.mubr.bf16.gmra.mxu0 %v5611
  %v5944 = vpop.f32.mrf.mxu0
  %v5945 = vadd.f32 0.0, %v5944
  %v5946 = vpop.f32.mrf.mxu0
  %v5947 = vpop.f32.mrf.mxu0
  %v5948 = vadd.f32 0.0, %v5947
  %v5949 = vpop.f32.mrf.mxu0
  %5950 = vdwg.mxu0
  %v5951 = vadd.f32 %v5521, %v5697
  %v5952 = vadd.f32 %v5522, %v5700
  %v5953 = vadd.f32 %v5523, %v5705
  %v5954 = vadd.f32 %v5524, %v5708
  %v5955 = vadd.f32 %v5525, %v5713
  %v5956 = vadd.f32 %v5526, %v5716
  %v5957 = vadd.f32 %v5527, %v5721
  %v5958 = vadd.f32 %v5528, %v5724
  %v5959 = vadd.f32 %v5529, %v5729
  %v5960 = vadd.f32 %v5530, %v5732
  %v5961 = vadd.f32 %v5531, %v5737
  %v5962 = vadd.f32 %v5532, %v5740
  %v5963 = vadd.f32 %v5533, %v5745
  %v5964 = vadd.f32 %v5534, %v5748
  %v5965 = vadd.f32 %v5535, %v5753
  %v5966 = vadd.f32 %v5536, %v5756
  %v5967 = vadd.f32 %v5537, %v5761
  %v5968 = vadd.f32 %v5538, %v5764
  %v5969 = vadd.f32 %v5539, %v5769
  %v5970 = vadd.f32 %v5540, %v5772
  %v5971 = vadd.f32 %v5541, %v5777
  %v5972 = vadd.f32 %v5542, %v5780
  %v5973 = vadd.f32 %v5543, %v5785
  %v5974 = vadd.f32 %v5544, %v5788
  %v5975 = vadd.f32 %v5545, %v5793
  %v5976 = vadd.f32 %v5546, %v5796
  %v5977 = vadd.f32 %v5547, %v5801
  %v5978 = vadd.f32 %v5548, %v5804
  %v5979 = vadd.f32 %v5549, %v5809
  %v5980 = vadd.f32 %v5550, %v5812
  %v5981 = vadd.f32 %v5551, %v5817
  %v5982 = vadd.f32 %v5552, %v5820
  %v5983 = vadd.f32 %v5553, %v5825
  %v5984 = vadd.f32 %v5554, %v5828
  %v5985 = vadd.f32 %v5555, %v5833
  %v5986 = vadd.f32 %v5556, %v5836
  %v5987 = vadd.f32 %v5557, %v5841
  %v5988 = vadd.f32 %v5558, %v5844
  %v5989 = vadd.f32 %v5559, %v5849
  %v5990 = vadd.f32 %v5560, %v5852
  %v5991 = vadd.f32 %v5561, %v5857
  %v5992 = vadd.f32 %v5562, %v5860
  %v5993 = vadd.f32 %v5563, %v5865
  %v5994 = vadd.f32 %v5564, %v5868
  %v5995 = vadd.f32 %v5565, %v5873
  %v5996 = vadd.f32 %v5566, %v5876
  %v5997 = vadd.f32 %v5567, %v5881
  %v5998 = vadd.f32 %v5568, %v5884
  %v5999 = vadd.f32 %v5569, %v5889
  %v6000 = vadd.f32 %v5570, %v5892
  %v6001 = vadd.f32 %v5571, %v5897
  %v6002 = vadd.f32 %v5572, %v5900
  %v6003 = vadd.f32 %v5573, %v5905
  %v6004 = vadd.f32 %v5574, %v5908
  %v6005 = vadd.f32 %v5575, %v5913
  %v6006 = vadd.f32 %v5576, %v5916
  %v6007 = vadd.f32 %v5577, %v5921
  %v6008 = vadd.f32 %v5578, %v5924
  %v6009 = vadd.f32 %v5579, %v5929
  %v6010 = vadd.f32 %v5580, %v5932
  %v6011 = vadd.f32 %v5581, %v5937
  %v6012 = vadd.f32 %v5582, %v5940
  %v6013 = vadd.f32 %v5583, %v5945
  %v6014 = vadd.f32 %v5584, %v5948
  %v6016 = vshrl.u32 %v1579, 16
  %v6018 = vrot.slane %v6016, 4
  %v6019 = vshll.u32 %v1579, 16
  %v6021 = vrot.slane %v6019, 5
  %v6022 = vor.u32 %v6018, %v6021
  %v6023 = vrot.slane %v6022, 4
  %v6025 = vshll.u32 %v1580, 16
  %v6027 = vrot.slane %v6025, 5
  %v6028 = vsel %vm1654, %v6023, %v6027
  %v6029 = vshrl.u32 %v1580, 16
  %v6031 = vrot.slane %v6029, 4
  %v6032 = vor.u32 %v6031, %v6027
  %v6033 = vrot.slane %v6032, 4
  %v6035 = vshll.u32 %v1581, 16
  %v6037 = vrot.slane %v6035, 5
  %v6038 = vsel %vm1654, %v6033, %v6037
  %v6040 = vshrl.u32 %v1633, 16
  %v6042 = vrot.slane %v6040, 4
  %v6043 = vshll.u32 %v1633, 16
  %v6045 = vrot.slane %v6043, 5
  %v6046 = vor.u32 %v6042, %v6045
  %v6047 = vrot.slane %v6046, 4
  %v6049 = vshll.u32 %v1634, 16
  %v6051 = vrot.slane %v6049, 5
  %v6052 = vsel %vm1654, %v6047, %v6051
  %v6053 = vshrl.u32 %v1634, 16
  %v6055 = vrot.slane %v6053, 4
  %v6056 = vor.u32 %v6055, %v6051
  %v6057 = vrot.slane %v6056, 4
  %v6059 = vshll.u32 %v1635, 16
  %v6061 = vrot.slane %v6059, 5
  %v6062 = vsel %vm1654, %v6057, %v6061
  %s6063 = scalar_lea.vmem %s3, 448
  %v6064 = vld [vmem:[%s6063] sm:$0xf]
  %v6065 = vld [vmem:[%s6063 + $0x4] sm:$0xf]
  %v6066 = vld [vmem:[%s6063 + $0x8] sm:$0xf]
  %v6067 = vld [vmem:[%s6063 + $0xc] sm:$0xf]
  %v6068 = vld [vmem:[%s6063 + $0x10] sm:$0xf]
  %v6069 = vld [vmem:[%s6063 + $0x14] sm:$0xf]
  %v6070 = vld [vmem:[%s6063 + $0x18] sm:$0xf]
  %v6071 = vld [vmem:[%s6063 + $0x1c] sm:$0xf]
  %v6072 = vld [vmem:[%s6063 + $0x20] sm:$0xf]
  %v6073 = vld [vmem:[%s6063 + $0x24] sm:$0xf]
  %v6074 = vld [vmem:[%s6063 + $0x28] sm:$0xf]
  %v6075 = vld [vmem:[%s6063 + $0x2c] sm:$0xf]
  %v6076 = vld [vmem:[%s6063 + $0x30] sm:$0xf]
  %v6077 = vld [vmem:[%s6063 + $0x34] sm:$0xf]
  %v6078 = vld [vmem:[%s6063 + $0x38] sm:$0xf]
  %v6079 = vld [vmem:[%s6063 + $0x3c] sm:$0xf]
  %v6080 = vunpack.c.l.b16 %v6028
  %v6081 = vunpack.c.l.b16 %v6038
  %v6082 = vunpack.c.l.b16 %v6052
  %v6083 = vunpack.c.l.b16 %v6062
  %v6084 = vpack.c.b16 %v6081, %v6080
  %v6085 = vpack.c.b16 %v6083, %v6082
  %v6104 = vunpack.c.l.b16 %v6064
  %v6105 = vunpack.c.l.b16 %v6065
  %v6106 = vunpack.c.l.b16 %v6066
  %v6107 = vunpack.c.l.b16 %v6067
  %v6108 = vunpack.c.l.b16 %v6068
  %v6109 = vunpack.c.l.b16 %v6069
  %v6110 = vunpack.c.l.b16 %v6070
  %v6111 = vunpack.c.l.b16 %v6071
  %v6112 = vunpack.c.l.b16 %v6072
  %v6113 = vunpack.c.l.b16 %v6073
  %v6114 = vunpack.c.l.b16 %v6074
  %v6115 = vunpack.c.l.b16 %v6075
  %v6116 = vunpack.c.l.b16 %v6076
  %v6117 = vunpack.c.l.b16 %v6077
  %v6118 = vunpack.c.l.b16 %v6078
  %v6119 = vunpack.c.l.b16 %v6079
  %v6120 = vpack.c.b16 %v6105, %v6104
  %v6121 = vpack.c.b16 %v6107, %v6106
  %v6122 = vpack.c.b16 %v6109, %v6108
  %v6123 = vpack.c.b16 %v6111, %v6110
  %v6124 = vpack.c.b16 %v6113, %v6112
  %v6125 = vpack.c.b16 %v6115, %v6114
  %v6126 = vpack.c.b16 %v6117, %v6116
  %v6127 = vpack.c.b16 %v6119, %v6118
  %6136 = vmatprep.subr.bf16.mxu0 0
  %6137 = vmatpush1.bf16.msra.mxu0 %v6127
  %6138 = vmatprep.subr.bf16.mxu0 0
  %6139 = vmatpush1.bf16.msra.mxu0 %v6126
  %6140 = vmatprep.subr.bf16.mxu0 0
  %6141 = vmatpush1.bf16.msra.mxu0 %v6125
  %6142 = vmatprep.subr.bf16.mxu0 0
  %6143 = vmatpush1.bf16.msra.mxu0 %v6124
  %6144 = vmatprep.subr.bf16.mxu0 0
  %6145 = vmatpush1.bf16.msra.mxu0 %v6123
  %6146 = vmatprep.subr.bf16.mxu0 0
  %6147 = vmatpush1.bf16.msra.mxu0 %v6122
  %6148 = vmatprep.subr.bf16.mxu0 0
  %6149 = vmatpush1.bf16.msra.mxu0 %v6121
  %6150 = vmatprep.subr.bf16.mxu0 0
  %6151 = vmatpush1.bf16.msra.mxu0 %v6120
  %6152 = vmatprep.subr.bf16.mxu0 0
  %6153 = vmatpush2.bf16.msra.mxu0 0
  %6154 = vmatprep.subr.bf16.mxu0 0
  %6155 = vmatpush2.bf16.msra.mxu0 0
  %6156 = vmatprep.subr.bf16.mxu0 0
  %6157 = vmatpush2.bf16.msra.mxu0 0
  %6158 = vmatprep.subr.bf16.mxu0 0
  %6159 = vmatpush2.bf16.msra.mxu0 0
  %6160 = vmatprep.subr.bf16.mxu0 0
  %6161 = vmatpush2.bf16.msra.mxu0 0
  %6162 = vmatprep.subr.bf16.mxu0 0
  %6163 = vmatpush2.bf16.msra.mxu0 0
  %6164 = vmatprep.subr.bf16.mxu0 0
  %6165 = vmatpush2.bf16.msra.mxu0 0
  %6166 = vmatprep.subr.bf16.mxu0 0
  %6167 = vmatpush2.bf16.msra.mxu0 0
  %6168 = vmatprep.mubr.bf16.mxu0 0
  %6169 = vmatmul.mubr.bf16.gmra.mxu0 %v2506
  %v6170 = vpop.f32.mrf.mxu0
  %v6171 = vadd.f32 0.0, %v6170
  %v6172 = vpop.f32.mrf.mxu0
  %v6173 = vpop.f32.mrf.mxu0
  %v6174 = vadd.f32 0.0, %v6173
  %v6175 = vpop.f32.mrf.mxu0
  %6176 = vmatprep.mubr.bf16.mxu0 0
  %6177 = vmatmul.mubr.bf16.gmra.mxu0 %v2507
  %v6178 = vpop.f32.mrf.mxu0
  %v6179 = vadd.f32 0.0, %v6178
  %v6180 = vpop.f32.mrf.mxu0
  %v6181 = vpop.f32.mrf.mxu0
  %v6182 = vadd.f32 0.0, %v6181
  %v6183 = vpop.f32.mrf.mxu0
  %6184 = vmatprep.mubr.bf16.mxu0 0
  %6185 = vmatmul.mubr.bf16.gmra.mxu0 %v2508
  %v6186 = vpop.f32.mrf.mxu0
  %v6187 = vadd.f32 0.0, %v6186
  %v6188 = vpop.f32.mrf.mxu0
  %v6189 = vpop.f32.mrf.mxu0
  %v6190 = vadd.f32 0.0, %v6189
  %v6191 = vpop.f32.mrf.mxu0
  %6192 = vmatprep.mubr.bf16.mxu0 0
  %6193 = vmatmul.mubr.bf16.gmra.mxu0 %v2509
  %v6194 = vpop.f32.mrf.mxu0
  %v6195 = vadd.f32 0.0, %v6194
  %v6196 = vpop.f32.mrf.mxu0
  %v6197 = vpop.f32.mrf.mxu0
  %v6198 = vadd.f32 0.0, %v6197
  %v6199 = vpop.f32.mrf.mxu0
  %6200 = vmatprep.mubr.bf16.mxu0 0
  %6201 = vmatmul.mubr.bf16.gmra.mxu0 %v2510
  %v6202 = vpop.f32.mrf.mxu0
  %v6203 = vadd.f32 0.0, %v6202
  %v6204 = vpop.f32.mrf.mxu0
  %v6205 = vpop.f32.mrf.mxu0
  %v6206 = vadd.f32 0.0, %v6205
  %v6207 = vpop.f32.mrf.mxu0
  %6208 = vmatprep.mubr.bf16.mxu0 0
  %6209 = vmatmul.mubr.bf16.gmra.mxu0 %v2511
  %v6210 = vpop.f32.mrf.mxu0
  %v6211 = vadd.f32 0.0, %v6210
  %v6212 = vpop.f32.mrf.mxu0
  %v6213 = vpop.f32.mrf.mxu0
  %v6214 = vadd.f32 0.0, %v6213
  %v6215 = vpop.f32.mrf.mxu0
  %6216 = vmatprep.mubr.bf16.mxu0 0
  %6217 = vmatmul.mubr.bf16.gmra.mxu0 %v2512
  %v6218 = vpop.f32.mrf.mxu0
  %v6219 = vadd.f32 0.0, %v6218
  %v6220 = vpop.f32.mrf.mxu0
  %v6221 = vpop.f32.mrf.mxu0
  %v6222 = vadd.f32 0.0, %v6221
  %v6223 = vpop.f32.mrf.mxu0
  %6224 = vmatprep.mubr.bf16.mxu0 0
  %6225 = vmatmul.mubr.bf16.gmra.mxu0 %v2513
  %v6226 = vpop.f32.mrf.mxu0
  %v6227 = vadd.f32 0.0, %v6226
  %v6228 = vpop.f32.mrf.mxu0
  %v6229 = vpop.f32.mrf.mxu0
  %v6230 = vadd.f32 0.0, %v6229
  %v6231 = vpop.f32.mrf.mxu0
  %6232 = vmatprep.mubr.bf16.mxu0 0
  %6233 = vmatmul.mubr.bf16.gmra.mxu0 %v2514
  %v6234 = vpop.f32.mrf.mxu0
  %v6235 = vadd.f32 0.0, %v6234
  %v6236 = vpop.f32.mrf.mxu0
  %v6237 = vpop.f32.mrf.mxu0
  %v6238 = vadd.f32 0.0, %v6237
  %v6239 = vpop.f32.mrf.mxu0
  %6240 = vmatprep.mubr.bf16.mxu0 0
  %6241 = vmatmul.mubr.bf16.gmra.mxu0 %v2515
  %v6242 = vpop.f32.mrf.mxu0
  %v6243 = vadd.f32 0.0, %v6242
  %v6244 = vpop.f32.mrf.mxu0
  %v6245 = vpop.f32.mrf.mxu0
  %v6246 = vadd.f32 0.0, %v6245
  %v6247 = vpop.f32.mrf.mxu0
  %6248 = vmatprep.mubr.bf16.mxu0 0
  %6249 = vmatmul.mubr.bf16.gmra.mxu0 %v2516
  %v6250 = vpop.f32.mrf.mxu0
  %v6251 = vadd.f32 0.0, %v6250
  %v6252 = vpop.f32.mrf.mxu0
  %v6253 = vpop.f32.mrf.mxu0
  %v6254 = vadd.f32 0.0, %v6253
  %v6255 = vpop.f32.mrf.mxu0
  %6256 = vmatprep.mubr.bf16.mxu0 0
  %6257 = vmatmul.mubr.bf16.gmra.mxu0 %v2517
  %v6258 = vpop.f32.mrf.mxu0
  %v6259 = vadd.f32 0.0, %v6258
  %v6260 = vpop.f32.mrf.mxu0
  %v6261 = vpop.f32.mrf.mxu0
  %v6262 = vadd.f32 0.0, %v6261
  %v6263 = vpop.f32.mrf.mxu0
  %6264 = vmatprep.mubr.bf16.mxu0 0
  %6265 = vmatmul.mubr.bf16.gmra.mxu0 %v2518
  %v6266 = vpop.f32.mrf.mxu0
  %v6267 = vadd.f32 0.0, %v6266
  %v6268 = vpop.f32.mrf.mxu0
  %v6269 = vpop.f32.mrf.mxu0
  %v6270 = vadd.f32 0.0, %v6269
  %v6271 = vpop.f32.mrf.mxu0
  %6272 = vmatprep.mubr.bf16.mxu0 0
  %6273 = vmatmul.mubr.bf16.gmra.mxu0 %v2519
  %v6274 = vpop.f32.mrf.mxu0
  %v6275 = vadd.f32 0.0, %v6274
  %v6276 = vpop.f32.mrf.mxu0
  %v6277 = vpop.f32.mrf.mxu0
  %v6278 = vadd.f32 0.0, %v6277
  %v6279 = vpop.f32.mrf.mxu0
  %6280 = vmatprep.mubr.bf16.mxu0 0
  %6281 = vmatmul.mubr.bf16.gmra.mxu0 %v4738
  %v6282 = vpop.f32.mrf.mxu0
  %v6283 = vadd.f32 0.0, %v6282
  %v6284 = vpop.f32.mrf.mxu0
  %v6285 = vpop.f32.mrf.mxu0
  %v6286 = vadd.f32 0.0, %v6285
  %v6287 = vpop.f32.mrf.mxu0
  %6288 = vmatprep.mubr.bf16.mxu0 0
  %6289 = vmatmul.mubr.bf16.gmra.mxu0 %v6084
  %v6290 = vpop.f32.mrf.mxu0
  %v6291 = vadd.f32 0.0, %v6290
  %v6292 = vpop.f32.mrf.mxu0
  %v6293 = vpop.f32.mrf.mxu0
  %v6294 = vadd.f32 0.0, %v6293
  %v6295 = vpop.f32.mrf.mxu0
  %6296 = vmatprep.mubr.bf16.mxu0 0
  %6297 = vmatmul.mubr.bf16.gmra.mxu0 %v2522
  %v6298 = vpop.f32.mrf.mxu0
  %v6299 = vadd.f32 0.0, %v6298
  %v6300 = vpop.f32.mrf.mxu0
  %v6301 = vpop.f32.mrf.mxu0
  %v6302 = vadd.f32 0.0, %v6301
  %v6303 = vpop.f32.mrf.mxu0
  %6304 = vmatprep.mubr.bf16.mxu0 0
  %6305 = vmatmul.mubr.bf16.gmra.mxu0 %v2523
  %v6306 = vpop.f32.mrf.mxu0
  %v6307 = vadd.f32 0.0, %v6306
  %v6308 = vpop.f32.mrf.mxu0
  %v6309 = vpop.f32.mrf.mxu0
  %v6310 = vadd.f32 0.0, %v6309
  %v6311 = vpop.f32.mrf.mxu0
  %6312 = vmatprep.mubr.bf16.mxu0 0
  %6313 = vmatmul.mubr.bf16.gmra.mxu0 %v2524
  %v6314 = vpop.f32.mrf.mxu0
  %v6315 = vadd.f32 0.0, %v6314
  %v6316 = vpop.f32.mrf.mxu0
  %v6317 = vpop.f32.mrf.mxu0
  %v6318 = vadd.f32 0.0, %v6317
  %v6319 = vpop.f32.mrf.mxu0
  %6320 = vmatprep.mubr.bf16.mxu0 0
  %6321 = vmatmul.mubr.bf16.gmra.mxu0 %v2525
  %v6322 = vpop.f32.mrf.mxu0
  %v6323 = vadd.f32 0.0, %v6322
  %v6324 = vpop.f32.mrf.mxu0
  %v6325 = vpop.f32.mrf.mxu0
  %v6326 = vadd.f32 0.0, %v6325
  %v6327 = vpop.f32.mrf.mxu0
  %6328 = vmatprep.mubr.bf16.mxu0 0
  %6329 = vmatmul.mubr.bf16.gmra.mxu0 %v2526
  %v6330 = vpop.f32.mrf.mxu0
  %v6331 = vadd.f32 0.0, %v6330
  %v6332 = vpop.f32.mrf.mxu0
  %v6333 = vpop.f32.mrf.mxu0
  %v6334 = vadd.f32 0.0, %v6333
  %v6335 = vpop.f32.mrf.mxu0
  %6336 = vmatprep.mubr.bf16.mxu0 0
  %6337 = vmatmul.mubr.bf16.gmra.mxu0 %v2527
  %v6338 = vpop.f32.mrf.mxu0
  %v6339 = vadd.f32 0.0, %v6338
  %v6340 = vpop.f32.mrf.mxu0
  %v6341 = vpop.f32.mrf.mxu0
  %v6342 = vadd.f32 0.0, %v6341
  %v6343 = vpop.f32.mrf.mxu0
  %6344 = vmatprep.mubr.bf16.mxu0 0
  %6345 = vmatmul.mubr.bf16.gmra.mxu0 %v2528
  %v6346 = vpop.f32.mrf.mxu0
  %v6347 = vadd.f32 0.0, %v6346
  %v6348 = vpop.f32.mrf.mxu0
  %v6349 = vpop.f32.mrf.mxu0
  %v6350 = vadd.f32 0.0, %v6349
  %v6351 = vpop.f32.mrf.mxu0
  %6352 = vmatprep.mubr.bf16.mxu0 0
  %6353 = vmatmul.mubr.bf16.gmra.mxu0 %v2529
  %v6354 = vpop.f32.mrf.mxu0
  %v6355 = vadd.f32 0.0, %v6354
  %v6356 = vpop.f32.mrf.mxu0
  %v6357 = vpop.f32.mrf.mxu0
  %v6358 = vadd.f32 0.0, %v6357
  %v6359 = vpop.f32.mrf.mxu0
  %6360 = vmatprep.mubr.bf16.mxu0 0
  %6361 = vmatmul.mubr.bf16.gmra.mxu0 %v2530
  %v6362 = vpop.f32.mrf.mxu0
  %v6363 = vadd.f32 0.0, %v6362
  %v6364 = vpop.f32.mrf.mxu0
  %v6365 = vpop.f32.mrf.mxu0
  %v6366 = vadd.f32 0.0, %v6365
  %v6367 = vpop.f32.mrf.mxu0
  %6368 = vmatprep.mubr.bf16.mxu0 0
  %6369 = vmatmul.mubr.bf16.gmra.mxu0 %v2531
  %v6370 = vpop.f32.mrf.mxu0
  %v6371 = vadd.f32 0.0, %v6370
  %v6372 = vpop.f32.mrf.mxu0
  %v6373 = vpop.f32.mrf.mxu0
  %v6374 = vadd.f32 0.0, %v6373
  %v6375 = vpop.f32.mrf.mxu0
  %6376 = vmatprep.mubr.bf16.mxu0 0
  %6377 = vmatmul.mubr.bf16.gmra.mxu0 %v2532
  %v6378 = vpop.f32.mrf.mxu0
  %v6379 = vadd.f32 0.0, %v6378
  %v6380 = vpop.f32.mrf.mxu0
  %v6381 = vpop.f32.mrf.mxu0
  %v6382 = vadd.f32 0.0, %v6381
  %v6383 = vpop.f32.mrf.mxu0
  %6384 = vmatprep.mubr.bf16.mxu0 0
  %6385 = vmatmul.mubr.bf16.gmra.mxu0 %v2533
  %v6386 = vpop.f32.mrf.mxu0
  %v6387 = vadd.f32 0.0, %v6386
  %v6388 = vpop.f32.mrf.mxu0
  %v6389 = vpop.f32.mrf.mxu0
  %v6390 = vadd.f32 0.0, %v6389
  %v6391 = vpop.f32.mrf.mxu0
  %6392 = vmatprep.mubr.bf16.mxu0 0
  %6393 = vmatmul.mubr.bf16.gmra.mxu0 %v2534
  %v6394 = vpop.f32.mrf.mxu0
  %v6395 = vadd.f32 0.0, %v6394
  %v6396 = vpop.f32.mrf.mxu0
  %v6397 = vpop.f32.mrf.mxu0
  %v6398 = vadd.f32 0.0, %v6397
  %v6399 = vpop.f32.mrf.mxu0
  %6400 = vmatprep.mubr.bf16.mxu0 0
  %6401 = vmatmul.mubr.bf16.gmra.mxu0 %v2535
  %v6402 = vpop.f32.mrf.mxu0
  %v6403 = vadd.f32 0.0, %v6402
  %v6404 = vpop.f32.mrf.mxu0
  %v6405 = vpop.f32.mrf.mxu0
  %v6406 = vadd.f32 0.0, %v6405
  %v6407 = vpop.f32.mrf.mxu0
  %6408 = vmatprep.mubr.bf16.mxu0 0
  %6409 = vmatmul.mubr.bf16.gmra.mxu0 %v4739
  %v6410 = vpop.f32.mrf.mxu0
  %v6411 = vadd.f32 0.0, %v6410
  %v6412 = vpop.f32.mrf.mxu0
  %v6413 = vpop.f32.mrf.mxu0
  %v6414 = vadd.f32 0.0, %v6413
  %v6415 = vpop.f32.mrf.mxu0
  %6416 = vmatprep.mubr.bf16.mxu0 0
  %6417 = vmatmul.mubr.bf16.gmra.mxu0 %v6085
  %v6418 = vpop.f32.mrf.mxu0
  %v6419 = vadd.f32 0.0, %v6418
  %v6420 = vpop.f32.mrf.mxu0
  %v6421 = vpop.f32.mrf.mxu0
  %v6422 = vadd.f32 0.0, %v6421
  %v6423 = vpop.f32.mrf.mxu0
  %6424 = vdwg.mxu0
  %v6425 = vadd.f32 %v5951, %v6171
  %v6426 = vadd.f32 %v5952, %v6174
  %v6427 = vadd.f32 %v5953, %v6179
  %v6428 = vadd.f32 %v5954, %v6182
  %v6429 = vadd.f32 %v5955, %v6187
  %v6430 = vadd.f32 %v5956, %v6190
  %v6431 = vadd.f32 %v5957, %v6195
  %v6432 = vadd.f32 %v5958, %v6198
  %v6433 = vadd.f32 %v5959, %v6203
  %v6434 = vadd.f32 %v5960, %v6206
  %v6435 = vadd.f32 %v5961, %v6211
  %v6436 = vadd.f32 %v5962, %v6214
  %v6437 = vadd.f32 %v5963, %v6219
  %v6438 = vadd.f32 %v5964, %v6222
  %v6439 = vadd.f32 %v5965, %v6227
  %v6440 = vadd.f32 %v5966, %v6230
  %v6441 = vadd.f32 %v5967, %v6235
  %v6442 = vadd.f32 %v5968, %v6238
  %v6443 = vadd.f32 %v5969, %v6243
  %v6444 = vadd.f32 %v5970, %v6246
  %v6445 = vadd.f32 %v5971, %v6251
  %v6446 = vadd.f32 %v5972, %v6254
  %v6447 = vadd.f32 %v5973, %v6259
  %v6448 = vadd.f32 %v5974, %v6262
  %v6449 = vadd.f32 %v5975, %v6267
  %v6450 = vadd.f32 %v5976, %v6270
  %v6451 = vadd.f32 %v5977, %v6275
  %v6452 = vadd.f32 %v5978, %v6278
  %v6453 = vadd.f32 %v5979, %v6283
  %v6454 = vadd.f32 %v5980, %v6286
  %v6455 = vadd.f32 %v5981, %v6291
  %v6456 = vadd.f32 %v5982, %v6294
  %v6457 = vadd.f32 %v5983, %v6299
  %v6458 = vadd.f32 %v5984, %v6302
  %v6459 = vadd.f32 %v5985, %v6307
  %v6460 = vadd.f32 %v5986, %v6310
  %v6461 = vadd.f32 %v5987, %v6315
  %v6462 = vadd.f32 %v5988, %v6318
  %v6463 = vadd.f32 %v5989, %v6323
  %v6464 = vadd.f32 %v5990, %v6326
  %v6465 = vadd.f32 %v5991, %v6331
  %v6466 = vadd.f32 %v5992, %v6334
  %v6467 = vadd.f32 %v5993, %v6339
  %v6468 = vadd.f32 %v5994, %v6342
  %v6469 = vadd.f32 %v5995, %v6347
  %v6470 = vadd.f32 %v5996, %v6350
  %v6471 = vadd.f32 %v5997, %v6355
  %v6472 = vadd.f32 %v5998, %v6358
  %v6473 = vadd.f32 %v5999, %v6363
  %v6474 = vadd.f32 %v6000, %v6366
  %v6475 = vadd.f32 %v6001, %v6371
  %v6476 = vadd.f32 %v6002, %v6374
  %v6477 = vadd.f32 %v6003, %v6379
  %v6478 = vadd.f32 %v6004, %v6382
  %v6479 = vadd.f32 %v6005, %v6387
  %v6480 = vadd.f32 %v6006, %v6390
  %v6481 = vadd.f32 %v6007, %v6395
  %v6482 = vadd.f32 %v6008, %v6398
  %v6483 = vadd.f32 %v6009, %v6403
  %v6484 = vadd.f32 %v6010, %v6406
  %v6485 = vadd.f32 %v6011, %v6411
  %v6486 = vadd.f32 %v6012, %v6414
  %v6487 = vadd.f32 %v6013, %v6419
  %v6488 = vadd.f32 %v6014, %v6422
  %v6491 = vrot.slane %v1579, 5
  %v6492 = vrot.slane %v6491, 4
  %v6493 = vrot.slane %v1580, 5
  %v6494 = vsel %vm3468, %v6492, %v6493
  %v6495 = vrot.slane %v6493, 4
  %v6496 = vrot.slane %v1581, 5
  %v6497 = vsel %vm3468, %v6495, %v6496
  %v6498 = vrot.slane %v1633, 5
  %v6499 = vrot.slane %v6498, 4
  %v6500 = vrot.slane %v1634, 5
  %v6501 = vsel %vm3468, %v6499, %v6500
  %v6502 = vrot.slane %v6500, 4
  %v6503 = vrot.slane %v1635, 5
  %v6504 = vsel %vm3468, %v6502, %v6503
  %s6505 = scalar_lea.vmem %s3, 512
  %v6506 = vld [vmem:[%s6505] sm:$0xf]
  %v6507 = vld [vmem:[%s6505 + $0x4] sm:$0xf]
  %v6508 = vld [vmem:[%s6505 + $0x8] sm:$0xf]
  %v6509 = vld [vmem:[%s6505 + $0xc] sm:$0xf]
  %v6510 = vld [vmem:[%s6505 + $0x10] sm:$0xf]
  %v6511 = vld [vmem:[%s6505 + $0x14] sm:$0xf]
  %v6512 = vld [vmem:[%s6505 + $0x18] sm:$0xf]
  %v6513 = vld [vmem:[%s6505 + $0x1c] sm:$0xf]
  %v6514 = vld [vmem:[%s6505 + $0x20] sm:$0xf]
  %v6515 = vld [vmem:[%s6505 + $0x24] sm:$0xf]
  %v6516 = vld [vmem:[%s6505 + $0x28] sm:$0xf]
  %v6517 = vld [vmem:[%s6505 + $0x2c] sm:$0xf]
  %v6518 = vld [vmem:[%s6505 + $0x30] sm:$0xf]
  %v6519 = vld [vmem:[%s6505 + $0x34] sm:$0xf]
  %v6520 = vld [vmem:[%s6505 + $0x38] sm:$0xf]
  %v6521 = vld [vmem:[%s6505 + $0x3c] sm:$0xf]
  %v6522 = vunpack.c.l.b16 %v6494
  %v6523 = vunpack.c.l.b16 %v6497
  %v6524 = vunpack.c.l.b16 %v6501
  %v6525 = vunpack.c.l.b16 %v6504
  %v6526 = vpack.c.b16 %v6523, %v6522
  %v6527 = vpack.c.b16 %v6525, %v6524
  %v6546 = vunpack.c.l.b16 %v6506
  %v6547 = vunpack.c.l.b16 %v6507
  %v6548 = vunpack.c.l.b16 %v6508
  %v6549 = vunpack.c.l.b16 %v6509
  %v6550 = vunpack.c.l.b16 %v6510
  %v6551 = vunpack.c.l.b16 %v6511
  %v6552 = vunpack.c.l.b16 %v6512
  %v6553 = vunpack.c.l.b16 %v6513
  %v6554 = vunpack.c.l.b16 %v6514
  %v6555 = vunpack.c.l.b16 %v6515
  %v6556 = vunpack.c.l.b16 %v6516
  %v6557 = vunpack.c.l.b16 %v6517
  %v6558 = vunpack.c.l.b16 %v6518
  %v6559 = vunpack.c.l.b16 %v6519
  %v6560 = vunpack.c.l.b16 %v6520
  %v6561 = vunpack.c.l.b16 %v6521
  %v6562 = vpack.c.b16 %v6547, %v6546
  %v6563 = vpack.c.b16 %v6549, %v6548
  %v6564 = vpack.c.b16 %v6551, %v6550
  %v6565 = vpack.c.b16 %v6553, %v6552
  %v6566 = vpack.c.b16 %v6555, %v6554
  %v6567 = vpack.c.b16 %v6557, %v6556
  %v6568 = vpack.c.b16 %v6559, %v6558
  %v6569 = vpack.c.b16 %v6561, %v6560
  %6578 = vmatprep.subr.bf16.mxu0 0
  %6579 = vmatpush1.bf16.msra.mxu0 %v6569
  %6580 = vmatprep.subr.bf16.mxu0 0
  %6581 = vmatpush1.bf16.msra.mxu0 %v6568
  %6582 = vmatprep.subr.bf16.mxu0 0
  %6583 = vmatpush1.bf16.msra.mxu0 %v6567
  %6584 = vmatprep.subr.bf16.mxu0 0
  %6585 = vmatpush1.bf16.msra.mxu0 %v6566
  %6586 = vmatprep.subr.bf16.mxu0 0
  %6587 = vmatpush1.bf16.msra.mxu0 %v6565
  %6588 = vmatprep.subr.bf16.mxu0 0
  %6589 = vmatpush1.bf16.msra.mxu0 %v6564
  %6590 = vmatprep.subr.bf16.mxu0 0
  %6591 = vmatpush1.bf16.msra.mxu0 %v6563
  %6592 = vmatprep.subr.bf16.mxu0 0
  %6593 = vmatpush1.bf16.msra.mxu0 %v6562
  %6594 = vmatprep.subr.bf16.mxu0 0
  %6595 = vmatpush2.bf16.msra.mxu0 0
  %6596 = vmatprep.subr.bf16.mxu0 0
  %6597 = vmatpush2.bf16.msra.mxu0 0
  %6598 = vmatprep.subr.bf16.mxu0 0
  %6599 = vmatpush2.bf16.msra.mxu0 0
  %6600 = vmatprep.subr.bf16.mxu0 0
  %6601 = vmatpush2.bf16.msra.mxu0 0
  %6602 = vmatprep.subr.bf16.mxu0 0
  %6603 = vmatpush2.bf16.msra.mxu0 0
  %6604 = vmatprep.subr.bf16.mxu0 0
  %6605 = vmatpush2.bf16.msra.mxu0 0
  %6606 = vmatprep.subr.bf16.mxu0 0
  %6607 = vmatpush2.bf16.msra.mxu0 0
  %6608 = vmatprep.subr.bf16.mxu0 0
  %6609 = vmatpush2.bf16.msra.mxu0 0
  %6610 = vmatprep.mubr.bf16.mxu0 0
  %6611 = vmatmul.mubr.bf16.gmra.mxu0 %v3776
  %v6612 = vpop.f32.mrf.mxu0
  %v6613 = vadd.f32 0.0, %v6612
  %v6614 = vpop.f32.mrf.mxu0
  %v6615 = vpop.f32.mrf.mxu0
  %v6616 = vadd.f32 0.0, %v6615
  %v6617 = vpop.f32.mrf.mxu0
  %6618 = vmatprep.mubr.bf16.mxu0 0
  %6619 = vmatmul.mubr.bf16.gmra.mxu0 %v3777
  %v6620 = vpop.f32.mrf.mxu0
  %v6621 = vadd.f32 0.0, %v6620
  %v6622 = vpop.f32.mrf.mxu0
  %v6623 = vpop.f32.mrf.mxu0
  %v6624 = vadd.f32 0.0, %v6623
  %v6625 = vpop.f32.mrf.mxu0
  %6626 = vmatprep.mubr.bf16.mxu0 0
  %6627 = vmatmul.mubr.bf16.gmra.mxu0 %v3778
  %v6628 = vpop.f32.mrf.mxu0
  %v6629 = vadd.f32 0.0, %v6628
  %v6630 = vpop.f32.mrf.mxu0
  %v6631 = vpop.f32.mrf.mxu0
  %v6632 = vadd.f32 0.0, %v6631
  %v6633 = vpop.f32.mrf.mxu0
  %6634 = vmatprep.mubr.bf16.mxu0 0
  %6635 = vmatmul.mubr.bf16.gmra.mxu0 %v3779
  %v6636 = vpop.f32.mrf.mxu0
  %v6637 = vadd.f32 0.0, %v6636
  %v6638 = vpop.f32.mrf.mxu0
  %v6639 = vpop.f32.mrf.mxu0
  %v6640 = vadd.f32 0.0, %v6639
  %v6641 = vpop.f32.mrf.mxu0
  %6642 = vmatprep.mubr.bf16.mxu0 0
  %6643 = vmatmul.mubr.bf16.gmra.mxu0 %v3780
  %v6644 = vpop.f32.mrf.mxu0
  %v6645 = vadd.f32 0.0, %v6644
  %v6646 = vpop.f32.mrf.mxu0
  %v6647 = vpop.f32.mrf.mxu0
  %v6648 = vadd.f32 0.0, %v6647
  %v6649 = vpop.f32.mrf.mxu0
  %6650 = vmatprep.mubr.bf16.mxu0 0
  %6651 = vmatmul.mubr.bf16.gmra.mxu0 %v3781
  %v6652 = vpop.f32.mrf.mxu0
  %v6653 = vadd.f32 0.0, %v6652
  %v6654 = vpop.f32.mrf.mxu0
  %v6655 = vpop.f32.mrf.mxu0
  %v6656 = vadd.f32 0.0, %v6655
  %v6657 = vpop.f32.mrf.mxu0
  %6658 = vmatprep.mubr.bf16.mxu0 0
  %6659 = vmatmul.mubr.bf16.gmra.mxu0 %v3782
  %v6660 = vpop.f32.mrf.mxu0
  %v6661 = vadd.f32 0.0, %v6660
  %v6662 = vpop.f32.mrf.mxu0
  %v6663 = vpop.f32.mrf.mxu0
  %v6664 = vadd.f32 0.0, %v6663
  %v6665 = vpop.f32.mrf.mxu0
  %6666 = vmatprep.mubr.bf16.mxu0 0
  %6667 = vmatmul.mubr.bf16.gmra.mxu0 %v3783
  %v6668 = vpop.f32.mrf.mxu0
  %v6669 = vadd.f32 0.0, %v6668
  %v6670 = vpop.f32.mrf.mxu0
  %v6671 = vpop.f32.mrf.mxu0
  %v6672 = vadd.f32 0.0, %v6671
  %v6673 = vpop.f32.mrf.mxu0
  %6674 = vmatprep.mubr.bf16.mxu0 0
  %6675 = vmatmul.mubr.bf16.gmra.mxu0 %v3784
  %v6676 = vpop.f32.mrf.mxu0
  %v6677 = vadd.f32 0.0, %v6676
  %v6678 = vpop.f32.mrf.mxu0
  %v6679 = vpop.f32.mrf.mxu0
  %v6680 = vadd.f32 0.0, %v6679
  %v6681 = vpop.f32.mrf.mxu0
  %6682 = vmatprep.mubr.bf16.mxu0 0
  %6683 = vmatmul.mubr.bf16.gmra.mxu0 %v3785
  %v6684 = vpop.f32.mrf.mxu0
  %v6685 = vadd.f32 0.0, %v6684
  %v6686 = vpop.f32.mrf.mxu0
  %v6687 = vpop.f32.mrf.mxu0
  %v6688 = vadd.f32 0.0, %v6687
  %v6689 = vpop.f32.mrf.mxu0
  %6690 = vmatprep.mubr.bf16.mxu0 0
  %6691 = vmatmul.mubr.bf16.gmra.mxu0 %v3786
  %v6692 = vpop.f32.mrf.mxu0
  %v6693 = vadd.f32 0.0, %v6692
  %v6694 = vpop.f32.mrf.mxu0
  %v6695 = vpop.f32.mrf.mxu0
  %v6696 = vadd.f32 0.0, %v6695
  %v6697 = vpop.f32.mrf.mxu0
  %6698 = vmatprep.mubr.bf16.mxu0 0
  %6699 = vmatmul.mubr.bf16.gmra.mxu0 %v3787
  %v6700 = vpop.f32.mrf.mxu0
  %v6701 = vadd.f32 0.0, %v6700
  %v6702 = vpop.f32.mrf.mxu0
  %v6703 = vpop.f32.mrf.mxu0
  %v6704 = vadd.f32 0.0, %v6703
  %v6705 = vpop.f32.mrf.mxu0
  %6706 = vmatprep.mubr.bf16.mxu0 0
  %6707 = vmatmul.mubr.bf16.gmra.mxu0 %v3788
  %v6708 = vpop.f32.mrf.mxu0
  %v6709 = vadd.f32 0.0, %v6708
  %v6710 = vpop.f32.mrf.mxu0
  %v6711 = vpop.f32.mrf.mxu0
  %v6712 = vadd.f32 0.0, %v6711
  %v6713 = vpop.f32.mrf.mxu0
  %6714 = vmatprep.mubr.bf16.mxu0 0
  %6715 = vmatmul.mubr.bf16.gmra.mxu0 %v3789
  %v6716 = vpop.f32.mrf.mxu0
  %v6717 = vadd.f32 0.0, %v6716
  %v6718 = vpop.f32.mrf.mxu0
  %v6719 = vpop.f32.mrf.mxu0
  %v6720 = vadd.f32 0.0, %v6719
  %v6721 = vpop.f32.mrf.mxu0
  %6722 = vmatprep.mubr.bf16.mxu0 0
  %6723 = vmatmul.mubr.bf16.gmra.mxu0 %v5180
  %v6724 = vpop.f32.mrf.mxu0
  %v6725 = vadd.f32 0.0, %v6724
  %v6726 = vpop.f32.mrf.mxu0
  %v6727 = vpop.f32.mrf.mxu0
  %v6728 = vadd.f32 0.0, %v6727
  %v6729 = vpop.f32.mrf.mxu0
  %6730 = vmatprep.mubr.bf16.mxu0 0
  %6731 = vmatmul.mubr.bf16.gmra.mxu0 %v6526
  %v6732 = vpop.f32.mrf.mxu0
  %v6733 = vadd.f32 0.0, %v6732
  %v6734 = vpop.f32.mrf.mxu0
  %v6735 = vpop.f32.mrf.mxu0
  %v6736 = vadd.f32 0.0, %v6735
  %v6737 = vpop.f32.mrf.mxu0
  %6738 = vmatprep.mubr.bf16.mxu0 0
  %6739 = vmatmul.mubr.bf16.gmra.mxu0 %v3792
  %v6740 = vpop.f32.mrf.mxu0
  %v6741 = vadd.f32 0.0, %v6740
  %v6742 = vpop.f32.mrf.mxu0
  %v6743 = vpop.f32.mrf.mxu0
  %v6744 = vadd.f32 0.0, %v6743
  %v6745 = vpop.f32.mrf.mxu0
  %6746 = vmatprep.mubr.bf16.mxu0 0
  %6747 = vmatmul.mubr.bf16.gmra.mxu0 %v3793
  %v6748 = vpop.f32.mrf.mxu0
  %v6749 = vadd.f32 0.0, %v6748
  %v6750 = vpop.f32.mrf.mxu0
  %v6751 = vpop.f32.mrf.mxu0
  %v6752 = vadd.f32 0.0, %v6751
  %v6753 = vpop.f32.mrf.mxu0
  %6754 = vmatprep.mubr.bf16.mxu0 0
  %6755 = vmatmul.mubr.bf16.gmra.mxu0 %v3794
  %v6756 = vpop.f32.mrf.mxu0
  %v6757 = vadd.f32 0.0, %v6756
  %v6758 = vpop.f32.mrf.mxu0
  %v6759 = vpop.f32.mrf.mxu0
  %v6760 = vadd.f32 0.0, %v6759
  %v6761 = vpop.f32.mrf.mxu0
  %6762 = vmatprep.mubr.bf16.mxu0 0
  %6763 = vmatmul.mubr.bf16.gmra.mxu0 %v3795
  %v6764 = vpop.f32.mrf.mxu0
  %v6765 = vadd.f32 0.0, %v6764
  %v6766 = vpop.f32.mrf.mxu0
  %v6767 = vpop.f32.mrf.mxu0
  %v6768 = vadd.f32 0.0, %v6767
  %v6769 = vpop.f32.mrf.mxu0
  %6770 = vmatprep.mubr.bf16.mxu0 0
  %6771 = vmatmul.mubr.bf16.gmra.mxu0 %v3796
  %v6772 = vpop.f32.mrf.mxu0
  %v6773 = vadd.f32 0.0, %v6772
  %v6774 = vpop.f32.mrf.mxu0
  %v6775 = vpop.f32.mrf.mxu0
  %v6776 = vadd.f32 0.0, %v6775
  %v6777 = vpop.f32.mrf.mxu0
  %6778 = vmatprep.mubr.bf16.mxu0 0
  %6779 = vmatmul.mubr.bf16.gmra.mxu0 %v3797
  %v6780 = vpop.f32.mrf.mxu0
  %v6781 = vadd.f32 0.0, %v6780
  %v6782 = vpop.f32.mrf.mxu0
  %v6783 = vpop.f32.mrf.mxu0
  %v6784 = vadd.f32 0.0, %v6783
  %v6785 = vpop.f32.mrf.mxu0
  %6786 = vmatprep.mubr.bf16.mxu0 0
  %6787 = vmatmul.mubr.bf16.gmra.mxu0 %v3798
  %v6788 = vpop.f32.mrf.mxu0
  %v6789 = vadd.f32 0.0, %v6788
  %v6790 = vpop.f32.mrf.mxu0
  %v6791 = vpop.f32.mrf.mxu0
  %v6792 = vadd.f32 0.0, %v6791
  %v6793 = vpop.f32.mrf.mxu0
  %6794 = vmatprep.mubr.bf16.mxu0 0
  %6795 = vmatmul.mubr.bf16.gmra.mxu0 %v3799
  %v6796 = vpop.f32.mrf.mxu0
  %v6797 = vadd.f32 0.0, %v6796
  %v6798 = vpop.f32.mrf.mxu0
  %v6799 = vpop.f32.mrf.mxu0
  %v6800 = vadd.f32 0.0, %v6799
  %v6801 = vpop.f32.mrf.mxu0
  %6802 = vmatprep.mubr.bf16.mxu0 0
  %6803 = vmatmul.mubr.bf16.gmra.mxu0 %v3800
  %v6804 = vpop.f32.mrf.mxu0
  %v6805 = vadd.f32 0.0, %v6804
  %v6806 = vpop.f32.mrf.mxu0
  %v6807 = vpop.f32.mrf.mxu0
  %v6808 = vadd.f32 0.0, %v6807
  %v6809 = vpop.f32.mrf.mxu0
  %6810 = vmatprep.mubr.bf16.mxu0 0
  %6811 = vmatmul.mubr.bf16.gmra.mxu0 %v3801
  %v6812 = vpop.f32.mrf.mxu0
  %v6813 = vadd.f32 0.0, %v6812
  %v6814 = vpop.f32.mrf.mxu0
  %v6815 = vpop.f32.mrf.mxu0
  %v6816 = vadd.f32 0.0, %v6815
  %v6817 = vpop.f32.mrf.mxu0
  %6818 = vmatprep.mubr.bf16.mxu0 0
  %6819 = vmatmul.mubr.bf16.gmra.mxu0 %v3802
  %v6820 = vpop.f32.mrf.mxu0
  %v6821 = vadd.f32 0.0, %v6820
  %v6822 = vpop.f32.mrf.mxu0
  %v6823 = vpop.f32.mrf.mxu0
  %v6824 = vadd.f32 0.0, %v6823
  %v6825 = vpop.f32.mrf.mxu0
  %6826 = vmatprep.mubr.bf16.mxu0 0
  %6827 = vmatmul.mubr.bf16.gmra.mxu0 %v3803
  %v6828 = vpop.f32.mrf.mxu0
  %v6829 = vadd.f32 0.0, %v6828
  %v6830 = vpop.f32.mrf.mxu0
  %v6831 = vpop.f32.mrf.mxu0
  %v6832 = vadd.f32 0.0, %v6831
  %v6833 = vpop.f32.mrf.mxu0
  %6834 = vmatprep.mubr.bf16.mxu0 0
  %6835 = vmatmul.mubr.bf16.gmra.mxu0 %v3804
  %v6836 = vpop.f32.mrf.mxu0
  %v6837 = vadd.f32 0.0, %v6836
  %v6838 = vpop.f32.mrf.mxu0
  %v6839 = vpop.f32.mrf.mxu0
  %v6840 = vadd.f32 0.0, %v6839
  %v6841 = vpop.f32.mrf.mxu0
  %6842 = vmatprep.mubr.bf16.mxu0 0
  %6843 = vmatmul.mubr.bf16.gmra.mxu0 %v3805
  %v6844 = vpop.f32.mrf.mxu0
  %v6845 = vadd.f32 0.0, %v6844
  %v6846 = vpop.f32.mrf.mxu0
  %v6847 = vpop.f32.mrf.mxu0
  %v6848 = vadd.f32 0.0, %v6847
  %v6849 = vpop.f32.mrf.mxu0
  %6850 = vmatprep.mubr.bf16.mxu0 0
  %6851 = vmatmul.mubr.bf16.gmra.mxu0 %v5181
  %v6852 = vpop.f32.mrf.mxu0
  %v6853 = vadd.f32 0.0, %v6852
  %v6854 = vpop.f32.mrf.mxu0
  %v6855 = vpop.f32.mrf.mxu0
  %v6856 = vadd.f32 0.0, %v6855
  %v6857 = vpop.f32.mrf.mxu0
  %6858 = vmatprep.mubr.bf16.mxu0 0
  %6859 = vmatmul.mubr.bf16.gmra.mxu0 %v6527
  %v6860 = vpop.f32.mrf.mxu0
  %v6861 = vadd.f32 0.0, %v6860
  %v6862 = vpop.f32.mrf.mxu0
  %v6863 = vpop.f32.mrf.mxu0
  %v6864 = vadd.f32 0.0, %v6863
  %v6865 = vpop.f32.mrf.mxu0
  %6866 = vdwg.mxu0
  %v6867 = vadd.f32 %v6425, %v6613
  %v6868 = vadd.f32 %v6426, %v6616
  %v6869 = vadd.f32 %v6427, %v6621
  %v6870 = vadd.f32 %v6428, %v6624
  %v6871 = vadd.f32 %v6429, %v6629
  %v6872 = vadd.f32 %v6430, %v6632
  %v6873 = vadd.f32 %v6431, %v6637
  %v6874 = vadd.f32 %v6432, %v6640
  %v6875 = vadd.f32 %v6433, %v6645
  %v6876 = vadd.f32 %v6434, %v6648
  %v6877 = vadd.f32 %v6435, %v6653
  %v6878 = vadd.f32 %v6436, %v6656
  %v6879 = vadd.f32 %v6437, %v6661
  %v6880 = vadd.f32 %v6438, %v6664
  %v6881 = vadd.f32 %v6439, %v6669
  %v6882 = vadd.f32 %v6440, %v6672
  %v6883 = vadd.f32 %v6441, %v6677
  %v6884 = vadd.f32 %v6442, %v6680
  %v6885 = vadd.f32 %v6443, %v6685
  %v6886 = vadd.f32 %v6444, %v6688
  %v6887 = vadd.f32 %v6445, %v6693
  %v6888 = vadd.f32 %v6446, %v6696
  %v6889 = vadd.f32 %v6447, %v6701
  %v6890 = vadd.f32 %v6448, %v6704
  %v6891 = vadd.f32 %v6449, %v6709
  %v6892 = vadd.f32 %v6450, %v6712
  %v6893 = vadd.f32 %v6451, %v6717
  %v6894 = vadd.f32 %v6452, %v6720
  %v6895 = vadd.f32 %v6453, %v6725
  %v6896 = vadd.f32 %v6454, %v6728
  %v6897 = vadd.f32 %v6455, %v6733
  %v6898 = vadd.f32 %v6456, %v6736
  %v6899 = vadd.f32 %v6457, %v6741
  %v6900 = vadd.f32 %v6458, %v6744
  %v6901 = vadd.f32 %v6459, %v6749
  %v6902 = vadd.f32 %v6460, %v6752
  %v6903 = vadd.f32 %v6461, %v6757
  %v6904 = vadd.f32 %v6462, %v6760
  %v6905 = vadd.f32 %v6463, %v6765
  %v6906 = vadd.f32 %v6464, %v6768
  %v6907 = vadd.f32 %v6465, %v6773
  %v6908 = vadd.f32 %v6466, %v6776
  %v6909 = vadd.f32 %v6467, %v6781
  %v6910 = vadd.f32 %v6468, %v6784
  %v6911 = vadd.f32 %v6469, %v6789
  %v6912 = vadd.f32 %v6470, %v6792
  %v6913 = vadd.f32 %v6471, %v6797
  %v6914 = vadd.f32 %v6472, %v6800
  %v6915 = vadd.f32 %v6473, %v6805
  %v6916 = vadd.f32 %v6474, %v6808
  %v6917 = vadd.f32 %v6475, %v6813
  %v6918 = vadd.f32 %v6476, %v6816
  %v6919 = vadd.f32 %v6477, %v6821
  %v6920 = vadd.f32 %v6478, %v6824
  %v6921 = vadd.f32 %v6479, %v6829
  %v6922 = vadd.f32 %v6480, %v6832
  %v6923 = vadd.f32 %v6481, %v6837
  %v6924 = vadd.f32 %v6482, %v6840
  %v6925 = vadd.f32 %v6483, %v6845
  %v6926 = vadd.f32 %v6484, %v6848
  %v6927 = vadd.f32 %v6485, %v6853
  %v6928 = vadd.f32 %v6486, %v6856
  %v6929 = vadd.f32 %v6487, %v6861
  %v6930 = vadd.f32 %v6488, %v6864
  %v6931 = vpack.c.bf16 %v6868, %v6867
  %v6932 = vpack.c.bf16 %v6870, %v6869
  %v6933 = vpack.c.bf16 %v6872, %v6871
  %v6934 = vpack.c.bf16 %v6874, %v6873
  %v6935 = vpack.c.bf16 %v6876, %v6875
  %v6936 = vpack.c.bf16 %v6878, %v6877
  %v6937 = vpack.c.bf16 %v6880, %v6879
  %v6938 = vpack.c.bf16 %v6882, %v6881
  %v6939 = vpack.c.bf16 %v6884, %v6883
  %v6940 = vpack.c.bf16 %v6886, %v6885
  %v6941 = vpack.c.bf16 %v6888, %v6887
  %v6942 = vpack.c.bf16 %v6890, %v6889
  %v6943 = vpack.c.bf16 %v6892, %v6891
  %v6944 = vpack.c.bf16 %v6894, %v6893
  %v6945 = vpack.c.bf16 %v6896, %v6895
  %v6946 = vpack.c.bf16 %v6898, %v6897
  %v6947 = vpack.c.bf16 %v6900, %v6899
  %v6948 = vpack.c.bf16 %v6902, %v6901
  %v6949 = vpack.c.bf16 %v6904, %v6903
  %v6950 = vpack.c.bf16 %v6906, %v6905
  %v6951 = vpack.c.bf16 %v6908, %v6907
  %v6952 = vpack.c.bf16 %v6910, %v6909
  %v6953 = vpack.c.bf16 %v6912, %v6911
  %v6954 = vpack.c.bf16 %v6914, %v6913
  %v6955 = vpack.c.bf16 %v6916, %v6915
  %v6956 = vpack.c.bf16 %v6918, %v6917
  %v6957 = vpack.c.bf16 %v6920, %v6919
  %v6958 = vpack.c.bf16 %v6922, %v6921
  %v6959 = vpack.c.bf16 %v6924, %v6923
  %v6960 = vpack.c.bf16 %v6926, %v6925
  %v6961 = vpack.c.bf16 %v6928, %v6927
  %v6962 = vpack.c.bf16 %v6930, %v6929
  %v6995 = vunpack.c.l.b16 %v6931
  %v6996 = vunpack.c.h.b16 %v6931
  %v6997 = vunpack.c.l.b16 %v6932
  %v6998 = vunpack.c.h.b16 %v6932
  %v6999 = vunpack.c.l.b16 %v6933
  %v7000 = vunpack.c.h.b16 %v6933
  %v7001 = vunpack.c.l.b16 %v6934
  %v7002 = vunpack.c.h.b16 %v6934
  %v7003 = vunpack.c.l.b16 %v6935
  %v7004 = vunpack.c.h.b16 %v6935
  %v7005 = vunpack.c.l.b16 %v6936
  %v7006 = vunpack.c.h.b16 %v6936
  %v7007 = vunpack.c.l.b16 %v6937
  %v7008 = vunpack.c.h.b16 %v6937
  %v7009 = vunpack.c.l.b16 %v6938
  %v7010 = vunpack.c.h.b16 %v6938
  %v7011 = vunpack.c.l.b16 %v6939
  %v7012 = vunpack.c.h.b16 %v6939
  %v7013 = vunpack.c.l.b16 %v6940
  %v7014 = vunpack.c.h.b16 %v6940
  %v7015 = vunpack.c.l.b16 %v6941
  %v7016 = vunpack.c.h.b16 %v6941
  %v7017 = vunpack.c.l.b16 %v6942
  %v7018 = vunpack.c.h.b16 %v6942
  %v7019 = vunpack.c.l.b16 %v6943
  %v7020 = vunpack.c.h.b16 %v6943
  %v7021 = vunpack.c.l.b16 %v6944
  %v7022 = vunpack.c.h.b16 %v6944
  %v7023 = vunpack.c.l.b16 %v6945
  %v7024 = vunpack.c.h.b16 %v6945
  %v7025 = vunpack.c.l.b16 %v6946
  %v7026 = vunpack.c.h.b16 %v6946
  %v7027 = vunpack.c.l.b16 %v6947
  %v7028 = vunpack.c.h.b16 %v6947
  %v7029 = vunpack.c.l.b16 %v6948
  %v7030 = vunpack.c.h.b16 %v6948
  %v7031 = vunpack.c.l.b16 %v6949
  %v7032 = vunpack.c.h.b16 %v6949
  %v7033 = vunpack.c.l.b16 %v6950
  %v7034 = vunpack.c.h.b16 %v6950
  %v7035 = vunpack.c.l.b16 %v6951
  %v7036 = vunpack.c.h.b16 %v6951
  %v7037 = vunpack.c.l.b16 %v6952
  %v7038 = vunpack.c.h.b16 %v6952
  %v7039 = vunpack.c.l.b16 %v6953
  %v7040 = vunpack.c.h.b16 %v6953
  %v7041 = vunpack.c.l.b16 %v6954
  %v7042 = vunpack.c.h.b16 %v6954
  %v7043 = vunpack.c.l.b16 %v6955
  %v7044 = vunpack.c.h.b16 %v6955
  %v7045 = vunpack.c.l.b16 %v6956
  %v7046 = vunpack.c.h.b16 %v6956
  %v7047 = vunpack.c.l.b16 %v6957
  %v7048 = vunpack.c.h.b16 %v6957
  %v7049 = vunpack.c.l.b16 %v6958
  %v7050 = vunpack.c.h.b16 %v6958
  %v7051 = vunpack.c.l.b16 %v6959
  %v7052 = vunpack.c.h.b16 %v6959
  %v7053 = vunpack.c.l.b16 %v6960
  %v7054 = vunpack.c.h.b16 %v6960
  %v7055 = vunpack.c.l.b16 %v6961
  %v7056 = vunpack.c.h.b16 %v6961
  %v7057 = vunpack.c.l.b16 %v6962
  %v7058 = vunpack.c.h.b16 %v6962
  %v7059 = vpack.c.b16 %v6995, %v6995
  %v7060 = vpack.c.b16 %v6996, %v6996
  %v7061 = vpack.c.b16 %v6997, %v6997
  %v7062 = vpack.c.b16 %v6998, %v6998
  %v7063 = vpack.c.b16 %v6999, %v6999
  %v7064 = vpack.c.b16 %v7000, %v7000
  %v7065 = vpack.c.b16 %v7001, %v7001
  %v7066 = vpack.c.b16 %v7002, %v7002
  %v7067 = vpack.c.b16 %v7003, %v7003
  %v7068 = vpack.c.b16 %v7004, %v7004
  %v7069 = vpack.c.b16 %v7005, %v7005
  %v7070 = vpack.c.b16 %v7006, %v7006
  %v7071 = vpack.c.b16 %v7007, %v7007
  %v7072 = vpack.c.b16 %v7008, %v7008
  %v7073 = vpack.c.b16 %v7009, %v7009
  %v7074 = vpack.c.b16 %v7010, %v7010
  %v7075 = vpack.c.b16 %v7011, %v7011
  %v7076 = vpack.c.b16 %v7012, %v7012
  %v7077 = vpack.c.b16 %v7013, %v7013
  %v7078 = vpack.c.b16 %v7014, %v7014
  %v7079 = vpack.c.b16 %v7015, %v7015
  %v7080 = vpack.c.b16 %v7016, %v7016
  %v7081 = vpack.c.b16 %v7017, %v7017
  %v7082 = vpack.c.b16 %v7018, %v7018
  %v7083 = vpack.c.b16 %v7019, %v7019
  %v7084 = vpack.c.b16 %v7020, %v7020
  %v7085 = vpack.c.b16 %v7021, %v7021
  %v7086 = vpack.c.b16 %v7022, %v7022
  %v7087 = vpack.c.b16 %v7023, %v7023
  %v7088 = vpack.c.b16 %v7024, %v7024
  %v7089 = vpack.c.b16 %v7025, %v7025
  %v7090 = vpack.c.b16 %v7026, %v7026
  %v7091 = vpack.c.b16 %v7027, %v7027
  %v7092 = vpack.c.b16 %v7028, %v7028
  %v7093 = vpack.c.b16 %v7029, %v7029
  %v7094 = vpack.c.b16 %v7030, %v7030
  %v7095 = vpack.c.b16 %v7031, %v7031
  %v7096 = vpack.c.b16 %v7032, %v7032
  %v7097 = vpack.c.b16 %v7033, %v7033
  %v7098 = vpack.c.b16 %v7034, %v7034
  %v7099 = vpack.c.b16 %v7035, %v7035
  %v7100 = vpack.c.b16 %v7036, %v7036
  %v7101 = vpack.c.b16 %v7037, %v7037
  %v7102 = vpack.c.b16 %v7038, %v7038
  %v7103 = vpack.c.b16 %v7039, %v7039
  %v7104 = vpack.c.b16 %v7040, %v7040
  %v7105 = vpack.c.b16 %v7041, %v7041
  %v7106 = vpack.c.b16 %v7042, %v7042
  %v7107 = vpack.c.b16 %v7043, %v7043
  %v7108 = vpack.c.b16 %v7044, %v7044
  %v7109 = vpack.c.b16 %v7045, %v7045
  %v7110 = vpack.c.b16 %v7046, %v7046
  %v7111 = vpack.c.b16 %v7047, %v7047
  %v7112 = vpack.c.b16 %v7048, %v7048
  %v7113 = vpack.c.b16 %v7049, %v7049
  %v7114 = vpack.c.b16 %v7050, %v7050
  %v7115 = vpack.c.b16 %v7051, %v7051
  %v7116 = vpack.c.b16 %v7052, %v7052
  %v7117 = vpack.c.b16 %v7053, %v7053
  %v7118 = vpack.c.b16 %v7054, %v7054
  %v7119 = vpack.c.b16 %v7055, %v7055
  %v7120 = vpack.c.b16 %v7056, %v7056
  %v7121 = vpack.c.b16 %v7057, %v7057
  %v7122 = vpack.c.b16 %v7058, %v7058
  %7187 = vst [vmem:[%s4] sm:$0xf] %v7059
  %7188 = vst [vmem:[%s4 + $0x4] sm:$0xf] %v7060
  %7189 = vst [vmem:[%s4 + $0x8] sm:$0xf] %v7061
  %7190 = vst [vmem:[%s4 + $0xc] sm:$0xf] %v7062
  %7191 = vst [vmem:[%s4 + $0x10] sm:$0xf] %v7063
  %7192 = vst [vmem:[%s4 + $0x14] sm:$0xf] %v7064
  %7193 = vst [vmem:[%s4 + $0x18] sm:$0xf] %v7065
  %7194 = vst [vmem:[%s4 + $0x1c] sm:$0xf] %v7066
  %7195 = vst [vmem:[%s4 + $0x20] sm:$0xf] %v7067
  %7196 = vst [vmem:[%s4 + $0x24] sm:$0xf] %v7068
  %7197 = vst [vmem:[%s4 + $0x28] sm:$0xf] %v7069
  %7198 = vst [vmem:[%s4 + $0x2c] sm:$0xf] %v7070
  %7199 = vst [vmem:[%s4 + $0x30] sm:$0xf] %v7071
  %7200 = vst [vmem:[%s4 + $0x34] sm:$0xf] %v7072
  %7201 = vst [vmem:[%s4 + $0x38] sm:$0xf] %v7073
  %7202 = vst [vmem:[%s4 + $0x3c] sm:$0xf] %v7074
  %7203 = vst [vmem:[%s4 + $0x40] sm:$0xf] %v7075
  %7204 = vst [vmem:[%s4 + $0x44] sm:$0xf] %v7076
  %7205 = vst [vmem:[%s4 + $0x48] sm:$0xf] %v7077
  %7206 = vst [vmem:[%s4 + $0x4c] sm:$0xf] %v7078
  %7207 = vst [vmem:[%s4 + $0x50] sm:$0xf] %v7079
  %7208 = vst [vmem:[%s4 + $0x54] sm:$0xf] %v7080
  %7209 = vst [vmem:[%s4 + $0x58] sm:$0xf] %v7081
  %7210 = vst [vmem:[%s4 + $0x5c] sm:$0xf] %v7082
  %7211 = vst [vmem:[%s4 + $0x60] sm:$0xf] %v7083
  %7212 = vst [vmem:[%s4 + $0x64] sm:$0xf] %v7084
  %7213 = vst [vmem:[%s4 + $0x68] sm:$0xf] %v7085
  %7214 = vst [vmem:[%s4 + $0x6c] sm:$0xf] %v7086
  %7215 = vst [vmem:[%s4 + $0x70] sm:$0xf] %v7087
  %7216 = vst [vmem:[%s4 + $0x74] sm:$0xf] %v7088
  %7217 = vst [vmem:[%s4 + $0x78] sm:$0xf] %v7089
  %7218 = vst [vmem:[%s4 + $0x7c] sm:$0xf] %v7090
  %7219 = vst [vmem:[%s4 + $0x80] sm:$0xf] %v7091
  %7220 = vst [vmem:[%s4 + $0x84] sm:$0xf] %v7092
  %7221 = vst [vmem:[%s4 + $0x88] sm:$0xf] %v7093
  %7222 = vst [vmem:[%s4 + $0x8c] sm:$0xf] %v7094
  %7223 = vst [vmem:[%s4 + $0x90] sm:$0xf] %v7095
  %7224 = vst [vmem:[%s4 + $0x94] sm:$0xf] %v7096
  %7225 = vst [vmem:[%s4 + $0x98] sm:$0xf] %v7097
  %7226 = vst [vmem:[%s4 + $0x9c] sm:$0xf] %v7098
  %7227 = vst [vmem:[%s4 + $0xa0] sm:$0xf] %v7099
  %7228 = vst [vmem:[%s4 + $0xa4] sm:$0xf] %v7100
  %7229 = vst [vmem:[%s4 + $0xa8] sm:$0xf] %v7101
  %7230 = vst [vmem:[%s4 + $0xac] sm:$0xf] %v7102
  %7231 = vst [vmem:[%s4 + $0xb0] sm:$0xf] %v7103
  %7232 = vst [vmem:[%s4 + $0xb4] sm:$0xf] %v7104
  %7233 = vst [vmem:[%s4 + $0xb8] sm:$0xf] %v7105
  %7234 = vst [vmem:[%s4 + $0xbc] sm:$0xf] %v7106
  %7235 = vst [vmem:[%s4 + $0xc0] sm:$0xf] %v7107
  %7236 = vst [vmem:[%s4 + $0xc4] sm:$0xf] %v7108
  %7237 = vst [vmem:[%s4 + $0xc8] sm:$0xf] %v7109
  %7238 = vst [vmem:[%s4 + $0xcc] sm:$0xf] %v7110
  %7239 = vst [vmem:[%s4 + $0xd0] sm:$0xf] %v7111
  %7240 = vst [vmem:[%s4 + $0xd4] sm:$0xf] %v7112
  %7241 = vst [vmem:[%s4 + $0xd8] sm:$0xf] %v7113
  %7242 = vst [vmem:[%s4 + $0xdc] sm:$0xf] %v7114
  %7243 = vst [vmem:[%s4 + $0xe0] sm:$0xf] %v7115
  %7244 = vst [vmem:[%s4 + $0xe4] sm:$0xf] %v7116
  %7245 = vst [vmem:[%s4 + $0xe8] sm:$0xf] %v7117
  %7246 = vst [vmem:[%s4 + $0xec] sm:$0xf] %v7118
  %7247 = vst [vmem:[%s4 + $0xf0] sm:$0xf] %v7119
  %7248 = vst [vmem:[%s4 + $0xf4] sm:$0xf] %v7120
  %7249 = vst [vmem:[%s4 + $0xf8] sm:$0xf] %v7121
  %7250 = vst [vmem:[%s4 + $0xfc] sm:$0xf] %v7122
  %v7251 = vadd.f32 %v6867, %v6868
  %v7252 = vadd.f32 %v7251, %v6869
  %v7253 = vadd.f32 %v7252, %v6870
  %v7254 = vadd.f32 %v7253, %v6871
  %v7255 = vadd.f32 %v7254, %v6872
  %v7256 = vadd.f32 %v7255, %v6873
  %v7257 = vadd.f32 %v7256, %v6874
  %v7258 = vadd.f32 %v7257, %v6875
  %v7259 = vadd.f32 %v7258, %v6876
  %v7260 = vadd.f32 %v7259, %v6877
  %v7261 = vadd.f32 %v7260, %v6878
  %v7262 = vadd.f32 %v7261, %v6879
  %v7263 = vadd.f32 %v7262, %v6880
  %v7264 = vadd.f32 %v7263, %v6881
  %v7265 = vadd.f32 %v7264, %v6882
  %v7266 = vadd.f32 %v7265, %v6883
  %v7267 = vadd.f32 %v7266, %v6884
  %v7268 = vadd.f32 %v7267, %v6885
  %v7269 = vadd.f32 %v7268, %v6886
  %v7270 = vadd.f32 %v7269, %v6887
  %v7271 = vadd.f32 %v7270, %v6888
  %v7272 = vadd.f32 %v7271, %v6889
  %v7273 = vadd.f32 %v7272, %v6890
  %v7274 = vadd.f32 %v7273, %v6891
  %v7275 = vadd.f32 %v7274, %v6892
  %v7276 = vadd.f32 %v7275, %v6893
  %v7277 = vadd.f32 %v7276, %v6894
  %v7278 = vadd.f32 %v7277, %v6895
  %v7279 = vadd.f32 %v7278, %v6896
  %v7280 = vadd.f32 %v7279, %v6897
  %v7281 = vadd.f32 %v7280, %v6898
  %v7282 = vadd.f32 %v7281, %v6899
  %v7283 = vadd.f32 %v7282, %v6900
  %v7284 = vadd.f32 %v7283, %v6901
  %v7285 = vadd.f32 %v7284, %v6902
  %v7286 = vadd.f32 %v7285, %v6903
  %v7287 = vadd.f32 %v7286, %v6904
  %v7288 = vadd.f32 %v7287, %v6905
  %v7289 = vadd.f32 %v7288, %v6906
  %v7290 = vadd.f32 %v7289, %v6907
  %v7291 = vadd.f32 %v7290, %v6908
  %v7292 = vadd.f32 %v7291, %v6909
  %v7293 = vadd.f32 %v7292, %v6910
  %v7294 = vadd.f32 %v7293, %v6911
  %v7295 = vadd.f32 %v7294, %v6912
  %v7296 = vadd.f32 %v7295, %v6913
  %v7297 = vadd.f32 %v7296, %v6914
  %v7298 = vadd.f32 %v7297, %v6915
  %v7299 = vadd.f32 %v7298, %v6916
  %v7300 = vadd.f32 %v7299, %v6917
  %v7301 = vadd.f32 %v7300, %v6918
  %v7302 = vadd.f32 %v7301, %v6919
  %v7303 = vadd.f32 %v7302, %v6920
  %v7304 = vadd.f32 %v7303, %v6921
  %v7305 = vadd.f32 %v7304, %v6922
  %v7306 = vadd.f32 %v7305, %v6923
  %v7307 = vadd.f32 %v7306, %v6924
  %v7308 = vadd.f32 %v7307, %v6925
  %v7309 = vadd.f32 %v7308, %v6926
  %v7310 = vadd.f32 %v7309, %v6927
  %v7311 = vadd.f32 %v7310, %v6928
  %v7312 = vadd.f32 %v7311, %v6929
  %v7313 = vadd.f32 %v7312, %v6930
  %v7314 = vrot.slane %v7313, 4
  %v7315 = vadd.f32 %v7313, %v7314
  %v7316 = vrot.slane %v7315, 2
  %v7317 = vadd.f32 %v7315, %v7316
  %v7318 = vrot.slane %v7317, 1
  %v7319 = vadd.f32 %v7317, %v7318
  %7320 = vst [vmem:[%s5] sm:$0x1] %v7319
  %v7321 = vmul.f32 %v6867, %v6867
  %v7322 = vmul.f32 %v6868, %v6868
  %v7323 = vmul.f32 %v6869, %v6869
  %v7324 = vmul.f32 %v6870, %v6870
  %v7325 = vmul.f32 %v6871, %v6871
  %v7326 = vmul.f32 %v6872, %v6872
  %v7327 = vmul.f32 %v6873, %v6873
  %v7328 = vmul.f32 %v6874, %v6874
  %v7329 = vmul.f32 %v6875, %v6875
  %v7330 = vmul.f32 %v6876, %v6876
  %v7331 = vmul.f32 %v6877, %v6877
  %v7332 = vmul.f32 %v6878, %v6878
  %v7333 = vmul.f32 %v6879, %v6879
  %v7334 = vmul.f32 %v6880, %v6880
  %v7335 = vmul.f32 %v6881, %v6881
  %v7336 = vmul.f32 %v6882, %v6882
  %v7337 = vmul.f32 %v6883, %v6883
  %v7338 = vmul.f32 %v6884, %v6884
  %v7339 = vmul.f32 %v6885, %v6885
  %v7340 = vmul.f32 %v6886, %v6886
  %v7341 = vmul.f32 %v6887, %v6887
  %v7342 = vmul.f32 %v6888, %v6888
  %v7343 = vmul.f32 %v6889, %v6889
  %v7344 = vmul.f32 %v6890, %v6890
  %v7345 = vmul.f32 %v6891, %v6891
  %v7346 = vmul.f32 %v6892, %v6892
  %v7347 = vmul.f32 %v6893, %v6893
  %v7348 = vmul.f32 %v6894, %v6894
  %v7349 = vmul.f32 %v6895, %v6895
  %v7350 = vmul.f32 %v6896, %v6896
  %v7351 = vmul.f32 %v6897, %v6897
  %v7352 = vmul.f32 %v6898, %v6898
  %v7353 = vmul.f32 %v6899, %v6899
  %v7354 = vmul.f32 %v6900, %v6900
  %v7355 = vmul.f32 %v6901, %v6901
  %v7356 = vmul.f32 %v6902, %v6902
  %v7357 = vmul.f32 %v6903, %v6903
  %v7358 = vmul.f32 %v6904, %v6904
  %v7359 = vmul.f32 %v6905, %v6905
  %v7360 = vmul.f32 %v6906, %v6906
  %v7361 = vmul.f32 %v6907, %v6907
  %v7362 = vmul.f32 %v6908, %v6908
  %v7363 = vmul.f32 %v6909, %v6909
  %v7364 = vmul.f32 %v6910, %v6910
  %v7365 = vmul.f32 %v6911, %v6911
  %v7366 = vmul.f32 %v6912, %v6912
  %v7367 = vmul.f32 %v6913, %v6913
  %v7368 = vmul.f32 %v6914, %v6914
  %v7369 = vmul.f32 %v6915, %v6915
  %v7370 = vmul.f32 %v6916, %v6916
  %v7371 = vmul.f32 %v6917, %v6917
  %v7372 = vmul.f32 %v6918, %v6918
  %v7373 = vmul.f32 %v6919, %v6919
  %v7374 = vmul.f32 %v6920, %v6920
  %v7375 = vmul.f32 %v6921, %v6921
  %v7376 = vmul.f32 %v6922, %v6922
  %v7377 = vmul.f32 %v6923, %v6923
  %v7378 = vmul.f32 %v6924, %v6924
  %v7379 = vmul.f32 %v6925, %v6925
  %v7380 = vmul.f32 %v6926, %v6926
  %v7381 = vmul.f32 %v6927, %v6927
  %v7382 = vmul.f32 %v6928, %v6928
  %v7383 = vmul.f32 %v6929, %v6929
  %v7384 = vmul.f32 %v6930, %v6930
  %v7385 = vadd.f32 %v7321, %v7322
  %v7386 = vadd.f32 %v7385, %v7323
  %v7387 = vadd.f32 %v7386, %v7324
  %v7388 = vadd.f32 %v7387, %v7325
  %v7389 = vadd.f32 %v7388, %v7326
  %v7390 = vadd.f32 %v7389, %v7327
  %v7391 = vadd.f32 %v7390, %v7328
  %v7392 = vadd.f32 %v7391, %v7329
  %v7393 = vadd.f32 %v7392, %v7330
  %v7394 = vadd.f32 %v7393, %v7331
  %v7395 = vadd.f32 %v7394, %v7332
  %v7396 = vadd.f32 %v7395, %v7333
  %v7397 = vadd.f32 %v7396, %v7334
  %v7398 = vadd.f32 %v7397, %v7335
  %v7399 = vadd.f32 %v7398, %v7336
  %v7400 = vadd.f32 %v7399, %v7337
  %v7401 = vadd.f32 %v7400, %v7338
  %v7402 = vadd.f32 %v7401, %v7339
  %v7403 = vadd.f32 %v7402, %v7340
  %v7404 = vadd.f32 %v7403, %v7341
  %v7405 = vadd.f32 %v7404, %v7342
  %v7406 = vadd.f32 %v7405, %v7343
  %v7407 = vadd.f32 %v7406, %v7344
  %v7408 = vadd.f32 %v7407, %v7345
  %v7409 = vadd.f32 %v7408, %v7346
  %v7410 = vadd.f32 %v7409, %v7347
  %v7411 = vadd.f32 %v7410, %v7348
  %v7412 = vadd.f32 %v7411, %v7349
  %v7413 = vadd.f32 %v7412, %v7350
  %v7414 = vadd.f32 %v7413, %v7351
  %v7415 = vadd.f32 %v7414, %v7352
  %v7416 = vadd.f32 %v7415, %v7353
  %v7417 = vadd.f32 %v7416, %v7354
  %v7418 = vadd.f32 %v7417, %v7355
  %v7419 = vadd.f32 %v7418, %v7356
  %v7420 = vadd.f32 %v7419, %v7357
  %v7421 = vadd.f32 %v7420, %v7358
  %v7422 = vadd.f32 %v7421, %v7359
  %v7423 = vadd.f32 %v7422, %v7360
  %v7424 = vadd.f32 %v7423, %v7361
  %v7425 = vadd.f32 %v7424, %v7362
  %v7426 = vadd.f32 %v7425, %v7363
  %v7427 = vadd.f32 %v7426, %v7364
  %v7428 = vadd.f32 %v7427, %v7365
  %v7429 = vadd.f32 %v7428, %v7366
  %v7430 = vadd.f32 %v7429, %v7367
  %v7431 = vadd.f32 %v7430, %v7368
  %v7432 = vadd.f32 %v7431, %v7369
  %v7433 = vadd.f32 %v7432, %v7370
  %v7434 = vadd.f32 %v7433, %v7371
  %v7435 = vadd.f32 %v7434, %v7372
  %v7436 = vadd.f32 %v7435, %v7373
  %v7437 = vadd.f32 %v7436, %v7374
  %v7438 = vadd.f32 %v7437, %v7375
  %v7439 = vadd.f32 %v7438, %v7376
  %v7440 = vadd.f32 %v7439, %v7377
  %v7441 = vadd.f32 %v7440, %v7378
  %v7442 = vadd.f32 %v7441, %v7379
  %v7443 = vadd.f32 %v7442, %v7380
  %v7444 = vadd.f32 %v7443, %v7381
  %v7445 = vadd.f32 %v7444, %v7382
  %v7446 = vadd.f32 %v7445, %v7383
  %v7447 = vadd.f32 %v7446, %v7384
  %v7448 = vrot.slane %v7447, 4
  %v7449 = vadd.f32 %v7447, %v7448
  %v7450 = vrot.slane %v7449, 2
  %v7451 = vadd.f32 %v7449, %v7450
  %v7452 = vrot.slane %v7451, 1
  %v7453 = vadd.f32 %v7451, %v7452
  %7454 = vst [vmem:[%s6] sm:$0x1] %v7453
  // Predicated region
  $region18: #{residual_block_forward_nhwc.4} parent=0 // pred_check
    _
  $region19: #{residual_block_forward_nhwc.4} parent=0 // pred_check_branch
    %7456 = sbr.rel (0) target = $region21
  $region20: #{residual_block_forward_nhwc.4} parent=0 // pred_region
    _
  $region21: #{residual_block_forward_nhwc.4} parent=0 // pred_fallthru
    _
  // Predicated region
  $region22: #{residual_block_forward_nhwc.4} parent=0 // pred_check
    _
  $region23: #{residual_block_forward_nhwc.4} parent=0 // pred_check_branch
    %7458 = sbr.rel (0) target = $region25
  $region24: #{residual_block_forward_nhwc.4} parent=0 // pred_region
    _
  $region25: #{residual_block_forward_nhwc.4} parent=0 // pred_fallthru
    _
  // Predicated region
  $region26: #{residual_block_forward_nhwc.4} parent=0 // pred_check
    _
  $region27: #{residual_block_forward_nhwc.4} parent=0 // pred_check_branch
    %7460 = sbr.rel (0) target = $region29
  $region28: #{residual_block_forward_nhwc.4} parent=0 // pred_region
    _
  $region29: #{residual_block_forward_nhwc.4} parent=0 // pred_fallthru
    _
  // Predicated region
  $region30: #{residual_block_forward_nhwc.4} parent=0 // pred_check
    _
  $region31: #{residual_block_forward_nhwc.4} parent=0 // pred_check_branch
    %7462 = sbr.rel (0) target = $region33
  $region32: #{residual_block_forward_nhwc.4} parent=0 // pred_region
    _
  $region33: #{residual_block_forward_nhwc.4} parent=0 // pred_fallthru
    _
  // Predicated region
  $region34: #{residual_block_forward_nhwc.4} parent=0 // pred_check
    _
  $region35: #{residual_block_forward_nhwc.4} parent=0 // pred_check_branch
    %7464 = sbr.rel (0) target = $region37
  $region36: #{residual_block_forward_nhwc.4} parent=0 // pred_region
    _
  $region37: #{residual_block_forward_nhwc.4} parent=0 // pred_fallthru
    _
  // Predicated region
  $region38: #{residual_block_forward_nhwc.4} parent=0 // pred_check
    _
  $region39: #{residual_block_forward_nhwc.4} parent=0 // pred_check_branch
    %7466 = sbr.rel (0) target = $region41
  $region40: #{residual_block_forward_nhwc.4} parent=0 // pred_region
    _
  $region41: #{residual_block_forward_nhwc.4} parent=0 // pred_fallthru
    _

</llo_original>
